<compile_context>
chip_gen: v7x
topology: tpu7x:2x2x1
jax: 0.10.0
libtpu: 0.0.40
codegen_flags: <defaults>
</compile_context>

<pallas_src>
import jax
import jax.numpy as jnp
from jax.experimental import pallas as pl
from jax.experimental.pallas import tpu as pltpu


# bf16 feeds the MXU at its peak rate on v6e/v7x and avoids the emulated f32 path
# on v5e; accumulation/BN stay f32.  Set to jnp.float32 for a bit-tight check.
_MXU_DTYPE = jnp.bfloat16
_BN_EPS = 1e-5


# ------------------------------ Pallas kernel ---------------------------------

def _conv3x3_cm(xp_ref, wt_ref, cin, n, h, w):
    """3x3 same-padding conv as 9 accumulated MXU matmuls, channels-major output.

    xp_ref : VMEM (N, H+2, W+2, Cpad) _MXU_DTYPE halo buffer (border zeroed,
             interior filled with the conv input, channels [cin:] unused).
    wt_ref : VMEM (Cout_, 9*cin) _MXU_DTYPE; tap k slice = [:, k*cin:(k+1)*cin].
    returns: (Cout_, N*H*W) float32 accumulator.
    """
    m = n * h * w
    cout = wt_ref.shape[0]
    acc = jnp.zeros((cout, m), jnp.float32)
    k = 0
    for dy in range(3):
        for dx in range(3):
            patch = xp_ref[:, dy:dy + h, dx:dx + w, :cin].reshape(m, cin)   # (M, cin)
            w_tap = wt_ref[:, k * cin:(k + 1) * cin]                        # (cout, cin)
            acc = acc + jax.lax.dot_general(
                w_tap, patch,
                dimension_numbers=(((1,), (1,)), ((), ())),
                preferred_element_type=jnp.float32)                         # (cout, M)
            k += 1
    return acc


def _bn_relu_cm(y, gamma_ref, beta_ref, inv_m):
    """Train-mode (batch-stat, biased-var) BatchNorm + ReLU on channels-major (C, M)."""
    mu = jnp.sum(y, axis=1, keepdims=True) * inv_m                  # (C, 1)
    ex2 = jnp.sum(y * y, axis=1, keepdims=True) * inv_m             # (C, 1)
    var = ex2 - mu * mu                                             # biased, PyTorch-style
    scale = jax.lax.rsqrt(var + _BN_EPS) * gamma_ref[...]           # (C, 1)
    shift = beta_ref[...] - mu * scale                              # (C, 1)
    return jnp.maximum(y * scale + shift, 0.0)                      # (C, M) f32


def _double_conv_bn_relu_kernel(x_ref, w1t_ref, g1_ref, beta1_ref,
                                w2t_ref, g2_ref, beta2_ref,
                                o_ref, xp_ref):
    # x_ref   : (N, H, W, Cin)  _MXU_DTYPE          w1t_ref: (Cmid, 9*Cin) _MXU_DTYPE
    # g1/beta1: (Cmid, 1) f32                        w2t_ref: (Cout, 9*Cmid) _MXU_DTYPE
    # g2/beta2: (Cout, 1) f32                        o_ref  : (N, Cout, H*W) f32
    # xp_ref  : (N, H+2, W+2, Cpad) _MXU_DTYPE halo scratch
    N, H, W, Cin = x_ref.shape
    Cmid = w1t_ref.shape[0]
    HW = H * W
    M = N * HW
    inv_m = 1.0 / M
    Cpad = xp_ref.shape[-1]

    # Zero only the 1-pixel halo border (interior is fully overwritten below);
    # the border provides same-padding for both convolutions.
    zrow = jnp.zeros((N, 1, W + 2, Cpad), xp_ref.dtype)
    zcol = jnp.zeros((N, H + 2, 1, Cpad), xp_ref.dtype)
    xp_ref[:, 0:1, :, :] = zrow
    xp_ref[:, H + 1:H + 2, :, :] = zrow
    xp_ref[:, :, 0:1, :] = zcol
    xp_ref[:, :, W + 1:W + 2, :] = zcol

    # ---------------- block 1: conv3x3 -> BN(batch stats) -> ReLU ----------------
    # Conv bias omitted: it only shifts the per-channel batch mean and cancels.
    xp_ref[:, 1:H + 1, 1:W + 1, :Cin] = x_ref[...].astype(xp_ref.dtype)
    y1 = _conv3x3_cm(xp_ref, w1t_ref, Cin, N, H, W)          # (Cmid, M) f32
    h1 = _bn_relu_cm(y1, g1_ref, beta1_ref, inv_m)           # (Cmid, M) f32

    # ---------------- block 2: conv3x3 -> BN(batch stats) -> ReLU ----------------
    # One small XLU transpose turns the lane-dense (Cmid, M) block-1 output back
    # into NHWC element order for conv2's halo fill.
    h1_nhwc = jnp.transpose(h1).reshape(N, H, W, Cmid).astype(xp_ref.dtype)
    xp_ref[:, 1:H + 1, 1:W + 1, :Cmid] = h1_nhwc
    y2 = _conv3x3_cm(xp_ref, w2t_ref, Cmid, N, H, W)         # (Cout, M) f32
    h2 = _bn_relu_cm(y2, g2_ref, beta2_ref, inv_m)           # (Cout, M) f32

    # Channels-major result is already NCHW element order; store lane-dense
    # (last dim H*W = 256) slabs per batch element.
    for n in range(N):                                       # static, small N
        o_ref[n] = h2[:, n * HW:(n + 1) * HW].astype(o_ref.dtype)


# --------------------------------- wrapper -------------------------------------

def double_conv2d_bn_forward(x_nchw, params):
    """Forward of double_conv2d_bn (training-mode BN), fully fused in one Pallas call.

    x_nchw: (N, Cin, H, W) float32 (PyTorch layout).  Returns (N, Cout, H, W).
    """
    N, Cin, H, W = x_nchw.shape
    w1, w2 = params["w1"], params["w2"]            # HWIO: (3,3,Cin,Cmid), (3,3,Cmid,Cout)
    Cmid, Cout = w1.shape[-1], w2.shape[-1]
    Cpad = max(Cin, Cmid)

    x_nhwc = jnp.transpose(x_nchw, (0, 2, 3, 1)).astype(_MXU_DTYPE)
    # Pre-transposed, channels-major weights: tap k lives at [:, k*Cin:(k+1)*Cin].
    w1t = jnp.transpose(w1.reshape(9 * Cin, Cmid)).astype(_MXU_DTYPE)     # (Cmid, 9*Cin)
    w2t = jnp.transpose(w2.reshape(9 * Cmid, Cout)).astype(_MXU_DTYPE)    # (Cout, 9*Cmid)
    g1 = params["gamma1"].reshape(Cmid, 1).astype(jnp.float32)
    beta1 = params["beta1"].reshape(Cmid, 1).astype(jnp.float32)
    g2 = params["gamma2"].reshape(Cout, 1).astype(jnp.float32)
    beta2 = params["beta2"].reshape(Cout, 1).astype(jnp.float32)
    # params["b1"] / params["b2"] (conv biases) are intentionally NOT passed:
    # train-mode BatchNorm absorbs them into the batch mean, so they cancel exactly.

    out = pl.pallas_call(
        _double_conv_bn_relu_kernel,
        out_shape=jax.ShapeDtypeStruct((N, Cout, H * W), x_nchw.dtype),
        in_specs=[pl.BlockSpec(memory_space=pltpu.MemorySpace.VMEM)] * 7,
        out_specs=pl.BlockSpec(memory_space=pltpu.MemorySpace.VMEM),
        scratch_shapes=[
            pltpu.VMEM((N, H + 2, W + 2, Cpad), _MXU_DTYPE),   # zero-bordered halo
        ],
    )(x_nhwc, w1t, g1, beta1, w2t, g2, beta2)

    # (N, Cout, H*W) is already NCHW element order -> free reshape, no transpose.
    return out.reshape(N, Cout, H, W)


# ------------------------- pure-JAX reference (check) ---------------------------

def _ref_forward(x_nchw, params):
    def conv(x, w_hwio, b):
        y = jax.lax.conv_general_dilated(
            x, w_hwio, window_strides=(1, 1), padding=((1, 1), (1, 1)),
            dimension_numbers=("NCHW", "HWIO", "NCHW"))
        return y + b[None, :, None, None]

    def bnr(x, g, bta):
        mean = jnp.mean(x, axis=(0, 2, 3), keepdims=True)
        var = jnp.mean((x - mean) ** 2, axis=(0, 2, 3), keepdims=True)   # biased, PyTorch-style
        y = (x - mean) * jax.lax.rsqrt(var + _BN_EPS)
        y = y * g[None, :, None, None] + bta[None, :, None, None]
        return jnp.maximum(y, 0.0)

    h = bnr(conv(x_nchw, params["w1"], params["b1"]), params["gamma1"], params["beta1"])
    h = bnr(conv(h, params["w2"], params["b2"]), params["gamma2"], params["beta2"])
    return h


# ----------------------------------- main ---------------------------------------

if __name__ == "__main__":
    N, Cin, Cout, H, W = 2, 4, 8, 16, 16

    key = jax.random.PRNGKey(0)
    k = jax.random.split(key, 9)
    params = {
        # conv weights stored in HWIO (kh, kw, Cin, Cout)
        "w1": jax.random.normal(k[0], (3, 3, Cin, Cout), jnp.float32) * 0.2,
        "b1": jax.random.normal(k[1], (Cout,), jnp.float32) * 0.1,
        "gamma1": 1.0 + 0.1 * jax.random.normal(k[2], (Cout,), jnp.float32),
        "beta1": 0.1 * jax.random.normal(k[3], (Cout,), jnp.float32),
        "w2": jax.random.normal(k[4], (3, 3, Cout, Cout), jnp.float32) * 0.2,
        "b2": jax.random.normal(k[5], (Cout,), jnp.float32) * 0.1,
        "gamma2": 1.0 + 0.1 * jax.random.normal(k[6], (Cout,), jnp.float32),
        "beta2": 0.1 * jax.random.normal(k[7], (Cout,), jnp.float32),
    }

    x = jax.random.normal(k[8], (N, Cin, H, W), jnp.float32)     # NCHW like PyTorch

    out = jax.block_until_ready(double_conv2d_bn_forward(x, params))
    ref = jax.block_until_ready(_ref_forward(x, params))

    max_err = float(jnp.max(jnp.abs(out - ref)))
    assert out.shape == (N, Cout, H, W), out.shape
    # bf16 MXU operands (f32 accumulation) -> widened tolerance; the f32 path
    # (_MXU_DTYPE = jnp.float32) stays under 5e-3.
    tol = 5e-3 if _MXU_DTYPE == jnp.float32 else 7.5e-2
    assert max_err < tol, f"max abs error {max_err}"

    print("KERNEL_OK")
</pallas_src>

<mosaic_0001>
module attributes {stable_mosaic.version = 11 : i64} {
  func.func @_double_conv_bn_relu_kernel(%arg0: memref<2x16x16x4xbf16, #tpu.memory_space<vmem>>, %arg1: memref<8x36xbf16, #tpu.memory_space<vmem>>, %arg2: memref<8x1xf32, #tpu.memory_space<vmem>>, %arg3: memref<8x1xf32, #tpu.memory_space<vmem>>, %arg4: memref<8x72xbf16, #tpu.memory_space<vmem>>, %arg5: memref<8x1xf32, #tpu.memory_space<vmem>>, %arg6: memref<8x1xf32, #tpu.memory_space<vmem>>, %arg7: memref<2x8x256xf32, #tpu.memory_space<vmem>>, %arg8: memref<2x18x18x8xbf16, #tpu.memory_space<vmem>>) attributes {dimension_semantics = [], scalar_prefetch = 0 : i64, scratch_operands = 1 : i64, tpu.core_type = #tpu.core_type<tc>} {
    %cst = arith.constant 0.000000e+00 : bf16
    %0 = vector.broadcast %cst : bf16 to vector<2x1x18x8xbf16>
    %cst_0 = arith.constant 0.000000e+00 : bf16
    %1 = vector.broadcast %cst_0 : bf16 to vector<2x18x1x8xbf16>
    %c0 = arith.constant 0 : index
    %c0_1 = arith.constant 0 : index
    %c0_2 = arith.constant 0 : index
    %c0_3 = arith.constant 0 : index
    %2 = vector.load %arg8[%c0, %c0_1, %c0_2, %c0_3] : memref<2x18x18x8xbf16, #tpu.memory_space<vmem>>, vector<2x1x18x8xbf16>
    tpu.vector_store %arg8[%c0, %c0_1, %c0_2, %c0_3], %0 {strides = array<i32>} : memref<2x18x18x8xbf16, #tpu.memory_space<vmem>>, vector<2x1x18x8xbf16>,
    %c0_4 = arith.constant 0 : index
    %c17 = arith.constant 17 : index
    %c0_5 = arith.constant 0 : index
    %c0_6 = arith.constant 0 : index
    %3 = vector.load %arg8[%c0_4, %c17, %c0_5, %c0_6] : memref<2x18x18x8xbf16, #tpu.memory_space<vmem>>, vector<2x1x18x8xbf16>
    tpu.vector_store %arg8[%c0_4, %c17, %c0_5, %c0_6], %0 {strides = array<i32>} : memref<2x18x18x8xbf16, #tpu.memory_space<vmem>>, vector<2x1x18x8xbf16>,
    %c0_7 = arith.constant 0 : index
    %c0_8 = arith.constant 0 : index
    %c0_9 = arith.constant 0 : index
    %c0_10 = arith.constant 0 : index
    %4 = vector.load %arg8[%c0_7, %c0_8, %c0_9, %c0_10] : memref<2x18x18x8xbf16, #tpu.memory_space<vmem>>, vector<2x18x1x8xbf16>
    tpu.vector_store %arg8[%c0_7, %c0_8, %c0_9, %c0_10], %1 {strides = array<i32>} : memref<2x18x18x8xbf16, #tpu.memory_space<vmem>>, vector<2x18x1x8xbf16>,
    %c0_11 = arith.constant 0 : index
    %c0_12 = arith.constant 0 : index
    %c17_13 = arith.constant 17 : index
    %c0_14 = arith.constant 0 : index
    %5 = vector.load %arg8[%c0_11, %c0_12, %c17_13, %c0_14] : memref<2x18x18x8xbf16, #tpu.memory_space<vmem>>, vector<2x18x1x8xbf16>
    tpu.vector_store %arg8[%c0_11, %c0_12, %c17_13, %c0_14], %1 {strides = array<i32>} : memref<2x18x18x8xbf16, #tpu.memory_space<vmem>>, vector<2x18x1x8xbf16>,
    %c0_15 = arith.constant 0 : index
    %c0_16 = arith.constant 0 : index
    %c0_17 = arith.constant 0 : index
    %c0_18 = arith.constant 0 : index
    %6 = vector.load %arg0[%c0_15, %c0_16, %c0_17, %c0_18] : memref<2x16x16x4xbf16, #tpu.memory_space<vmem>>, vector<2x16x16x4xbf16>
    %c0_19 = arith.constant 0 : index
    %c1 = arith.constant 1 : index
    %c1_20 = arith.constant 1 : index
    %c0_21 = arith.constant 0 : index
    %7 = vector.load %arg8[%c0_19, %c1, %c1_20, %c0_21] : memref<2x18x18x8xbf16, #tpu.memory_space<vmem>>, vector<2x16x16x4xbf16>
    tpu.vector_store %arg8[%c0_19, %c1, %c1_20, %c0_21], %6 {strides = array<i32>} : memref<2x18x18x8xbf16, #tpu.memory_space<vmem>>, vector<2x16x16x4xbf16>,
    %cst_22 = arith.constant 0.000000e+00 : f32
    %8 = vector.broadcast %cst_22 : f32 to vector<8x512xf32>
    %c0_23 = arith.constant 0 : index
    %c0_24 = arith.constant 0 : index
    %c0_25 = arith.constant 0 : index
    %c0_26 = arith.constant 0 : index
    %9 = vector.load %arg8[%c0_23, %c0_24, %c0_25, %c0_26] : memref<2x18x18x8xbf16, #tpu.memory_space<vmem>>, vector<2x16x16x4xbf16>
    %10 = vector.shape_cast %9 : vector<2x16x16x4xbf16> to vector<512x4xbf16>
    %c0_27 = arith.constant 0 : index
    %c0_28 = arith.constant 0 : index
    %11 = vector.load %arg1[%c0_27, %c0_28] : memref<8x36xbf16, #tpu.memory_space<vmem>>, vector<8x4xbf16>
    %cst_29 = arith.constant dense<0.000000e+00> : vector<8x512xf32>
    %12 = tpu.matmul %11, %10, %cst_29 {dimension_numbers = #tpu.dot_dimension_numbers<[1], [1], [0], [0], [0, 0, 1, 0], [], []>} : vector<8x4xbf16>, vector<512x4xbf16>, vector<8x512xf32> -> vector<8x512xf32>
    %13 = arith.addf %8, %12 : vector<8x512xf32>
    %c0_30 = arith.constant 0 : index
    %c0_31 = arith.constant 0 : index
    %c1_32 = arith.constant 1 : index
    %c0_33 = arith.constant 0 : index
    %14 = vector.load %arg8[%c0_30, %c0_31, %c1_32, %c0_33] : memref<2x18x18x8xbf16, #tpu.memory_space<vmem>>, vector<2x16x16x4xbf16>
    %15 = vector.shape_cast %14 : vector<2x16x16x4xbf16> to vector<512x4xbf16>
    %c0_34 = arith.constant 0 : index
    %c4 = arith.constant 4 : index
    %16 = vector.load %arg1[%c0_34, %c4] : memref<8x36xbf16, #tpu.memory_space<vmem>>, vector<8x4xbf16>
    %cst_35 = arith.constant dense<0.000000e+00> : vector<8x512xf32>
    %17 = tpu.matmul %16, %15, %cst_35 {dimension_numbers = #tpu.dot_dimension_numbers<[1], [1], [0], [0], [0, 0, 1, 0], [], []>} : vector<8x4xbf16>, vector<512x4xbf16>, vector<8x512xf32> -> vector<8x512xf32>
    %18 = arith.addf %13, %17 : vector<8x512xf32>
    %c0_36 = arith.constant 0 : index
    %c0_37 = arith.constant 0 : index
    %c2 = arith.constant 2 : index
    %c0_38 = arith.constant 0 : index
    %19 = vector.load %arg8[%c0_36, %c0_37, %c2, %c0_38] : memref<2x18x18x8xbf16, #tpu.memory_space<vmem>>, vector<2x16x16x4xbf16>
    %20 = vector.shape_cast %19 : vector<2x16x16x4xbf16> to vector<512x4xbf16>
    %c0_39 = arith.constant 0 : index
    %c8 = arith.constant 8 : index
    %21 = vector.load %arg1[%c0_39, %c8] : memref<8x36xbf16, #tpu.memory_space<vmem>>, vector<8x4xbf16>
    %cst_40 = arith.constant dense<0.000000e+00> : vector<8x512xf32>
    %22 = tpu.matmul %21, %20, %cst_40 {dimension_numbers = #tpu.dot_dimension_numbers<[1], [1], [0], [0], [0, 0, 1, 0], [], []>} : vector<8x4xbf16>, vector<512x4xbf16>, vector<8x512xf32> -> vector<8x512xf32>
    %23 = arith.addf %18, %22 : vector<8x512xf32>
    %c0_41 = arith.constant 0 : index
    %c1_42 = arith.constant 1 : index
    %c0_43 = arith.constant 0 : index
    %c0_44 = arith.constant 0 : index
    %24 = vector.load %arg8[%c0_41, %c1_42, %c0_43, %c0_44] : memref<2x18x18x8xbf16, #tpu.memory_space<vmem>>, vector<2x16x16x4xbf16>
    %25 = vector.shape_cast %24 : vector<2x16x16x4xbf16> to vector<512x4xbf16>
    %c0_45 = arith.constant 0 : index
    %c12 = arith.constant 12 : index
    %26 = vector.load %arg1[%c0_45, %c12] : memref<8x36xbf16, #tpu.memory_space<vmem>>, vector<8x4xbf16>
    %cst_46 = arith.constant dense<0.000000e+00> : vector<8x512xf32>
    %27 = tpu.matmul %26, %25, %cst_46 {dimension_numbers = #tpu.dot_dimension_numbers<[1], [1], [0], [0], [0, 0, 1, 0], [], []>} : vector<8x4xbf16>, vector<512x4xbf16>, vector<8x512xf32> -> vector<8x512xf32>
    %28 = arith.addf %23, %27 : vector<8x512xf32>
    %c0_47 = arith.constant 0 : index
    %c1_48 = arith.constant 1 : index
    %c1_49 = arith.constant 1 : index
    %c0_50 = arith.constant 0 : index
    %29 = vector.load %arg8[%c0_47, %c1_48, %c1_49, %c0_50] : memref<2x18x18x8xbf16, #tpu.memory_space<vmem>>, vector<2x16x16x4xbf16>
    %30 = vector.shape_cast %29 : vector<2x16x16x4xbf16> to vector<512x4xbf16>
    %c0_51 = arith.constant 0 : index
    %c16 = arith.constant 16 : index
    %31 = vector.load %arg1[%c0_51, %c16] : memref<8x36xbf16, #tpu.memory_space<vmem>>, vector<8x4xbf16>
    %cst_52 = arith.constant dense<0.000000e+00> : vector<8x512xf32>
    %32 = tpu.matmul %31, %30, %cst_52 {dimension_numbers = #tpu.dot_dimension_numbers<[1], [1], [0], [0], [0, 0, 1, 0], [], []>} : vector<8x4xbf16>, vector<512x4xbf16>, vector<8x512xf32> -> vector<8x512xf32>
    %33 = arith.addf %28, %32 : vector<8x512xf32>
    %c0_53 = arith.constant 0 : index
    %c1_54 = arith.constant 1 : index
    %c2_55 = arith.constant 2 : index
    %c0_56 = arith.constant 0 : index
    %34 = vector.load %arg8[%c0_53, %c1_54, %c2_55, %c0_56] : memref<2x18x18x8xbf16, #tpu.memory_space<vmem>>, vector<2x16x16x4xbf16>
    %35 = vector.shape_cast %34 : vector<2x16x16x4xbf16> to vector<512x4xbf16>
    %c0_57 = arith.constant 0 : index
    %c20 = arith.constant 20 : index
    %36 = vector.load %arg1[%c0_57, %c20] : memref<8x36xbf16, #tpu.memory_space<vmem>>, vector<8x4xbf16>
    %cst_58 = arith.constant dense<0.000000e+00> : vector<8x512xf32>
    %37 = tpu.matmul %36, %35, %cst_58 {dimension_numbers = #tpu.dot_dimension_numbers<[1], [1], [0], [0], [0, 0, 1, 0], [], []>} : vector<8x4xbf16>, vector<512x4xbf16>, vector<8x512xf32> -> vector<8x512xf32>
    %38 = arith.addf %33, %37 : vector<8x512xf32>
    %c0_59 = arith.constant 0 : index
    %c2_60 = arith.constant 2 : index
    %c0_61 = arith.constant 0 : index
    %c0_62 = arith.constant 0 : index
    %39 = vector.load %arg8[%c0_59, %c2_60, %c0_61, %c0_62] : memref<2x18x18x8xbf16, #tpu.memory_space<vmem>>, vector<2x16x16x4xbf16>
    %40 = vector.shape_cast %39 : vector<2x16x16x4xbf16> to vector<512x4xbf16>
    %c0_63 = arith.constant 0 : index
    %c24 = arith.constant 24 : index
    %41 = vector.load %arg1[%c0_63, %c24] : memref<8x36xbf16, #tpu.memory_space<vmem>>, vector<8x4xbf16>
    %cst_64 = arith.constant dense<0.000000e+00> : vector<8x512xf32>
    %42 = tpu.matmul %41, %40, %cst_64 {dimension_numbers = #tpu.dot_dimension_numbers<[1], [1], [0], [0], [0, 0, 1, 0], [], []>} : vector<8x4xbf16>, vector<512x4xbf16>, vector<8x512xf32> -> vector<8x512xf32>
    %43 = arith.addf %38, %42 : vector<8x512xf32>
    %c0_65 = arith.constant 0 : index
    %c2_66 = arith.constant 2 : index
    %c1_67 = arith.constant 1 : index
    %c0_68 = arith.constant 0 : index
    %44 = vector.load %arg8[%c0_65, %c2_66, %c1_67, %c0_68] : memref<2x18x18x8xbf16, #tpu.memory_space<vmem>>, vector<2x16x16x4xbf16>
    %45 = vector.shape_cast %44 : vector<2x16x16x4xbf16> to vector<512x4xbf16>
    %c0_69 = arith.constant 0 : index
    %c28 = arith.constant 28 : index
    %46 = vector.load %arg1[%c0_69, %c28] : memref<8x36xbf16, #tpu.memory_space<vmem>>, vector<8x4xbf16>
    %cst_70 = arith.constant dense<0.000000e+00> : vector<8x512xf32>
    %47 = tpu.matmul %46, %45, %cst_70 {dimension_numbers = #tpu.dot_dimension_numbers<[1], [1], [0], [0], [0, 0, 1, 0], [], []>} : vector<8x4xbf16>, vector<512x4xbf16>, vector<8x512xf32> -> vector<8x512xf32>
    %48 = arith.addf %43, %47 : vector<8x512xf32>
    %c0_71 = arith.constant 0 : index
    %c2_72 = arith.constant 2 : index
    %c2_73 = arith.constant 2 : index
    %c0_74 = arith.constant 0 : index
    %49 = vector.load %arg8[%c0_71, %c2_72, %c2_73, %c0_74] : memref<2x18x18x8xbf16, #tpu.memory_space<vmem>>, vector<2x16x16x4xbf16>
    %50 = vector.shape_cast %49 : vector<2x16x16x4xbf16> to vector<512x4xbf16>
    %c0_75 = arith.constant 0 : index
    %c32 = arith.constant 32 : index
    %51 = vector.load %arg1[%c0_75, %c32] : memref<8x36xbf16, #tpu.memory_space<vmem>>, vector<8x4xbf16>
    %cst_76 = arith.constant dense<0.000000e+00> : vector<8x512xf32>
    %52 = tpu.matmul %51, %50, %cst_76 {dimension_numbers = #tpu.dot_dimension_numbers<[1], [1], [0], [0], [0, 0, 1, 0], [], []>} : vector<8x4xbf16>, vector<512x4xbf16>, vector<8x512xf32> -> vector<8x512xf32>
    %53 = arith.addf %48, %52 : vector<8x512xf32>
    %cst_77 = arith.constant dense<0.000000e+00> : vector<8xf32>
    %54 = vector.multi_reduction <add>, %53, %cst_77 [1] : vector<8x512xf32> to vector<8xf32>
    %55 = vector.shape_cast %54 : vector<8xf32> to vector<8x1xf32>
    %cst_78 = arith.constant 0.001953125 : f32
    %56 = vector.broadcast %cst_78 : f32 to vector<8x1xf32>
    %57 = arith.mulf %55, %56 : vector<8x1xf32>
    %58 = arith.mulf %53, %53 : vector<8x512xf32>
    %cst_79 = arith.constant dense<0.000000e+00> : vector<8xf32>
    %59 = vector.multi_reduction <add>, %58, %cst_79 [1] : vector<8x512xf32> to vector<8xf32>
    %60 = vector.shape_cast %59 : vector<8xf32> to vector<8x1xf32>
    %cst_80 = arith.constant 0.001953125 : f32
    %61 = vector.broadcast %cst_80 : f32 to vector<8x1xf32>
    %62 = arith.mulf %60, %61 : vector<8x1xf32>
    %63 = arith.mulf %57, %57 : vector<8x1xf32>
    %64 = arith.subf %62, %63 : vector<8x1xf32>
    %cst_81 = arith.constant 9.99999974E-6 : f32
    %65 = vector.broadcast %cst_81 : f32 to vector<8x1xf32>
    %66 = arith.addf %64, %65 : vector<8x1xf32>
    %67 = math.rsqrt %66 : vector<8x1xf32>
    %c0_82 = arith.constant 0 : index
    %c0_83 = arith.constant 0 : index
    %68 = vector.load %arg2[%c0_82, %c0_83] : memref<8x1xf32, #tpu.memory_space<vmem>>, vector<8x1xf32>
    %69 = arith.mulf %67, %68 : vector<8x1xf32>
    %c0_84 = arith.constant 0 : index
    %c0_85 = arith.constant 0 : index
    %70 = vector.load %arg3[%c0_84, %c0_85] : memref<8x1xf32, #tpu.memory_space<vmem>>, vector<8x1xf32>
    %71 = arith.mulf %57, %69 : vector<8x1xf32>
    %72 = arith.subf %70, %71 : vector<8x1xf32>
    %73 = vector.broadcast %69 : vector<8x1xf32> to vector<8x512xf32>
    %74 = arith.mulf %53, %73 : vector<8x512xf32>
    %75 = vector.broadcast %72 : vector<8x1xf32> to vector<8x512xf32>
    %76 = arith.addf %74, %75 : vector<8x512xf32>
    %cst_86 = arith.constant 0.000000e+00 : f32
    %77 = vector.broadcast %cst_86 : f32 to vector<8x512xf32>
    %78 = arith.maximumf %76, %77 : vector<8x512xf32>
    %79 = tpu.transpose %78, [1, 0] : vector<8x512xf32> -> vector<512x8xf32>
    %80 = vector.shape_cast %79 : vector<512x8xf32> to vector<2x16x16x8xf32>
    %81 = arith.truncf %80 : vector<2x16x16x8xf32> to vector<2x16x16x8xbf16>
    %c0_87 = arith.constant 0 : index
    %c1_88 = arith.constant 1 : index
    %c1_89 = arith.constant 1 : index
    %c0_90 = arith.constant 0 : index
    %82 = vector.load %arg8[%c0_87, %c1_88, %c1_89, %c0_90] : memref<2x18x18x8xbf16, #tpu.memory_space<vmem>>, vector<2x16x16x8xbf16>
    tpu.vector_store %arg8[%c0_87, %c1_88, %c1_89, %c0_90], %81 {strides = array<i32>} : memref<2x18x18x8xbf16, #tpu.memory_space<vmem>>, vector<2x16x16x8xbf16>,
    %cst_91 = arith.constant 0.000000e+00 : f32
    %83 = vector.broadcast %cst_91 : f32 to vector<8x512xf32>
    %c0_92 = arith.constant 0 : index
    %c0_93 = arith.constant 0 : index
    %c0_94 = arith.constant 0 : index
    %c0_95 = arith.constant 0 : index
    %84 = vector.load %arg8[%c0_92, %c0_93, %c0_94, %c0_95] : memref<2x18x18x8xbf16, #tpu.memory_space<vmem>>, vector<2x16x16x8xbf16>
    %85 = vector.shape_cast %84 : vector<2x16x16x8xbf16> to vector<512x8xbf16>
    %c0_96 = arith.constant 0 : index
    %c0_97 = arith.constant 0 : index
    %86 = vector.load %arg4[%c0_96, %c0_97] : memref<8x72xbf16, #tpu.memory_space<vmem>>, vector<8x8xbf16>
    %cst_98 = arith.constant dense<0.000000e+00> : vector<8x512xf32>
    %87 = tpu.matmul %86, %85, %cst_98 {dimension_numbers = #tpu.dot_dimension_numbers<[1], [1], [0], [0], [0, 0, 1, 0], [], []>} : vector<8x8xbf16>, vector<512x8xbf16>, vector<8x512xf32> -> vector<8x512xf32>
    %88 = arith.addf %83, %87 : vector<8x512xf32>
    %c0_99 = arith.constant 0 : index
    %c0_100 = arith.constant 0 : index
    %c1_101 = arith.constant 1 : index
    %c0_102 = arith.constant 0 : index
    %89 = vector.load %arg8[%c0_99, %c0_100, %c1_101, %c0_102] : memref<2x18x18x8xbf16, #tpu.memory_space<vmem>>, vector<2x16x16x8xbf16>
    %90 = vector.shape_cast %89 : vector<2x16x16x8xbf16> to vector<512x8xbf16>
    %c0_103 = arith.constant 0 : index
    %c8_104 = arith.constant 8 : index
    %91 = vector.load %arg4[%c0_103, %c8_104] : memref<8x72xbf16, #tpu.memory_space<vmem>>, vector<8x8xbf16>
    %cst_105 = arith.constant dense<0.000000e+00> : vector<8x512xf32>
    %92 = tpu.matmul %91, %90, %cst_105 {dimension_numbers = #tpu.dot_dimension_numbers<[1], [1], [0], [0], [0, 0, 1, 0], [], []>} : vector<8x8xbf16>, vector<512x8xbf16>, vector<8x512xf32> -> vector<8x512xf32>
    %93 = arith.addf %88, %92 : vector<8x512xf32>
    %c0_106 = arith.constant 0 : index
    %c0_107 = arith.constant 0 : index
    %c2_108 = arith.constant 2 : index
    %c0_109 = arith.constant 0 : index
    %94 = vector.load %arg8[%c0_106, %c0_107, %c2_108, %c0_109] : memref<2x18x18x8xbf16, #tpu.memory_space<vmem>>, vector<2x16x16x8xbf16>
    %95 = vector.shape_cast %94 : vector<2x16x16x8xbf16> to vector<512x8xbf16>
    %c0_110 = arith.constant 0 : index
    %c16_111 = arith.constant 16 : index
    %96 = vector.load %arg4[%c0_110, %c16_111] : memref<8x72xbf16, #tpu.memory_space<vmem>>, vector<8x8xbf16>
    %cst_112 = arith.constant dense<0.000000e+00> : vector<8x512xf32>
    %97 = tpu.matmul %96, %95, %cst_112 {dimension_numbers = #tpu.dot_dimension_numbers<[1], [1], [0], [0], [0, 0, 1, 0], [], []>} : vector<8x8xbf16>, vector<512x8xbf16>, vector<8x512xf32> -> vector<8x512xf32>
    %98 = arith.addf %93, %97 : vector<8x512xf32>
    %c0_113 = arith.constant 0 : index
    %c1_114 = arith.constant 1 : index
    %c0_115 = arith.constant 0 : index
    %c0_116 = arith.constant 0 : index
    %99 = vector.load %arg8[%c0_113, %c1_114, %c0_115, %c0_116] : memref<2x18x18x8xbf16, #tpu.memory_space<vmem>>, vector<2x16x16x8xbf16>
    %100 = vector.shape_cast %99 : vector<2x16x16x8xbf16> to vector<512x8xbf16>
    %c0_117 = arith.constant 0 : index
    %c24_118 = arith.constant 24 : index
    %101 = vector.load %arg4[%c0_117, %c24_118] : memref<8x72xbf16, #tpu.memory_space<vmem>>, vector<8x8xbf16>
    %cst_119 = arith.constant dense<0.000000e+00> : vector<8x512xf32>
    %102 = tpu.matmul %101, %100, %cst_119 {dimension_numbers = #tpu.dot_dimension_numbers<[1], [1], [0], [0], [0, 0, 1, 0], [], []>} : vector<8x8xbf16>, vector<512x8xbf16>, vector<8x512xf32> -> vector<8x512xf32>
    %103 = arith.addf %98, %102 : vector<8x512xf32>
    %c0_120 = arith.constant 0 : index
    %c1_121 = arith.constant 1 : index
    %c1_122 = arith.constant 1 : index
    %c0_123 = arith.constant 0 : index
    %104 = vector.load %arg8[%c0_120, %c1_121, %c1_122, %c0_123] : memref<2x18x18x8xbf16, #tpu.memory_space<vmem>>, vector<2x16x16x8xbf16>
    %105 = vector.shape_cast %104 : vector<2x16x16x8xbf16> to vector<512x8xbf16>
    %c0_124 = arith.constant 0 : index
    %c32_125 = arith.constant 32 : index
    %106 = vector.load %arg4[%c0_124, %c32_125] : memref<8x72xbf16, #tpu.memory_space<vmem>>, vector<8x8xbf16>
    %cst_126 = arith.constant dense<0.000000e+00> : vector<8x512xf32>
    %107 = tpu.matmul %106, %105, %cst_126 {dimension_numbers = #tpu.dot_dimension_numbers<[1], [1], [0], [0], [0, 0, 1, 0], [], []>} : vector<8x8xbf16>, vector<512x8xbf16>, vector<8x512xf32> -> vector<8x512xf32>
    %108 = arith.addf %103, %107 : vector<8x512xf32>
    %c0_127 = arith.constant 0 : index
    %c1_128 = arith.constant 1 : index
    %c2_129 = arith.constant 2 : index
    %c0_130 = arith.constant 0 : index
    %109 = vector.load %arg8[%c0_127, %c1_128, %c2_129, %c0_130] : memref<2x18x18x8xbf16, #tpu.memory_space<vmem>>, vector<2x16x16x8xbf16>
    %110 = vector.shape_cast %109 : vector<2x16x16x8xbf16> to vector<512x8xbf16>
    %c0_131 = arith.constant 0 : index
    %c40 = arith.constant 40 : index
    %111 = vector.load %arg4[%c0_131, %c40] : memref<8x72xbf16, #tpu.memory_space<vmem>>, vector<8x8xbf16>
    %cst_132 = arith.constant dense<0.000000e+00> : vector<8x512xf32>
    %112 = tpu.matmul %111, %110, %cst_132 {dimension_numbers = #tpu.dot_dimension_numbers<[1], [1], [0], [0], [0, 0, 1, 0], [], []>} : vector<8x8xbf16>, vector<512x8xbf16>, vector<8x512xf32> -> vector<8x512xf32>
    %113 = arith.addf %108, %112 : vector<8x512xf32>
    %c0_133 = arith.constant 0 : index
    %c2_134 = arith.constant 2 : index
    %c0_135 = arith.constant 0 : index
    %c0_136 = arith.constant 0 : index
    %114 = vector.load %arg8[%c0_133, %c2_134, %c0_135, %c0_136] : memref<2x18x18x8xbf16, #tpu.memory_space<vmem>>, vector<2x16x16x8xbf16>
    %115 = vector.shape_cast %114 : vector<2x16x16x8xbf16> to vector<512x8xbf16>
    %c0_137 = arith.constant 0 : index
    %c48 = arith.constant 48 : index
    %116 = vector.load %arg4[%c0_137, %c48] : memref<8x72xbf16, #tpu.memory_space<vmem>>, vector<8x8xbf16>
    %cst_138 = arith.constant dense<0.000000e+00> : vector<8x512xf32>
    %117 = tpu.matmul %116, %115, %cst_138 {dimension_numbers = #tpu.dot_dimension_numbers<[1], [1], [0], [0], [0, 0, 1, 0], [], []>} : vector<8x8xbf16>, vector<512x8xbf16>, vector<8x512xf32> -> vector<8x512xf32>
    %118 = arith.addf %113, %117 : vector<8x512xf32>
    %c0_139 = arith.constant 0 : index
    %c2_140 = arith.constant 2 : index
    %c1_141 = arith.constant 1 : index
    %c0_142 = arith.constant 0 : index
    %119 = vector.load %arg8[%c0_139, %c2_140, %c1_141, %c0_142] : memref<2x18x18x8xbf16, #tpu.memory_space<vmem>>, vector<2x16x16x8xbf16>
    %120 = vector.shape_cast %119 : vector<2x16x16x8xbf16> to vector<512x8xbf16>
    %c0_143 = arith.constant 0 : index
    %c56 = arith.constant 56 : index
    %121 = vector.load %arg4[%c0_143, %c56] : memref<8x72xbf16, #tpu.memory_space<vmem>>, vector<8x8xbf16>
    %cst_144 = arith.constant dense<0.000000e+00> : vector<8x512xf32>
    %122 = tpu.matmul %121, %120, %cst_144 {dimension_numbers = #tpu.dot_dimension_numbers<[1], [1], [0], [0], [0, 0, 1, 0], [], []>} : vector<8x8xbf16>, vector<512x8xbf16>, vector<8x512xf32> -> vector<8x512xf32>
    %123 = arith.addf %118, %122 : vector<8x512xf32>
    %c0_145 = arith.constant 0 : index
    %c2_146 = arith.constant 2 : index
    %c2_147 = arith.constant 2 : index
    %c0_148 = arith.constant 0 : index
    %124 = vector.load %arg8[%c0_145, %c2_146, %c2_147, %c0_148] : memref<2x18x18x8xbf16, #tpu.memory_space<vmem>>, vector<2x16x16x8xbf16>
    %125 = vector.shape_cast %124 : vector<2x16x16x8xbf16> to vector<512x8xbf16>
    %c0_149 = arith.constant 0 : index
    %c64 = arith.constant 64 : index
    %126 = vector.load %arg4[%c0_149, %c64] : memref<8x72xbf16, #tpu.memory_space<vmem>>, vector<8x8xbf16>
    %cst_150 = arith.constant dense<0.000000e+00> : vector<8x512xf32>
    %127 = tpu.matmul %126, %125, %cst_150 {dimension_numbers = #tpu.dot_dimension_numbers<[1], [1], [0], [0], [0, 0, 1, 0], [], []>} : vector<8x8xbf16>, vector<512x8xbf16>, vector<8x512xf32> -> vector<8x512xf32>
    %128 = arith.addf %123, %127 : vector<8x512xf32>
    %cst_151 = arith.constant dense<0.000000e+00> : vector<8xf32>
    %129 = vector.multi_reduction <add>, %128, %cst_151 [1] : vector<8x512xf32> to vector<8xf32>
    %130 = vector.shape_cast %129 : vector<8xf32> to vector<8x1xf32>
    %cst_152 = arith.constant 0.001953125 : f32
    %131 = vector.broadcast %cst_152 : f32 to vector<8x1xf32>
    %132 = arith.mulf %130, %131 : vector<8x1xf32>
    %133 = arith.mulf %128, %128 : vector<8x512xf32>
    %cst_153 = arith.constant dense<0.000000e+00> : vector<8xf32>
    %134 = vector.multi_reduction <add>, %133, %cst_153 [1] : vector<8x512xf32> to vector<8xf32>
    %135 = vector.shape_cast %134 : vector<8xf32> to vector<8x1xf32>
    %cst_154 = arith.constant 0.001953125 : f32
    %136 = vector.broadcast %cst_154 : f32 to vector<8x1xf32>
    %137 = arith.mulf %135, %136 : vector<8x1xf32>
    %138 = arith.mulf %132, %132 : vector<8x1xf32>
    %139 = arith.subf %137, %138 : vector<8x1xf32>
    %cst_155 = arith.constant 9.99999974E-6 : f32
    %140 = vector.broadcast %cst_155 : f32 to vector<8x1xf32>
    %141 = arith.addf %139, %140 : vector<8x1xf32>
    %142 = math.rsqrt %141 : vector<8x1xf32>
    %c0_156 = arith.constant 0 : index
    %c0_157 = arith.constant 0 : index
    %143 = vector.load %arg5[%c0_156, %c0_157] : memref<8x1xf32, #tpu.memory_space<vmem>>, vector<8x1xf32>
    %144 = arith.mulf %142, %143 : vector<8x1xf32>
    %c0_158 = arith.constant 0 : index
    %c0_159 = arith.constant 0 : index
    %145 = vector.load %arg6[%c0_158, %c0_159] : memref<8x1xf32, #tpu.memory_space<vmem>>, vector<8x1xf32>
    %146 = arith.mulf %132, %144 : vector<8x1xf32>
    %147 = arith.subf %145, %146 : vector<8x1xf32>
    %148 = vector.broadcast %144 : vector<8x1xf32> to vector<8x512xf32>
    %149 = arith.mulf %128, %148 : vector<8x512xf32>
    %150 = vector.broadcast %147 : vector<8x1xf32> to vector<8x512xf32>
    %151 = arith.addf %149, %150 : vector<8x512xf32>
    %cst_160 = arith.constant 0.000000e+00 : f32
    %152 = vector.broadcast %cst_160 : f32 to vector<8x512xf32>
    %153 = arith.maximumf %151, %152 : vector<8x512xf32>
    %154 = vector.extract_strided_slice %153 {offsets = [0, 0], sizes = [8, 256], strides = [1, 1]} : vector<8x512xf32> to vector<8x256xf32>
    %c0_161 = arith.constant 0 : index
    %c0_162 = arith.constant 0 : index
    %c0_163 = arith.constant 0 : index
    %155 = vector.load %arg7[%c0_161, %c0_162, %c0_163] : memref<2x8x256xf32, #tpu.memory_space<vmem>>, vector<1x8x256xf32>
    %156 = vector.shape_cast %155 : vector<1x8x256xf32> to vector<8x256xf32>
    %157 = vector.shape_cast %154 : vector<8x256xf32> to vector<1x8x256xf32>
    tpu.vector_store %arg7[%c0_161, %c0_162, %c0_163], %157 {strides = array<i32>} : memref<2x8x256xf32, #tpu.memory_space<vmem>>, vector<1x8x256xf32>,
    %158 = vector.extract_strided_slice %153 {offsets = [0, 256], sizes = [8, 256], strides = [1, 1]} : vector<8x512xf32> to vector<8x256xf32>
    %c1_164 = arith.constant 1 : index
    %c0_165 = arith.constant 0 : index
    %c0_166 = arith.constant 0 : index
    %159 = vector.load %arg7[%c1_164, %c0_165, %c0_166] : memref<2x8x256xf32, #tpu.memory_space<vmem>>, vector<1x8x256xf32>
    %160 = vector.shape_cast %159 : vector<1x8x256xf32> to vector<8x256xf32>
    %161 = vector.shape_cast %158 : vector<8x256xf32> to vector<1x8x256xf32>
    tpu.vector_store %arg7[%c1_164, %c0_165, %c0_166], %161 {strides = array<i32>} : memref<2x8x256xf32, #tpu.memory_space<vmem>>, vector<1x8x256xf32>,
    return
  }
}

</mosaic_0001>

<llo_original>
// kernel: tpu_custom_call.1
$region0: #{tpu_custom_call.1}
  #allocation0 [shape = 'u32[]', space=smem, size = 0x4, offset = 0x4, fixed_abs, tag = 'smem constant byte address 0x4 - core index']
  #allocation1 [shape = 'u32[144,128]{1,0:T(1,128)}', space=vmem, size = 0x12000, scoped, tag = 'internal scratch']
  #allocation2 [shape = 'bf16[2,18,18,8]{3,2,1,0:T(8,128)(2,1)}', space=vmem, size = 0x36000, scoped, tag = 'scratch operand']
  %s0 = inlined_call_operand.vmem [shape: bf16[2,16,16,4], index: 0, kind: input, shape index: {}]
  %s1 = inlined_call_operand.vmem [shape: bf16[8,36], index: 1, kind: input, shape index: {}]
  %s2 = inlined_call_operand.vmem [shape: f32[8,1], index: 2, kind: input, shape index: {}]
  %s3 = inlined_call_operand.vmem [shape: f32[8,1], index: 3, kind: input, shape index: {}]
  %s4 = inlined_call_operand.vmem [shape: bf16[8,72], index: 4, kind: input, shape index: {}]
  %s5 = inlined_call_operand.vmem [shape: f32[8,1], index: 5, kind: input, shape index: {}]
  %s6 = inlined_call_operand.vmem [shape: f32[8,1], index: 6, kind: input, shape index: {}]
  %s7 = inlined_call_operand.hbm [shape: f32[2,8,256], index: 7, kind: output, shape index: {}]
  %s8 = sld [smem:[#allocation0]]
  $region38: #{tpu_custom_call.1} parent=0
    _
  %s10 = ssub.s32 1, %s8
  %s11 = scalar_select 0, %s10, %s8
  $region1: #{tpu_custom_call.1} parent=0
    #allocation3 [shape = 'u8[16384]{0}', space=vmem, size = 0x4000, scoped, tag = 'output window, operand 0, single buffered']
    #allocation4 [shape = 's32[1]{0}', space=sflag, size = 0x4, scoped, tag = 'scoped memory for tpu_custom_call.1']
    %12 = vsyncpa [#allocation4], 0
    // Predicated region
    $region2: #{tpu_custom_call.1} parent=1 // pred_check
      _
    $region3: #{tpu_custom_call.1} parent=1 // pred_check_branch
      %14 = sbr.rel (0) target = $region5
    $region4: #{tpu_custom_call.1} parent=1 // pred_region
      _
    $region5: #{tpu_custom_call.1} parent=1 // pred_fallthru
      _
    // Predicated region
    $region6: #{tpu_custom_call.1} parent=1 // pred_check
      _
    $region7: #{tpu_custom_call.1} parent=1 // pred_check_branch
      %16 = sbr.rel (0) target = $region9
    $region8: #{tpu_custom_call.1} parent=1 // pred_region
      _
    $region9: #{tpu_custom_call.1} parent=1 // pred_fallthru
      _
    // Predicated region
    $region10: #{tpu_custom_call.1} parent=1 // pred_check
      _
    $region11: #{tpu_custom_call.1} parent=1 // pred_check_branch
      %18 = sbr.rel (0) target = $region13
    $region12: #{tpu_custom_call.1} parent=1 // pred_region
      _
    $region13: #{tpu_custom_call.1} parent=1 // pred_fallthru
      _
    // Predicated region
    $region14: #{tpu_custom_call.1} parent=1 // pred_check
      _
    $region15: #{tpu_custom_call.1} parent=1 // pred_check_branch
      %20 = sbr.rel (0) target = $region17
    $region16: #{tpu_custom_call.1} parent=1 // pred_region
      _
    $region17: #{tpu_custom_call.1} parent=1 // pred_fallthru
      _
    // Predicated region
    $region18: #{tpu_custom_call.1} parent=1 // pred_check
      _
    $region19: #{tpu_custom_call.1} parent=1 // pred_check_branch
      %22 = sbr.rel (0) target = $region21
    $region20: #{tpu_custom_call.1} parent=1 // pred_region
      _
    $region21: #{tpu_custom_call.1} parent=1 // pred_fallthru
      _
    // Predicated region
    $region22: #{tpu_custom_call.1} parent=1 // pred_check
      _
    $region23: #{tpu_custom_call.1} parent=1 // pred_check_branch
      %24 = sbr.rel (0) target = $region25
    $region24: #{tpu_custom_call.1} parent=1 // pred_region
      _
    $region25: #{tpu_custom_call.1} parent=1 // pred_fallthru
      _
    // Predicated region
    $region26: #{tpu_custom_call.1} parent=1 // pred_check
      _
    $region27: #{tpu_custom_call.1} parent=1 // pred_check_branch
      %26 = sbr.rel (0) target = $region29
    $region28: #{tpu_custom_call.1} parent=1 // pred_region
      _
    $region29: #{tpu_custom_call.1} parent=1 // pred_fallthru
      _
    %vm28 = vcmask 60416
    %29 = vst.msk [vmem:[#allocation2] sm:$0xf] %vm28, 0
    %30 = vst.msk [vmem:[#allocation2 + $0x4] sm:$0xf] %vm28, 0
    %vm31 = vcmask 57344
    %32 = vst.msk [vmem:[#allocation2 + $0x8] sm:$0x1] %vm31, 0
    %33 = vst.msk [vmem:[#allocation2 + $0xd8] sm:$0xf] %vm28, 0
    %34 = vst.msk [vmem:[#allocation2 + $0xdc] sm:$0xf] %vm28, 0
    %35 = vst.msk [vmem:[#allocation2 + $0xe0] sm:$0x1] %vm31, 0
    %s36 = scalar_lea.vmem [#allocation2], 204
    %37 = vst.msk [vmem:[%s36] sm:$0xf] %vm28, 0
    %38 = vst.msk [vmem:[%s36 + $0x4] sm:$0xf] %vm28, 0
    %39 = vst.msk [vmem:[%s36 + $0x8] sm:$0x1] %vm31, 0
    %40 = vst.msk [vmem:[%s36 + $0xd8] sm:$0xf] %vm28, 0
    %41 = vst.msk [vmem:[%s36 + $0xdc] sm:$0xf] %vm28, 0
    %42 = vst.msk [vmem:[%s36 + $0xe0] sm:$0x1] %vm31, 0
    %vm43 = vcmask 57344
    %vm44 = vsmask.f32 256
    %vm45 = vmand %vm43, %vm44
    %v46 = vld [vmem:[#allocation2] sm:$0x1]
    %v47 = vsel %vm45, 0, %v46
    %48 = vst [vmem:[#allocation2] sm:$0x1] %v47
    %v49 = vld [vmem:[#allocation2 + $0xc] sm:$0x1]
    %v50 = vsel %vm45, 0, %v49
    %51 = vst [vmem:[#allocation2 + $0xc] sm:$0x1] %v50
    %v52 = vld [vmem:[#allocation2 + $0x18] sm:$0x1]
    %v53 = vsel %vm45, 0, %v52
    %54 = vst [vmem:[#allocation2 + $0x18] sm:$0x1] %v53
    %v55 = vld [vmem:[#allocation2 + $0x24] sm:$0x1]
    %v56 = vsel %vm45, 0, %v55
    %57 = vst [vmem:[#allocation2 + $0x24] sm:$0x1] %v56
    %v58 = vld [vmem:[#allocation2 + $0x30] sm:$0x1]
    %v59 = vsel %vm45, 0, %v58
    %60 = vst [vmem:[#allocation2 + $0x30] sm:$0x1] %v59
    %v61 = vld [vmem:[#allocation2 + $0x3c] sm:$0x1]
    %v62 = vsel %vm45, 0, %v61
    %63 = vst [vmem:[#allocation2 + $0x3c] sm:$0x1] %v62
    %v64 = vld [vmem:[#allocation2 + $0x48] sm:$0x1]
    %v65 = vsel %vm45, 0, %v64
    %66 = vst [vmem:[#allocation2 + $0x48] sm:$0x1] %v65
    %v67 = vld [vmem:[#allocation2 + $0x54] sm:$0x1]
    %v68 = vsel %vm45, 0, %v67
    %69 = vst [vmem:[#allocation2 + $0x54] sm:$0x1] %v68
    %v70 = vld [vmem:[#allocation2 + $0x60] sm:$0x1]
    %v71 = vsel %vm45, 0, %v70
    %72 = vst [vmem:[#allocation2 + $0x60] sm:$0x1] %v71
    %v73 = vld [vmem:[#allocation2 + $0x6c] sm:$0x1]
    %v74 = vsel %vm45, 0, %v73
    %75 = vst [vmem:[#allocation2 + $0x6c] sm:$0x1] %v74
    %v76 = vld [vmem:[#allocation2 + $0x78] sm:$0x1]
    %v77 = vsel %vm45, 0, %v76
    %78 = vst [vmem:[#allocation2 + $0x78] sm:$0x1] %v77
    %v79 = vld [vmem:[#allocation2 + $0x84] sm:$0x1]
    %v80 = vsel %vm45, 0, %v79
    %81 = vst [vmem:[#allocation2 + $0x84] sm:$0x1] %v80
    %v82 = vld [vmem:[#allocation2 + $0x90] sm:$0x1]
    %v83 = vsel %vm45, 0, %v82
    %84 = vst [vmem:[#allocation2 + $0x90] sm:$0x1] %v83
    %v85 = vld [vmem:[#allocation2 + $0x9c] sm:$0x1]
    %v86 = vsel %vm45, 0, %v85
    %87 = vst [vmem:[#allocation2 + $0x9c] sm:$0x1] %v86
    %v88 = vld [vmem:[#allocation2 + $0xa8] sm:$0x1]
    %v89 = vsel %vm45, 0, %v88
    %90 = vst [vmem:[#allocation2 + $0xa8] sm:$0x1] %v89
    %v91 = vld [vmem:[#allocation2 + $0xb4] sm:$0x1]
    %v92 = vsel %vm45, 0, %v91
    %93 = vst [vmem:[#allocation2 + $0xb4] sm:$0x1] %v92
    %v94 = vld [vmem:[#allocation2 + $0xc0] sm:$0x1]
    %v95 = vsel %vm45, 0, %v94
    %96 = vst [vmem:[#allocation2 + $0xc0] sm:$0x1] %v95
    %v97 = vld [vmem:[#allocation2 + $0xcc] sm:$0x1]
    %v98 = vsel %vm45, 0, %v97
    %99 = vst [vmem:[#allocation2 + $0xcc] sm:$0x1] %v98
    %v100 = vld [vmem:[#allocation2 + $0xd8] sm:$0x1]
    %v101 = vsel %vm45, 0, %v100
    %102 = vst [vmem:[#allocation2 + $0xd8] sm:$0x1] %v101
    %v103 = vld [vmem:[#allocation2 + $0xe4] sm:$0x1]
    %v104 = vsel %vm45, 0, %v103
    %105 = vst [vmem:[#allocation2 + $0xe4] sm:$0x1] %v104
    %v106 = vld [vmem:[#allocation2 + $0xf0] sm:$0x1]
    %v107 = vsel %vm45, 0, %v106
    %108 = vst [vmem:[#allocation2 + $0xf0] sm:$0x1] %v107
    %v109 = vld [vmem:[#allocation2 + $0xfc] sm:$0x1]
    %v110 = vsel %vm45, 0, %v109
    %111 = vst [vmem:[#allocation2 + $0xfc] sm:$0x1] %v110
    %v112 = vld [vmem:[#allocation2 + $0x108] sm:$0x1]
    %v113 = vsel %vm45, 0, %v112
    %114 = vst [vmem:[#allocation2 + $0x108] sm:$0x1] %v113
    %v115 = vld [vmem:[#allocation2 + $0x114] sm:$0x1]
    %v116 = vsel %vm45, 0, %v115
    %117 = vst [vmem:[#allocation2 + $0x114] sm:$0x1] %v116
    %v118 = vld [vmem:[#allocation2 + $0x120] sm:$0x1]
    %v119 = vsel %vm45, 0, %v118
    %120 = vst [vmem:[#allocation2 + $0x120] sm:$0x1] %v119
    %v121 = vld [vmem:[#allocation2 + $0x12c] sm:$0x1]
    %v122 = vsel %vm45, 0, %v121
    %123 = vst [vmem:[#allocation2 + $0x12c] sm:$0x1] %v122
    %v124 = vld [vmem:[#allocation2 + $0x138] sm:$0x1]
    %v125 = vsel %vm45, 0, %v124
    %126 = vst [vmem:[#allocation2 + $0x138] sm:$0x1] %v125
    %v127 = vld [vmem:[#allocation2 + $0x144] sm:$0x1]
    %v128 = vsel %vm45, 0, %v127
    %129 = vst [vmem:[#allocation2 + $0x144] sm:$0x1] %v128
    %v130 = vld [vmem:[#allocation2 + $0x150] sm:$0x1]
    %v131 = vsel %vm45, 0, %v130
    %132 = vst [vmem:[#allocation2 + $0x150] sm:$0x1] %v131
    %v133 = vld [vmem:[#allocation2 + $0x15c] sm:$0x1]
    %v134 = vsel %vm45, 0, %v133
    %135 = vst [vmem:[#allocation2 + $0x15c] sm:$0x1] %v134
    %v136 = vld [vmem:[#allocation2 + $0x168] sm:$0x1]
    %v137 = vsel %vm45, 0, %v136
    %138 = vst [vmem:[#allocation2 + $0x168] sm:$0x1] %v137
    %v139 = vld [vmem:[#allocation2 + $0x174] sm:$0x1]
    %v140 = vsel %vm45, 0, %v139
    %141 = vst [vmem:[#allocation2 + $0x174] sm:$0x1] %v140
    %v142 = vld [vmem:[#allocation2 + $0x180] sm:$0x1]
    %v143 = vsel %vm45, 0, %v142
    %144 = vst [vmem:[#allocation2 + $0x180] sm:$0x1] %v143
    %v145 = vld [vmem:[#allocation2 + $0x18c] sm:$0x1]
    %v146 = vsel %vm45, 0, %v145
    %147 = vst [vmem:[#allocation2 + $0x18c] sm:$0x1] %v146
    %v148 = vld [vmem:[#allocation2 + $0x198] sm:$0x1]
    %v149 = vsel %vm45, 0, %v148
    %150 = vst [vmem:[#allocation2 + $0x198] sm:$0x1] %v149
    %v151 = vld [vmem:[#allocation2 + $0x1a4] sm:$0x1]
    %v152 = vsel %vm45, 0, %v151
    %153 = vst [vmem:[#allocation2 + $0x1a4] sm:$0x1] %v152
    %vm154 = vsmask.f32 7938
    %vm155 = vmand %vm43, %vm154
    %v156 = vld [vmem:[#allocation2 + $0x8] sm:$0x1]
    %v157 = vsel %vm155, 0, %v156
    %158 = vst [vmem:[#allocation2 + $0x8] sm:$0x1] %v157
    %v159 = vld [vmem:[#allocation2 + $0x14] sm:$0x1]
    %v160 = vsel %vm155, 0, %v159
    %161 = vst [vmem:[#allocation2 + $0x14] sm:$0x1] %v160
    %v162 = vld [vmem:[#allocation2 + $0x20] sm:$0x1]
    %v163 = vsel %vm155, 0, %v162
    %164 = vst [vmem:[#allocation2 + $0x20] sm:$0x1] %v163
    %v165 = vld [vmem:[#allocation2 + $0x2c] sm:$0x1]
    %v166 = vsel %vm155, 0, %v165
    %167 = vst [vmem:[#allocation2 + $0x2c] sm:$0x1] %v166
    %v168 = vld [vmem:[#allocation2 + $0x38] sm:$0x1]
    %v169 = vsel %vm155, 0, %v168
    %170 = vst [vmem:[#allocation2 + $0x38] sm:$0x1] %v169
    %v171 = vld [vmem:[#allocation2 + $0x44] sm:$0x1]
    %v172 = vsel %vm155, 0, %v171
    %173 = vst [vmem:[#allocation2 + $0x44] sm:$0x1] %v172
    %v174 = vld [vmem:[#allocation2 + $0x50] sm:$0x1]
    %v175 = vsel %vm155, 0, %v174
    %176 = vst [vmem:[#allocation2 + $0x50] sm:$0x1] %v175
    %v177 = vld [vmem:[#allocation2 + $0x5c] sm:$0x1]
    %v178 = vsel %vm155, 0, %v177
    %179 = vst [vmem:[#allocation2 + $0x5c] sm:$0x1] %v178
    %v180 = vld [vmem:[#allocation2 + $0x68] sm:$0x1]
    %v181 = vsel %vm155, 0, %v180
    %182 = vst [vmem:[#allocation2 + $0x68] sm:$0x1] %v181
    %v183 = vld [vmem:[#allocation2 + $0x74] sm:$0x1]
    %v184 = vsel %vm155, 0, %v183
    %185 = vst [vmem:[#allocation2 + $0x74] sm:$0x1] %v184
    %v186 = vld [vmem:[#allocation2 + $0x80] sm:$0x1]
    %v187 = vsel %vm155, 0, %v186
    %188 = vst [vmem:[#allocation2 + $0x80] sm:$0x1] %v187
    %v189 = vld [vmem:[#allocation2 + $0x8c] sm:$0x1]
    %v190 = vsel %vm155, 0, %v189
    %191 = vst [vmem:[#allocation2 + $0x8c] sm:$0x1] %v190
    %v192 = vld [vmem:[#allocation2 + $0x98] sm:$0x1]
    %v193 = vsel %vm155, 0, %v192
    %194 = vst [vmem:[#allocation2 + $0x98] sm:$0x1] %v193
    %v195 = vld [vmem:[#allocation2 + $0xa4] sm:$0x1]
    %v196 = vsel %vm155, 0, %v195
    %197 = vst [vmem:[#allocation2 + $0xa4] sm:$0x1] %v196
    %v198 = vld [vmem:[#allocation2 + $0xb0] sm:$0x1]
    %v199 = vsel %vm155, 0, %v198
    %200 = vst [vmem:[#allocation2 + $0xb0] sm:$0x1] %v199
    %v201 = vld [vmem:[#allocation2 + $0xbc] sm:$0x1]
    %v202 = vsel %vm155, 0, %v201
    %203 = vst [vmem:[#allocation2 + $0xbc] sm:$0x1] %v202
    %v204 = vld [vmem:[#allocation2 + $0xc8] sm:$0x1]
    %v205 = vsel %vm155, 0, %v204
    %206 = vst [vmem:[#allocation2 + $0xc8] sm:$0x1] %v205
    %v207 = vld [vmem:[#allocation2 + $0xd4] sm:$0x1]
    %v208 = vsel %vm155, 0, %v207
    %209 = vst [vmem:[#allocation2 + $0xd4] sm:$0x1] %v208
    %v210 = vld [vmem:[#allocation2 + $0xe0] sm:$0x1]
    %v211 = vsel %vm155, 0, %v210
    %212 = vst [vmem:[#allocation2 + $0xe0] sm:$0x1] %v211
    %v213 = vld [vmem:[#allocation2 + $0xec] sm:$0x1]
    %v214 = vsel %vm155, 0, %v213
    %215 = vst [vmem:[#allocation2 + $0xec] sm:$0x1] %v214
    %v216 = vld [vmem:[#allocation2 + $0xf8] sm:$0x1]
    %v217 = vsel %vm155, 0, %v216
    %218 = vst [vmem:[#allocation2 + $0xf8] sm:$0x1] %v217
    %v219 = vld [vmem:[#allocation2 + $0x104] sm:$0x1]
    %v220 = vsel %vm155, 0, %v219
    %221 = vst [vmem:[#allocation2 + $0x104] sm:$0x1] %v220
    %v222 = vld [vmem:[#allocation2 + $0x110] sm:$0x1]
    %v223 = vsel %vm155, 0, %v222
    %224 = vst [vmem:[#allocation2 + $0x110] sm:$0x1] %v223
    %v225 = vld [vmem:[#allocation2 + $0x11c] sm:$0x1]
    %v226 = vsel %vm155, 0, %v225
    %227 = vst [vmem:[#allocation2 + $0x11c] sm:$0x1] %v226
    %v228 = vld [vmem:[#allocation2 + $0x128] sm:$0x1]
    %v229 = vsel %vm155, 0, %v228
    %230 = vst [vmem:[#allocation2 + $0x128] sm:$0x1] %v229
    %v231 = vld [vmem:[#allocation2 + $0x134] sm:$0x1]
    %v232 = vsel %vm155, 0, %v231
    %233 = vst [vmem:[#allocation2 + $0x134] sm:$0x1] %v232
    %v234 = vld [vmem:[#allocation2 + $0x140] sm:$0x1]
    %v235 = vsel %vm155, 0, %v234
    %236 = vst [vmem:[#allocation2 + $0x140] sm:$0x1] %v235
    %v237 = vld [vmem:[#allocation2 + $0x14c] sm:$0x1]
    %v238 = vsel %vm155, 0, %v237
    %239 = vst [vmem:[#allocation2 + $0x14c] sm:$0x1] %v238
    %v240 = vld [vmem:[#allocation2 + $0x158] sm:$0x1]
    %v241 = vsel %vm155, 0, %v240
    %242 = vst [vmem:[#allocation2 + $0x158] sm:$0x1] %v241
    %v243 = vld [vmem:[#allocation2 + $0x164] sm:$0x1]
    %v244 = vsel %vm155, 0, %v243
    %245 = vst [vmem:[#allocation2 + $0x164] sm:$0x1] %v244
    %v246 = vld [vmem:[#allocation2 + $0x170] sm:$0x1]
    %v247 = vsel %vm155, 0, %v246
    %248 = vst [vmem:[#allocation2 + $0x170] sm:$0x1] %v247
    %v249 = vld [vmem:[#allocation2 + $0x17c] sm:$0x1]
    %v250 = vsel %vm155, 0, %v249
    %251 = vst [vmem:[#allocation2 + $0x17c] sm:$0x1] %v250
    %v252 = vld [vmem:[#allocation2 + $0x188] sm:$0x1]
    %v253 = vsel %vm155, 0, %v252
    %254 = vst [vmem:[#allocation2 + $0x188] sm:$0x1] %v253
    %v255 = vld [vmem:[#allocation2 + $0x194] sm:$0x1]
    %v256 = vsel %vm155, 0, %v255
    %257 = vst [vmem:[#allocation2 + $0x194] sm:$0x1] %v256
    %v258 = vld [vmem:[#allocation2 + $0x1a0] sm:$0x1]
    %v259 = vsel %vm155, 0, %v258
    %260 = vst [vmem:[#allocation2 + $0x1a0] sm:$0x1] %v259
    %v261 = vld [vmem:[#allocation2 + $0x1ac] sm:$0x1]
    %v262 = vsel %vm155, 0, %v261
    %263 = vst [vmem:[#allocation2 + $0x1ac] sm:$0x1] %v262
    %v264 = vld [vmem:[%s0] sm:$0xf]
    %v265 = vld [vmem:[%s0 + $0x4] sm:$0xf]
    %v266 = vld [vmem:[%s0 + $0x8] sm:$0xf]
    %v267 = vld [vmem:[%s0 + $0xc] sm:$0xf]
    %v268 = vld [vmem:[%s0 + $0x10] sm:$0xf]
    %v269 = vld [vmem:[%s0 + $0x14] sm:$0xf]
    %v270 = vld [vmem:[%s0 + $0x18] sm:$0xf]
    %v271 = vld [vmem:[%s0 + $0x1c] sm:$0xf]
    %v272 = vld [vmem:[%s0 + $0x20] sm:$0xf]
    %v273 = vld [vmem:[%s0 + $0x24] sm:$0xf]
    %v274 = vld [vmem:[%s0 + $0x28] sm:$0xf]
    %v275 = vld [vmem:[%s0 + $0x2c] sm:$0xf]
    %v276 = vld [vmem:[%s0 + $0x30] sm:$0xf]
    %v277 = vld [vmem:[%s0 + $0x34] sm:$0xf]
    %v278 = vld [vmem:[%s0 + $0x38] sm:$0xf]
    %v279 = vld [vmem:[%s0 + $0x3c] sm:$0xf]
    %v280 = vld [vmem:[%s0 + $0x40] sm:$0xf]
    %v281 = vld [vmem:[%s0 + $0x44] sm:$0xf]
    %v282 = vld [vmem:[%s0 + $0x48] sm:$0xf]
    %v283 = vld [vmem:[%s0 + $0x4c] sm:$0xf]
    %v284 = vld [vmem:[%s0 + $0x50] sm:$0xf]
    %v285 = vld [vmem:[%s0 + $0x54] sm:$0xf]
    %v286 = vld [vmem:[%s0 + $0x58] sm:$0xf]
    %v287 = vld [vmem:[%s0 + $0x5c] sm:$0xf]
    %v288 = vld [vmem:[%s0 + $0x60] sm:$0xf]
    %v289 = vld [vmem:[%s0 + $0x64] sm:$0xf]
    %v290 = vld [vmem:[%s0 + $0x68] sm:$0xf]
    %v291 = vld [vmem:[%s0 + $0x6c] sm:$0xf]
    %v292 = vld [vmem:[%s0 + $0x70] sm:$0xf]
    %v293 = vld [vmem:[%s0 + $0x74] sm:$0xf]
    %v294 = vld [vmem:[%s0 + $0x78] sm:$0xf]
    %v295 = vld [vmem:[%s0 + $0x7c] sm:$0xf]
    %v296 = vld [vmem:[%s0 + $0x80] sm:$0xf]
    %v297 = vld [vmem:[%s0 + $0x84] sm:$0xf]
    %v298 = vld [vmem:[%s0 + $0x88] sm:$0xf]
    %v299 = vld [vmem:[%s0 + $0x8c] sm:$0xf]
    %v300 = vld [vmem:[%s0 + $0x90] sm:$0xf]
    %v301 = vld [vmem:[%s0 + $0x94] sm:$0xf]
    %v302 = vld [vmem:[%s0 + $0x98] sm:$0xf]
    %v303 = vld [vmem:[%s0 + $0x9c] sm:$0xf]
    %v304 = vld [vmem:[%s0 + $0xa0] sm:$0xf]
    %v305 = vld [vmem:[%s0 + $0xa4] sm:$0xf]
    %v306 = vld [vmem:[%s0 + $0xa8] sm:$0xf]
    %v307 = vld [vmem:[%s0 + $0xac] sm:$0xf]
    %v308 = vld [vmem:[%s0 + $0xb0] sm:$0xf]
    %v309 = vld [vmem:[%s0 + $0xb4] sm:$0xf]
    %v310 = vld [vmem:[%s0 + $0xb8] sm:$0xf]
    %v311 = vld [vmem:[%s0 + $0xbc] sm:$0xf]
    %v312 = vld [vmem:[%s0 + $0xc0] sm:$0xf]
    %v313 = vld [vmem:[%s0 + $0xc4] sm:$0xf]
    %v314 = vld [vmem:[%s0 + $0xc8] sm:$0xf]
    %v315 = vld [vmem:[%s0 + $0xcc] sm:$0xf]
    %v316 = vld [vmem:[%s0 + $0xd0] sm:$0xf]
    %v317 = vld [vmem:[%s0 + $0xd4] sm:$0xf]
    %v318 = vld [vmem:[%s0 + $0xd8] sm:$0xf]
    %v319 = vld [vmem:[%s0 + $0xdc] sm:$0xf]
    %v320 = vld [vmem:[%s0 + $0xe0] sm:$0xf]
    %v321 = vld [vmem:[%s0 + $0xe4] sm:$0xf]
    %v322 = vld [vmem:[%s0 + $0xe8] sm:$0xf]
    %v323 = vld [vmem:[%s0 + $0xec] sm:$0xf]
    %v324 = vld [vmem:[%s0 + $0xf0] sm:$0xf]
    %v325 = vld [vmem:[%s0 + $0xf4] sm:$0xf]
    %v326 = vld [vmem:[%s0 + $0xf8] sm:$0xf]
    %v327 = vld [vmem:[%s0 + $0xfc] sm:$0xf]
    %vm328 = vsmask.f32 4368
    %vm329 = vmor %vm44, %vm328
    %v331 = vshrl.u32 %v264, 16
    %v333 = vrot.slane %v331, 7
    %v334 = vshll.u32 %v264, 16
    %v336 = vor.u32 %v333, %v334
    %v337 = vrot.slane %v333, 4
    %v339 = vshrl.u32 %v265, 16
    %v341 = vrot.slane %v339, 7
    %v342 = vshll.u32 %v265, 16
    %v344 = vor.u32 %v341, %v342
    %v345 = vsel %vm329, %v337, %v344
    %v346 = vrot.slane %v341, 4
    %v348 = vshrl.u32 %v266, 16
    %v350 = vrot.slane %v348, 7
    %v351 = vshll.u32 %v266, 16
    %v353 = vor.u32 %v350, %v351
    %v354 = vrot.slane %v350, 4
    %v356 = vshrl.u32 %v267, 16
    %v358 = vrot.slane %v356, 7
    %v359 = vshll.u32 %v267, 16
    %v361 = vor.u32 %v358, %v359
    %v362 = vsel %vm329, %v354, %v361
    %v363 = vrot.slane %v358, 4
    %v365 = vshrl.u32 %v268, 16
    %v367 = vrot.slane %v365, 7
    %v368 = vshll.u32 %v268, 16
    %v370 = vor.u32 %v367, %v368
    %v371 = vrot.slane %v367, 4
    %v373 = vshrl.u32 %v269, 16
    %v375 = vrot.slane %v373, 7
    %v376 = vshll.u32 %v269, 16
    %v378 = vor.u32 %v375, %v376
    %v379 = vsel %vm329, %v371, %v378
    %v380 = vrot.slane %v375, 4
    %v382 = vshrl.u32 %v270, 16
    %v384 = vrot.slane %v382, 7
    %v385 = vshll.u32 %v270, 16
    %v387 = vor.u32 %v384, %v385
    %v388 = vrot.slane %v384, 4
    %v390 = vshrl.u32 %v271, 16
    %v392 = vrot.slane %v390, 7
    %v393 = vshll.u32 %v271, 16
    %v395 = vor.u32 %v392, %v393
    %v396 = vsel %vm329, %v388, %v395
    %v397 = vrot.slane %v392, 4
    %v399 = vshrl.u32 %v272, 16
    %v401 = vrot.slane %v399, 7
    %v402 = vshll.u32 %v272, 16
    %v404 = vor.u32 %v401, %v402
    %v405 = vrot.slane %v401, 4
    %v407 = vshrl.u32 %v273, 16
    %v409 = vrot.slane %v407, 7
    %v410 = vshll.u32 %v273, 16
    %v412 = vor.u32 %v409, %v410
    %v413 = vsel %vm329, %v405, %v412
    %v414 = vrot.slane %v409, 4
    %v416 = vshrl.u32 %v274, 16
    %v418 = vrot.slane %v416, 7
    %v419 = vshll.u32 %v274, 16
    %v421 = vor.u32 %v418, %v419
    %v422 = vrot.slane %v418, 4
    %v424 = vshrl.u32 %v275, 16
    %v426 = vrot.slane %v424, 7
    %v427 = vshll.u32 %v275, 16
    %v429 = vor.u32 %v426, %v427
    %v430 = vsel %vm329, %v422, %v429
    %v431 = vrot.slane %v426, 4
    %v433 = vshrl.u32 %v276, 16
    %v435 = vrot.slane %v433, 7
    %v436 = vshll.u32 %v276, 16
    %v438 = vor.u32 %v435, %v436
    %v439 = vrot.slane %v435, 4
    %v441 = vshrl.u32 %v277, 16
    %v443 = vrot.slane %v441, 7
    %v444 = vshll.u32 %v277, 16
    %v446 = vor.u32 %v443, %v444
    %v447 = vsel %vm329, %v439, %v446
    %v448 = vrot.slane %v443, 4
    %v450 = vshrl.u32 %v278, 16
    %v452 = vrot.slane %v450, 7
    %v453 = vshll.u32 %v278, 16
    %v455 = vor.u32 %v452, %v453
    %v456 = vrot.slane %v452, 4
    %v458 = vshrl.u32 %v279, 16
    %v460 = vrot.slane %v458, 7
    %v461 = vshll.u32 %v279, 16
    %v463 = vor.u32 %v460, %v461
    %v464 = vsel %vm329, %v456, %v463
    %v465 = vrot.slane %v460, 4
    %v467 = vshrl.u32 %v280, 16
    %v469 = vrot.slane %v467, 7
    %v470 = vshll.u32 %v280, 16
    %v472 = vor.u32 %v469, %v470
    %v473 = vrot.slane %v469, 4
    %v475 = vshrl.u32 %v281, 16
    %v477 = vrot.slane %v475, 7
    %v478 = vshll.u32 %v281, 16
    %v480 = vor.u32 %v477, %v478
    %v481 = vsel %vm329, %v473, %v480
    %v482 = vrot.slane %v477, 4
    %v484 = vshrl.u32 %v282, 16
    %v486 = vrot.slane %v484, 7
    %v487 = vshll.u32 %v282, 16
    %v489 = vor.u32 %v486, %v487
    %v490 = vrot.slane %v486, 4
    %v492 = vshrl.u32 %v283, 16
    %v494 = vrot.slane %v492, 7
    %v495 = vshll.u32 %v283, 16
    %v497 = vor.u32 %v494, %v495
    %v498 = vsel %vm329, %v490, %v497
    %v499 = vrot.slane %v494, 4
    %v501 = vshrl.u32 %v284, 16
    %v503 = vrot.slane %v501, 7
    %v504 = vshll.u32 %v284, 16
    %v506 = vor.u32 %v503, %v504
    %v507 = vrot.slane %v503, 4
    %v509 = vshrl.u32 %v285, 16
    %v511 = vrot.slane %v509, 7
    %v512 = vshll.u32 %v285, 16
    %v514 = vor.u32 %v511, %v512
    %v515 = vsel %vm329, %v507, %v514
    %v516 = vrot.slane %v511, 4
    %v518 = vshrl.u32 %v286, 16
    %v520 = vrot.slane %v518, 7
    %v521 = vshll.u32 %v286, 16
    %v523 = vor.u32 %v520, %v521
    %v524 = vrot.slane %v520, 4
    %v526 = vshrl.u32 %v287, 16
    %v528 = vrot.slane %v526, 7
    %v529 = vshll.u32 %v287, 16
    %v531 = vor.u32 %v528, %v529
    %v532 = vsel %vm329, %v524, %v531
    %v533 = vrot.slane %v528, 4
    %v535 = vshrl.u32 %v288, 16
    %v537 = vrot.slane %v535, 7
    %v538 = vshll.u32 %v288, 16
    %v540 = vor.u32 %v537, %v538
    %v541 = vrot.slane %v537, 4
    %v543 = vshrl.u32 %v289, 16
    %v545 = vrot.slane %v543, 7
    %v546 = vshll.u32 %v289, 16
    %v548 = vor.u32 %v545, %v546
    %v549 = vsel %vm329, %v541, %v548
    %v550 = vrot.slane %v545, 4
    %v552 = vshrl.u32 %v290, 16
    %v554 = vrot.slane %v552, 7
    %v555 = vshll.u32 %v290, 16
    %v557 = vor.u32 %v554, %v555
    %v558 = vrot.slane %v554, 4
    %v560 = vshrl.u32 %v291, 16
    %v562 = vrot.slane %v560, 7
    %v563 = vshll.u32 %v291, 16
    %v565 = vor.u32 %v562, %v563
    %v566 = vsel %vm329, %v558, %v565
    %v567 = vrot.slane %v562, 4
    %v569 = vshrl.u32 %v292, 16
    %v571 = vrot.slane %v569, 7
    %v572 = vshll.u32 %v292, 16
    %v574 = vor.u32 %v571, %v572
    %v575 = vrot.slane %v571, 4
    %v577 = vshrl.u32 %v293, 16
    %v579 = vrot.slane %v577, 7
    %v580 = vshll.u32 %v293, 16
    %v582 = vor.u32 %v579, %v580
    %v583 = vsel %vm329, %v575, %v582
    %v584 = vrot.slane %v579, 4
    %v586 = vshrl.u32 %v294, 16
    %v588 = vrot.slane %v586, 7
    %v589 = vshll.u32 %v294, 16
    %v591 = vor.u32 %v588, %v589
    %v592 = vrot.slane %v588, 4
    %v594 = vshrl.u32 %v295, 16
    %v596 = vrot.slane %v594, 7
    %v597 = vshll.u32 %v295, 16
    %v599 = vor.u32 %v596, %v597
    %v600 = vsel %vm329, %v592, %v599
    %v601 = vrot.slane %v596, 4
    %v603 = vshrl.u32 %v296, 16
    %v605 = vrot.slane %v603, 7
    %v606 = vshll.u32 %v296, 16
    %v608 = vor.u32 %v605, %v606
    %v609 = vrot.slane %v605, 4
    %v611 = vshrl.u32 %v297, 16
    %v613 = vrot.slane %v611, 7
    %v614 = vshll.u32 %v297, 16
    %v616 = vor.u32 %v613, %v614
    %v617 = vsel %vm329, %v609, %v616
    %v618 = vrot.slane %v613, 4
    %v620 = vshrl.u32 %v298, 16
    %v622 = vrot.slane %v620, 7
    %v623 = vshll.u32 %v298, 16
    %v625 = vor.u32 %v622, %v623
    %v626 = vrot.slane %v622, 4
    %v628 = vshrl.u32 %v299, 16
    %v630 = vrot.slane %v628, 7
    %v631 = vshll.u32 %v299, 16
    %v633 = vor.u32 %v630, %v631
    %v634 = vsel %vm329, %v626, %v633
    %v635 = vrot.slane %v630, 4
    %v637 = vshrl.u32 %v300, 16
    %v639 = vrot.slane %v637, 7
    %v640 = vshll.u32 %v300, 16
    %v642 = vor.u32 %v639, %v640
    %v643 = vrot.slane %v639, 4
    %v645 = vshrl.u32 %v301, 16
    %v647 = vrot.slane %v645, 7
    %v648 = vshll.u32 %v301, 16
    %v650 = vor.u32 %v647, %v648
    %v651 = vsel %vm329, %v643, %v650
    %v652 = vrot.slane %v647, 4
    %v654 = vshrl.u32 %v302, 16
    %v656 = vrot.slane %v654, 7
    %v657 = vshll.u32 %v302, 16
    %v659 = vor.u32 %v656, %v657
    %v660 = vrot.slane %v656, 4
    %v662 = vshrl.u32 %v303, 16
    %v664 = vrot.slane %v662, 7
    %v665 = vshll.u32 %v303, 16
    %v667 = vor.u32 %v664, %v665
    %v668 = vsel %vm329, %v660, %v667
    %v669 = vrot.slane %v664, 4
    %v671 = vshrl.u32 %v304, 16
    %v673 = vrot.slane %v671, 7
    %v674 = vshll.u32 %v304, 16
    %v676 = vor.u32 %v673, %v674
    %v677 = vrot.slane %v673, 4
    %v679 = vshrl.u32 %v305, 16
    %v681 = vrot.slane %v679, 7
    %v682 = vshll.u32 %v305, 16
    %v684 = vor.u32 %v681, %v682
    %v685 = vsel %vm329, %v677, %v684
    %v686 = vrot.slane %v681, 4
    %v688 = vshrl.u32 %v306, 16
    %v690 = vrot.slane %v688, 7
    %v691 = vshll.u32 %v306, 16
    %v693 = vor.u32 %v690, %v691
    %v694 = vrot.slane %v690, 4
    %v696 = vshrl.u32 %v307, 16
    %v698 = vrot.slane %v696, 7
    %v699 = vshll.u32 %v307, 16
    %v701 = vor.u32 %v698, %v699
    %v702 = vsel %vm329, %v694, %v701
    %v703 = vrot.slane %v698, 4
    %v705 = vshrl.u32 %v308, 16
    %v707 = vrot.slane %v705, 7
    %v708 = vshll.u32 %v308, 16
    %v710 = vor.u32 %v707, %v708
    %v711 = vrot.slane %v707, 4
    %v713 = vshrl.u32 %v309, 16
    %v715 = vrot.slane %v713, 7
    %v716 = vshll.u32 %v309, 16
    %v718 = vor.u32 %v715, %v716
    %v719 = vsel %vm329, %v711, %v718
    %v720 = vrot.slane %v715, 4
    %v722 = vshrl.u32 %v310, 16
    %v724 = vrot.slane %v722, 7
    %v725 = vshll.u32 %v310, 16
    %v727 = vor.u32 %v724, %v725
    %v728 = vrot.slane %v724, 4
    %v730 = vshrl.u32 %v311, 16
    %v732 = vrot.slane %v730, 7
    %v733 = vshll.u32 %v311, 16
    %v735 = vor.u32 %v732, %v733
    %v736 = vsel %vm329, %v728, %v735
    %v737 = vrot.slane %v732, 4
    %v739 = vshrl.u32 %v312, 16
    %v741 = vrot.slane %v739, 7
    %v742 = vshll.u32 %v312, 16
    %v744 = vor.u32 %v741, %v742
    %v745 = vrot.slane %v741, 4
    %v747 = vshrl.u32 %v313, 16
    %v749 = vrot.slane %v747, 7
    %v750 = vshll.u32 %v313, 16
    %v752 = vor.u32 %v749, %v750
    %v753 = vsel %vm329, %v745, %v752
    %v754 = vrot.slane %v749, 4
    %v756 = vshrl.u32 %v314, 16
    %v758 = vrot.slane %v756, 7
    %v759 = vshll.u32 %v314, 16
    %v761 = vor.u32 %v758, %v759
    %v762 = vrot.slane %v758, 4
    %v764 = vshrl.u32 %v315, 16
    %v766 = vrot.slane %v764, 7
    %v767 = vshll.u32 %v315, 16
    %v769 = vor.u32 %v766, %v767
    %v770 = vsel %vm329, %v762, %v769
    %v771 = vrot.slane %v766, 4
    %v773 = vshrl.u32 %v316, 16
    %v775 = vrot.slane %v773, 7
    %v776 = vshll.u32 %v316, 16
    %v778 = vor.u32 %v775, %v776
    %v779 = vrot.slane %v775, 4
    %v781 = vshrl.u32 %v317, 16
    %v783 = vrot.slane %v781, 7
    %v784 = vshll.u32 %v317, 16
    %v786 = vor.u32 %v783, %v784
    %v787 = vsel %vm329, %v779, %v786
    %v788 = vrot.slane %v783, 4
    %v790 = vshrl.u32 %v318, 16
    %v792 = vrot.slane %v790, 7
    %v793 = vshll.u32 %v318, 16
    %v795 = vor.u32 %v792, %v793
    %v796 = vrot.slane %v792, 4
    %v798 = vshrl.u32 %v319, 16
    %v800 = vrot.slane %v798, 7
    %v801 = vshll.u32 %v319, 16
    %v803 = vor.u32 %v800, %v801
    %v804 = vsel %vm329, %v796, %v803
    %v805 = vrot.slane %v800, 4
    %v807 = vshrl.u32 %v320, 16
    %v809 = vrot.slane %v807, 7
    %v810 = vshll.u32 %v320, 16
    %v812 = vor.u32 %v809, %v810
    %v813 = vrot.slane %v809, 4
    %v815 = vshrl.u32 %v321, 16
    %v817 = vrot.slane %v815, 7
    %v818 = vshll.u32 %v321, 16
    %v820 = vor.u32 %v817, %v818
    %v821 = vsel %vm329, %v813, %v820
    %v822 = vrot.slane %v817, 4
    %v824 = vshrl.u32 %v322, 16
    %v826 = vrot.slane %v824, 7
    %v827 = vshll.u32 %v322, 16
    %v829 = vor.u32 %v826, %v827
    %v830 = vrot.slane %v826, 4
    %v832 = vshrl.u32 %v323, 16
    %v834 = vrot.slane %v832, 7
    %v835 = vshll.u32 %v323, 16
    %v837 = vor.u32 %v834, %v835
    %v838 = vsel %vm329, %v830, %v837
    %v839 = vrot.slane %v834, 4
    %v841 = vshrl.u32 %v324, 16
    %v843 = vrot.slane %v841, 7
    %v844 = vshll.u32 %v324, 16
    %v846 = vor.u32 %v843, %v844
    %v847 = vrot.slane %v843, 4
    %v849 = vshrl.u32 %v325, 16
    %v851 = vrot.slane %v849, 7
    %v852 = vshll.u32 %v325, 16
    %v854 = vor.u32 %v851, %v852
    %v855 = vsel %vm329, %v847, %v854
    %v856 = vrot.slane %v851, 4
    %v858 = vshrl.u32 %v326, 16
    %v860 = vrot.slane %v858, 7
    %v861 = vshll.u32 %v326, 16
    %v863 = vor.u32 %v860, %v861
    %v864 = vrot.slane %v860, 4
    %v866 = vshrl.u32 %v327, 16
    %v868 = vrot.slane %v866, 7
    %v869 = vshll.u32 %v327, 16
    %v871 = vor.u32 %v868, %v869
    %v872 = vsel %vm329, %v864, %v871
    %v873 = vrot.slane %v868, 4
    %s970 = scalar_lea.vmem [#allocation2], 12
    %vm971 = vcmask 27648
    %vm972 = vmand %vm971, %vm154
    %v973 = vld [vmem:[%s970] sm:$0xf]
    %v974 = vsel %vm972, %v336, %v973
    %975 = vst [vmem:[%s970] sm:$0xf] %v974
    %vm976 = vcmask 27648
    %977 = vst.msk [vmem:[%s970 + $0x4] sm:$0xf] %vm976, %v345
    %vm978 = vcmask 24576
    %vm979 = vmand %vm978, %vm44
    %v980 = vld [vmem:[%s970 + $0x8] sm:$0x1]
    %v981 = vsel %vm979, %v346, %v980
    %982 = vst [vmem:[%s970 + $0x8] sm:$0x1] %v981
    %v983 = vld [vmem:[%s970 + $0xc] sm:$0xf]
    %v984 = vsel %vm972, %v353, %v983
    %985 = vst [vmem:[%s970 + $0xc] sm:$0xf] %v984
    %986 = vst.msk [vmem:[%s970 + $0x10] sm:$0xf] %vm976, %v362
    %v987 = vld [vmem:[%s970 + $0x14] sm:$0x1]
    %v988 = vsel %vm979, %v363, %v987
    %989 = vst [vmem:[%s970 + $0x14] sm:$0x1] %v988
    %v990 = vld [vmem:[%s970 + $0x18] sm:$0xf]
    %v991 = vsel %vm972, %v370, %v990
    %992 = vst [vmem:[%s970 + $0x18] sm:$0xf] %v991
    %993 = vst.msk [vmem:[%s970 + $0x1c] sm:$0xf] %vm976, %v379
    %v994 = vld [vmem:[%s970 + $0x20] sm:$0x1]
    %v995 = vsel %vm979, %v380, %v994
    %996 = vst [vmem:[%s970 + $0x20] sm:$0x1] %v995
    %v997 = vld [vmem:[%s970 + $0x24] sm:$0xf]
    %v998 = vsel %vm972, %v387, %v997
    %999 = vst [vmem:[%s970 + $0x24] sm:$0xf] %v998
    %1000 = vst.msk [vmem:[%s970 + $0x28] sm:$0xf] %vm976, %v396
    %v1001 = vld [vmem:[%s970 + $0x2c] sm:$0x1]
    %v1002 = vsel %vm979, %v397, %v1001
    %1003 = vst [vmem:[%s970 + $0x2c] sm:$0x1] %v1002
    %v1004 = vld [vmem:[%s970 + $0x30] sm:$0xf]
    %v1005 = vsel %vm972, %v404, %v1004
    %1006 = vst [vmem:[%s970 + $0x30] sm:$0xf] %v1005
    %1007 = vst.msk [vmem:[%s970 + $0x34] sm:$0xf] %vm976, %v413
    %v1008 = vld [vmem:[%s970 + $0x38] sm:$0x1]
    %v1009 = vsel %vm979, %v414, %v1008
    %1010 = vst [vmem:[%s970 + $0x38] sm:$0x1] %v1009
    %v1011 = vld [vmem:[%s970 + $0x3c] sm:$0xf]
    %v1012 = vsel %vm972, %v421, %v1011
    %1013 = vst [vmem:[%s970 + $0x3c] sm:$0xf] %v1012
    %1014 = vst.msk [vmem:[%s970 + $0x40] sm:$0xf] %vm976, %v430
    %v1015 = vld [vmem:[%s970 + $0x44] sm:$0x1]
    %v1016 = vsel %vm979, %v431, %v1015
    %1017 = vst [vmem:[%s970 + $0x44] sm:$0x1] %v1016
    %v1018 = vld [vmem:[%s970 + $0x48] sm:$0xf]
    %v1019 = vsel %vm972, %v438, %v1018
    %1020 = vst [vmem:[%s970 + $0x48] sm:$0xf] %v1019
    %1021 = vst.msk [vmem:[%s970 + $0x4c] sm:$0xf] %vm976, %v447
    %v1022 = vld [vmem:[%s970 + $0x50] sm:$0x1]
    %v1023 = vsel %vm979, %v448, %v1022
    %1024 = vst [vmem:[%s970 + $0x50] sm:$0x1] %v1023
    %v1025 = vld [vmem:[%s970 + $0x54] sm:$0xf]
    %v1026 = vsel %vm972, %v455, %v1025
    %1027 = vst [vmem:[%s970 + $0x54] sm:$0xf] %v1026
    %1028 = vst.msk [vmem:[%s970 + $0x58] sm:$0xf] %vm976, %v464
    %v1029 = vld [vmem:[%s970 + $0x5c] sm:$0x1]
    %v1030 = vsel %vm979, %v465, %v1029
    %1031 = vst [vmem:[%s970 + $0x5c] sm:$0x1] %v1030
    %v1032 = vld [vmem:[%s970 + $0x60] sm:$0xf]
    %v1033 = vsel %vm972, %v472, %v1032
    %1034 = vst [vmem:[%s970 + $0x60] sm:$0xf] %v1033
    %1035 = vst.msk [vmem:[%s970 + $0x64] sm:$0xf] %vm976, %v481
    %v1036 = vld [vmem:[%s970 + $0x68] sm:$0x1]
    %v1037 = vsel %vm979, %v482, %v1036
    %1038 = vst [vmem:[%s970 + $0x68] sm:$0x1] %v1037
    %v1039 = vld [vmem:[%s970 + $0x6c] sm:$0xf]
    %v1040 = vsel %vm972, %v489, %v1039
    %1041 = vst [vmem:[%s970 + $0x6c] sm:$0xf] %v1040
    %1042 = vst.msk [vmem:[%s970 + $0x70] sm:$0xf] %vm976, %v498
    %v1043 = vld [vmem:[%s970 + $0x74] sm:$0x1]
    %v1044 = vsel %vm979, %v499, %v1043
    %1045 = vst [vmem:[%s970 + $0x74] sm:$0x1] %v1044
    %v1046 = vld [vmem:[%s970 + $0x78] sm:$0xf]
    %v1047 = vsel %vm972, %v506, %v1046
    %1048 = vst [vmem:[%s970 + $0x78] sm:$0xf] %v1047
    %1049 = vst.msk [vmem:[%s970 + $0x7c] sm:$0xf] %vm976, %v515
    %v1050 = vld [vmem:[%s970 + $0x80] sm:$0x1]
    %v1051 = vsel %vm979, %v516, %v1050
    %1052 = vst [vmem:[%s970 + $0x80] sm:$0x1] %v1051
    %v1053 = vld [vmem:[%s970 + $0x84] sm:$0xf]
    %v1054 = vsel %vm972, %v523, %v1053
    %1055 = vst [vmem:[%s970 + $0x84] sm:$0xf] %v1054
    %1056 = vst.msk [vmem:[%s970 + $0x88] sm:$0xf] %vm976, %v532
    %v1057 = vld [vmem:[%s970 + $0x8c] sm:$0x1]
    %v1058 = vsel %vm979, %v533, %v1057
    %1059 = vst [vmem:[%s970 + $0x8c] sm:$0x1] %v1058
    %v1060 = vld [vmem:[%s970 + $0x90] sm:$0xf]
    %v1061 = vsel %vm972, %v540, %v1060
    %1062 = vst [vmem:[%s970 + $0x90] sm:$0xf] %v1061
    %1063 = vst.msk [vmem:[%s970 + $0x94] sm:$0xf] %vm976, %v549
    %v1064 = vld [vmem:[%s970 + $0x98] sm:$0x1]
    %v1065 = vsel %vm979, %v550, %v1064
    %1066 = vst [vmem:[%s970 + $0x98] sm:$0x1] %v1065
    %v1067 = vld [vmem:[%s970 + $0x9c] sm:$0xf]
    %v1068 = vsel %vm972, %v557, %v1067
    %1069 = vst [vmem:[%s970 + $0x9c] sm:$0xf] %v1068
    %1070 = vst.msk [vmem:[%s970 + $0xa0] sm:$0xf] %vm976, %v566
    %v1071 = vld [vmem:[%s970 + $0xa4] sm:$0x1]
    %v1072 = vsel %vm979, %v567, %v1071
    %1073 = vst [vmem:[%s970 + $0xa4] sm:$0x1] %v1072
    %v1074 = vld [vmem:[%s970 + $0xa8] sm:$0xf]
    %v1075 = vsel %vm972, %v574, %v1074
    %1076 = vst [vmem:[%s970 + $0xa8] sm:$0xf] %v1075
    %1077 = vst.msk [vmem:[%s970 + $0xac] sm:$0xf] %vm976, %v583
    %v1078 = vld [vmem:[%s970 + $0xb0] sm:$0x1]
    %v1079 = vsel %vm979, %v584, %v1078
    %1080 = vst [vmem:[%s970 + $0xb0] sm:$0x1] %v1079
    %v1081 = vld [vmem:[%s970 + $0xb4] sm:$0xf]
    %v1082 = vsel %vm972, %v591, %v1081
    %1083 = vst [vmem:[%s970 + $0xb4] sm:$0xf] %v1082
    %1084 = vst.msk [vmem:[%s970 + $0xb8] sm:$0xf] %vm976, %v600
    %v1085 = vld [vmem:[%s970 + $0xbc] sm:$0x1]
    %v1086 = vsel %vm979, %v601, %v1085
    %1087 = vst [vmem:[%s970 + $0xbc] sm:$0x1] %v1086
    %v1088 = vld [vmem:[%s970 + $0xd8] sm:$0xf]
    %v1089 = vsel %vm972, %v608, %v1088
    %1090 = vst [vmem:[%s970 + $0xd8] sm:$0xf] %v1089
    %1091 = vst.msk [vmem:[%s970 + $0xdc] sm:$0xf] %vm976, %v617
    %v1092 = vld [vmem:[%s970 + $0xe0] sm:$0x1]
    %v1093 = vsel %vm979, %v618, %v1092
    %1094 = vst [vmem:[%s970 + $0xe0] sm:$0x1] %v1093
    %v1095 = vld [vmem:[%s970 + $0xe4] sm:$0xf]
    %v1096 = vsel %vm972, %v625, %v1095
    %1097 = vst [vmem:[%s970 + $0xe4] sm:$0xf] %v1096
    %1098 = vst.msk [vmem:[%s970 + $0xe8] sm:$0xf] %vm976, %v634
    %v1099 = vld [vmem:[%s970 + $0xec] sm:$0x1]
    %v1100 = vsel %vm979, %v635, %v1099
    %1101 = vst [vmem:[%s970 + $0xec] sm:$0x1] %v1100
    %v1102 = vld [vmem:[%s970 + $0xf0] sm:$0xf]
    %v1103 = vsel %vm972, %v642, %v1102
    %1104 = vst [vmem:[%s970 + $0xf0] sm:$0xf] %v1103
    %1105 = vst.msk [vmem:[%s970 + $0xf4] sm:$0xf] %vm976, %v651
    %v1106 = vld [vmem:[%s970 + $0xf8] sm:$0x1]
    %v1107 = vsel %vm979, %v652, %v1106
    %1108 = vst [vmem:[%s970 + $0xf8] sm:$0x1] %v1107
    %v1109 = vld [vmem:[%s970 + $0xfc] sm:$0xf]
    %v1110 = vsel %vm972, %v659, %v1109
    %1111 = vst [vmem:[%s970 + $0xfc] sm:$0xf] %v1110
    %1112 = vst.msk [vmem:[%s970 + $0x100] sm:$0xf] %vm976, %v668
    %v1113 = vld [vmem:[%s970 + $0x104] sm:$0x1]
    %v1114 = vsel %vm979, %v669, %v1113
    %1115 = vst [vmem:[%s970 + $0x104] sm:$0x1] %v1114
    %v1116 = vld [vmem:[%s970 + $0x108] sm:$0xf]
    %v1117 = vsel %vm972, %v676, %v1116
    %1118 = vst [vmem:[%s970 + $0x108] sm:$0xf] %v1117
    %1119 = vst.msk [vmem:[%s970 + $0x10c] sm:$0xf] %vm976, %v685
    %v1120 = vld [vmem:[%s970 + $0x110] sm:$0x1]
    %v1121 = vsel %vm979, %v686, %v1120
    %1122 = vst [vmem:[%s970 + $0x110] sm:$0x1] %v1121
    %v1123 = vld [vmem:[%s970 + $0x114] sm:$0xf]
    %v1124 = vsel %vm972, %v693, %v1123
    %1125 = vst [vmem:[%s970 + $0x114] sm:$0xf] %v1124
    %1126 = vst.msk [vmem:[%s970 + $0x118] sm:$0xf] %vm976, %v702
    %v1127 = vld [vmem:[%s970 + $0x11c] sm:$0x1]
    %v1128 = vsel %vm979, %v703, %v1127
    %1129 = vst [vmem:[%s970 + $0x11c] sm:$0x1] %v1128
    %v1130 = vld [vmem:[%s970 + $0x120] sm:$0xf]
    %v1131 = vsel %vm972, %v710, %v1130
    %1132 = vst [vmem:[%s970 + $0x120] sm:$0xf] %v1131
    %1133 = vst.msk [vmem:[%s970 + $0x124] sm:$0xf] %vm976, %v719
    %v1134 = vld [vmem:[%s970 + $0x128] sm:$0x1]
    %v1135 = vsel %vm979, %v720, %v1134
    %1136 = vst [vmem:[%s970 + $0x128] sm:$0x1] %v1135
    %v1137 = vld [vmem:[%s970 + $0x12c] sm:$0xf]
    %v1138 = vsel %vm972, %v727, %v1137
    %1139 = vst [vmem:[%s970 + $0x12c] sm:$0xf] %v1138
    %1140 = vst.msk [vmem:[%s970 + $0x130] sm:$0xf] %vm976, %v736
    %v1141 = vld [vmem:[%s970 + $0x134] sm:$0x1]
    %v1142 = vsel %vm979, %v737, %v1141
    %1143 = vst [vmem:[%s970 + $0x134] sm:$0x1] %v1142
    %v1144 = vld [vmem:[%s970 + $0x138] sm:$0xf]
    %v1145 = vsel %vm972, %v744, %v1144
    %1146 = vst [vmem:[%s970 + $0x138] sm:$0xf] %v1145
    %1147 = vst.msk [vmem:[%s970 + $0x13c] sm:$0xf] %vm976, %v753
    %v1148 = vld [vmem:[%s970 + $0x140] sm:$0x1]
    %v1149 = vsel %vm979, %v754, %v1148
    %1150 = vst [vmem:[%s970 + $0x140] sm:$0x1] %v1149
    %v1151 = vld [vmem:[%s970 + $0x144] sm:$0xf]
    %v1152 = vsel %vm972, %v761, %v1151
    %1153 = vst [vmem:[%s970 + $0x144] sm:$0xf] %v1152
    %1154 = vst.msk [vmem:[%s970 + $0x148] sm:$0xf] %vm976, %v770
    %v1155 = vld [vmem:[%s970 + $0x14c] sm:$0x1]
    %v1156 = vsel %vm979, %v771, %v1155
    %1157 = vst [vmem:[%s970 + $0x14c] sm:$0x1] %v1156
    %v1158 = vld [vmem:[%s970 + $0x150] sm:$0xf]
    %v1159 = vsel %vm972, %v778, %v1158
    %1160 = vst [vmem:[%s970 + $0x150] sm:$0xf] %v1159
    %1161 = vst.msk [vmem:[%s970 + $0x154] sm:$0xf] %vm976, %v787
    %v1162 = vld [vmem:[%s970 + $0x158] sm:$0x1]
    %v1163 = vsel %vm979, %v788, %v1162
    %1164 = vst [vmem:[%s970 + $0x158] sm:$0x1] %v1163
    %v1165 = vld [vmem:[%s970 + $0x15c] sm:$0xf]
    %v1166 = vsel %vm972, %v795, %v1165
    %1167 = vst [vmem:[%s970 + $0x15c] sm:$0xf] %v1166
    %1168 = vst.msk [vmem:[%s970 + $0x160] sm:$0xf] %vm976, %v804
    %v1169 = vld [vmem:[%s970 + $0x164] sm:$0x1]
    %v1170 = vsel %vm979, %v805, %v1169
    %1171 = vst [vmem:[%s970 + $0x164] sm:$0x1] %v1170
    %v1172 = vld [vmem:[%s970 + $0x168] sm:$0xf]
    %v1173 = vsel %vm972, %v812, %v1172
    %1174 = vst [vmem:[%s970 + $0x168] sm:$0xf] %v1173
    %1175 = vst.msk [vmem:[%s970 + $0x16c] sm:$0xf] %vm976, %v821
    %v1176 = vld [vmem:[%s970 + $0x170] sm:$0x1]
    %v1177 = vsel %vm979, %v822, %v1176
    %1178 = vst [vmem:[%s970 + $0x170] sm:$0x1] %v1177
    %v1179 = vld [vmem:[%s970 + $0x174] sm:$0xf]
    %v1180 = vsel %vm972, %v829, %v1179
    %1181 = vst [vmem:[%s970 + $0x174] sm:$0xf] %v1180
    %1182 = vst.msk [vmem:[%s970 + $0x178] sm:$0xf] %vm976, %v838
    %v1183 = vld [vmem:[%s970 + $0x17c] sm:$0x1]
    %v1184 = vsel %vm979, %v839, %v1183
    %1185 = vst [vmem:[%s970 + $0x17c] sm:$0x1] %v1184
    %v1186 = vld [vmem:[%s970 + $0x180] sm:$0xf]
    %v1187 = vsel %vm972, %v846, %v1186
    %1188 = vst [vmem:[%s970 + $0x180] sm:$0xf] %v1187
    %1189 = vst.msk [vmem:[%s970 + $0x184] sm:$0xf] %vm976, %v855
    %v1190 = vld [vmem:[%s970 + $0x188] sm:$0x1]
    %v1191 = vsel %vm979, %v856, %v1190
    %1192 = vst [vmem:[%s970 + $0x188] sm:$0x1] %v1191
    %v1193 = vld [vmem:[%s970 + $0x18c] sm:$0xf]
    %v1194 = vsel %vm972, %v863, %v1193
    %1195 = vst [vmem:[%s970 + $0x18c] sm:$0xf] %v1194
    %1196 = vst.msk [vmem:[%s970 + $0x190] sm:$0xf] %vm976, %v872
    %v1197 = vld [vmem:[%s970 + $0x194] sm:$0x1]
    %v1198 = vsel %vm979, %v873, %v1197
    %1199 = vst [vmem:[%s970 + $0x194] sm:$0x1] %v1198
    %v1200 = vld [vmem:[#allocation2] sm:$0xf]
    %v1201 = vld [vmem:[#allocation2 + $0x4] sm:$0xf]
    %v1202 = vld [vmem:[#allocation2 + $0xc] sm:$0xf]
    %v1203 = vld [vmem:[#allocation2 + $0x10] sm:$0xf]
    %v1204 = vld [vmem:[#allocation2 + $0x18] sm:$0xf]
    %v1205 = vld [vmem:[#allocation2 + $0x1c] sm:$0xf]
    %v1206 = vld [vmem:[#allocation2 + $0x24] sm:$0xf]
    %v1207 = vld [vmem:[#allocation2 + $0x28] sm:$0xf]
    %v1208 = vld [vmem:[#allocation2 + $0x30] sm:$0xf]
    %v1209 = vld [vmem:[#allocation2 + $0x34] sm:$0xf]
    %v1210 = vld [vmem:[#allocation2 + $0x3c] sm:$0xf]
    %v1211 = vld [vmem:[#allocation2 + $0x40] sm:$0xf]
    %v1212 = vld [vmem:[#allocation2 + $0x48] sm:$0xf]
    %v1213 = vld [vmem:[#allocation2 + $0x4c] sm:$0xf]
    %v1214 = vld [vmem:[#allocation2 + $0x54] sm:$0xf]
    %v1215 = vld [vmem:[#allocation2 + $0x58] sm:$0xf]
    %v1216 = vld [vmem:[#allocation2 + $0x60] sm:$0xf]
    %v1217 = vld [vmem:[#allocation2 + $0x64] sm:$0xf]
    %v1218 = vld [vmem:[#allocation2 + $0x6c] sm:$0xf]
    %v1219 = vld [vmem:[#allocation2 + $0x70] sm:$0xf]
    %v1220 = vld [vmem:[#allocation2 + $0x78] sm:$0xf]
    %v1221 = vld [vmem:[#allocation2 + $0x7c] sm:$0xf]
    %v1222 = vld [vmem:[#allocation2 + $0x84] sm:$0xf]
    %v1223 = vld [vmem:[#allocation2 + $0x88] sm:$0xf]
    %v1224 = vld [vmem:[#allocation2 + $0x90] sm:$0xf]
    %v1225 = vld [vmem:[#allocation2 + $0x94] sm:$0xf]
    %v1226 = vld [vmem:[#allocation2 + $0x9c] sm:$0xf]
    %v1227 = vld [vmem:[#allocation2 + $0xa0] sm:$0xf]
    %v1228 = vld [vmem:[#allocation2 + $0xa8] sm:$0xf]
    %v1229 = vld [vmem:[#allocation2 + $0xac] sm:$0xf]
    %v1230 = vld [vmem:[#allocation2 + $0xb4] sm:$0xf]
    %v1231 = vld [vmem:[#allocation2 + $0xb8] sm:$0xf]
    %v1232 = vld [vmem:[#allocation2 + $0xd8] sm:$0xf]
    %v1233 = vld [vmem:[#allocation2 + $0xdc] sm:$0xf]
    %v1234 = vld [vmem:[#allocation2 + $0xe4] sm:$0xf]
    %v1235 = vld [vmem:[#allocation2 + $0xe8] sm:$0xf]
    %v1236 = vld [vmem:[#allocation2 + $0xf0] sm:$0xf]
    %v1237 = vld [vmem:[#allocation2 + $0xf4] sm:$0xf]
    %v1238 = vld [vmem:[#allocation2 + $0xfc] sm:$0xf]
    %v1239 = vld [vmem:[#allocation2 + $0x100] sm:$0xf]
    %v1240 = vld [vmem:[#allocation2 + $0x108] sm:$0xf]
    %v1241 = vld [vmem:[#allocation2 + $0x10c] sm:$0xf]
    %v1242 = vld [vmem:[#allocation2 + $0x114] sm:$0xf]
    %v1243 = vld [vmem:[#allocation2 + $0x118] sm:$0xf]
    %v1244 = vld [vmem:[#allocation2 + $0x120] sm:$0xf]
    %v1245 = vld [vmem:[#allocation2 + $0x124] sm:$0xf]
    %v1246 = vld [vmem:[#allocation2 + $0x12c] sm:$0xf]
    %v1247 = vld [vmem:[#allocation2 + $0x130] sm:$0xf]
    %v1248 = vld [vmem:[#allocation2 + $0x138] sm:$0xf]
    %v1249 = vld [vmem:[#allocation2 + $0x13c] sm:$0xf]
    %v1250 = vld [vmem:[#allocation2 + $0x144] sm:$0xf]
    %v1251 = vld [vmem:[#allocation2 + $0x148] sm:$0xf]
    %v1252 = vld [vmem:[#allocation2 + $0x150] sm:$0xf]
    %v1253 = vld [vmem:[#allocation2 + $0x154] sm:$0xf]
    %v1254 = vld [vmem:[#allocation2 + $0x15c] sm:$0xf]
    %v1255 = vld [vmem:[#allocation2 + $0x160] sm:$0xf]
    %v1256 = vld [vmem:[#allocation2 + $0x168] sm:$0xf]
    %v1257 = vld [vmem:[#allocation2 + $0x16c] sm:$0xf]
    %v1258 = vld [vmem:[#allocation2 + $0x174] sm:$0xf]
    %v1259 = vld [vmem:[#allocation2 + $0x178] sm:$0xf]
    %v1260 = vld [vmem:[#allocation2 + $0x180] sm:$0xf]
    %v1261 = vld [vmem:[#allocation2 + $0x184] sm:$0xf]
    %v1262 = vld [vmem:[#allocation2 + $0x18c] sm:$0xf]
    %v1263 = vld [vmem:[#allocation2 + $0x190] sm:$0xf]
    %v1264 = vld [vmem:[%s1] sm:$0xf]
    %v1265 = vld [vmem:[#allocation2 + $0x8] sm:$0x1]
    %v1266 = vld [vmem:[#allocation2 + $0x14] sm:$0x1]
    %v1267 = vld [vmem:[#allocation2 + $0x20] sm:$0x1]
    %v1268 = vld [vmem:[#allocation2 + $0x2c] sm:$0x1]
    %v1269 = vld [vmem:[#allocation2 + $0x38] sm:$0x1]
    %v1270 = vld [vmem:[#allocation2 + $0x44] sm:$0x1]
    %v1271 = vld [vmem:[#allocation2 + $0x50] sm:$0x1]
    %v1272 = vld [vmem:[#allocation2 + $0x5c] sm:$0x1]
    %v1273 = vld [vmem:[#allocation2 + $0x68] sm:$0x1]
    %v1274 = vld [vmem:[#allocation2 + $0x74] sm:$0x1]
    %v1275 = vld [vmem:[#allocation2 + $0x80] sm:$0x1]
    %v1276 = vld [vmem:[#allocation2 + $0x8c] sm:$0x1]
    %v1277 = vld [vmem:[#allocation2 + $0x98] sm:$0x1]
    %v1278 = vld [vmem:[#allocation2 + $0xa4] sm:$0x1]
    %v1279 = vld [vmem:[#allocation2 + $0xb0] sm:$0x1]
    %v1280 = vld [vmem:[#allocation2 + $0xbc] sm:$0x1]
    %v1281 = vld [vmem:[#allocation2 + $0xe0] sm:$0x1]
    %v1282 = vld [vmem:[#allocation2 + $0xec] sm:$0x1]
    %v1283 = vld [vmem:[#allocation2 + $0xf8] sm:$0x1]
    %v1284 = vld [vmem:[#allocation2 + $0x104] sm:$0x1]
    %v1285 = vld [vmem:[#allocation2 + $0x110] sm:$0x1]
    %v1286 = vld [vmem:[#allocation2 + $0x11c] sm:$0x1]
    %v1287 = vld [vmem:[#allocation2 + $0x128] sm:$0x1]
    %v1288 = vld [vmem:[#allocation2 + $0x134] sm:$0x1]
    %v1289 = vld [vmem:[#allocation2 + $0x140] sm:$0x1]
    %v1290 = vld [vmem:[#allocation2 + $0x14c] sm:$0x1]
    %v1291 = vld [vmem:[#allocation2 + $0x158] sm:$0x1]
    %v1292 = vld [vmem:[#allocation2 + $0x164] sm:$0x1]
    %v1293 = vld [vmem:[#allocation2 + $0x170] sm:$0x1]
    %v1294 = vld [vmem:[#allocation2 + $0x17c] sm:$0x1]
    %v1295 = vld [vmem:[#allocation2 + $0x188] sm:$0x1]
    %v1296 = vld [vmem:[#allocation2 + $0x194] sm:$0x1]
    %vm1297 = vsmask.f32 3328
    %vm1298 = vsmask.f32 7440
    %vm1299 = vmor %vm1297, %vm1298
    %v1301 = vshrl.u32 %v1200, 16
    %v1303 = vrot.slane %v1301, 4
    %v1304 = vshll.u32 %v1200, 16
    %v1306 = vrot.slane %v1304, 5
    %v1307 = vor.u32 %v1303, %v1306
    %v1308 = vrot.slane %v1307, 4
    %v1310 = vshll.u32 %v1201, 16
    %v1312 = vrot.slane %v1310, 5
    %v1313 = vsel %vm1299, %v1308, %v1312
    %v1314 = vshrl.u32 %v1201, 16
    %v1316 = vrot.slane %v1314, 4
    %v1317 = vor.u32 %v1316, %v1312
    %v1318 = vrot.slane %v1317, 4
    %v1320 = vshll.u32 %v1265, 16
    %v1322 = vrot.slane %v1320, 5
    %v1323 = vsel %vm1299, %v1318, %v1322
    %v1325 = vshrl.u32 %v1202, 16
    %v1327 = vrot.slane %v1325, 4
    %v1328 = vshll.u32 %v1202, 16
    %v1330 = vrot.slane %v1328, 5
    %v1331 = vor.u32 %v1327, %v1330
    %v1332 = vrot.slane %v1331, 4
    %v1334 = vshll.u32 %v1203, 16
    %v1336 = vrot.slane %v1334, 5
    %v1337 = vsel %vm1299, %v1332, %v1336
    %v1338 = vshrl.u32 %v1203, 16
    %v1340 = vrot.slane %v1338, 4
    %v1341 = vor.u32 %v1340, %v1336
    %v1342 = vrot.slane %v1341, 4
    %v1344 = vshll.u32 %v1266, 16
    %v1346 = vrot.slane %v1344, 5
    %v1347 = vsel %vm1299, %v1342, %v1346
    %v1349 = vshrl.u32 %v1204, 16
    %v1351 = vrot.slane %v1349, 4
    %v1352 = vshll.u32 %v1204, 16
    %v1354 = vrot.slane %v1352, 5
    %v1355 = vor.u32 %v1351, %v1354
    %v1356 = vrot.slane %v1355, 4
    %v1358 = vshll.u32 %v1205, 16
    %v1360 = vrot.slane %v1358, 5
    %v1361 = vsel %vm1299, %v1356, %v1360
    %v1362 = vshrl.u32 %v1205, 16
    %v1364 = vrot.slane %v1362, 4
    %v1365 = vor.u32 %v1364, %v1360
    %v1366 = vrot.slane %v1365, 4
    %v1368 = vshll.u32 %v1267, 16
    %v1370 = vrot.slane %v1368, 5
    %v1371 = vsel %vm1299, %v1366, %v1370
    %v1373 = vshrl.u32 %v1206, 16
    %v1375 = vrot.slane %v1373, 4
    %v1376 = vshll.u32 %v1206, 16
    %v1378 = vrot.slane %v1376, 5
    %v1379 = vor.u32 %v1375, %v1378
    %v1380 = vrot.slane %v1379, 4
    %v1382 = vshll.u32 %v1207, 16
    %v1384 = vrot.slane %v1382, 5
    %v1385 = vsel %vm1299, %v1380, %v1384
    %v1386 = vshrl.u32 %v1207, 16
    %v1388 = vrot.slane %v1386, 4
    %v1389 = vor.u32 %v1388, %v1384
    %v1390 = vrot.slane %v1389, 4
    %v1392 = vshll.u32 %v1268, 16
    %v1394 = vrot.slane %v1392, 5
    %v1395 = vsel %vm1299, %v1390, %v1394
    %v1397 = vshrl.u32 %v1208, 16
    %v1399 = vrot.slane %v1397, 4
    %v1400 = vshll.u32 %v1208, 16
    %v1402 = vrot.slane %v1400, 5
    %v1403 = vor.u32 %v1399, %v1402
    %v1404 = vrot.slane %v1403, 4
    %v1406 = vshll.u32 %v1209, 16
    %v1408 = vrot.slane %v1406, 5
    %v1409 = vsel %vm1299, %v1404, %v1408
    %v1410 = vshrl.u32 %v1209, 16
    %v1412 = vrot.slane %v1410, 4
    %v1413 = vor.u32 %v1412, %v1408
    %v1414 = vrot.slane %v1413, 4
    %v1416 = vshll.u32 %v1269, 16
    %v1418 = vrot.slane %v1416, 5
    %v1419 = vsel %vm1299, %v1414, %v1418
    %v1421 = vshrl.u32 %v1210, 16
    %v1423 = vrot.slane %v1421, 4
    %v1424 = vshll.u32 %v1210, 16
    %v1426 = vrot.slane %v1424, 5
    %v1427 = vor.u32 %v1423, %v1426
    %v1428 = vrot.slane %v1427, 4
    %v1430 = vshll.u32 %v1211, 16
    %v1432 = vrot.slane %v1430, 5
    %v1433 = vsel %vm1299, %v1428, %v1432
    %v1434 = vshrl.u32 %v1211, 16
    %v1436 = vrot.slane %v1434, 4
    %v1437 = vor.u32 %v1436, %v1432
    %v1438 = vrot.slane %v1437, 4
    %v1440 = vshll.u32 %v1270, 16
    %v1442 = vrot.slane %v1440, 5
    %v1443 = vsel %vm1299, %v1438, %v1442
    %v1445 = vshrl.u32 %v1212, 16
    %v1447 = vrot.slane %v1445, 4
    %v1448 = vshll.u32 %v1212, 16
    %v1450 = vrot.slane %v1448, 5
    %v1451 = vor.u32 %v1447, %v1450
    %v1452 = vrot.slane %v1451, 4
    %v1454 = vshll.u32 %v1213, 16
    %v1456 = vrot.slane %v1454, 5
    %v1457 = vsel %vm1299, %v1452, %v1456
    %v1458 = vshrl.u32 %v1213, 16
    %v1460 = vrot.slane %v1458, 4
    %v1461 = vor.u32 %v1460, %v1456
    %v1462 = vrot.slane %v1461, 4
    %v1464 = vshll.u32 %v1271, 16
    %v1466 = vrot.slane %v1464, 5
    %v1467 = vsel %vm1299, %v1462, %v1466
    %v1469 = vshrl.u32 %v1214, 16
    %v1471 = vrot.slane %v1469, 4
    %v1472 = vshll.u32 %v1214, 16
    %v1474 = vrot.slane %v1472, 5
    %v1475 = vor.u32 %v1471, %v1474
    %v1476 = vrot.slane %v1475, 4
    %v1478 = vshll.u32 %v1215, 16
    %v1480 = vrot.slane %v1478, 5
    %v1481 = vsel %vm1299, %v1476, %v1480
    %v1482 = vshrl.u32 %v1215, 16
    %v1484 = vrot.slane %v1482, 4
    %v1485 = vor.u32 %v1484, %v1480
    %v1486 = vrot.slane %v1485, 4
    %v1488 = vshll.u32 %v1272, 16
    %v1490 = vrot.slane %v1488, 5
    %v1491 = vsel %vm1299, %v1486, %v1490
    %v1493 = vshrl.u32 %v1216, 16
    %v1495 = vrot.slane %v1493, 4
    %v1496 = vshll.u32 %v1216, 16
    %v1498 = vrot.slane %v1496, 5
    %v1499 = vor.u32 %v1495, %v1498
    %v1500 = vrot.slane %v1499, 4
    %v1502 = vshll.u32 %v1217, 16
    %v1504 = vrot.slane %v1502, 5
    %v1505 = vsel %vm1299, %v1500, %v1504
    %v1506 = vshrl.u32 %v1217, 16
    %v1508 = vrot.slane %v1506, 4
    %v1509 = vor.u32 %v1508, %v1504
    %v1510 = vrot.slane %v1509, 4
    %v1512 = vshll.u32 %v1273, 16
    %v1514 = vrot.slane %v1512, 5
    %v1515 = vsel %vm1299, %v1510, %v1514
    %v1517 = vshrl.u32 %v1218, 16
    %v1519 = vrot.slane %v1517, 4
    %v1520 = vshll.u32 %v1218, 16
    %v1522 = vrot.slane %v1520, 5
    %v1523 = vor.u32 %v1519, %v1522
    %v1524 = vrot.slane %v1523, 4
    %v1526 = vshll.u32 %v1219, 16
    %v1528 = vrot.slane %v1526, 5
    %v1529 = vsel %vm1299, %v1524, %v1528
    %v1530 = vshrl.u32 %v1219, 16
    %v1532 = vrot.slane %v1530, 4
    %v1533 = vor.u32 %v1532, %v1528
    %v1534 = vrot.slane %v1533, 4
    %v1536 = vshll.u32 %v1274, 16
    %v1538 = vrot.slane %v1536, 5
    %v1539 = vsel %vm1299, %v1534, %v1538
    %v1541 = vshrl.u32 %v1220, 16
    %v1543 = vrot.slane %v1541, 4
    %v1544 = vshll.u32 %v1220, 16
    %v1546 = vrot.slane %v1544, 5
    %v1547 = vor.u32 %v1543, %v1546
    %v1548 = vrot.slane %v1547, 4
    %v1550 = vshll.u32 %v1221, 16
    %v1552 = vrot.slane %v1550, 5
    %v1553 = vsel %vm1299, %v1548, %v1552
    %v1554 = vshrl.u32 %v1221, 16
    %v1556 = vrot.slane %v1554, 4
    %v1557 = vor.u32 %v1556, %v1552
    %v1558 = vrot.slane %v1557, 4
    %v1560 = vshll.u32 %v1275, 16
    %v1562 = vrot.slane %v1560, 5
    %v1563 = vsel %vm1299, %v1558, %v1562
    %v1565 = vshrl.u32 %v1222, 16
    %v1567 = vrot.slane %v1565, 4
    %v1568 = vshll.u32 %v1222, 16
    %v1570 = vrot.slane %v1568, 5
    %v1571 = vor.u32 %v1567, %v1570
    %v1572 = vrot.slane %v1571, 4
    %v1574 = vshll.u32 %v1223, 16
    %v1576 = vrot.slane %v1574, 5
    %v1577 = vsel %vm1299, %v1572, %v1576
    %v1578 = vshrl.u32 %v1223, 16
    %v1580 = vrot.slane %v1578, 4
    %v1581 = vor.u32 %v1580, %v1576
    %v1582 = vrot.slane %v1581, 4
    %v1584 = vshll.u32 %v1276, 16
    %v1586 = vrot.slane %v1584, 5
    %v1587 = vsel %vm1299, %v1582, %v1586
    %v1589 = vshrl.u32 %v1224, 16
    %v1591 = vrot.slane %v1589, 4
    %v1592 = vshll.u32 %v1224, 16
    %v1594 = vrot.slane %v1592, 5
    %v1595 = vor.u32 %v1591, %v1594
    %v1596 = vrot.slane %v1595, 4
    %v1598 = vshll.u32 %v1225, 16
    %v1600 = vrot.slane %v1598, 5
    %v1601 = vsel %vm1299, %v1596, %v1600
    %v1602 = vshrl.u32 %v1225, 16
    %v1604 = vrot.slane %v1602, 4
    %v1605 = vor.u32 %v1604, %v1600
    %v1606 = vrot.slane %v1605, 4
    %v1608 = vshll.u32 %v1277, 16
    %v1610 = vrot.slane %v1608, 5
    %v1611 = vsel %vm1299, %v1606, %v1610
    %v1613 = vshrl.u32 %v1226, 16
    %v1615 = vrot.slane %v1613, 4
    %v1616 = vshll.u32 %v1226, 16
    %v1618 = vrot.slane %v1616, 5
    %v1619 = vor.u32 %v1615, %v1618
    %v1620 = vrot.slane %v1619, 4
    %v1622 = vshll.u32 %v1227, 16
    %v1624 = vrot.slane %v1622, 5
    %v1625 = vsel %vm1299, %v1620, %v1624
    %v1626 = vshrl.u32 %v1227, 16
    %v1628 = vrot.slane %v1626, 4
    %v1629 = vor.u32 %v1628, %v1624
    %v1630 = vrot.slane %v1629, 4
    %v1632 = vshll.u32 %v1278, 16
    %v1634 = vrot.slane %v1632, 5
    %v1635 = vsel %vm1299, %v1630, %v1634
    %v1637 = vshrl.u32 %v1228, 16
    %v1639 = vrot.slane %v1637, 4
    %v1640 = vshll.u32 %v1228, 16
    %v1642 = vrot.slane %v1640, 5
    %v1643 = vor.u32 %v1639, %v1642
    %v1644 = vrot.slane %v1643, 4
    %v1646 = vshll.u32 %v1229, 16
    %v1648 = vrot.slane %v1646, 5
    %v1649 = vsel %vm1299, %v1644, %v1648
    %v1650 = vshrl.u32 %v1229, 16
    %v1652 = vrot.slane %v1650, 4
    %v1653 = vor.u32 %v1652, %v1648
    %v1654 = vrot.slane %v1653, 4
    %v1656 = vshll.u32 %v1279, 16
    %v1658 = vrot.slane %v1656, 5
    %v1659 = vsel %vm1299, %v1654, %v1658
    %v1661 = vshrl.u32 %v1230, 16
    %v1663 = vrot.slane %v1661, 4
    %v1664 = vshll.u32 %v1230, 16
    %v1666 = vrot.slane %v1664, 5
    %v1667 = vor.u32 %v1663, %v1666
    %v1668 = vrot.slane %v1667, 4
    %v1670 = vshll.u32 %v1231, 16
    %v1672 = vrot.slane %v1670, 5
    %v1673 = vsel %vm1299, %v1668, %v1672
    %v1674 = vshrl.u32 %v1231, 16
    %v1676 = vrot.slane %v1674, 4
    %v1677 = vor.u32 %v1676, %v1672
    %v1678 = vrot.slane %v1677, 4
    %v1680 = vshll.u32 %v1280, 16
    %v1682 = vrot.slane %v1680, 5
    %v1683 = vsel %vm1299, %v1678, %v1682
    %v1685 = vshrl.u32 %v1232, 16
    %v1687 = vrot.slane %v1685, 4
    %v1688 = vshll.u32 %v1232, 16
    %v1690 = vrot.slane %v1688, 5
    %v1691 = vor.u32 %v1687, %v1690
    %v1692 = vrot.slane %v1691, 4
    %v1694 = vshll.u32 %v1233, 16
    %v1696 = vrot.slane %v1694, 5
    %v1697 = vsel %vm1299, %v1692, %v1696
    %v1698 = vshrl.u32 %v1233, 16
    %v1700 = vrot.slane %v1698, 4
    %v1701 = vor.u32 %v1700, %v1696
    %v1702 = vrot.slane %v1701, 4
    %v1704 = vshll.u32 %v1281, 16
    %v1706 = vrot.slane %v1704, 5
    %v1707 = vsel %vm1299, %v1702, %v1706
    %v1709 = vshrl.u32 %v1234, 16
    %v1711 = vrot.slane %v1709, 4
    %v1712 = vshll.u32 %v1234, 16
    %v1714 = vrot.slane %v1712, 5
    %v1715 = vor.u32 %v1711, %v1714
    %v1716 = vrot.slane %v1715, 4
    %v1718 = vshll.u32 %v1235, 16
    %v1720 = vrot.slane %v1718, 5
    %v1721 = vsel %vm1299, %v1716, %v1720
    %v1722 = vshrl.u32 %v1235, 16
    %v1724 = vrot.slane %v1722, 4
    %v1725 = vor.u32 %v1724, %v1720
    %v1726 = vrot.slane %v1725, 4
    %v1728 = vshll.u32 %v1282, 16
    %v1730 = vrot.slane %v1728, 5
    %v1731 = vsel %vm1299, %v1726, %v1730
    %v1733 = vshrl.u32 %v1236, 16
    %v1735 = vrot.slane %v1733, 4
    %v1736 = vshll.u32 %v1236, 16
    %v1738 = vrot.slane %v1736, 5
    %v1739 = vor.u32 %v1735, %v1738
    %v1740 = vrot.slane %v1739, 4
    %v1742 = vshll.u32 %v1237, 16
    %v1744 = vrot.slane %v1742, 5
    %v1745 = vsel %vm1299, %v1740, %v1744
    %v1746 = vshrl.u32 %v1237, 16
    %v1748 = vrot.slane %v1746, 4
    %v1749 = vor.u32 %v1748, %v1744
    %v1750 = vrot.slane %v1749, 4
    %v1752 = vshll.u32 %v1283, 16
    %v1754 = vrot.slane %v1752, 5
    %v1755 = vsel %vm1299, %v1750, %v1754
    %v1757 = vshrl.u32 %v1238, 16
    %v1759 = vrot.slane %v1757, 4
    %v1760 = vshll.u32 %v1238, 16
    %v1762 = vrot.slane %v1760, 5
    %v1763 = vor.u32 %v1759, %v1762
    %v1764 = vrot.slane %v1763, 4
    %v1766 = vshll.u32 %v1239, 16
    %v1768 = vrot.slane %v1766, 5
    %v1769 = vsel %vm1299, %v1764, %v1768
    %v1770 = vshrl.u32 %v1239, 16
    %v1772 = vrot.slane %v1770, 4
    %v1773 = vor.u32 %v1772, %v1768
    %v1774 = vrot.slane %v1773, 4
    %v1776 = vshll.u32 %v1284, 16
    %v1778 = vrot.slane %v1776, 5
    %v1779 = vsel %vm1299, %v1774, %v1778
    %v1781 = vshrl.u32 %v1240, 16
    %v1783 = vrot.slane %v1781, 4
    %v1784 = vshll.u32 %v1240, 16
    %v1786 = vrot.slane %v1784, 5
    %v1787 = vor.u32 %v1783, %v1786
    %v1788 = vrot.slane %v1787, 4
    %v1790 = vshll.u32 %v1241, 16
    %v1792 = vrot.slane %v1790, 5
    %v1793 = vsel %vm1299, %v1788, %v1792
    %v1794 = vshrl.u32 %v1241, 16
    %v1796 = vrot.slane %v1794, 4
    %v1797 = vor.u32 %v1796, %v1792
    %v1798 = vrot.slane %v1797, 4
    %v1800 = vshll.u32 %v1285, 16
    %v1802 = vrot.slane %v1800, 5
    %v1803 = vsel %vm1299, %v1798, %v1802
    %v1805 = vshrl.u32 %v1242, 16
    %v1807 = vrot.slane %v1805, 4
    %v1808 = vshll.u32 %v1242, 16
    %v1810 = vrot.slane %v1808, 5
    %v1811 = vor.u32 %v1807, %v1810
    %v1812 = vrot.slane %v1811, 4
    %v1814 = vshll.u32 %v1243, 16
    %v1816 = vrot.slane %v1814, 5
    %v1817 = vsel %vm1299, %v1812, %v1816
    %v1818 = vshrl.u32 %v1243, 16
    %v1820 = vrot.slane %v1818, 4
    %v1821 = vor.u32 %v1820, %v1816
    %v1822 = vrot.slane %v1821, 4
    %v1824 = vshll.u32 %v1286, 16
    %v1826 = vrot.slane %v1824, 5
    %v1827 = vsel %vm1299, %v1822, %v1826
    %v1829 = vshrl.u32 %v1244, 16
    %v1831 = vrot.slane %v1829, 4
    %v1832 = vshll.u32 %v1244, 16
    %v1834 = vrot.slane %v1832, 5
    %v1835 = vor.u32 %v1831, %v1834
    %v1836 = vrot.slane %v1835, 4
    %v1838 = vshll.u32 %v1245, 16
    %v1840 = vrot.slane %v1838, 5
    %v1841 = vsel %vm1299, %v1836, %v1840
    %v1842 = vshrl.u32 %v1245, 16
    %v1844 = vrot.slane %v1842, 4
    %v1845 = vor.u32 %v1844, %v1840
    %v1846 = vrot.slane %v1845, 4
    %v1848 = vshll.u32 %v1287, 16
    %v1850 = vrot.slane %v1848, 5
    %v1851 = vsel %vm1299, %v1846, %v1850
    %v1853 = vshrl.u32 %v1246, 16
    %v1855 = vrot.slane %v1853, 4
    %v1856 = vshll.u32 %v1246, 16
    %v1858 = vrot.slane %v1856, 5
    %v1859 = vor.u32 %v1855, %v1858
    %v1860 = vrot.slane %v1859, 4
    %v1862 = vshll.u32 %v1247, 16
    %v1864 = vrot.slane %v1862, 5
    %v1865 = vsel %vm1299, %v1860, %v1864
    %v1866 = vshrl.u32 %v1247, 16
    %v1868 = vrot.slane %v1866, 4
    %v1869 = vor.u32 %v1868, %v1864
    %v1870 = vrot.slane %v1869, 4
    %v1872 = vshll.u32 %v1288, 16
    %v1874 = vrot.slane %v1872, 5
    %v1875 = vsel %vm1299, %v1870, %v1874
    %v1877 = vshrl.u32 %v1248, 16
    %v1879 = vrot.slane %v1877, 4
    %v1880 = vshll.u32 %v1248, 16
    %v1882 = vrot.slane %v1880, 5
    %v1883 = vor.u32 %v1879, %v1882
    %v1884 = vrot.slane %v1883, 4
    %v1886 = vshll.u32 %v1249, 16
    %v1888 = vrot.slane %v1886, 5
    %v1889 = vsel %vm1299, %v1884, %v1888
    %v1890 = vshrl.u32 %v1249, 16
    %v1892 = vrot.slane %v1890, 4
    %v1893 = vor.u32 %v1892, %v1888
    %v1894 = vrot.slane %v1893, 4
    %v1896 = vshll.u32 %v1289, 16
    %v1898 = vrot.slane %v1896, 5
    %v1899 = vsel %vm1299, %v1894, %v1898
    %v1901 = vshrl.u32 %v1250, 16
    %v1903 = vrot.slane %v1901, 4
    %v1904 = vshll.u32 %v1250, 16
    %v1906 = vrot.slane %v1904, 5
    %v1907 = vor.u32 %v1903, %v1906
    %v1908 = vrot.slane %v1907, 4
    %v1910 = vshll.u32 %v1251, 16
    %v1912 = vrot.slane %v1910, 5
    %v1913 = vsel %vm1299, %v1908, %v1912
    %v1914 = vshrl.u32 %v1251, 16
    %v1916 = vrot.slane %v1914, 4
    %v1917 = vor.u32 %v1916, %v1912
    %v1918 = vrot.slane %v1917, 4
    %v1920 = vshll.u32 %v1290, 16
    %v1922 = vrot.slane %v1920, 5
    %v1923 = vsel %vm1299, %v1918, %v1922
    %v1925 = vshrl.u32 %v1252, 16
    %v1927 = vrot.slane %v1925, 4
    %v1928 = vshll.u32 %v1252, 16
    %v1930 = vrot.slane %v1928, 5
    %v1931 = vor.u32 %v1927, %v1930
    %v1932 = vrot.slane %v1931, 4
    %v1934 = vshll.u32 %v1253, 16
    %v1936 = vrot.slane %v1934, 5
    %v1937 = vsel %vm1299, %v1932, %v1936
    %v1938 = vshrl.u32 %v1253, 16
    %v1940 = vrot.slane %v1938, 4
    %v1941 = vor.u32 %v1940, %v1936
    %v1942 = vrot.slane %v1941, 4
    %v1944 = vshll.u32 %v1291, 16
    %v1946 = vrot.slane %v1944, 5
    %v1947 = vsel %vm1299, %v1942, %v1946
    %v1949 = vshrl.u32 %v1254, 16
    %v1951 = vrot.slane %v1949, 4
    %v1952 = vshll.u32 %v1254, 16
    %v1954 = vrot.slane %v1952, 5
    %v1955 = vor.u32 %v1951, %v1954
    %v1956 = vrot.slane %v1955, 4
    %v1958 = vshll.u32 %v1255, 16
    %v1960 = vrot.slane %v1958, 5
    %v1961 = vsel %vm1299, %v1956, %v1960
    %v1962 = vshrl.u32 %v1255, 16
    %v1964 = vrot.slane %v1962, 4
    %v1965 = vor.u32 %v1964, %v1960
    %v1966 = vrot.slane %v1965, 4
    %v1968 = vshll.u32 %v1292, 16
    %v1970 = vrot.slane %v1968, 5
    %v1971 = vsel %vm1299, %v1966, %v1970
    %v1973 = vshrl.u32 %v1256, 16
    %v1975 = vrot.slane %v1973, 4
    %v1976 = vshll.u32 %v1256, 16
    %v1978 = vrot.slane %v1976, 5
    %v1979 = vor.u32 %v1975, %v1978
    %v1980 = vrot.slane %v1979, 4
    %v1982 = vshll.u32 %v1257, 16
    %v1984 = vrot.slane %v1982, 5
    %v1985 = vsel %vm1299, %v1980, %v1984
    %v1986 = vshrl.u32 %v1257, 16
    %v1988 = vrot.slane %v1986, 4
    %v1989 = vor.u32 %v1988, %v1984
    %v1990 = vrot.slane %v1989, 4
    %v1992 = vshll.u32 %v1293, 16
    %v1994 = vrot.slane %v1992, 5
    %v1995 = vsel %vm1299, %v1990, %v1994
    %v1997 = vshrl.u32 %v1258, 16
    %v1999 = vrot.slane %v1997, 4
    %v2000 = vshll.u32 %v1258, 16
    %v2002 = vrot.slane %v2000, 5
    %v2003 = vor.u32 %v1999, %v2002
    %v2004 = vrot.slane %v2003, 4
    %v2006 = vshll.u32 %v1259, 16
    %v2008 = vrot.slane %v2006, 5
    %v2009 = vsel %vm1299, %v2004, %v2008
    %v2010 = vshrl.u32 %v1259, 16
    %v2012 = vrot.slane %v2010, 4
    %v2013 = vor.u32 %v2012, %v2008
    %v2014 = vrot.slane %v2013, 4
    %v2016 = vshll.u32 %v1294, 16
    %v2018 = vrot.slane %v2016, 5
    %v2019 = vsel %vm1299, %v2014, %v2018
    %v2021 = vshrl.u32 %v1260, 16
    %v2023 = vrot.slane %v2021, 4
    %v2024 = vshll.u32 %v1260, 16
    %v2026 = vrot.slane %v2024, 5
    %v2027 = vor.u32 %v2023, %v2026
    %v2028 = vrot.slane %v2027, 4
    %v2030 = vshll.u32 %v1261, 16
    %v2032 = vrot.slane %v2030, 5
    %v2033 = vsel %vm1299, %v2028, %v2032
    %v2034 = vshrl.u32 %v1261, 16
    %v2036 = vrot.slane %v2034, 4
    %v2037 = vor.u32 %v2036, %v2032
    %v2038 = vrot.slane %v2037, 4
    %v2040 = vshll.u32 %v1295, 16
    %v2042 = vrot.slane %v2040, 5
    %v2043 = vsel %vm1299, %v2038, %v2042
    %v2045 = vshrl.u32 %v1262, 16
    %v2047 = vrot.slane %v2045, 4
    %v2048 = vshll.u32 %v1262, 16
    %v2050 = vrot.slane %v2048, 5
    %v2051 = vor.u32 %v2047, %v2050
    %v2052 = vrot.slane %v2051, 4
    %v2054 = vshll.u32 %v1263, 16
    %v2056 = vrot.slane %v2054, 5
    %v2057 = vsel %vm1299, %v2052, %v2056
    %v2058 = vshrl.u32 %v1263, 16
    %v2060 = vrot.slane %v2058, 4
    %v2061 = vor.u32 %v2060, %v2056
    %v2062 = vrot.slane %v2061, 4
    %v2064 = vshll.u32 %v1296, 16
    %v2066 = vrot.slane %v2064, 5
    %v2067 = vsel %vm1299, %v2062, %v2066
    %v2069 = vunpack.c.l.b16 %v1264
    %v2070 = vpack.c.b16 %v2069, %v2069
    %2071 = vrot.lane.b32.xlu0 %v2070, 124
    %v2072 = vpop.permute.xlu0 %2071
    %v2073 = vunpack.c.l.b16 %v1313
    %v2074 = vunpack.c.l.b16 %v1323
    %v2075 = vunpack.c.l.b16 %v1337
    %v2076 = vunpack.c.l.b16 %v1347
    %v2077 = vunpack.c.l.b16 %v1361
    %v2078 = vunpack.c.l.b16 %v1371
    %v2079 = vunpack.c.l.b16 %v1385
    %v2080 = vunpack.c.l.b16 %v1395
    %v2081 = vunpack.c.l.b16 %v1409
    %v2082 = vunpack.c.l.b16 %v1419
    %v2083 = vunpack.c.l.b16 %v1433
    %v2084 = vunpack.c.l.b16 %v1443
    %v2085 = vunpack.c.l.b16 %v1457
    %v2086 = vunpack.c.l.b16 %v1467
    %v2087 = vunpack.c.l.b16 %v1481
    %v2088 = vunpack.c.l.b16 %v1491
    %v2089 = vunpack.c.l.b16 %v1505
    %v2090 = vunpack.c.l.b16 %v1515
    %v2091 = vunpack.c.l.b16 %v1529
    %v2092 = vunpack.c.l.b16 %v1539
    %v2093 = vunpack.c.l.b16 %v1553
    %v2094 = vunpack.c.l.b16 %v1563
    %v2095 = vunpack.c.l.b16 %v1577
    %v2096 = vunpack.c.l.b16 %v1587
    %v2097 = vunpack.c.l.b16 %v1601
    %v2098 = vunpack.c.l.b16 %v1611
    %v2099 = vunpack.c.l.b16 %v1625
    %v2100 = vunpack.c.l.b16 %v1635
    %v2101 = vunpack.c.l.b16 %v1649
    %v2102 = vunpack.c.l.b16 %v1659
    %v2103 = vunpack.c.l.b16 %v1673
    %v2104 = vunpack.c.l.b16 %v1683
    %v2105 = vunpack.c.l.b16 %v1697
    %v2106 = vunpack.c.l.b16 %v1707
    %v2107 = vunpack.c.l.b16 %v1721
    %v2108 = vunpack.c.l.b16 %v1731
    %v2109 = vunpack.c.l.b16 %v1745
    %v2110 = vunpack.c.l.b16 %v1755
    %v2111 = vunpack.c.l.b16 %v1769
    %v2112 = vunpack.c.l.b16 %v1779
    %v2113 = vunpack.c.l.b16 %v1793
    %v2114 = vunpack.c.l.b16 %v1803
    %v2115 = vunpack.c.l.b16 %v1817
    %v2116 = vunpack.c.l.b16 %v1827
    %v2117 = vunpack.c.l.b16 %v1841
    %v2118 = vunpack.c.l.b16 %v1851
    %v2119 = vunpack.c.l.b16 %v1865
    %v2120 = vunpack.c.l.b16 %v1875
    %v2121 = vunpack.c.l.b16 %v1889
    %v2122 = vunpack.c.l.b16 %v1899
    %v2123 = vunpack.c.l.b16 %v1913
    %v2124 = vunpack.c.l.b16 %v1923
    %v2125 = vunpack.c.l.b16 %v1937
    %v2126 = vunpack.c.l.b16 %v1947
    %v2127 = vunpack.c.l.b16 %v1961
    %v2128 = vunpack.c.l.b16 %v1971
    %v2129 = vunpack.c.l.b16 %v1985
    %v2130 = vunpack.c.l.b16 %v1995
    %v2131 = vunpack.c.l.b16 %v2009
    %v2132 = vunpack.c.l.b16 %v2019
    %v2133 = vunpack.c.l.b16 %v2033
    %v2134 = vunpack.c.l.b16 %v2043
    %v2135 = vunpack.c.l.b16 %v2057
    %v2136 = vunpack.c.l.b16 %v2067
    %v2137 = vpack.c.b16 %v2074, %v2073
    %v2138 = vpack.c.b16 %v2076, %v2075
    %v2139 = vpack.c.b16 %v2078, %v2077
    %v2140 = vpack.c.b16 %v2080, %v2079
    %v2141 = vpack.c.b16 %v2082, %v2081
    %v2142 = vpack.c.b16 %v2084, %v2083
    %v2143 = vpack.c.b16 %v2086, %v2085
    %v2144 = vpack.c.b16 %v2088, %v2087
    %v2145 = vpack.c.b16 %v2090, %v2089
    %v2146 = vpack.c.b16 %v2092, %v2091
    %v2147 = vpack.c.b16 %v2094, %v2093
    %v2148 = vpack.c.b16 %v2096, %v2095
    %v2149 = vpack.c.b16 %v2098, %v2097
    %v2150 = vpack.c.b16 %v2100, %v2099
    %v2151 = vpack.c.b16 %v2102, %v2101
    %v2152 = vpack.c.b16 %v2104, %v2103
    %v2153 = vpack.c.b16 %v2106, %v2105
    %v2154 = vpack.c.b16 %v2108, %v2107
    %v2155 = vpack.c.b16 %v2110, %v2109
    %v2156 = vpack.c.b16 %v2112, %v2111
    %v2157 = vpack.c.b16 %v2114, %v2113
    %v2158 = vpack.c.b16 %v2116, %v2115
    %v2159 = vpack.c.b16 %v2118, %v2117
    %v2160 = vpack.c.b16 %v2120, %v2119
    %v2161 = vpack.c.b16 %v2122, %v2121
    %v2162 = vpack.c.b16 %v2124, %v2123
    %v2163 = vpack.c.b16 %v2126, %v2125
    %v2164 = vpack.c.b16 %v2128, %v2127
    %v2165 = vpack.c.b16 %v2130, %v2129
    %v2166 = vpack.c.b16 %v2132, %v2131
    %v2167 = vpack.c.b16 %v2134, %v2133
    %v2168 = vpack.c.b16 %v2136, %v2135
    %vm2169 = vcmask 31744
    %v2171 = vsel %vm2169, %v2072, 0
    %v2174 = vsel %vm2169, %v2137, 0
    %v2177 = vsel %vm2169, %v2138, 0
    %v2180 = vsel %vm2169, %v2139, 0
    %v2183 = vsel %vm2169, %v2140, 0
    %v2186 = vsel %vm2169, %v2141, 0
    %v2189 = vsel %vm2169, %v2142, 0
    %v2192 = vsel %vm2169, %v2143, 0
    %v2195 = vsel %vm2169, %v2144, 0
    %v2198 = vsel %vm2169, %v2145, 0
    %v2201 = vsel %vm2169, %v2146, 0
    %v2204 = vsel %vm2169, %v2147, 0
    %v2207 = vsel %vm2169, %v2148, 0
    %v2210 = vsel %vm2169, %v2149, 0
    %v2213 = vsel %vm2169, %v2150, 0
    %v2216 = vsel %vm2169, %v2151, 0
    %v2219 = vsel %vm2169, %v2152, 0
    %v2222 = vsel %vm2169, %v2153, 0
    %v2225 = vsel %vm2169, %v2154, 0
    %v2228 = vsel %vm2169, %v2155, 0
    %v2231 = vsel %vm2169, %v2156, 0
    %v2234 = vsel %vm2169, %v2157, 0
    %v2237 = vsel %vm2169, %v2158, 0
    %v2240 = vsel %vm2169, %v2159, 0
    %v2243 = vsel %vm2169, %v2160, 0
    %v2246 = vsel %vm2169, %v2161, 0
    %v2249 = vsel %vm2169, %v2162, 0
    %v2252 = vsel %vm2169, %v2163, 0
    %v2255 = vsel %vm2169, %v2164, 0
    %v2258 = vsel %vm2169, %v2165, 0
    %v2261 = vsel %vm2169, %v2166, 0
    %v2264 = vsel %vm2169, %v2167, 0
    %v2267 = vsel %vm2169, %v2168, 0
    %2269 = vmatprep.subr.bf16.mxu0 0
    %2270 = vmatpush1.bf16.xpose.msra.mxu0 %v2174
    %2271 = vmatprep.subr.bf16.mxu0 0
    %2272 = vmatpush1.bf16.xpose.msra.mxu0 %v2177
    %2273 = vmatprep.subr.bf16.mxu0 0
    %2274 = vmatpush1.bf16.xpose.msra.mxu0 %v2180
    %2275 = vmatprep.subr.bf16.mxu0 0
    %2276 = vmatpush1.bf16.xpose.msra.mxu0 %v2183
    %2277 = vmatprep.subr.bf16.mxu0 0
    %2278 = vmatpush1.bf16.xpose.msra.mxu0 %v2186
    %2279 = vmatprep.subr.bf16.mxu0 0
    %2280 = vmatpush1.bf16.xpose.msra.mxu0 %v2189
    %2281 = vmatprep.subr.bf16.mxu0 0
    %2282 = vmatpush1.bf16.xpose.msra.mxu0 %v2192
    %2283 = vmatprep.subr.bf16.mxu0 0
    %2284 = vmatpush1.bf16.xpose.msra.mxu0 %v2195
    %2285 = vmatprep.subr.bf16.mxu0 0
    %2286 = vmatpush1.bf16.xpose.msra.mxu0 %v2198
    %2287 = vmatprep.subr.bf16.mxu0 0
    %2288 = vmatpush1.bf16.xpose.msra.mxu0 %v2201
    %2289 = vmatprep.subr.bf16.mxu0 0
    %2290 = vmatpush1.bf16.xpose.msra.mxu0 %v2204
    %2291 = vmatprep.subr.bf16.mxu0 0
    %2292 = vmatpush1.bf16.xpose.msra.mxu0 %v2207
    %2293 = vmatprep.subr.bf16.mxu0 0
    %2294 = vmatpush1.bf16.xpose.msra.mxu0 %v2210
    %2295 = vmatprep.subr.bf16.mxu0 0
    %2296 = vmatpush1.bf16.xpose.msra.mxu0 %v2213
    %2297 = vmatprep.subr.bf16.mxu0 0
    %2298 = vmatpush1.bf16.xpose.msra.mxu0 %v2216
    %2299 = vmatprep.subr.bf16.mxu0 0
    %2300 = vmatpush1.bf16.xpose.msra.mxu0 %v2219
    %2301 = vmatprep.mubr.bf16.mxu0 0
    %2302 = vmatmul.mubr.bf16.gmra.mrb[0].mxu0 %v2171
    %v2303 = vpop.f32.mrb[0].mxu0
    %v2304 = vadd.f32 0.0, %v2303
    %v2305 = vpop.f32.mrb[0].mxu0
    %v2306 = vadd.f32 0.0, %v2305
    %v2307 = vpop.f32.mrb[0].mxu0
    %v2308 = vpop.f32.mrb[0].mxu0
    %2309 = vdwg.mxu0
    %2310 = vmatprep.subr.bf16.mxu0 0
    %2311 = vmatpush1.bf16.xpose.msra.mxu0 %v2222
    %2312 = vmatprep.subr.bf16.mxu0 0
    %2313 = vmatpush1.bf16.xpose.msra.mxu0 %v2225
    %2314 = vmatprep.subr.bf16.mxu0 0
    %2315 = vmatpush1.bf16.xpose.msra.mxu0 %v2228
    %2316 = vmatprep.subr.bf16.mxu0 0
    %2317 = vmatpush1.bf16.xpose.msra.mxu0 %v2231
    %2318 = vmatprep.subr.bf16.mxu0 0
    %2319 = vmatpush1.bf16.xpose.msra.mxu0 %v2234
    %2320 = vmatprep.subr.bf16.mxu0 0
    %2321 = vmatpush1.bf16.xpose.msra.mxu0 %v2237
    %2322 = vmatprep.subr.bf16.mxu0 0
    %2323 = vmatpush1.bf16.xpose.msra.mxu0 %v2240
    %2324 = vmatprep.subr.bf16.mxu0 0
    %2325 = vmatpush1.bf16.xpose.msra.mxu0 %v2243
    %2326 = vmatprep.subr.bf16.mxu0 0
    %2327 = vmatpush1.bf16.xpose.msra.mxu0 %v2246
    %2328 = vmatprep.subr.bf16.mxu0 0
    %2329 = vmatpush1.bf16.xpose.msra.mxu0 %v2249
    %2330 = vmatprep.subr.bf16.mxu0 0
    %2331 = vmatpush1.bf16.xpose.msra.mxu0 %v2252
    %2332 = vmatprep.subr.bf16.mxu0 0
    %2333 = vmatpush1.bf16.xpose.msra.mxu0 %v2255
    %2334 = vmatprep.subr.bf16.mxu0 0
    %2335 = vmatpush1.bf16.xpose.msra.mxu0 %v2258
    %2336 = vmatprep.subr.bf16.mxu0 0
    %2337 = vmatpush1.bf16.xpose.msra.mxu0 %v2261
    %2338 = vmatprep.subr.bf16.mxu0 0
    %2339 = vmatpush1.bf16.xpose.msra.mxu0 %v2264
    %2340 = vmatprep.subr.bf16.mxu0 0
    %2341 = vmatpush1.bf16.xpose.msra.mxu0 %v2267
    %2342 = vmatprep.mubr.bf16.mxu0 0
    %2343 = vmatmul.mubr.bf16.gmra.mrb[0].mxu0 %v2171
    %v2344 = vpop.f32.mrb[0].mxu0
    %v2345 = vadd.f32 0.0, %v2344
    %v2346 = vpop.f32.mrb[0].mxu0
    %v2347 = vadd.f32 0.0, %v2346
    %v2348 = vpop.f32.mrb[0].mxu0
    %v2349 = vpop.f32.mrb[0].mxu0
    %2350 = vdwg.mxu0
    %v2415 = vunpack.c.l.b16 %v1200
    %v2416 = vunpack.c.l.b16 %v1201
    %v2417 = vunpack.c.l.b16 %v1202
    %v2418 = vunpack.c.l.b16 %v1203
    %v2419 = vunpack.c.l.b16 %v1204
    %v2420 = vunpack.c.l.b16 %v1205
    %v2421 = vunpack.c.l.b16 %v1206
    %v2422 = vunpack.c.l.b16 %v1207
    %v2423 = vunpack.c.l.b16 %v1208
    %v2424 = vunpack.c.l.b16 %v1209
    %v2425 = vunpack.c.l.b16 %v1210
    %v2426 = vunpack.c.l.b16 %v1211
    %v2427 = vunpack.c.l.b16 %v1212
    %v2428 = vunpack.c.l.b16 %v1213
    %v2429 = vunpack.c.l.b16 %v1214
    %v2430 = vunpack.c.l.b16 %v1215
    %v2431 = vunpack.c.l.b16 %v1216
    %v2432 = vunpack.c.l.b16 %v1217
    %v2433 = vunpack.c.l.b16 %v1218
    %v2434 = vunpack.c.l.b16 %v1219
    %v2435 = vunpack.c.l.b16 %v1220
    %v2436 = vunpack.c.l.b16 %v1221
    %v2437 = vunpack.c.l.b16 %v1222
    %v2438 = vunpack.c.l.b16 %v1223
    %v2439 = vunpack.c.l.b16 %v1224
    %v2440 = vunpack.c.l.b16 %v1225
    %v2441 = vunpack.c.l.b16 %v1226
    %v2442 = vunpack.c.l.b16 %v1227
    %v2443 = vunpack.c.l.b16 %v1228
    %v2444 = vunpack.c.l.b16 %v1229
    %v2445 = vunpack.c.l.b16 %v1230
    %v2446 = vunpack.c.l.b16 %v1231
    %v2447 = vunpack.c.l.b16 %v1232
    %v2448 = vunpack.c.l.b16 %v1233
    %v2449 = vunpack.c.l.b16 %v1234
    %v2450 = vunpack.c.l.b16 %v1235
    %v2451 = vunpack.c.l.b16 %v1236
    %v2452 = vunpack.c.l.b16 %v1237
    %v2453 = vunpack.c.l.b16 %v1238
    %v2454 = vunpack.c.l.b16 %v1239
    %v2455 = vunpack.c.l.b16 %v1240
    %v2456 = vunpack.c.l.b16 %v1241
    %v2457 = vunpack.c.l.b16 %v1242
    %v2458 = vunpack.c.l.b16 %v1243
    %v2459 = vunpack.c.l.b16 %v1244
    %v2460 = vunpack.c.l.b16 %v1245
    %v2461 = vunpack.c.l.b16 %v1246
    %v2462 = vunpack.c.l.b16 %v1247
    %v2463 = vunpack.c.l.b16 %v1248
    %v2464 = vunpack.c.l.b16 %v1249
    %v2465 = vunpack.c.l.b16 %v1250
    %v2466 = vunpack.c.l.b16 %v1251
    %v2467 = vunpack.c.l.b16 %v1252
    %v2468 = vunpack.c.l.b16 %v1253
    %v2469 = vunpack.c.l.b16 %v1254
    %v2470 = vunpack.c.l.b16 %v1255
    %v2471 = vunpack.c.l.b16 %v1256
    %v2472 = vunpack.c.l.b16 %v1257
    %v2473 = vunpack.c.l.b16 %v1258
    %v2474 = vunpack.c.l.b16 %v1259
    %v2475 = vunpack.c.l.b16 %v1260
    %v2476 = vunpack.c.l.b16 %v1261
    %v2477 = vunpack.c.l.b16 %v1262
    %v2478 = vunpack.c.l.b16 %v1263
    %v2479 = vpack.c.b16 %v2416, %v2415
    %v2480 = vpack.c.b16 %v2418, %v2417
    %v2481 = vpack.c.b16 %v2420, %v2419
    %v2482 = vpack.c.b16 %v2422, %v2421
    %v2483 = vpack.c.b16 %v2424, %v2423
    %v2484 = vpack.c.b16 %v2426, %v2425
    %v2485 = vpack.c.b16 %v2428, %v2427
    %v2486 = vpack.c.b16 %v2430, %v2429
    %v2487 = vpack.c.b16 %v2432, %v2431
    %v2488 = vpack.c.b16 %v2434, %v2433
    %v2489 = vpack.c.b16 %v2436, %v2435
    %v2490 = vpack.c.b16 %v2438, %v2437
    %v2491 = vpack.c.b16 %v2440, %v2439
    %v2492 = vpack.c.b16 %v2442, %v2441
    %v2493 = vpack.c.b16 %v2444, %v2443
    %v2494 = vpack.c.b16 %v2446, %v2445
    %v2495 = vpack.c.b16 %v2448, %v2447
    %v2496 = vpack.c.b16 %v2450, %v2449
    %v2497 = vpack.c.b16 %v2452, %v2451
    %v2498 = vpack.c.b16 %v2454, %v2453
    %v2499 = vpack.c.b16 %v2456, %v2455
    %v2500 = vpack.c.b16 %v2458, %v2457
    %v2501 = vpack.c.b16 %v2460, %v2459
    %v2502 = vpack.c.b16 %v2462, %v2461
    %v2503 = vpack.c.b16 %v2464, %v2463
    %v2504 = vpack.c.b16 %v2466, %v2465
    %v2505 = vpack.c.b16 %v2468, %v2467
    %v2506 = vpack.c.b16 %v2470, %v2469
    %v2507 = vpack.c.b16 %v2472, %v2471
    %v2508 = vpack.c.b16 %v2474, %v2473
    %v2509 = vpack.c.b16 %v2476, %v2475
    %v2510 = vpack.c.b16 %v2478, %v2477
    %v2512 = vsel %vm2169, %v1264, 0
    %v2515 = vsel %vm2169, %v2479, 0
    %v2518 = vsel %vm2169, %v2480, 0
    %v2521 = vsel %vm2169, %v2481, 0
    %v2524 = vsel %vm2169, %v2482, 0
    %v2527 = vsel %vm2169, %v2483, 0
    %v2530 = vsel %vm2169, %v2484, 0
    %v2533 = vsel %vm2169, %v2485, 0
    %v2536 = vsel %vm2169, %v2486, 0
    %v2539 = vsel %vm2169, %v2487, 0
    %v2542 = vsel %vm2169, %v2488, 0
    %v2545 = vsel %vm2169, %v2489, 0
    %v2548 = vsel %vm2169, %v2490, 0
    %v2551 = vsel %vm2169, %v2491, 0
    %v2554 = vsel %vm2169, %v2492, 0
    %v2557 = vsel %vm2169, %v2493, 0
    %v2560 = vsel %vm2169, %v2494, 0
    %v2563 = vsel %vm2169, %v2495, 0
    %v2566 = vsel %vm2169, %v2496, 0
    %v2569 = vsel %vm2169, %v2497, 0
    %v2572 = vsel %vm2169, %v2498, 0
    %v2575 = vsel %vm2169, %v2499, 0
    %v2578 = vsel %vm2169, %v2500, 0
    %v2581 = vsel %vm2169, %v2501, 0
    %v2584 = vsel %vm2169, %v2502, 0
    %v2587 = vsel %vm2169, %v2503, 0
    %v2590 = vsel %vm2169, %v2504, 0
    %v2593 = vsel %vm2169, %v2505, 0
    %v2596 = vsel %vm2169, %v2506, 0
    %v2599 = vsel %vm2169, %v2507, 0
    %v2602 = vsel %vm2169, %v2508, 0
    %v2605 = vsel %vm2169, %v2509, 0
    %v2608 = vsel %vm2169, %v2510, 0
    %2610 = vmatprep.subr.bf16.mxu0 0
    %2611 = vmatpush1.bf16.xpose.msra.mxu0 %v2515
    %2612 = vmatprep.subr.bf16.mxu0 0
    %2613 = vmatpush1.bf16.xpose.msra.mxu0 %v2518
    %2614 = vmatprep.subr.bf16.mxu0 0
    %2615 = vmatpush1.bf16.xpose.msra.mxu0 %v2521
    %2616 = vmatprep.subr.bf16.mxu0 0
    %2617 = vmatpush1.bf16.xpose.msra.mxu0 %v2524
    %2618 = vmatprep.subr.bf16.mxu0 0
    %2619 = vmatpush1.bf16.xpose.msra.mxu0 %v2527
    %2620 = vmatprep.subr.bf16.mxu0 0
    %2621 = vmatpush1.bf16.xpose.msra.mxu0 %v2530
    %2622 = vmatprep.subr.bf16.mxu0 0
    %2623 = vmatpush1.bf16.xpose.msra.mxu0 %v2533
    %2624 = vmatprep.subr.bf16.mxu0 0
    %2625 = vmatpush1.bf16.xpose.msra.mxu0 %v2536
    %2626 = vmatprep.subr.bf16.mxu0 0
    %2627 = vmatpush1.bf16.xpose.msra.mxu0 %v2539
    %2628 = vmatprep.subr.bf16.mxu0 0
    %2629 = vmatpush1.bf16.xpose.msra.mxu0 %v2542
    %2630 = vmatprep.subr.bf16.mxu0 0
    %2631 = vmatpush1.bf16.xpose.msra.mxu0 %v2545
    %2632 = vmatprep.subr.bf16.mxu0 0
    %2633 = vmatpush1.bf16.xpose.msra.mxu0 %v2548
    %2634 = vmatprep.subr.bf16.mxu0 0
    %2635 = vmatpush1.bf16.xpose.msra.mxu0 %v2551
    %2636 = vmatprep.subr.bf16.mxu0 0
    %2637 = vmatpush1.bf16.xpose.msra.mxu0 %v2554
    %2638 = vmatprep.subr.bf16.mxu0 0
    %2639 = vmatpush1.bf16.xpose.msra.mxu0 %v2557
    %2640 = vmatprep.subr.bf16.mxu0 0
    %2641 = vmatpush1.bf16.xpose.msra.mxu0 %v2560
    %2642 = vmatprep.mubr.bf16.mxu0 0
    %2643 = vmatmul.mubr.bf16.gmra.mrb[0].mxu0 %v2512
    %v2644 = vpop.f32.mrb[0].mxu0
    %v2645 = vadd.f32 %v2304, %v2644
    %v2646 = vpop.f32.mrb[0].mxu0
    %v2647 = vadd.f32 %v2306, %v2646
    %v2648 = vpop.f32.mrb[0].mxu0
    %v2649 = vpop.f32.mrb[0].mxu0
    %2650 = vdwg.mxu0
    %2651 = vmatprep.subr.bf16.mxu0 0
    %2652 = vmatpush1.bf16.xpose.msra.mxu0 %v2563
    %2653 = vmatprep.subr.bf16.mxu0 0
    %2654 = vmatpush1.bf16.xpose.msra.mxu0 %v2566
    %2655 = vmatprep.subr.bf16.mxu0 0
    %2656 = vmatpush1.bf16.xpose.msra.mxu0 %v2569
    %2657 = vmatprep.subr.bf16.mxu0 0
    %2658 = vmatpush1.bf16.xpose.msra.mxu0 %v2572
    %2659 = vmatprep.subr.bf16.mxu0 0
    %2660 = vmatpush1.bf16.xpose.msra.mxu0 %v2575
    %2661 = vmatprep.subr.bf16.mxu0 0
    %2662 = vmatpush1.bf16.xpose.msra.mxu0 %v2578
    %2663 = vmatprep.subr.bf16.mxu0 0
    %2664 = vmatpush1.bf16.xpose.msra.mxu0 %v2581
    %2665 = vmatprep.subr.bf16.mxu0 0
    %2666 = vmatpush1.bf16.xpose.msra.mxu0 %v2584
    %2667 = vmatprep.subr.bf16.mxu0 0
    %2668 = vmatpush1.bf16.xpose.msra.mxu0 %v2587
    %2669 = vmatprep.subr.bf16.mxu0 0
    %2670 = vmatpush1.bf16.xpose.msra.mxu0 %v2590
    %2671 = vmatprep.subr.bf16.mxu0 0
    %2672 = vmatpush1.bf16.xpose.msra.mxu0 %v2593
    %2673 = vmatprep.subr.bf16.mxu0 0
    %2674 = vmatpush1.bf16.xpose.msra.mxu0 %v2596
    %2675 = vmatprep.subr.bf16.mxu0 0
    %2676 = vmatpush1.bf16.xpose.msra.mxu0 %v2599
    %2677 = vmatprep.subr.bf16.mxu0 0
    %2678 = vmatpush1.bf16.xpose.msra.mxu0 %v2602
    %2679 = vmatprep.subr.bf16.mxu0 0
    %2680 = vmatpush1.bf16.xpose.msra.mxu0 %v2605
    %2681 = vmatprep.subr.bf16.mxu0 0
    %2682 = vmatpush1.bf16.xpose.msra.mxu0 %v2608
    %2683 = vmatprep.mubr.bf16.mxu0 0
    %2684 = vmatmul.mubr.bf16.gmra.mrb[0].mxu0 %v2512
    %v2685 = vpop.f32.mrb[0].mxu0
    %v2686 = vadd.f32 %v2345, %v2685
    %v2687 = vpop.f32.mrb[0].mxu0
    %v2688 = vadd.f32 %v2347, %v2687
    %v2689 = vpop.f32.mrb[0].mxu0
    %v2690 = vpop.f32.mrb[0].mxu0
    %2691 = vdwg.mxu0
    %v2692 = vld [vmem:[#allocation2] sm:$0xe]
    %v2693 = vld [vmem:[#allocation2 + $0xc] sm:$0xe]
    %v2694 = vld [vmem:[#allocation2 + $0x18] sm:$0xe]
    %v2695 = vld [vmem:[#allocation2 + $0x24] sm:$0xe]
    %v2696 = vld [vmem:[#allocation2 + $0x30] sm:$0xe]
    %v2697 = vld [vmem:[#allocation2 + $0x3c] sm:$0xe]
    %v2698 = vld [vmem:[#allocation2 + $0x48] sm:$0xe]
    %v2699 = vld [vmem:[#allocation2 + $0x54] sm:$0xe]
    %v2700 = vld [vmem:[#allocation2 + $0x60] sm:$0xe]
    %v2701 = vld [vmem:[#allocation2 + $0x6c] sm:$0xe]
    %v2702 = vld [vmem:[#allocation2 + $0x78] sm:$0xe]
    %v2703 = vld [vmem:[#allocation2 + $0x84] sm:$0xe]
    %v2704 = vld [vmem:[#allocation2 + $0x90] sm:$0xe]
    %v2705 = vld [vmem:[#allocation2 + $0x9c] sm:$0xe]
    %v2706 = vld [vmem:[#allocation2 + $0xa8] sm:$0xe]
    %v2707 = vld [vmem:[#allocation2 + $0xb4] sm:$0xe]
    %v2708 = vld [vmem:[#allocation2 + $0xd8] sm:$0xe]
    %v2709 = vld [vmem:[#allocation2 + $0xe4] sm:$0xe]
    %v2710 = vld [vmem:[#allocation2 + $0xf0] sm:$0xe]
    %v2711 = vld [vmem:[#allocation2 + $0xfc] sm:$0xe]
    %v2712 = vld [vmem:[#allocation2 + $0x108] sm:$0xe]
    %v2713 = vld [vmem:[#allocation2 + $0x114] sm:$0xe]
    %v2714 = vld [vmem:[#allocation2 + $0x120] sm:$0xe]
    %v2715 = vld [vmem:[#allocation2 + $0x12c] sm:$0xe]
    %v2716 = vld [vmem:[#allocation2 + $0x138] sm:$0xe]
    %v2717 = vld [vmem:[#allocation2 + $0x144] sm:$0xe]
    %v2718 = vld [vmem:[#allocation2 + $0x150] sm:$0xe]
    %v2719 = vld [vmem:[#allocation2 + $0x15c] sm:$0xe]
    %v2720 = vld [vmem:[#allocation2 + $0x168] sm:$0xe]
    %v2721 = vld [vmem:[#allocation2 + $0x174] sm:$0xe]
    %v2722 = vld [vmem:[#allocation2 + $0x180] sm:$0xe]
    %v2723 = vld [vmem:[#allocation2 + $0x18c] sm:$0xe]
    %vm2788 = vcmask 1042432
    %vm2789 = vcmask 1046532
    %vm2790 = vmor %vm2788, %vm2789
    %v2791 = vrot.slane %v2692, 5
    %v2792 = vrot.slane %v2791, 4
    %v2793 = vrot.slane %v1201, 5
    %v2794 = vsel %vm2790, %v2792, %v2793
    %v2795 = vrot.slane %v2793, 4
    %v2796 = vrot.slane %v1265, 5
    %v2797 = vsel %vm2790, %v2795, %v2796
    %v2798 = vrot.slane %v2693, 5
    %v2799 = vrot.slane %v2798, 4
    %v2800 = vrot.slane %v1203, 5
    %v2801 = vsel %vm2790, %v2799, %v2800
    %v2802 = vrot.slane %v2800, 4
    %v2803 = vrot.slane %v1266, 5
    %v2804 = vsel %vm2790, %v2802, %v2803
    %v2805 = vrot.slane %v2694, 5
    %v2806 = vrot.slane %v2805, 4
    %v2807 = vrot.slane %v1205, 5
    %v2808 = vsel %vm2790, %v2806, %v2807
    %v2809 = vrot.slane %v2807, 4
    %v2810 = vrot.slane %v1267, 5
    %v2811 = vsel %vm2790, %v2809, %v2810
    %v2812 = vrot.slane %v2695, 5
    %v2813 = vrot.slane %v2812, 4
    %v2814 = vrot.slane %v1207, 5
    %v2815 = vsel %vm2790, %v2813, %v2814
    %v2816 = vrot.slane %v2814, 4
    %v2817 = vrot.slane %v1268, 5
    %v2818 = vsel %vm2790, %v2816, %v2817
    %v2819 = vrot.slane %v2696, 5
    %v2820 = vrot.slane %v2819, 4
    %v2821 = vrot.slane %v1209, 5
    %v2822 = vsel %vm2790, %v2820, %v2821
    %v2823 = vrot.slane %v2821, 4
    %v2824 = vrot.slane %v1269, 5
    %v2825 = vsel %vm2790, %v2823, %v2824
    %v2826 = vrot.slane %v2697, 5
    %v2827 = vrot.slane %v2826, 4
    %v2828 = vrot.slane %v1211, 5
    %v2829 = vsel %vm2790, %v2827, %v2828
    %v2830 = vrot.slane %v2828, 4
    %v2831 = vrot.slane %v1270, 5
    %v2832 = vsel %vm2790, %v2830, %v2831
    %v2833 = vrot.slane %v2698, 5
    %v2834 = vrot.slane %v2833, 4
    %v2835 = vrot.slane %v1213, 5
    %v2836 = vsel %vm2790, %v2834, %v2835
    %v2837 = vrot.slane %v2835, 4
    %v2838 = vrot.slane %v1271, 5
    %v2839 = vsel %vm2790, %v2837, %v2838
    %v2840 = vrot.slane %v2699, 5
    %v2841 = vrot.slane %v2840, 4
    %v2842 = vrot.slane %v1215, 5
    %v2843 = vsel %vm2790, %v2841, %v2842
    %v2844 = vrot.slane %v2842, 4
    %v2845 = vrot.slane %v1272, 5
    %v2846 = vsel %vm2790, %v2844, %v2845
    %v2847 = vrot.slane %v2700, 5
    %v2848 = vrot.slane %v2847, 4
    %v2849 = vrot.slane %v1217, 5
    %v2850 = vsel %vm2790, %v2848, %v2849
    %v2851 = vrot.slane %v2849, 4
    %v2852 = vrot.slane %v1273, 5
    %v2853 = vsel %vm2790, %v2851, %v2852
    %v2854 = vrot.slane %v2701, 5
    %v2855 = vrot.slane %v2854, 4
    %v2856 = vrot.slane %v1219, 5
    %v2857 = vsel %vm2790, %v2855, %v2856
    %v2858 = vrot.slane %v2856, 4
    %v2859 = vrot.slane %v1274, 5
    %v2860 = vsel %vm2790, %v2858, %v2859
    %v2861 = vrot.slane %v2702, 5
    %v2862 = vrot.slane %v2861, 4
    %v2863 = vrot.slane %v1221, 5
    %v2864 = vsel %vm2790, %v2862, %v2863
    %v2865 = vrot.slane %v2863, 4
    %v2866 = vrot.slane %v1275, 5
    %v2867 = vsel %vm2790, %v2865, %v2866
    %v2868 = vrot.slane %v2703, 5
    %v2869 = vrot.slane %v2868, 4
    %v2870 = vrot.slane %v1223, 5
    %v2871 = vsel %vm2790, %v2869, %v2870
    %v2872 = vrot.slane %v2870, 4
    %v2873 = vrot.slane %v1276, 5
    %v2874 = vsel %vm2790, %v2872, %v2873
    %v2875 = vrot.slane %v2704, 5
    %v2876 = vrot.slane %v2875, 4
    %v2877 = vrot.slane %v1225, 5
    %v2878 = vsel %vm2790, %v2876, %v2877
    %v2879 = vrot.slane %v2877, 4
    %v2880 = vrot.slane %v1277, 5
    %v2881 = vsel %vm2790, %v2879, %v2880
    %v2882 = vrot.slane %v2705, 5
    %v2883 = vrot.slane %v2882, 4
    %v2884 = vrot.slane %v1227, 5
    %v2885 = vsel %vm2790, %v2883, %v2884
    %v2886 = vrot.slane %v2884, 4
    %v2887 = vrot.slane %v1278, 5
    %v2888 = vsel %vm2790, %v2886, %v2887
    %v2889 = vrot.slane %v2706, 5
    %v2890 = vrot.slane %v2889, 4
    %v2891 = vrot.slane %v1229, 5
    %v2892 = vsel %vm2790, %v2890, %v2891
    %v2893 = vrot.slane %v2891, 4
    %v2894 = vrot.slane %v1279, 5
    %v2895 = vsel %vm2790, %v2893, %v2894
    %v2896 = vrot.slane %v2707, 5
    %v2897 = vrot.slane %v2896, 4
    %v2898 = vrot.slane %v1231, 5
    %v2899 = vsel %vm2790, %v2897, %v2898
    %v2900 = vrot.slane %v2898, 4
    %v2901 = vrot.slane %v1280, 5
    %v2902 = vsel %vm2790, %v2900, %v2901
    %v2903 = vrot.slane %v2708, 5
    %v2904 = vrot.slane %v2903, 4
    %v2905 = vrot.slane %v1233, 5
    %v2906 = vsel %vm2790, %v2904, %v2905
    %v2907 = vrot.slane %v2905, 4
    %v2908 = vrot.slane %v1281, 5
    %v2909 = vsel %vm2790, %v2907, %v2908
    %v2910 = vrot.slane %v2709, 5
    %v2911 = vrot.slane %v2910, 4
    %v2912 = vrot.slane %v1235, 5
    %v2913 = vsel %vm2790, %v2911, %v2912
    %v2914 = vrot.slane %v2912, 4
    %v2915 = vrot.slane %v1282, 5
    %v2916 = vsel %vm2790, %v2914, %v2915
    %v2917 = vrot.slane %v2710, 5
    %v2918 = vrot.slane %v2917, 4
    %v2919 = vrot.slane %v1237, 5
    %v2920 = vsel %vm2790, %v2918, %v2919
    %v2921 = vrot.slane %v2919, 4
    %v2922 = vrot.slane %v1283, 5
    %v2923 = vsel %vm2790, %v2921, %v2922
    %v2924 = vrot.slane %v2711, 5
    %v2925 = vrot.slane %v2924, 4
    %v2926 = vrot.slane %v1239, 5
    %v2927 = vsel %vm2790, %v2925, %v2926
    %v2928 = vrot.slane %v2926, 4
    %v2929 = vrot.slane %v1284, 5
    %v2930 = vsel %vm2790, %v2928, %v2929
    %v2931 = vrot.slane %v2712, 5
    %v2932 = vrot.slane %v2931, 4
    %v2933 = vrot.slane %v1241, 5
    %v2934 = vsel %vm2790, %v2932, %v2933
    %v2935 = vrot.slane %v2933, 4
    %v2936 = vrot.slane %v1285, 5
    %v2937 = vsel %vm2790, %v2935, %v2936
    %v2938 = vrot.slane %v2713, 5
    %v2939 = vrot.slane %v2938, 4
    %v2940 = vrot.slane %v1243, 5
    %v2941 = vsel %vm2790, %v2939, %v2940
    %v2942 = vrot.slane %v2940, 4
    %v2943 = vrot.slane %v1286, 5
    %v2944 = vsel %vm2790, %v2942, %v2943
    %v2945 = vrot.slane %v2714, 5
    %v2946 = vrot.slane %v2945, 4
    %v2947 = vrot.slane %v1245, 5
    %v2948 = vsel %vm2790, %v2946, %v2947
    %v2949 = vrot.slane %v2947, 4
    %v2950 = vrot.slane %v1287, 5
    %v2951 = vsel %vm2790, %v2949, %v2950
    %v2952 = vrot.slane %v2715, 5
    %v2953 = vrot.slane %v2952, 4
    %v2954 = vrot.slane %v1247, 5
    %v2955 = vsel %vm2790, %v2953, %v2954
    %v2956 = vrot.slane %v2954, 4
    %v2957 = vrot.slane %v1288, 5
    %v2958 = vsel %vm2790, %v2956, %v2957
    %v2959 = vrot.slane %v2716, 5
    %v2960 = vrot.slane %v2959, 4
    %v2961 = vrot.slane %v1249, 5
    %v2962 = vsel %vm2790, %v2960, %v2961
    %v2963 = vrot.slane %v2961, 4
    %v2964 = vrot.slane %v1289, 5
    %v2965 = vsel %vm2790, %v2963, %v2964
    %v2966 = vrot.slane %v2717, 5
    %v2967 = vrot.slane %v2966, 4
    %v2968 = vrot.slane %v1251, 5
    %v2969 = vsel %vm2790, %v2967, %v2968
    %v2970 = vrot.slane %v2968, 4
    %v2971 = vrot.slane %v1290, 5
    %v2972 = vsel %vm2790, %v2970, %v2971
    %v2973 = vrot.slane %v2718, 5
    %v2974 = vrot.slane %v2973, 4
    %v2975 = vrot.slane %v1253, 5
    %v2976 = vsel %vm2790, %v2974, %v2975
    %v2977 = vrot.slane %v2975, 4
    %v2978 = vrot.slane %v1291, 5
    %v2979 = vsel %vm2790, %v2977, %v2978
    %v2980 = vrot.slane %v2719, 5
    %v2981 = vrot.slane %v2980, 4
    %v2982 = vrot.slane %v1255, 5
    %v2983 = vsel %vm2790, %v2981, %v2982
    %v2984 = vrot.slane %v2982, 4
    %v2985 = vrot.slane %v1292, 5
    %v2986 = vsel %vm2790, %v2984, %v2985
    %v2987 = vrot.slane %v2720, 5
    %v2988 = vrot.slane %v2987, 4
    %v2989 = vrot.slane %v1257, 5
    %v2990 = vsel %vm2790, %v2988, %v2989
    %v2991 = vrot.slane %v2989, 4
    %v2992 = vrot.slane %v1293, 5
    %v2993 = vsel %vm2790, %v2991, %v2992
    %v2994 = vrot.slane %v2721, 5
    %v2995 = vrot.slane %v2994, 4
    %v2996 = vrot.slane %v1259, 5
    %v2997 = vsel %vm2790, %v2995, %v2996
    %v2998 = vrot.slane %v2996, 4
    %v2999 = vrot.slane %v1294, 5
    %v3000 = vsel %vm2790, %v2998, %v2999
    %v3001 = vrot.slane %v2722, 5
    %v3002 = vrot.slane %v3001, 4
    %v3003 = vrot.slane %v1261, 5
    %v3004 = vsel %vm2790, %v3002, %v3003
    %v3005 = vrot.slane %v3003, 4
    %v3006 = vrot.slane %v1295, 5
    %v3007 = vsel %vm2790, %v3005, %v3006
    %v3008 = vrot.slane %v2723, 5
    %v3009 = vrot.slane %v3008, 4
    %v3010 = vrot.slane %v1263, 5
    %v3011 = vsel %vm2790, %v3009, %v3010
    %v3012 = vrot.slane %v3010, 4
    %v3013 = vrot.slane %v1296, 5
    %v3014 = vsel %vm2790, %v3012, %v3013
    %3015 = vrot.lane.b32.xlu0 %v2070, 120
    %v3016 = vpop.permute.xlu0 %3015
    %v3017 = vunpack.c.l.b16 %v2794
    %v3018 = vunpack.c.l.b16 %v2797
    %v3019 = vunpack.c.l.b16 %v2801
    %v3020 = vunpack.c.l.b16 %v2804
    %v3021 = vunpack.c.l.b16 %v2808
    %v3022 = vunpack.c.l.b16 %v2811
    %v3023 = vunpack.c.l.b16 %v2815
    %v3024 = vunpack.c.l.b16 %v2818
    %v3025 = vunpack.c.l.b16 %v2822
    %v3026 = vunpack.c.l.b16 %v2825
    %v3027 = vunpack.c.l.b16 %v2829
    %v3028 = vunpack.c.l.b16 %v2832
    %v3029 = vunpack.c.l.b16 %v2836
    %v3030 = vunpack.c.l.b16 %v2839
    %v3031 = vunpack.c.l.b16 %v2843
    %v3032 = vunpack.c.l.b16 %v2846
    %v3033 = vunpack.c.l.b16 %v2850
    %v3034 = vunpack.c.l.b16 %v2853
    %v3035 = vunpack.c.l.b16 %v2857
    %v3036 = vunpack.c.l.b16 %v2860
    %v3037 = vunpack.c.l.b16 %v2864
    %v3038 = vunpack.c.l.b16 %v2867
    %v3039 = vunpack.c.l.b16 %v2871
    %v3040 = vunpack.c.l.b16 %v2874
    %v3041 = vunpack.c.l.b16 %v2878
    %v3042 = vunpack.c.l.b16 %v2881
    %v3043 = vunpack.c.l.b16 %v2885
    %v3044 = vunpack.c.l.b16 %v2888
    %v3045 = vunpack.c.l.b16 %v2892
    %v3046 = vunpack.c.l.b16 %v2895
    %v3047 = vunpack.c.l.b16 %v2899
    %v3048 = vunpack.c.l.b16 %v2902
    %v3049 = vunpack.c.l.b16 %v2906
    %v3050 = vunpack.c.l.b16 %v2909
    %v3051 = vunpack.c.l.b16 %v2913
    %v3052 = vunpack.c.l.b16 %v2916
    %v3053 = vunpack.c.l.b16 %v2920
    %v3054 = vunpack.c.l.b16 %v2923
    %v3055 = vunpack.c.l.b16 %v2927
    %v3056 = vunpack.c.l.b16 %v2930
    %v3057 = vunpack.c.l.b16 %v2934
    %v3058 = vunpack.c.l.b16 %v2937
    %v3059 = vunpack.c.l.b16 %v2941
    %v3060 = vunpack.c.l.b16 %v2944
    %v3061 = vunpack.c.l.b16 %v2948
    %v3062 = vunpack.c.l.b16 %v2951
    %v3063 = vunpack.c.l.b16 %v2955
    %v3064 = vunpack.c.l.b16 %v2958
    %v3065 = vunpack.c.l.b16 %v2962
    %v3066 = vunpack.c.l.b16 %v2965
    %v3067 = vunpack.c.l.b16 %v2969
    %v3068 = vunpack.c.l.b16 %v2972
    %v3069 = vunpack.c.l.b16 %v2976
    %v3070 = vunpack.c.l.b16 %v2979
    %v3071 = vunpack.c.l.b16 %v2983
    %v3072 = vunpack.c.l.b16 %v2986
    %v3073 = vunpack.c.l.b16 %v2990
    %v3074 = vunpack.c.l.b16 %v2993
    %v3075 = vunpack.c.l.b16 %v2997
    %v3076 = vunpack.c.l.b16 %v3000
    %v3077 = vunpack.c.l.b16 %v3004
    %v3078 = vunpack.c.l.b16 %v3007
    %v3079 = vunpack.c.l.b16 %v3011
    %v3080 = vunpack.c.l.b16 %v3014
    %v3081 = vpack.c.b16 %v3018, %v3017
    %v3082 = vpack.c.b16 %v3020, %v3019
    %v3083 = vpack.c.b16 %v3022, %v3021
    %v3084 = vpack.c.b16 %v3024, %v3023
    %v3085 = vpack.c.b16 %v3026, %v3025
    %v3086 = vpack.c.b16 %v3028, %v3027
    %v3087 = vpack.c.b16 %v3030, %v3029
    %v3088 = vpack.c.b16 %v3032, %v3031
    %v3089 = vpack.c.b16 %v3034, %v3033
    %v3090 = vpack.c.b16 %v3036, %v3035
    %v3091 = vpack.c.b16 %v3038, %v3037
    %v3092 = vpack.c.b16 %v3040, %v3039
    %v3093 = vpack.c.b16 %v3042, %v3041
    %v3094 = vpack.c.b16 %v3044, %v3043
    %v3095 = vpack.c.b16 %v3046, %v3045
    %v3096 = vpack.c.b16 %v3048, %v3047
    %v3097 = vpack.c.b16 %v3050, %v3049
    %v3098 = vpack.c.b16 %v3052, %v3051
    %v3099 = vpack.c.b16 %v3054, %v3053
    %v3100 = vpack.c.b16 %v3056, %v3055
    %v3101 = vpack.c.b16 %v3058, %v3057
    %v3102 = vpack.c.b16 %v3060, %v3059
    %v3103 = vpack.c.b16 %v3062, %v3061
    %v3104 = vpack.c.b16 %v3064, %v3063
    %v3105 = vpack.c.b16 %v3066, %v3065
    %v3106 = vpack.c.b16 %v3068, %v3067
    %v3107 = vpack.c.b16 %v3070, %v3069
    %v3108 = vpack.c.b16 %v3072, %v3071
    %v3109 = vpack.c.b16 %v3074, %v3073
    %v3110 = vpack.c.b16 %v3076, %v3075
    %v3111 = vpack.c.b16 %v3078, %v3077
    %v3112 = vpack.c.b16 %v3080, %v3079
    %v3114 = vsel %vm2169, %v3016, 0
    %v3117 = vsel %vm2169, %v3081, 0
    %v3120 = vsel %vm2169, %v3082, 0
    %v3123 = vsel %vm2169, %v3083, 0
    %v3126 = vsel %vm2169, %v3084, 0
    %v3129 = vsel %vm2169, %v3085, 0
    %v3132 = vsel %vm2169, %v3086, 0
    %v3135 = vsel %vm2169, %v3087, 0
    %v3138 = vsel %vm2169, %v3088, 0
    %v3141 = vsel %vm2169, %v3089, 0
    %v3144 = vsel %vm2169, %v3090, 0
    %v3147 = vsel %vm2169, %v3091, 0
    %v3150 = vsel %vm2169, %v3092, 0
    %v3153 = vsel %vm2169, %v3093, 0
    %v3156 = vsel %vm2169, %v3094, 0
    %v3159 = vsel %vm2169, %v3095, 0
    %v3162 = vsel %vm2169, %v3096, 0
    %v3165 = vsel %vm2169, %v3097, 0
    %v3168 = vsel %vm2169, %v3098, 0
    %v3171 = vsel %vm2169, %v3099, 0
    %v3174 = vsel %vm2169, %v3100, 0
    %v3177 = vsel %vm2169, %v3101, 0
    %v3180 = vsel %vm2169, %v3102, 0
    %v3183 = vsel %vm2169, %v3103, 0
    %v3186 = vsel %vm2169, %v3104, 0
    %v3189 = vsel %vm2169, %v3105, 0
    %v3192 = vsel %vm2169, %v3106, 0
    %v3195 = vsel %vm2169, %v3107, 0
    %v3198 = vsel %vm2169, %v3108, 0
    %v3201 = vsel %vm2169, %v3109, 0
    %v3204 = vsel %vm2169, %v3110, 0
    %v3207 = vsel %vm2169, %v3111, 0
    %v3210 = vsel %vm2169, %v3112, 0
    %3212 = vmatprep.subr.bf16.mxu0 0
    %3213 = vmatpush1.bf16.xpose.msra.mxu0 %v3117
    %3214 = vmatprep.subr.bf16.mxu0 0
    %3215 = vmatpush1.bf16.xpose.msra.mxu0 %v3120
    %3216 = vmatprep.subr.bf16.mxu0 0
    %3217 = vmatpush1.bf16.xpose.msra.mxu0 %v3123
    %3218 = vmatprep.subr.bf16.mxu0 0
    %3219 = vmatpush1.bf16.xpose.msra.mxu0 %v3126
    %3220 = vmatprep.subr.bf16.mxu0 0
    %3221 = vmatpush1.bf16.xpose.msra.mxu0 %v3129
    %3222 = vmatprep.subr.bf16.mxu0 0
    %3223 = vmatpush1.bf16.xpose.msra.mxu0 %v3132
    %3224 = vmatprep.subr.bf16.mxu0 0
    %3225 = vmatpush1.bf16.xpose.msra.mxu0 %v3135
    %3226 = vmatprep.subr.bf16.mxu0 0
    %3227 = vmatpush1.bf16.xpose.msra.mxu0 %v3138
    %3228 = vmatprep.subr.bf16.mxu0 0
    %3229 = vmatpush1.bf16.xpose.msra.mxu0 %v3141
    %3230 = vmatprep.subr.bf16.mxu0 0
    %3231 = vmatpush1.bf16.xpose.msra.mxu0 %v3144
    %3232 = vmatprep.subr.bf16.mxu0 0
    %3233 = vmatpush1.bf16.xpose.msra.mxu0 %v3147
    %3234 = vmatprep.subr.bf16.mxu0 0
    %3235 = vmatpush1.bf16.xpose.msra.mxu0 %v3150
    %3236 = vmatprep.subr.bf16.mxu0 0
    %3237 = vmatpush1.bf16.xpose.msra.mxu0 %v3153
    %3238 = vmatprep.subr.bf16.mxu0 0
    %3239 = vmatpush1.bf16.xpose.msra.mxu0 %v3156
    %3240 = vmatprep.subr.bf16.mxu0 0
    %3241 = vmatpush1.bf16.xpose.msra.mxu0 %v3159
    %3242 = vmatprep.subr.bf16.mxu0 0
    %3243 = vmatpush1.bf16.xpose.msra.mxu0 %v3162
    %3244 = vmatprep.mubr.bf16.mxu0 0
    %3245 = vmatmul.mubr.bf16.gmra.mrb[0].mxu0 %v3114
    %v3246 = vpop.f32.mrb[0].mxu0
    %v3247 = vadd.f32 0.0, %v3246
    %v3248 = vpop.f32.mrb[0].mxu0
    %v3249 = vadd.f32 0.0, %v3248
    %v3250 = vpop.f32.mrb[0].mxu0
    %v3251 = vpop.f32.mrb[0].mxu0
    %3252 = vdwg.mxu0
    %3253 = vmatprep.subr.bf16.mxu0 0
    %3254 = vmatpush1.bf16.xpose.msra.mxu0 %v3165
    %3255 = vmatprep.subr.bf16.mxu0 0
    %3256 = vmatpush1.bf16.xpose.msra.mxu0 %v3168
    %3257 = vmatprep.subr.bf16.mxu0 0
    %3258 = vmatpush1.bf16.xpose.msra.mxu0 %v3171
    %3259 = vmatprep.subr.bf16.mxu0 0
    %3260 = vmatpush1.bf16.xpose.msra.mxu0 %v3174
    %3261 = vmatprep.subr.bf16.mxu0 0
    %3262 = vmatpush1.bf16.xpose.msra.mxu0 %v3177
    %3263 = vmatprep.subr.bf16.mxu0 0
    %3264 = vmatpush1.bf16.xpose.msra.mxu0 %v3180
    %3265 = vmatprep.subr.bf16.mxu0 0
    %3266 = vmatpush1.bf16.xpose.msra.mxu0 %v3183
    %3267 = vmatprep.subr.bf16.mxu0 0
    %3268 = vmatpush1.bf16.xpose.msra.mxu0 %v3186
    %3269 = vmatprep.subr.bf16.mxu0 0
    %3270 = vmatpush1.bf16.xpose.msra.mxu0 %v3189
    %3271 = vmatprep.subr.bf16.mxu0 0
    %3272 = vmatpush1.bf16.xpose.msra.mxu0 %v3192
    %3273 = vmatprep.subr.bf16.mxu0 0
    %3274 = vmatpush1.bf16.xpose.msra.mxu0 %v3195
    %3275 = vmatprep.subr.bf16.mxu0 0
    %3276 = vmatpush1.bf16.xpose.msra.mxu0 %v3198
    %3277 = vmatprep.subr.bf16.mxu0 0
    %3278 = vmatpush1.bf16.xpose.msra.mxu0 %v3201
    %3279 = vmatprep.subr.bf16.mxu0 0
    %3280 = vmatpush1.bf16.xpose.msra.mxu0 %v3204
    %3281 = vmatprep.subr.bf16.mxu0 0
    %3282 = vmatpush1.bf16.xpose.msra.mxu0 %v3207
    %3283 = vmatprep.subr.bf16.mxu0 0
    %3284 = vmatpush1.bf16.xpose.msra.mxu0 %v3210
    %3285 = vmatprep.mubr.bf16.mxu0 0
    %3286 = vmatmul.mubr.bf16.gmra.mrb[0].mxu0 %v3114
    %v3287 = vpop.f32.mrb[0].mxu0
    %v3288 = vadd.f32 0.0, %v3287
    %v3289 = vpop.f32.mrb[0].mxu0
    %v3290 = vadd.f32 0.0, %v3289
    %v3291 = vpop.f32.mrb[0].mxu0
    %v3292 = vpop.f32.mrb[0].mxu0
    %3293 = vdwg.mxu0
    %v3294 = vadd.f32 %v2645, %v3247
    %v3295 = vadd.f32 %v2647, %v3249
    %v3296 = vadd.f32 %v2686, %v3288
    %v3297 = vadd.f32 %v2688, %v3290
    %v3298 = vld [vmem:[%s970] sm:$0xf]
    %v3299 = vld [vmem:[%s970 + $0x4] sm:$0xf]
    %v3300 = vld [vmem:[%s970 + $0xc] sm:$0xf]
    %v3301 = vld [vmem:[%s970 + $0x10] sm:$0xf]
    %v3302 = vld [vmem:[%s970 + $0x18] sm:$0xf]
    %v3303 = vld [vmem:[%s970 + $0x1c] sm:$0xf]
    %v3304 = vld [vmem:[%s970 + $0x24] sm:$0xf]
    %v3305 = vld [vmem:[%s970 + $0x28] sm:$0xf]
    %v3306 = vld [vmem:[%s970 + $0x30] sm:$0xf]
    %v3307 = vld [vmem:[%s970 + $0x34] sm:$0xf]
    %v3308 = vld [vmem:[%s970 + $0x3c] sm:$0xf]
    %v3309 = vld [vmem:[%s970 + $0x40] sm:$0xf]
    %v3310 = vld [vmem:[%s970 + $0x48] sm:$0xf]
    %v3311 = vld [vmem:[%s970 + $0x4c] sm:$0xf]
    %v3312 = vld [vmem:[%s970 + $0x54] sm:$0xf]
    %v3313 = vld [vmem:[%s970 + $0x58] sm:$0xf]
    %v3314 = vld [vmem:[%s970 + $0x60] sm:$0xf]
    %v3315 = vld [vmem:[%s970 + $0x64] sm:$0xf]
    %v3316 = vld [vmem:[%s970 + $0x6c] sm:$0xf]
    %v3317 = vld [vmem:[%s970 + $0x70] sm:$0xf]
    %v3318 = vld [vmem:[%s970 + $0x78] sm:$0xf]
    %v3319 = vld [vmem:[%s970 + $0x7c] sm:$0xf]
    %v3320 = vld [vmem:[%s970 + $0x84] sm:$0xf]
    %v3321 = vld [vmem:[%s970 + $0x88] sm:$0xf]
    %v3322 = vld [vmem:[%s970 + $0x90] sm:$0xf]
    %v3323 = vld [vmem:[%s970 + $0x94] sm:$0xf]
    %v3324 = vld [vmem:[%s970 + $0x9c] sm:$0xf]
    %v3325 = vld [vmem:[%s970 + $0xa0] sm:$0xf]
    %v3326 = vld [vmem:[%s970 + $0xa8] sm:$0xf]
    %v3327 = vld [vmem:[%s970 + $0xac] sm:$0xf]
    %v3328 = vld [vmem:[%s970 + $0xb4] sm:$0xf]
    %v3329 = vld [vmem:[%s970 + $0xb8] sm:$0xf]
    %v3330 = vld [vmem:[%s970 + $0xd8] sm:$0xf]
    %v3331 = vld [vmem:[%s970 + $0xdc] sm:$0xf]
    %v3332 = vld [vmem:[%s970 + $0xe4] sm:$0xf]
    %v3333 = vld [vmem:[%s970 + $0xe8] sm:$0xf]
    %v3334 = vld [vmem:[%s970 + $0xf0] sm:$0xf]
    %v3335 = vld [vmem:[%s970 + $0xf4] sm:$0xf]
    %v3336 = vld [vmem:[%s970 + $0xfc] sm:$0xf]
    %v3337 = vld [vmem:[%s970 + $0x100] sm:$0xf]
    %v3338 = vld [vmem:[%s970 + $0x108] sm:$0xf]
    %v3339 = vld [vmem:[%s970 + $0x10c] sm:$0xf]
    %v3340 = vld [vmem:[%s970 + $0x114] sm:$0xf]
    %v3341 = vld [vmem:[%s970 + $0x118] sm:$0xf]
    %v3342 = vld [vmem:[%s970 + $0x120] sm:$0xf]
    %v3343 = vld [vmem:[%s970 + $0x124] sm:$0xf]
    %v3344 = vld [vmem:[%s970 + $0x12c] sm:$0xf]
    %v3345 = vld [vmem:[%s970 + $0x130] sm:$0xf]
    %v3346 = vld [vmem:[%s970 + $0x138] sm:$0xf]
    %v3347 = vld [vmem:[%s970 + $0x13c] sm:$0xf]
    %v3348 = vld [vmem:[%s970 + $0x144] sm:$0xf]
    %v3349 = vld [vmem:[%s970 + $0x148] sm:$0xf]
    %v3350 = vld [vmem:[%s970 + $0x150] sm:$0xf]
    %v3351 = vld [vmem:[%s970 + $0x154] sm:$0xf]
    %v3352 = vld [vmem:[%s970 + $0x15c] sm:$0xf]
    %v3353 = vld [vmem:[%s970 + $0x160] sm:$0xf]
    %v3354 = vld [vmem:[%s970 + $0x168] sm:$0xf]
    %v3355 = vld [vmem:[%s970 + $0x16c] sm:$0xf]
    %v3356 = vld [vmem:[%s970 + $0x174] sm:$0xf]
    %v3357 = vld [vmem:[%s970 + $0x178] sm:$0xf]
    %v3358 = vld [vmem:[%s970 + $0x180] sm:$0xf]
    %v3359 = vld [vmem:[%s970 + $0x184] sm:$0xf]
    %v3360 = vld [vmem:[%s970 + $0x18c] sm:$0xf]
    %v3361 = vld [vmem:[%s970 + $0x190] sm:$0xf]
    %3362 = vrot.lane.b32.xlu0 %v2070, 116
    %v3363 = vpop.permute.xlu0 %3362
    %v3428 = vunpack.c.l.b16 %v3298
    %v3429 = vunpack.c.l.b16 %v3299
    %v3430 = vunpack.c.l.b16 %v3300
    %v3431 = vunpack.c.l.b16 %v3301
    %v3432 = vunpack.c.l.b16 %v3302
    %v3433 = vunpack.c.l.b16 %v3303
    %v3434 = vunpack.c.l.b16 %v3304
    %v3435 = vunpack.c.l.b16 %v3305
    %v3436 = vunpack.c.l.b16 %v3306
    %v3437 = vunpack.c.l.b16 %v3307
    %v3438 = vunpack.c.l.b16 %v3308
    %v3439 = vunpack.c.l.b16 %v3309
    %v3440 = vunpack.c.l.b16 %v3310
    %v3441 = vunpack.c.l.b16 %v3311
    %v3442 = vunpack.c.l.b16 %v3312
    %v3443 = vunpack.c.l.b16 %v3313
    %v3444 = vunpack.c.l.b16 %v3314
    %v3445 = vunpack.c.l.b16 %v3315
    %v3446 = vunpack.c.l.b16 %v3316
    %v3447 = vunpack.c.l.b16 %v3317
    %v3448 = vunpack.c.l.b16 %v3318
    %v3449 = vunpack.c.l.b16 %v3319
    %v3450 = vunpack.c.l.b16 %v3320
    %v3451 = vunpack.c.l.b16 %v3321
    %v3452 = vunpack.c.l.b16 %v3322
    %v3453 = vunpack.c.l.b16 %v3323
    %v3454 = vunpack.c.l.b16 %v3324
    %v3455 = vunpack.c.l.b16 %v3325
    %v3456 = vunpack.c.l.b16 %v3326
    %v3457 = vunpack.c.l.b16 %v3327
    %v3458 = vunpack.c.l.b16 %v3328
    %v3459 = vunpack.c.l.b16 %v3329
    %v3460 = vunpack.c.l.b16 %v3330
    %v3461 = vunpack.c.l.b16 %v3331
    %v3462 = vunpack.c.l.b16 %v3332
    %v3463 = vunpack.c.l.b16 %v3333
    %v3464 = vunpack.c.l.b16 %v3334
    %v3465 = vunpack.c.l.b16 %v3335
    %v3466 = vunpack.c.l.b16 %v3336
    %v3467 = vunpack.c.l.b16 %v3337
    %v3468 = vunpack.c.l.b16 %v3338
    %v3469 = vunpack.c.l.b16 %v3339
    %v3470 = vunpack.c.l.b16 %v3340
    %v3471 = vunpack.c.l.b16 %v3341
    %v3472 = vunpack.c.l.b16 %v3342
    %v3473 = vunpack.c.l.b16 %v3343
    %v3474 = vunpack.c.l.b16 %v3344
    %v3475 = vunpack.c.l.b16 %v3345
    %v3476 = vunpack.c.l.b16 %v3346
    %v3477 = vunpack.c.l.b16 %v3347
    %v3478 = vunpack.c.l.b16 %v3348
    %v3479 = vunpack.c.l.b16 %v3349
    %v3480 = vunpack.c.l.b16 %v3350
    %v3481 = vunpack.c.l.b16 %v3351
    %v3482 = vunpack.c.l.b16 %v3352
    %v3483 = vunpack.c.l.b16 %v3353
    %v3484 = vunpack.c.l.b16 %v3354
    %v3485 = vunpack.c.l.b16 %v3355
    %v3486 = vunpack.c.l.b16 %v3356
    %v3487 = vunpack.c.l.b16 %v3357
    %v3488 = vunpack.c.l.b16 %v3358
    %v3489 = vunpack.c.l.b16 %v3359
    %v3490 = vunpack.c.l.b16 %v3360
    %v3491 = vunpack.c.l.b16 %v3361
    %v3492 = vpack.c.b16 %v3429, %v3428
    %v3493 = vpack.c.b16 %v3431, %v3430
    %v3494 = vpack.c.b16 %v3433, %v3432
    %v3495 = vpack.c.b16 %v3435, %v3434
    %v3496 = vpack.c.b16 %v3437, %v3436
    %v3497 = vpack.c.b16 %v3439, %v3438
    %v3498 = vpack.c.b16 %v3441, %v3440
    %v3499 = vpack.c.b16 %v3443, %v3442
    %v3500 = vpack.c.b16 %v3445, %v3444
    %v3501 = vpack.c.b16 %v3447, %v3446
    %v3502 = vpack.c.b16 %v3449, %v3448
    %v3503 = vpack.c.b16 %v3451, %v3450
    %v3504 = vpack.c.b16 %v3453, %v3452
    %v3505 = vpack.c.b16 %v3455, %v3454
    %v3506 = vpack.c.b16 %v3457, %v3456
    %v3507 = vpack.c.b16 %v3459, %v3458
    %v3508 = vpack.c.b16 %v3461, %v3460
    %v3509 = vpack.c.b16 %v3463, %v3462
    %v3510 = vpack.c.b16 %v3465, %v3464
    %v3511 = vpack.c.b16 %v3467, %v3466
    %v3512 = vpack.c.b16 %v3469, %v3468
    %v3513 = vpack.c.b16 %v3471, %v3470
    %v3514 = vpack.c.b16 %v3473, %v3472
    %v3515 = vpack.c.b16 %v3475, %v3474
    %v3516 = vpack.c.b16 %v3477, %v3476
    %v3517 = vpack.c.b16 %v3479, %v3478
    %v3518 = vpack.c.b16 %v3481, %v3480
    %v3519 = vpack.c.b16 %v3483, %v3482
    %v3520 = vpack.c.b16 %v3485, %v3484
    %v3521 = vpack.c.b16 %v3487, %v3486
    %v3522 = vpack.c.b16 %v3489, %v3488
    %v3523 = vpack.c.b16 %v3491, %v3490
    %v3525 = vsel %vm2169, %v3363, 0
    %v3528 = vsel %vm2169, %v3492, 0
    %v3531 = vsel %vm2169, %v3493, 0
    %v3534 = vsel %vm2169, %v3494, 0
    %v3537 = vsel %vm2169, %v3495, 0
    %v3540 = vsel %vm2169, %v3496, 0
    %v3543 = vsel %vm2169, %v3497, 0
    %v3546 = vsel %vm2169, %v3498, 0
    %v3549 = vsel %vm2169, %v3499, 0
    %v3552 = vsel %vm2169, %v3500, 0
    %v3555 = vsel %vm2169, %v3501, 0
    %v3558 = vsel %vm2169, %v3502, 0
    %v3561 = vsel %vm2169, %v3503, 0
    %v3564 = vsel %vm2169, %v3504, 0
    %v3567 = vsel %vm2169, %v3505, 0
    %v3570 = vsel %vm2169, %v3506, 0
    %v3573 = vsel %vm2169, %v3507, 0
    %v3576 = vsel %vm2169, %v3508, 0
    %v3579 = vsel %vm2169, %v3509, 0
    %v3582 = vsel %vm2169, %v3510, 0
    %v3585 = vsel %vm2169, %v3511, 0
    %v3588 = vsel %vm2169, %v3512, 0
    %v3591 = vsel %vm2169, %v3513, 0
    %v3594 = vsel %vm2169, %v3514, 0
    %v3597 = vsel %vm2169, %v3515, 0
    %v3600 = vsel %vm2169, %v3516, 0
    %v3603 = vsel %vm2169, %v3517, 0
    %v3606 = vsel %vm2169, %v3518, 0
    %v3609 = vsel %vm2169, %v3519, 0
    %v3612 = vsel %vm2169, %v3520, 0
    %v3615 = vsel %vm2169, %v3521, 0
    %v3618 = vsel %vm2169, %v3522, 0
    %v3621 = vsel %vm2169, %v3523, 0
    %3623 = vmatprep.subr.bf16.mxu0 0
    %3624 = vmatpush1.bf16.xpose.msra.mxu0 %v3528
    %3625 = vmatprep.subr.bf16.mxu0 0
    %3626 = vmatpush1.bf16.xpose.msra.mxu0 %v3531
    %3627 = vmatprep.subr.bf16.mxu0 0
    %3628 = vmatpush1.bf16.xpose.msra.mxu0 %v3534
    %3629 = vmatprep.subr.bf16.mxu0 0
    %3630 = vmatpush1.bf16.xpose.msra.mxu0 %v3537
    %3631 = vmatprep.subr.bf16.mxu0 0
    %3632 = vmatpush1.bf16.xpose.msra.mxu0 %v3540
    %3633 = vmatprep.subr.bf16.mxu0 0
    %3634 = vmatpush1.bf16.xpose.msra.mxu0 %v3543
    %3635 = vmatprep.subr.bf16.mxu0 0
    %3636 = vmatpush1.bf16.xpose.msra.mxu0 %v3546
    %3637 = vmatprep.subr.bf16.mxu0 0
    %3638 = vmatpush1.bf16.xpose.msra.mxu0 %v3549
    %3639 = vmatprep.subr.bf16.mxu0 0
    %3640 = vmatpush1.bf16.xpose.msra.mxu0 %v3552
    %3641 = vmatprep.subr.bf16.mxu0 0
    %3642 = vmatpush1.bf16.xpose.msra.mxu0 %v3555
    %3643 = vmatprep.subr.bf16.mxu0 0
    %3644 = vmatpush1.bf16.xpose.msra.mxu0 %v3558
    %3645 = vmatprep.subr.bf16.mxu0 0
    %3646 = vmatpush1.bf16.xpose.msra.mxu0 %v3561
    %3647 = vmatprep.subr.bf16.mxu0 0
    %3648 = vmatpush1.bf16.xpose.msra.mxu0 %v3564
    %3649 = vmatprep.subr.bf16.mxu0 0
    %3650 = vmatpush1.bf16.xpose.msra.mxu0 %v3567
    %3651 = vmatprep.subr.bf16.mxu0 0
    %3652 = vmatpush1.bf16.xpose.msra.mxu0 %v3570
    %3653 = vmatprep.subr.bf16.mxu0 0
    %3654 = vmatpush1.bf16.xpose.msra.mxu0 %v3573
    %3655 = vmatprep.mubr.bf16.mxu0 0
    %3656 = vmatmul.mubr.bf16.gmra.mrb[0].mxu0 %v3525
    %v3657 = vpop.f32.mrb[0].mxu0
    %v3658 = vadd.f32 0.0, %v3657
    %v3659 = vpop.f32.mrb[0].mxu0
    %v3660 = vadd.f32 0.0, %v3659
    %v3661 = vpop.f32.mrb[0].mxu0
    %v3662 = vpop.f32.mrb[0].mxu0
    %3663 = vdwg.mxu0
    %3664 = vmatprep.subr.bf16.mxu0 0
    %3665 = vmatpush1.bf16.xpose.msra.mxu0 %v3576
    %3666 = vmatprep.subr.bf16.mxu0 0
    %3667 = vmatpush1.bf16.xpose.msra.mxu0 %v3579
    %3668 = vmatprep.subr.bf16.mxu0 0
    %3669 = vmatpush1.bf16.xpose.msra.mxu0 %v3582
    %3670 = vmatprep.subr.bf16.mxu0 0
    %3671 = vmatpush1.bf16.xpose.msra.mxu0 %v3585
    %3672 = vmatprep.subr.bf16.mxu0 0
    %3673 = vmatpush1.bf16.xpose.msra.mxu0 %v3588
    %3674 = vmatprep.subr.bf16.mxu0 0
    %3675 = vmatpush1.bf16.xpose.msra.mxu0 %v3591
    %3676 = vmatprep.subr.bf16.mxu0 0
    %3677 = vmatpush1.bf16.xpose.msra.mxu0 %v3594
    %3678 = vmatprep.subr.bf16.mxu0 0
    %3679 = vmatpush1.bf16.xpose.msra.mxu0 %v3597
    %3680 = vmatprep.subr.bf16.mxu0 0
    %3681 = vmatpush1.bf16.xpose.msra.mxu0 %v3600
    %3682 = vmatprep.subr.bf16.mxu0 0
    %3683 = vmatpush1.bf16.xpose.msra.mxu0 %v3603
    %3684 = vmatprep.subr.bf16.mxu0 0
    %3685 = vmatpush1.bf16.xpose.msra.mxu0 %v3606
    %3686 = vmatprep.subr.bf16.mxu0 0
    %3687 = vmatpush1.bf16.xpose.msra.mxu0 %v3609
    %3688 = vmatprep.subr.bf16.mxu0 0
    %3689 = vmatpush1.bf16.xpose.msra.mxu0 %v3612
    %3690 = vmatprep.subr.bf16.mxu0 0
    %3691 = vmatpush1.bf16.xpose.msra.mxu0 %v3615
    %3692 = vmatprep.subr.bf16.mxu0 0
    %3693 = vmatpush1.bf16.xpose.msra.mxu0 %v3618
    %3694 = vmatprep.subr.bf16.mxu0 0
    %3695 = vmatpush1.bf16.xpose.msra.mxu0 %v3621
    %3696 = vmatprep.mubr.bf16.mxu0 0
    %3697 = vmatmul.mubr.bf16.gmra.mrb[0].mxu0 %v3525
    %v3698 = vpop.f32.mrb[0].mxu0
    %v3699 = vadd.f32 0.0, %v3698
    %v3700 = vpop.f32.mrb[0].mxu0
    %v3701 = vadd.f32 0.0, %v3700
    %v3702 = vpop.f32.mrb[0].mxu0
    %v3703 = vpop.f32.mrb[0].mxu0
    %3704 = vdwg.mxu0
    %v3705 = vadd.f32 %v3294, %v3658
    %v3706 = vadd.f32 %v3295, %v3660
    %v3707 = vadd.f32 %v3296, %v3699
    %v3708 = vadd.f32 %v3297, %v3701
    %v3709 = vld [vmem:[%s970] sm:$0xf]
    %v3710 = vld [vmem:[%s970 + $0x4] sm:$0xf]
    %v3711 = vld [vmem:[%s970 + $0x8] sm:$0x1]
    %v3712 = vld [vmem:[%s970 + $0xc] sm:$0xf]
    %v3713 = vld [vmem:[%s970 + $0x10] sm:$0xf]
    %v3714 = vld [vmem:[%s970 + $0x14] sm:$0x1]
    %v3715 = vld [vmem:[%s970 + $0x18] sm:$0xf]
    %v3716 = vld [vmem:[%s970 + $0x1c] sm:$0xf]
    %v3717 = vld [vmem:[%s970 + $0x20] sm:$0x1]
    %v3718 = vld [vmem:[%s970 + $0x24] sm:$0xf]
    %v3719 = vld [vmem:[%s970 + $0x28] sm:$0xf]
    %v3720 = vld [vmem:[%s970 + $0x2c] sm:$0x1]
    %v3721 = vld [vmem:[%s970 + $0x30] sm:$0xf]
    %v3722 = vld [vmem:[%s970 + $0x34] sm:$0xf]
    %v3723 = vld [vmem:[%s970 + $0x38] sm:$0x1]
    %v3724 = vld [vmem:[%s970 + $0x3c] sm:$0xf]
    %v3725 = vld [vmem:[%s970 + $0x40] sm:$0xf]
    %v3726 = vld [vmem:[%s970 + $0x44] sm:$0x1]
    %v3727 = vld [vmem:[%s970 + $0x48] sm:$0xf]
    %v3728 = vld [vmem:[%s970 + $0x4c] sm:$0xf]
    %v3729 = vld [vmem:[%s970 + $0x50] sm:$0x1]
    %v3730 = vld [vmem:[%s970 + $0x54] sm:$0xf]
    %v3731 = vld [vmem:[%s970 + $0x58] sm:$0xf]
    %v3732 = vld [vmem:[%s970 + $0x5c] sm:$0x1]
    %v3733 = vld [vmem:[%s970 + $0x60] sm:$0xf]
    %v3734 = vld [vmem:[%s970 + $0x64] sm:$0xf]
    %v3735 = vld [vmem:[%s970 + $0x68] sm:$0x1]
    %v3736 = vld [vmem:[%s970 + $0x6c] sm:$0xf]
    %v3737 = vld [vmem:[%s970 + $0x70] sm:$0xf]
    %v3738 = vld [vmem:[%s970 + $0x74] sm:$0x1]
    %v3739 = vld [vmem:[%s970 + $0x78] sm:$0xf]
    %v3740 = vld [vmem:[%s970 + $0x7c] sm:$0xf]
    %v3741 = vld [vmem:[%s970 + $0x80] sm:$0x1]
    %v3742 = vld [vmem:[%s970 + $0x84] sm:$0xf]
    %v3743 = vld [vmem:[%s970 + $0x88] sm:$0xf]
    %v3744 = vld [vmem:[%s970 + $0x8c] sm:$0x1]
    %v3745 = vld [vmem:[%s970 + $0x90] sm:$0xf]
    %v3746 = vld [vmem:[%s970 + $0x94] sm:$0xf]
    %v3747 = vld [vmem:[%s970 + $0x98] sm:$0x1]
    %v3748 = vld [vmem:[%s970 + $0x9c] sm:$0xf]
    %v3749 = vld [vmem:[%s970 + $0xa0] sm:$0xf]
    %v3750 = vld [vmem:[%s970 + $0xa4] sm:$0x1]
    %v3751 = vld [vmem:[%s970 + $0xa8] sm:$0xf]
    %v3752 = vld [vmem:[%s970 + $0xac] sm:$0xf]
    %v3753 = vld [vmem:[%s970 + $0xb0] sm:$0x1]
    %v3754 = vld [vmem:[%s970 + $0xb4] sm:$0xf]
    %v3755 = vld [vmem:[%s970 + $0xb8] sm:$0xf]
    %v3756 = vld [vmem:[%s970 + $0xbc] sm:$0x1]
    %v3757 = vld [vmem:[%s970 + $0xd8] sm:$0xf]
    %v3758 = vld [vmem:[%s970 + $0xdc] sm:$0xf]
    %v3759 = vld [vmem:[%s970 + $0xe0] sm:$0x1]
    %v3760 = vld [vmem:[%s970 + $0xe4] sm:$0xf]
    %v3761 = vld [vmem:[%s970 + $0xe8] sm:$0xf]
    %v3762 = vld [vmem:[%s970 + $0xec] sm:$0x1]
    %v3763 = vld [vmem:[%s970 + $0xf0] sm:$0xf]
    %v3764 = vld [vmem:[%s970 + $0xf4] sm:$0xf]
    %v3765 = vld [vmem:[%s970 + $0xf8] sm:$0x1]
    %v3766 = vld [vmem:[%s970 + $0xfc] sm:$0xf]
    %v3767 = vld [vmem:[%s970 + $0x100] sm:$0xf]
    %v3768 = vld [vmem:[%s970 + $0x104] sm:$0x1]
    %v3769 = vld [vmem:[%s970 + $0x108] sm:$0xf]
    %v3770 = vld [vmem:[%s970 + $0x10c] sm:$0xf]
    %v3771 = vld [vmem:[%s970 + $0x110] sm:$0x1]
    %v3772 = vld [vmem:[%s970 + $0x114] sm:$0xf]
    %v3773 = vld [vmem:[%s970 + $0x118] sm:$0xf]
    %v3774 = vld [vmem:[%s970 + $0x11c] sm:$0x1]
    %v3775 = vld [vmem:[%s970 + $0x120] sm:$0xf]
    %v3776 = vld [vmem:[%s970 + $0x124] sm:$0xf]
    %v3777 = vld [vmem:[%s970 + $0x128] sm:$0x1]
    %v3778 = vld [vmem:[%s970 + $0x12c] sm:$0xf]
    %v3779 = vld [vmem:[%s970 + $0x130] sm:$0xf]
    %v3780 = vld [vmem:[%s970 + $0x134] sm:$0x1]
    %v3781 = vld [vmem:[%s970 + $0x138] sm:$0xf]
    %v3782 = vld [vmem:[%s970 + $0x13c] sm:$0xf]
    %v3783 = vld [vmem:[%s970 + $0x140] sm:$0x1]
    %v3784 = vld [vmem:[%s970 + $0x144] sm:$0xf]
    %v3785 = vld [vmem:[%s970 + $0x148] sm:$0xf]
    %v3786 = vld [vmem:[%s970 + $0x14c] sm:$0x1]
    %v3787 = vld [vmem:[%s970 + $0x150] sm:$0xf]
    %v3788 = vld [vmem:[%s970 + $0x154] sm:$0xf]
    %v3789 = vld [vmem:[%s970 + $0x158] sm:$0x1]
    %v3790 = vld [vmem:[%s970 + $0x15c] sm:$0xf]
    %v3791 = vld [vmem:[%s970 + $0x160] sm:$0xf]
    %v3792 = vld [vmem:[%s970 + $0x164] sm:$0x1]
    %v3793 = vld [vmem:[%s970 + $0x168] sm:$0xf]
    %v3794 = vld [vmem:[%s970 + $0x16c] sm:$0xf]
    %v3795 = vld [vmem:[%s970 + $0x170] sm:$0x1]
    %v3796 = vld [vmem:[%s970 + $0x174] sm:$0xf]
    %v3797 = vld [vmem:[%s970 + $0x178] sm:$0xf]
    %v3798 = vld [vmem:[%s970 + $0x17c] sm:$0x1]
    %v3799 = vld [vmem:[%s970 + $0x180] sm:$0xf]
    %v3800 = vld [vmem:[%s970 + $0x184] sm:$0xf]
    %v3801 = vld [vmem:[%s970 + $0x188] sm:$0x1]
    %v3802 = vld [vmem:[%s970 + $0x18c] sm:$0xf]
    %v3803 = vld [vmem:[%s970 + $0x190] sm:$0xf]
    %v3804 = vld [vmem:[%s970 + $0x194] sm:$0x1]
    %v3806 = vshrl.u32 %v3709, 16
    %v3808 = vrot.slane %v3806, 4
    %v3809 = vshll.u32 %v3709, 16
    %v3811 = vrot.slane %v3809, 5
    %v3812 = vor.u32 %v3808, %v3811
    %v3813 = vrot.slane %v3812, 4
    %v3815 = vshll.u32 %v3710, 16
    %v3817 = vrot.slane %v3815, 5
    %v3818 = vsel %vm1299, %v3813, %v3817
    %v3819 = vshrl.u32 %v3710, 16
    %v3821 = vrot.slane %v3819, 4
    %v3822 = vor.u32 %v3821, %v3817
    %v3823 = vrot.slane %v3822, 4
    %v3825 = vshll.u32 %v3711, 16
    %v3827 = vrot.slane %v3825, 5
    %v3828 = vsel %vm1299, %v3823, %v3827
    %v3830 = vshrl.u32 %v3712, 16
    %v3832 = vrot.slane %v3830, 4
    %v3833 = vshll.u32 %v3712, 16
    %v3835 = vrot.slane %v3833, 5
    %v3836 = vor.u32 %v3832, %v3835
    %v3837 = vrot.slane %v3836, 4
    %v3839 = vshll.u32 %v3713, 16
    %v3841 = vrot.slane %v3839, 5
    %v3842 = vsel %vm1299, %v3837, %v3841
    %v3843 = vshrl.u32 %v3713, 16
    %v3845 = vrot.slane %v3843, 4
    %v3846 = vor.u32 %v3845, %v3841
    %v3847 = vrot.slane %v3846, 4
    %v3849 = vshll.u32 %v3714, 16
    %v3851 = vrot.slane %v3849, 5
    %v3852 = vsel %vm1299, %v3847, %v3851
    %v3854 = vshrl.u32 %v3715, 16
    %v3856 = vrot.slane %v3854, 4
    %v3857 = vshll.u32 %v3715, 16
    %v3859 = vrot.slane %v3857, 5
    %v3860 = vor.u32 %v3856, %v3859
    %v3861 = vrot.slane %v3860, 4
    %v3863 = vshll.u32 %v3716, 16
    %v3865 = vrot.slane %v3863, 5
    %v3866 = vsel %vm1299, %v3861, %v3865
    %v3867 = vshrl.u32 %v3716, 16
    %v3869 = vrot.slane %v3867, 4
    %v3870 = vor.u32 %v3869, %v3865
    %v3871 = vrot.slane %v3870, 4
    %v3873 = vshll.u32 %v3717, 16
    %v3875 = vrot.slane %v3873, 5
    %v3876 = vsel %vm1299, %v3871, %v3875
    %v3878 = vshrl.u32 %v3718, 16
    %v3880 = vrot.slane %v3878, 4
    %v3881 = vshll.u32 %v3718, 16
    %v3883 = vrot.slane %v3881, 5
    %v3884 = vor.u32 %v3880, %v3883
    %v3885 = vrot.slane %v3884, 4
    %v3887 = vshll.u32 %v3719, 16
    %v3889 = vrot.slane %v3887, 5
    %v3890 = vsel %vm1299, %v3885, %v3889
    %v3891 = vshrl.u32 %v3719, 16
    %v3893 = vrot.slane %v3891, 4
    %v3894 = vor.u32 %v3893, %v3889
    %v3895 = vrot.slane %v3894, 4
    %v3897 = vshll.u32 %v3720, 16
    %v3899 = vrot.slane %v3897, 5
    %v3900 = vsel %vm1299, %v3895, %v3899
    %v3902 = vshrl.u32 %v3721, 16
    %v3904 = vrot.slane %v3902, 4
    %v3905 = vshll.u32 %v3721, 16
    %v3907 = vrot.slane %v3905, 5
    %v3908 = vor.u32 %v3904, %v3907
    %v3909 = vrot.slane %v3908, 4
    %v3911 = vshll.u32 %v3722, 16
    %v3913 = vrot.slane %v3911, 5
    %v3914 = vsel %vm1299, %v3909, %v3913
    %v3915 = vshrl.u32 %v3722, 16
    %v3917 = vrot.slane %v3915, 4
    %v3918 = vor.u32 %v3917, %v3913
    %v3919 = vrot.slane %v3918, 4
    %v3921 = vshll.u32 %v3723, 16
    %v3923 = vrot.slane %v3921, 5
    %v3924 = vsel %vm1299, %v3919, %v3923
    %v3926 = vshrl.u32 %v3724, 16
    %v3928 = vrot.slane %v3926, 4
    %v3929 = vshll.u32 %v3724, 16
    %v3931 = vrot.slane %v3929, 5
    %v3932 = vor.u32 %v3928, %v3931
    %v3933 = vrot.slane %v3932, 4
    %v3935 = vshll.u32 %v3725, 16
    %v3937 = vrot.slane %v3935, 5
    %v3938 = vsel %vm1299, %v3933, %v3937
    %v3939 = vshrl.u32 %v3725, 16
    %v3941 = vrot.slane %v3939, 4
    %v3942 = vor.u32 %v3941, %v3937
    %v3943 = vrot.slane %v3942, 4
    %v3945 = vshll.u32 %v3726, 16
    %v3947 = vrot.slane %v3945, 5
    %v3948 = vsel %vm1299, %v3943, %v3947
    %v3950 = vshrl.u32 %v3727, 16
    %v3952 = vrot.slane %v3950, 4
    %v3953 = vshll.u32 %v3727, 16
    %v3955 = vrot.slane %v3953, 5
    %v3956 = vor.u32 %v3952, %v3955
    %v3957 = vrot.slane %v3956, 4
    %v3959 = vshll.u32 %v3728, 16
    %v3961 = vrot.slane %v3959, 5
    %v3962 = vsel %vm1299, %v3957, %v3961
    %v3963 = vshrl.u32 %v3728, 16
    %v3965 = vrot.slane %v3963, 4
    %v3966 = vor.u32 %v3965, %v3961
    %v3967 = vrot.slane %v3966, 4
    %v3969 = vshll.u32 %v3729, 16
    %v3971 = vrot.slane %v3969, 5
    %v3972 = vsel %vm1299, %v3967, %v3971
    %v3974 = vshrl.u32 %v3730, 16
    %v3976 = vrot.slane %v3974, 4
    %v3977 = vshll.u32 %v3730, 16
    %v3979 = vrot.slane %v3977, 5
    %v3980 = vor.u32 %v3976, %v3979
    %v3981 = vrot.slane %v3980, 4
    %v3983 = vshll.u32 %v3731, 16
    %v3985 = vrot.slane %v3983, 5
    %v3986 = vsel %vm1299, %v3981, %v3985
    %v3987 = vshrl.u32 %v3731, 16
    %v3989 = vrot.slane %v3987, 4
    %v3990 = vor.u32 %v3989, %v3985
    %v3991 = vrot.slane %v3990, 4
    %v3993 = vshll.u32 %v3732, 16
    %v3995 = vrot.slane %v3993, 5
    %v3996 = vsel %vm1299, %v3991, %v3995
    %v3998 = vshrl.u32 %v3733, 16
    %v4000 = vrot.slane %v3998, 4
    %v4001 = vshll.u32 %v3733, 16
    %v4003 = vrot.slane %v4001, 5
    %v4004 = vor.u32 %v4000, %v4003
    %v4005 = vrot.slane %v4004, 4
    %v4007 = vshll.u32 %v3734, 16
    %v4009 = vrot.slane %v4007, 5
    %v4010 = vsel %vm1299, %v4005, %v4009
    %v4011 = vshrl.u32 %v3734, 16
    %v4013 = vrot.slane %v4011, 4
    %v4014 = vor.u32 %v4013, %v4009
    %v4015 = vrot.slane %v4014, 4
    %v4017 = vshll.u32 %v3735, 16
    %v4019 = vrot.slane %v4017, 5
    %v4020 = vsel %vm1299, %v4015, %v4019
    %v4022 = vshrl.u32 %v3736, 16
    %v4024 = vrot.slane %v4022, 4
    %v4025 = vshll.u32 %v3736, 16
    %v4027 = vrot.slane %v4025, 5
    %v4028 = vor.u32 %v4024, %v4027
    %v4029 = vrot.slane %v4028, 4
    %v4031 = vshll.u32 %v3737, 16
    %v4033 = vrot.slane %v4031, 5
    %v4034 = vsel %vm1299, %v4029, %v4033
    %v4035 = vshrl.u32 %v3737, 16
    %v4037 = vrot.slane %v4035, 4
    %v4038 = vor.u32 %v4037, %v4033
    %v4039 = vrot.slane %v4038, 4
    %v4041 = vshll.u32 %v3738, 16
    %v4043 = vrot.slane %v4041, 5
    %v4044 = vsel %vm1299, %v4039, %v4043
    %v4046 = vshrl.u32 %v3739, 16
    %v4048 = vrot.slane %v4046, 4
    %v4049 = vshll.u32 %v3739, 16
    %v4051 = vrot.slane %v4049, 5
    %v4052 = vor.u32 %v4048, %v4051
    %v4053 = vrot.slane %v4052, 4
    %v4055 = vshll.u32 %v3740, 16
    %v4057 = vrot.slane %v4055, 5
    %v4058 = vsel %vm1299, %v4053, %v4057
    %v4059 = vshrl.u32 %v3740, 16
    %v4061 = vrot.slane %v4059, 4
    %v4062 = vor.u32 %v4061, %v4057
    %v4063 = vrot.slane %v4062, 4
    %v4065 = vshll.u32 %v3741, 16
    %v4067 = vrot.slane %v4065, 5
    %v4068 = vsel %vm1299, %v4063, %v4067
    %v4070 = vshrl.u32 %v3742, 16
    %v4072 = vrot.slane %v4070, 4
    %v4073 = vshll.u32 %v3742, 16
    %v4075 = vrot.slane %v4073, 5
    %v4076 = vor.u32 %v4072, %v4075
    %v4077 = vrot.slane %v4076, 4
    %v4079 = vshll.u32 %v3743, 16
    %v4081 = vrot.slane %v4079, 5
    %v4082 = vsel %vm1299, %v4077, %v4081
    %v4083 = vshrl.u32 %v3743, 16
    %v4085 = vrot.slane %v4083, 4
    %v4086 = vor.u32 %v4085, %v4081
    %v4087 = vrot.slane %v4086, 4
    %v4089 = vshll.u32 %v3744, 16
    %v4091 = vrot.slane %v4089, 5
    %v4092 = vsel %vm1299, %v4087, %v4091
    %v4094 = vshrl.u32 %v3745, 16
    %v4096 = vrot.slane %v4094, 4
    %v4097 = vshll.u32 %v3745, 16
    %v4099 = vrot.slane %v4097, 5
    %v4100 = vor.u32 %v4096, %v4099
    %v4101 = vrot.slane %v4100, 4
    %v4103 = vshll.u32 %v3746, 16
    %v4105 = vrot.slane %v4103, 5
    %v4106 = vsel %vm1299, %v4101, %v4105
    %v4107 = vshrl.u32 %v3746, 16
    %v4109 = vrot.slane %v4107, 4
    %v4110 = vor.u32 %v4109, %v4105
    %v4111 = vrot.slane %v4110, 4
    %v4113 = vshll.u32 %v3747, 16
    %v4115 = vrot.slane %v4113, 5
    %v4116 = vsel %vm1299, %v4111, %v4115
    %v4118 = vshrl.u32 %v3748, 16
    %v4120 = vrot.slane %v4118, 4
    %v4121 = vshll.u32 %v3748, 16
    %v4123 = vrot.slane %v4121, 5
    %v4124 = vor.u32 %v4120, %v4123
    %v4125 = vrot.slane %v4124, 4
    %v4127 = vshll.u32 %v3749, 16
    %v4129 = vrot.slane %v4127, 5
    %v4130 = vsel %vm1299, %v4125, %v4129
    %v4131 = vshrl.u32 %v3749, 16
    %v4133 = vrot.slane %v4131, 4
    %v4134 = vor.u32 %v4133, %v4129
    %v4135 = vrot.slane %v4134, 4
    %v4137 = vshll.u32 %v3750, 16
    %v4139 = vrot.slane %v4137, 5
    %v4140 = vsel %vm1299, %v4135, %v4139
    %v4142 = vshrl.u32 %v3751, 16
    %v4144 = vrot.slane %v4142, 4
    %v4145 = vshll.u32 %v3751, 16
    %v4147 = vrot.slane %v4145, 5
    %v4148 = vor.u32 %v4144, %v4147
    %v4149 = vrot.slane %v4148, 4
    %v4151 = vshll.u32 %v3752, 16
    %v4153 = vrot.slane %v4151, 5
    %v4154 = vsel %vm1299, %v4149, %v4153
    %v4155 = vshrl.u32 %v3752, 16
    %v4157 = vrot.slane %v4155, 4
    %v4158 = vor.u32 %v4157, %v4153
    %v4159 = vrot.slane %v4158, 4
    %v4161 = vshll.u32 %v3753, 16
    %v4163 = vrot.slane %v4161, 5
    %v4164 = vsel %vm1299, %v4159, %v4163
    %v4166 = vshrl.u32 %v3754, 16
    %v4168 = vrot.slane %v4166, 4
    %v4169 = vshll.u32 %v3754, 16
    %v4171 = vrot.slane %v4169, 5
    %v4172 = vor.u32 %v4168, %v4171
    %v4173 = vrot.slane %v4172, 4
    %v4175 = vshll.u32 %v3755, 16
    %v4177 = vrot.slane %v4175, 5
    %v4178 = vsel %vm1299, %v4173, %v4177
    %v4179 = vshrl.u32 %v3755, 16
    %v4181 = vrot.slane %v4179, 4
    %v4182 = vor.u32 %v4181, %v4177
    %v4183 = vrot.slane %v4182, 4
    %v4185 = vshll.u32 %v3756, 16
    %v4187 = vrot.slane %v4185, 5
    %v4188 = vsel %vm1299, %v4183, %v4187
    %v4190 = vshrl.u32 %v3757, 16
    %v4192 = vrot.slane %v4190, 4
    %v4193 = vshll.u32 %v3757, 16
    %v4195 = vrot.slane %v4193, 5
    %v4196 = vor.u32 %v4192, %v4195
    %v4197 = vrot.slane %v4196, 4
    %v4199 = vshll.u32 %v3758, 16
    %v4201 = vrot.slane %v4199, 5
    %v4202 = vsel %vm1299, %v4197, %v4201
    %v4203 = vshrl.u32 %v3758, 16
    %v4205 = vrot.slane %v4203, 4
    %v4206 = vor.u32 %v4205, %v4201
    %v4207 = vrot.slane %v4206, 4
    %v4209 = vshll.u32 %v3759, 16
    %v4211 = vrot.slane %v4209, 5
    %v4212 = vsel %vm1299, %v4207, %v4211
    %v4214 = vshrl.u32 %v3760, 16
    %v4216 = vrot.slane %v4214, 4
    %v4217 = vshll.u32 %v3760, 16
    %v4219 = vrot.slane %v4217, 5
    %v4220 = vor.u32 %v4216, %v4219
    %v4221 = vrot.slane %v4220, 4
    %v4223 = vshll.u32 %v3761, 16
    %v4225 = vrot.slane %v4223, 5
    %v4226 = vsel %vm1299, %v4221, %v4225
    %v4227 = vshrl.u32 %v3761, 16
    %v4229 = vrot.slane %v4227, 4
    %v4230 = vor.u32 %v4229, %v4225
    %v4231 = vrot.slane %v4230, 4
    %v4233 = vshll.u32 %v3762, 16
    %v4235 = vrot.slane %v4233, 5
    %v4236 = vsel %vm1299, %v4231, %v4235
    %v4238 = vshrl.u32 %v3763, 16
    %v4240 = vrot.slane %v4238, 4
    %v4241 = vshll.u32 %v3763, 16
    %v4243 = vrot.slane %v4241, 5
    %v4244 = vor.u32 %v4240, %v4243
    %v4245 = vrot.slane %v4244, 4
    %v4247 = vshll.u32 %v3764, 16
    %v4249 = vrot.slane %v4247, 5
    %v4250 = vsel %vm1299, %v4245, %v4249
    %v4251 = vshrl.u32 %v3764, 16
    %v4253 = vrot.slane %v4251, 4
    %v4254 = vor.u32 %v4253, %v4249
    %v4255 = vrot.slane %v4254, 4
    %v4257 = vshll.u32 %v3765, 16
    %v4259 = vrot.slane %v4257, 5
    %v4260 = vsel %vm1299, %v4255, %v4259
    %v4262 = vshrl.u32 %v3766, 16
    %v4264 = vrot.slane %v4262, 4
    %v4265 = vshll.u32 %v3766, 16
    %v4267 = vrot.slane %v4265, 5
    %v4268 = vor.u32 %v4264, %v4267
    %v4269 = vrot.slane %v4268, 4
    %v4271 = vshll.u32 %v3767, 16
    %v4273 = vrot.slane %v4271, 5
    %v4274 = vsel %vm1299, %v4269, %v4273
    %v4275 = vshrl.u32 %v3767, 16
    %v4277 = vrot.slane %v4275, 4
    %v4278 = vor.u32 %v4277, %v4273
    %v4279 = vrot.slane %v4278, 4
    %v4281 = vshll.u32 %v3768, 16
    %v4283 = vrot.slane %v4281, 5
    %v4284 = vsel %vm1299, %v4279, %v4283
    %v4286 = vshrl.u32 %v3769, 16
    %v4288 = vrot.slane %v4286, 4
    %v4289 = vshll.u32 %v3769, 16
    %v4291 = vrot.slane %v4289, 5
    %v4292 = vor.u32 %v4288, %v4291
    %v4293 = vrot.slane %v4292, 4
    %v4295 = vshll.u32 %v3770, 16
    %v4297 = vrot.slane %v4295, 5
    %v4298 = vsel %vm1299, %v4293, %v4297
    %v4299 = vshrl.u32 %v3770, 16
    %v4301 = vrot.slane %v4299, 4
    %v4302 = vor.u32 %v4301, %v4297
    %v4303 = vrot.slane %v4302, 4
    %v4305 = vshll.u32 %v3771, 16
    %v4307 = vrot.slane %v4305, 5
    %v4308 = vsel %vm1299, %v4303, %v4307
    %v4310 = vshrl.u32 %v3772, 16
    %v4312 = vrot.slane %v4310, 4
    %v4313 = vshll.u32 %v3772, 16
    %v4315 = vrot.slane %v4313, 5
    %v4316 = vor.u32 %v4312, %v4315
    %v4317 = vrot.slane %v4316, 4
    %v4319 = vshll.u32 %v3773, 16
    %v4321 = vrot.slane %v4319, 5
    %v4322 = vsel %vm1299, %v4317, %v4321
    %v4323 = vshrl.u32 %v3773, 16
    %v4325 = vrot.slane %v4323, 4
    %v4326 = vor.u32 %v4325, %v4321
    %v4327 = vrot.slane %v4326, 4
    %v4329 = vshll.u32 %v3774, 16
    %v4331 = vrot.slane %v4329, 5
    %v4332 = vsel %vm1299, %v4327, %v4331
    %v4334 = vshrl.u32 %v3775, 16
    %v4336 = vrot.slane %v4334, 4
    %v4337 = vshll.u32 %v3775, 16
    %v4339 = vrot.slane %v4337, 5
    %v4340 = vor.u32 %v4336, %v4339
    %v4341 = vrot.slane %v4340, 4
    %v4343 = vshll.u32 %v3776, 16
    %v4345 = vrot.slane %v4343, 5
    %v4346 = vsel %vm1299, %v4341, %v4345
    %v4347 = vshrl.u32 %v3776, 16
    %v4349 = vrot.slane %v4347, 4
    %v4350 = vor.u32 %v4349, %v4345
    %v4351 = vrot.slane %v4350, 4
    %v4353 = vshll.u32 %v3777, 16
    %v4355 = vrot.slane %v4353, 5
    %v4356 = vsel %vm1299, %v4351, %v4355
    %v4358 = vshrl.u32 %v3778, 16
    %v4360 = vrot.slane %v4358, 4
    %v4361 = vshll.u32 %v3778, 16
    %v4363 = vrot.slane %v4361, 5
    %v4364 = vor.u32 %v4360, %v4363
    %v4365 = vrot.slane %v4364, 4
    %v4367 = vshll.u32 %v3779, 16
    %v4369 = vrot.slane %v4367, 5
    %v4370 = vsel %vm1299, %v4365, %v4369
    %v4371 = vshrl.u32 %v3779, 16
    %v4373 = vrot.slane %v4371, 4
    %v4374 = vor.u32 %v4373, %v4369
    %v4375 = vrot.slane %v4374, 4
    %v4377 = vshll.u32 %v3780, 16
    %v4379 = vrot.slane %v4377, 5
    %v4380 = vsel %vm1299, %v4375, %v4379
    %v4382 = vshrl.u32 %v3781, 16
    %v4384 = vrot.slane %v4382, 4
    %v4385 = vshll.u32 %v3781, 16
    %v4387 = vrot.slane %v4385, 5
    %v4388 = vor.u32 %v4384, %v4387
    %v4389 = vrot.slane %v4388, 4
    %v4391 = vshll.u32 %v3782, 16
    %v4393 = vrot.slane %v4391, 5
    %v4394 = vsel %vm1299, %v4389, %v4393
    %v4395 = vshrl.u32 %v3782, 16
    %v4397 = vrot.slane %v4395, 4
    %v4398 = vor.u32 %v4397, %v4393
    %v4399 = vrot.slane %v4398, 4
    %v4401 = vshll.u32 %v3783, 16
    %v4403 = vrot.slane %v4401, 5
    %v4404 = vsel %vm1299, %v4399, %v4403
    %v4406 = vshrl.u32 %v3784, 16
    %v4408 = vrot.slane %v4406, 4
    %v4409 = vshll.u32 %v3784, 16
    %v4411 = vrot.slane %v4409, 5
    %v4412 = vor.u32 %v4408, %v4411
    %v4413 = vrot.slane %v4412, 4
    %v4415 = vshll.u32 %v3785, 16
    %v4417 = vrot.slane %v4415, 5
    %v4418 = vsel %vm1299, %v4413, %v4417
    %v4419 = vshrl.u32 %v3785, 16
    %v4421 = vrot.slane %v4419, 4
    %v4422 = vor.u32 %v4421, %v4417
    %v4423 = vrot.slane %v4422, 4
    %v4425 = vshll.u32 %v3786, 16
    %v4427 = vrot.slane %v4425, 5
    %v4428 = vsel %vm1299, %v4423, %v4427
    %v4430 = vshrl.u32 %v3787, 16
    %v4432 = vrot.slane %v4430, 4
    %v4433 = vshll.u32 %v3787, 16
    %v4435 = vrot.slane %v4433, 5
    %v4436 = vor.u32 %v4432, %v4435
    %v4437 = vrot.slane %v4436, 4
    %v4439 = vshll.u32 %v3788, 16
    %v4441 = vrot.slane %v4439, 5
    %v4442 = vsel %vm1299, %v4437, %v4441
    %v4443 = vshrl.u32 %v3788, 16
    %v4445 = vrot.slane %v4443, 4
    %v4446 = vor.u32 %v4445, %v4441
    %v4447 = vrot.slane %v4446, 4
    %v4449 = vshll.u32 %v3789, 16
    %v4451 = vrot.slane %v4449, 5
    %v4452 = vsel %vm1299, %v4447, %v4451
    %v4454 = vshrl.u32 %v3790, 16
    %v4456 = vrot.slane %v4454, 4
    %v4457 = vshll.u32 %v3790, 16
    %v4459 = vrot.slane %v4457, 5
    %v4460 = vor.u32 %v4456, %v4459
    %v4461 = vrot.slane %v4460, 4
    %v4463 = vshll.u32 %v3791, 16
    %v4465 = vrot.slane %v4463, 5
    %v4466 = vsel %vm1299, %v4461, %v4465
    %v4467 = vshrl.u32 %v3791, 16
    %v4469 = vrot.slane %v4467, 4
    %v4470 = vor.u32 %v4469, %v4465
    %v4471 = vrot.slane %v4470, 4
    %v4473 = vshll.u32 %v3792, 16
    %v4475 = vrot.slane %v4473, 5
    %v4476 = vsel %vm1299, %v4471, %v4475
    %v4478 = vshrl.u32 %v3793, 16
    %v4480 = vrot.slane %v4478, 4
    %v4481 = vshll.u32 %v3793, 16
    %v4483 = vrot.slane %v4481, 5
    %v4484 = vor.u32 %v4480, %v4483
    %v4485 = vrot.slane %v4484, 4
    %v4487 = vshll.u32 %v3794, 16
    %v4489 = vrot.slane %v4487, 5
    %v4490 = vsel %vm1299, %v4485, %v4489
    %v4491 = vshrl.u32 %v3794, 16
    %v4493 = vrot.slane %v4491, 4
    %v4494 = vor.u32 %v4493, %v4489
    %v4495 = vrot.slane %v4494, 4
    %v4497 = vshll.u32 %v3795, 16
    %v4499 = vrot.slane %v4497, 5
    %v4500 = vsel %vm1299, %v4495, %v4499
    %v4502 = vshrl.u32 %v3796, 16
    %v4504 = vrot.slane %v4502, 4
    %v4505 = vshll.u32 %v3796, 16
    %v4507 = vrot.slane %v4505, 5
    %v4508 = vor.u32 %v4504, %v4507
    %v4509 = vrot.slane %v4508, 4
    %v4511 = vshll.u32 %v3797, 16
    %v4513 = vrot.slane %v4511, 5
    %v4514 = vsel %vm1299, %v4509, %v4513
    %v4515 = vshrl.u32 %v3797, 16
    %v4517 = vrot.slane %v4515, 4
    %v4518 = vor.u32 %v4517, %v4513
    %v4519 = vrot.slane %v4518, 4
    %v4521 = vshll.u32 %v3798, 16
    %v4523 = vrot.slane %v4521, 5
    %v4524 = vsel %vm1299, %v4519, %v4523
    %v4526 = vshrl.u32 %v3799, 16
    %v4528 = vrot.slane %v4526, 4
    %v4529 = vshll.u32 %v3799, 16
    %v4531 = vrot.slane %v4529, 5
    %v4532 = vor.u32 %v4528, %v4531
    %v4533 = vrot.slane %v4532, 4
    %v4535 = vshll.u32 %v3800, 16
    %v4537 = vrot.slane %v4535, 5
    %v4538 = vsel %vm1299, %v4533, %v4537
    %v4539 = vshrl.u32 %v3800, 16
    %v4541 = vrot.slane %v4539, 4
    %v4542 = vor.u32 %v4541, %v4537
    %v4543 = vrot.slane %v4542, 4
    %v4545 = vshll.u32 %v3801, 16
    %v4547 = vrot.slane %v4545, 5
    %v4548 = vsel %vm1299, %v4543, %v4547
    %v4550 = vshrl.u32 %v3802, 16
    %v4552 = vrot.slane %v4550, 4
    %v4553 = vshll.u32 %v3802, 16
    %v4555 = vrot.slane %v4553, 5
    %v4556 = vor.u32 %v4552, %v4555
    %v4557 = vrot.slane %v4556, 4
    %v4559 = vshll.u32 %v3803, 16
    %v4561 = vrot.slane %v4559, 5
    %v4562 = vsel %vm1299, %v4557, %v4561
    %v4563 = vshrl.u32 %v3803, 16
    %v4565 = vrot.slane %v4563, 4
    %v4566 = vor.u32 %v4565, %v4561
    %v4567 = vrot.slane %v4566, 4
    %v4569 = vshll.u32 %v3804, 16
    %v4571 = vrot.slane %v4569, 5
    %v4572 = vsel %vm1299, %v4567, %v4571
    %4573 = vrot.lane.b32.xlu0 %v2070, 112
    %v4574 = vpop.permute.xlu0 %4573
    %v4575 = vunpack.c.l.b16 %v3818
    %v4576 = vunpack.c.l.b16 %v3828
    %v4577 = vunpack.c.l.b16 %v3842
    %v4578 = vunpack.c.l.b16 %v3852
    %v4579 = vunpack.c.l.b16 %v3866
    %v4580 = vunpack.c.l.b16 %v3876
    %v4581 = vunpack.c.l.b16 %v3890
    %v4582 = vunpack.c.l.b16 %v3900
    %v4583 = vunpack.c.l.b16 %v3914
    %v4584 = vunpack.c.l.b16 %v3924
    %v4585 = vunpack.c.l.b16 %v3938
    %v4586 = vunpack.c.l.b16 %v3948
    %v4587 = vunpack.c.l.b16 %v3962
    %v4588 = vunpack.c.l.b16 %v3972
    %v4589 = vunpack.c.l.b16 %v3986
    %v4590 = vunpack.c.l.b16 %v3996
    %v4591 = vunpack.c.l.b16 %v4010
    %v4592 = vunpack.c.l.b16 %v4020
    %v4593 = vunpack.c.l.b16 %v4034
    %v4594 = vunpack.c.l.b16 %v4044
    %v4595 = vunpack.c.l.b16 %v4058
    %v4596 = vunpack.c.l.b16 %v4068
    %v4597 = vunpack.c.l.b16 %v4082
    %v4598 = vunpack.c.l.b16 %v4092
    %v4599 = vunpack.c.l.b16 %v4106
    %v4600 = vunpack.c.l.b16 %v4116
    %v4601 = vunpack.c.l.b16 %v4130
    %v4602 = vunpack.c.l.b16 %v4140
    %v4603 = vunpack.c.l.b16 %v4154
    %v4604 = vunpack.c.l.b16 %v4164
    %v4605 = vunpack.c.l.b16 %v4178
    %v4606 = vunpack.c.l.b16 %v4188
    %v4607 = vunpack.c.l.b16 %v4202
    %v4608 = vunpack.c.l.b16 %v4212
    %v4609 = vunpack.c.l.b16 %v4226
    %v4610 = vunpack.c.l.b16 %v4236
    %v4611 = vunpack.c.l.b16 %v4250
    %v4612 = vunpack.c.l.b16 %v4260
    %v4613 = vunpack.c.l.b16 %v4274
    %v4614 = vunpack.c.l.b16 %v4284
    %v4615 = vunpack.c.l.b16 %v4298
    %v4616 = vunpack.c.l.b16 %v4308
    %v4617 = vunpack.c.l.b16 %v4322
    %v4618 = vunpack.c.l.b16 %v4332
    %v4619 = vunpack.c.l.b16 %v4346
    %v4620 = vunpack.c.l.b16 %v4356
    %v4621 = vunpack.c.l.b16 %v4370
    %v4622 = vunpack.c.l.b16 %v4380
    %v4623 = vunpack.c.l.b16 %v4394
    %v4624 = vunpack.c.l.b16 %v4404
    %v4625 = vunpack.c.l.b16 %v4418
    %v4626 = vunpack.c.l.b16 %v4428
    %v4627 = vunpack.c.l.b16 %v4442
    %v4628 = vunpack.c.l.b16 %v4452
    %v4629 = vunpack.c.l.b16 %v4466
    %v4630 = vunpack.c.l.b16 %v4476
    %v4631 = vunpack.c.l.b16 %v4490
    %v4632 = vunpack.c.l.b16 %v4500
    %v4633 = vunpack.c.l.b16 %v4514
    %v4634 = vunpack.c.l.b16 %v4524
    %v4635 = vunpack.c.l.b16 %v4538
    %v4636 = vunpack.c.l.b16 %v4548
    %v4637 = vunpack.c.l.b16 %v4562
    %v4638 = vunpack.c.l.b16 %v4572
    %v4639 = vpack.c.b16 %v4576, %v4575
    %v4640 = vpack.c.b16 %v4578, %v4577
    %v4641 = vpack.c.b16 %v4580, %v4579
    %v4642 = vpack.c.b16 %v4582, %v4581
    %v4643 = vpack.c.b16 %v4584, %v4583
    %v4644 = vpack.c.b16 %v4586, %v4585
    %v4645 = vpack.c.b16 %v4588, %v4587
    %v4646 = vpack.c.b16 %v4590, %v4589
    %v4647 = vpack.c.b16 %v4592, %v4591
    %v4648 = vpack.c.b16 %v4594, %v4593
    %v4649 = vpack.c.b16 %v4596, %v4595
    %v4650 = vpack.c.b16 %v4598, %v4597
    %v4651 = vpack.c.b16 %v4600, %v4599
    %v4652 = vpack.c.b16 %v4602, %v4601
    %v4653 = vpack.c.b16 %v4604, %v4603
    %v4654 = vpack.c.b16 %v4606, %v4605
    %v4655 = vpack.c.b16 %v4608, %v4607
    %v4656 = vpack.c.b16 %v4610, %v4609
    %v4657 = vpack.c.b16 %v4612, %v4611
    %v4658 = vpack.c.b16 %v4614, %v4613
    %v4659 = vpack.c.b16 %v4616, %v4615
    %v4660 = vpack.c.b16 %v4618, %v4617
    %v4661 = vpack.c.b16 %v4620, %v4619
    %v4662 = vpack.c.b16 %v4622, %v4621
    %v4663 = vpack.c.b16 %v4624, %v4623
    %v4664 = vpack.c.b16 %v4626, %v4625
    %v4665 = vpack.c.b16 %v4628, %v4627
    %v4666 = vpack.c.b16 %v4630, %v4629
    %v4667 = vpack.c.b16 %v4632, %v4631
    %v4668 = vpack.c.b16 %v4634, %v4633
    %v4669 = vpack.c.b16 %v4636, %v4635
    %v4670 = vpack.c.b16 %v4638, %v4637
    %v4672 = vsel %vm2169, %v4574, 0
    %v4675 = vsel %vm2169, %v4639, 0
    %v4678 = vsel %vm2169, %v4640, 0
    %v4681 = vsel %vm2169, %v4641, 0
    %v4684 = vsel %vm2169, %v4642, 0
    %v4687 = vsel %vm2169, %v4643, 0
    %v4690 = vsel %vm2169, %v4644, 0
    %v4693 = vsel %vm2169, %v4645, 0
    %v4696 = vsel %vm2169, %v4646, 0
    %v4699 = vsel %vm2169, %v4647, 0
    %v4702 = vsel %vm2169, %v4648, 0
    %v4705 = vsel %vm2169, %v4649, 0
    %v4708 = vsel %vm2169, %v4650, 0
    %v4711 = vsel %vm2169, %v4651, 0
    %v4714 = vsel %vm2169, %v4652, 0
    %v4717 = vsel %vm2169, %v4653, 0
    %v4720 = vsel %vm2169, %v4654, 0
    %v4723 = vsel %vm2169, %v4655, 0
    %v4726 = vsel %vm2169, %v4656, 0
    %v4729 = vsel %vm2169, %v4657, 0
    %v4732 = vsel %vm2169, %v4658, 0
    %v4735 = vsel %vm2169, %v4659, 0
    %v4738 = vsel %vm2169, %v4660, 0
    %v4741 = vsel %vm2169, %v4661, 0
    %v4744 = vsel %vm2169, %v4662, 0
    %v4747 = vsel %vm2169, %v4663, 0
    %v4750 = vsel %vm2169, %v4664, 0
    %v4753 = vsel %vm2169, %v4665, 0
    %v4756 = vsel %vm2169, %v4666, 0
    %v4759 = vsel %vm2169, %v4667, 0
    %v4762 = vsel %vm2169, %v4668, 0
    %v4765 = vsel %vm2169, %v4669, 0
    %v4768 = vsel %vm2169, %v4670, 0
    %4770 = vmatprep.subr.bf16.mxu0 0
    %4771 = vmatpush1.bf16.xpose.msra.mxu0 %v4675
    %4772 = vmatprep.subr.bf16.mxu0 0
    %4773 = vmatpush1.bf16.xpose.msra.mxu0 %v4678
    %4774 = vmatprep.subr.bf16.mxu0 0
    %4775 = vmatpush1.bf16.xpose.msra.mxu0 %v4681
    %4776 = vmatprep.subr.bf16.mxu0 0
    %4777 = vmatpush1.bf16.xpose.msra.mxu0 %v4684
    %4778 = vmatprep.subr.bf16.mxu0 0
    %4779 = vmatpush1.bf16.xpose.msra.mxu0 %v4687
    %4780 = vmatprep.subr.bf16.mxu0 0
    %4781 = vmatpush1.bf16.xpose.msra.mxu0 %v4690
    %4782 = vmatprep.subr.bf16.mxu0 0
    %4783 = vmatpush1.bf16.xpose.msra.mxu0 %v4693
    %4784 = vmatprep.subr.bf16.mxu0 0
    %4785 = vmatpush1.bf16.xpose.msra.mxu0 %v4696
    %4786 = vmatprep.subr.bf16.mxu0 0
    %4787 = vmatpush1.bf16.xpose.msra.mxu0 %v4699
    %4788 = vmatprep.subr.bf16.mxu0 0
    %4789 = vmatpush1.bf16.xpose.msra.mxu0 %v4702
    %4790 = vmatprep.subr.bf16.mxu0 0
    %4791 = vmatpush1.bf16.xpose.msra.mxu0 %v4705
    %4792 = vmatprep.subr.bf16.mxu0 0
    %4793 = vmatpush1.bf16.xpose.msra.mxu0 %v4708
    %4794 = vmatprep.subr.bf16.mxu0 0
    %4795 = vmatpush1.bf16.xpose.msra.mxu0 %v4711
    %4796 = vmatprep.subr.bf16.mxu0 0
    %4797 = vmatpush1.bf16.xpose.msra.mxu0 %v4714
    %4798 = vmatprep.subr.bf16.mxu0 0
    %4799 = vmatpush1.bf16.xpose.msra.mxu0 %v4717
    %4800 = vmatprep.subr.bf16.mxu0 0
    %4801 = vmatpush1.bf16.xpose.msra.mxu0 %v4720
    %4802 = vmatprep.mubr.bf16.mxu0 0
    %4803 = vmatmul.mubr.bf16.gmra.mrb[0].mxu0 %v4672
    %v4804 = vpop.f32.mrb[0].mxu0
    %v4805 = vadd.f32 0.0, %v4804
    %v4806 = vpop.f32.mrb[0].mxu0
    %v4807 = vadd.f32 0.0, %v4806
    %v4808 = vpop.f32.mrb[0].mxu0
    %v4809 = vpop.f32.mrb[0].mxu0
    %4810 = vdwg.mxu0
    %4811 = vmatprep.subr.bf16.mxu0 0
    %4812 = vmatpush1.bf16.xpose.msra.mxu0 %v4723
    %4813 = vmatprep.subr.bf16.mxu0 0
    %4814 = vmatpush1.bf16.xpose.msra.mxu0 %v4726
    %4815 = vmatprep.subr.bf16.mxu0 0
    %4816 = vmatpush1.bf16.xpose.msra.mxu0 %v4729
    %4817 = vmatprep.subr.bf16.mxu0 0
    %4818 = vmatpush1.bf16.xpose.msra.mxu0 %v4732
    %4819 = vmatprep.subr.bf16.mxu0 0
    %4820 = vmatpush1.bf16.xpose.msra.mxu0 %v4735
    %4821 = vmatprep.subr.bf16.mxu0 0
    %4822 = vmatpush1.bf16.xpose.msra.mxu0 %v4738
    %4823 = vmatprep.subr.bf16.mxu0 0
    %4824 = vmatpush1.bf16.xpose.msra.mxu0 %v4741
    %4825 = vmatprep.subr.bf16.mxu0 0
    %4826 = vmatpush1.bf16.xpose.msra.mxu0 %v4744
    %4827 = vmatprep.subr.bf16.mxu0 0
    %4828 = vmatpush1.bf16.xpose.msra.mxu0 %v4747
    %4829 = vmatprep.subr.bf16.mxu0 0
    %4830 = vmatpush1.bf16.xpose.msra.mxu0 %v4750
    %4831 = vmatprep.subr.bf16.mxu0 0
    %4832 = vmatpush1.bf16.xpose.msra.mxu0 %v4753
    %4833 = vmatprep.subr.bf16.mxu0 0
    %4834 = vmatpush1.bf16.xpose.msra.mxu0 %v4756
    %4835 = vmatprep.subr.bf16.mxu0 0
    %4836 = vmatpush1.bf16.xpose.msra.mxu0 %v4759
    %4837 = vmatprep.subr.bf16.mxu0 0
    %4838 = vmatpush1.bf16.xpose.msra.mxu0 %v4762
    %4839 = vmatprep.subr.bf16.mxu0 0
    %4840 = vmatpush1.bf16.xpose.msra.mxu0 %v4765
    %4841 = vmatprep.subr.bf16.mxu0 0
    %4842 = vmatpush1.bf16.xpose.msra.mxu0 %v4768
    %4843 = vmatprep.mubr.bf16.mxu0 0
    %4844 = vmatmul.mubr.bf16.gmra.mrb[0].mxu0 %v4672
    %v4845 = vpop.f32.mrb[0].mxu0
    %v4846 = vadd.f32 0.0, %v4845
    %v4847 = vpop.f32.mrb[0].mxu0
    %v4848 = vadd.f32 0.0, %v4847
    %v4849 = vpop.f32.mrb[0].mxu0
    %v4850 = vpop.f32.mrb[0].mxu0
    %4851 = vdwg.mxu0
    %v4852 = vadd.f32 %v3705, %v4805
    %v4853 = vadd.f32 %v3706, %v4807
    %v4854 = vadd.f32 %v3707, %v4846
    %v4855 = vadd.f32 %v3708, %v4848
    %v4856 = vld [vmem:[%s970] sm:$0xe]
    %v4857 = vld [vmem:[%s970 + $0xc] sm:$0xe]
    %v4858 = vld [vmem:[%s970 + $0x18] sm:$0xe]
    %v4859 = vld [vmem:[%s970 + $0x24] sm:$0xe]
    %v4860 = vld [vmem:[%s970 + $0x30] sm:$0xe]
    %v4861 = vld [vmem:[%s970 + $0x3c] sm:$0xe]
    %v4862 = vld [vmem:[%s970 + $0x48] sm:$0xe]
    %v4863 = vld [vmem:[%s970 + $0x54] sm:$0xe]
    %v4864 = vld [vmem:[%s970 + $0x60] sm:$0xe]
    %v4865 = vld [vmem:[%s970 + $0x6c] sm:$0xe]
    %v4866 = vld [vmem:[%s970 + $0x78] sm:$0xe]
    %v4867 = vld [vmem:[%s970 + $0x84] sm:$0xe]
    %v4868 = vld [vmem:[%s970 + $0x90] sm:$0xe]
    %v4869 = vld [vmem:[%s970 + $0x9c] sm:$0xe]
    %v4870 = vld [vmem:[%s970 + $0xa8] sm:$0xe]
    %v4871 = vld [vmem:[%s970 + $0xb4] sm:$0xe]
    %v4872 = vld [vmem:[%s970 + $0xd8] sm:$0xe]
    %v4873 = vld [vmem:[%s970 + $0xe4] sm:$0xe]
    %v4874 = vld [vmem:[%s970 + $0xf0] sm:$0xe]
    %v4875 = vld [vmem:[%s970 + $0xfc] sm:$0xe]
    %v4876 = vld [vmem:[%s970 + $0x108] sm:$0xe]
    %v4877 = vld [vmem:[%s970 + $0x114] sm:$0xe]
    %v4878 = vld [vmem:[%s970 + $0x120] sm:$0xe]
    %v4879 = vld [vmem:[%s970 + $0x12c] sm:$0xe]
    %v4880 = vld [vmem:[%s970 + $0x138] sm:$0xe]
    %v4881 = vld [vmem:[%s970 + $0x144] sm:$0xe]
    %v4882 = vld [vmem:[%s970 + $0x150] sm:$0xe]
    %v4883 = vld [vmem:[%s970 + $0x15c] sm:$0xe]
    %v4884 = vld [vmem:[%s970 + $0x168] sm:$0xe]
    %v4885 = vld [vmem:[%s970 + $0x174] sm:$0xe]
    %v4886 = vld [vmem:[%s970 + $0x180] sm:$0xe]
    %v4887 = vld [vmem:[%s970 + $0x18c] sm:$0xe]
    %v4984 = vrot.slane %v4856, 5
    %v4985 = vrot.slane %v4984, 4
    %v4986 = vrot.slane %v3710, 5
    %v4987 = vsel %vm2790, %v4985, %v4986
    %v4988 = vrot.slane %v4986, 4
    %v4989 = vrot.slane %v3711, 5
    %v4990 = vsel %vm2790, %v4988, %v4989
    %v4991 = vrot.slane %v4857, 5
    %v4992 = vrot.slane %v4991, 4
    %v4993 = vrot.slane %v3713, 5
    %v4994 = vsel %vm2790, %v4992, %v4993
    %v4995 = vrot.slane %v4993, 4
    %v4996 = vrot.slane %v3714, 5
    %v4997 = vsel %vm2790, %v4995, %v4996
    %v4998 = vrot.slane %v4858, 5
    %v4999 = vrot.slane %v4998, 4
    %v5000 = vrot.slane %v3716, 5
    %v5001 = vsel %vm2790, %v4999, %v5000
    %v5002 = vrot.slane %v5000, 4
    %v5003 = vrot.slane %v3717, 5
    %v5004 = vsel %vm2790, %v5002, %v5003
    %v5005 = vrot.slane %v4859, 5
    %v5006 = vrot.slane %v5005, 4
    %v5007 = vrot.slane %v3719, 5
    %v5008 = vsel %vm2790, %v5006, %v5007
    %v5009 = vrot.slane %v5007, 4
    %v5010 = vrot.slane %v3720, 5
    %v5011 = vsel %vm2790, %v5009, %v5010
    %v5012 = vrot.slane %v4860, 5
    %v5013 = vrot.slane %v5012, 4
    %v5014 = vrot.slane %v3722, 5
    %v5015 = vsel %vm2790, %v5013, %v5014
    %v5016 = vrot.slane %v5014, 4
    %v5017 = vrot.slane %v3723, 5
    %v5018 = vsel %vm2790, %v5016, %v5017
    %v5019 = vrot.slane %v4861, 5
    %v5020 = vrot.slane %v5019, 4
    %v5021 = vrot.slane %v3725, 5
    %v5022 = vsel %vm2790, %v5020, %v5021
    %v5023 = vrot.slane %v5021, 4
    %v5024 = vrot.slane %v3726, 5
    %v5025 = vsel %vm2790, %v5023, %v5024
    %v5026 = vrot.slane %v4862, 5
    %v5027 = vrot.slane %v5026, 4
    %v5028 = vrot.slane %v3728, 5
    %v5029 = vsel %vm2790, %v5027, %v5028
    %v5030 = vrot.slane %v5028, 4
    %v5031 = vrot.slane %v3729, 5
    %v5032 = vsel %vm2790, %v5030, %v5031
    %v5033 = vrot.slane %v4863, 5
    %v5034 = vrot.slane %v5033, 4
    %v5035 = vrot.slane %v3731, 5
    %v5036 = vsel %vm2790, %v5034, %v5035
    %v5037 = vrot.slane %v5035, 4
    %v5038 = vrot.slane %v3732, 5
    %v5039 = vsel %vm2790, %v5037, %v5038
    %v5040 = vrot.slane %v4864, 5
    %v5041 = vrot.slane %v5040, 4
    %v5042 = vrot.slane %v3734, 5
    %v5043 = vsel %vm2790, %v5041, %v5042
    %v5044 = vrot.slane %v5042, 4
    %v5045 = vrot.slane %v3735, 5
    %v5046 = vsel %vm2790, %v5044, %v5045
    %v5047 = vrot.slane %v4865, 5
    %v5048 = vrot.slane %v5047, 4
    %v5049 = vrot.slane %v3737, 5
    %v5050 = vsel %vm2790, %v5048, %v5049
    %v5051 = vrot.slane %v5049, 4
    %v5052 = vrot.slane %v3738, 5
    %v5053 = vsel %vm2790, %v5051, %v5052
    %v5054 = vrot.slane %v4866, 5
    %v5055 = vrot.slane %v5054, 4
    %v5056 = vrot.slane %v3740, 5
    %v5057 = vsel %vm2790, %v5055, %v5056
    %v5058 = vrot.slane %v5056, 4
    %v5059 = vrot.slane %v3741, 5
    %v5060 = vsel %vm2790, %v5058, %v5059
    %v5061 = vrot.slane %v4867, 5
    %v5062 = vrot.slane %v5061, 4
    %v5063 = vrot.slane %v3743, 5
    %v5064 = vsel %vm2790, %v5062, %v5063
    %v5065 = vrot.slane %v5063, 4
    %v5066 = vrot.slane %v3744, 5
    %v5067 = vsel %vm2790, %v5065, %v5066
    %v5068 = vrot.slane %v4868, 5
    %v5069 = vrot.slane %v5068, 4
    %v5070 = vrot.slane %v3746, 5
    %v5071 = vsel %vm2790, %v5069, %v5070
    %v5072 = vrot.slane %v5070, 4
    %v5073 = vrot.slane %v3747, 5
    %v5074 = vsel %vm2790, %v5072, %v5073
    %v5075 = vrot.slane %v4869, 5
    %v5076 = vrot.slane %v5075, 4
    %v5077 = vrot.slane %v3749, 5
    %v5078 = vsel %vm2790, %v5076, %v5077
    %v5079 = vrot.slane %v5077, 4
    %v5080 = vrot.slane %v3750, 5
    %v5081 = vsel %vm2790, %v5079, %v5080
    %v5082 = vrot.slane %v4870, 5
    %v5083 = vrot.slane %v5082, 4
    %v5084 = vrot.slane %v3752, 5
    %v5085 = vsel %vm2790, %v5083, %v5084
    %v5086 = vrot.slane %v5084, 4
    %v5087 = vrot.slane %v3753, 5
    %v5088 = vsel %vm2790, %v5086, %v5087
    %v5089 = vrot.slane %v4871, 5
    %v5090 = vrot.slane %v5089, 4
    %v5091 = vrot.slane %v3755, 5
    %v5092 = vsel %vm2790, %v5090, %v5091
    %v5093 = vrot.slane %v5091, 4
    %v5094 = vrot.slane %v3756, 5
    %v5095 = vsel %vm2790, %v5093, %v5094
    %v5096 = vrot.slane %v4872, 5
    %v5097 = vrot.slane %v5096, 4
    %v5098 = vrot.slane %v3758, 5
    %v5099 = vsel %vm2790, %v5097, %v5098
    %v5100 = vrot.slane %v5098, 4
    %v5101 = vrot.slane %v3759, 5
    %v5102 = vsel %vm2790, %v5100, %v5101
    %v5103 = vrot.slane %v4873, 5
    %v5104 = vrot.slane %v5103, 4
    %v5105 = vrot.slane %v3761, 5
    %v5106 = vsel %vm2790, %v5104, %v5105
    %v5107 = vrot.slane %v5105, 4
    %v5108 = vrot.slane %v3762, 5
    %v5109 = vsel %vm2790, %v5107, %v5108
    %v5110 = vrot.slane %v4874, 5
    %v5111 = vrot.slane %v5110, 4
    %v5112 = vrot.slane %v3764, 5
    %v5113 = vsel %vm2790, %v5111, %v5112
    %v5114 = vrot.slane %v5112, 4
    %v5115 = vrot.slane %v3765, 5
    %v5116 = vsel %vm2790, %v5114, %v5115
    %v5117 = vrot.slane %v4875, 5
    %v5118 = vrot.slane %v5117, 4
    %v5119 = vrot.slane %v3767, 5
    %v5120 = vsel %vm2790, %v5118, %v5119
    %v5121 = vrot.slane %v5119, 4
    %v5122 = vrot.slane %v3768, 5
    %v5123 = vsel %vm2790, %v5121, %v5122
    %v5124 = vrot.slane %v4876, 5
    %v5125 = vrot.slane %v5124, 4
    %v5126 = vrot.slane %v3770, 5
    %v5127 = vsel %vm2790, %v5125, %v5126
    %v5128 = vrot.slane %v5126, 4
    %v5129 = vrot.slane %v3771, 5
    %v5130 = vsel %vm2790, %v5128, %v5129
    %v5131 = vrot.slane %v4877, 5
    %v5132 = vrot.slane %v5131, 4
    %v5133 = vrot.slane %v3773, 5
    %v5134 = vsel %vm2790, %v5132, %v5133
    %v5135 = vrot.slane %v5133, 4
    %v5136 = vrot.slane %v3774, 5
    %v5137 = vsel %vm2790, %v5135, %v5136
    %v5138 = vrot.slane %v4878, 5
    %v5139 = vrot.slane %v5138, 4
    %v5140 = vrot.slane %v3776, 5
    %v5141 = vsel %vm2790, %v5139, %v5140
    %v5142 = vrot.slane %v5140, 4
    %v5143 = vrot.slane %v3777, 5
    %v5144 = vsel %vm2790, %v5142, %v5143
    %v5145 = vrot.slane %v4879, 5
    %v5146 = vrot.slane %v5145, 4
    %v5147 = vrot.slane %v3779, 5
    %v5148 = vsel %vm2790, %v5146, %v5147
    %v5149 = vrot.slane %v5147, 4
    %v5150 = vrot.slane %v3780, 5
    %v5151 = vsel %vm2790, %v5149, %v5150
    %v5152 = vrot.slane %v4880, 5
    %v5153 = vrot.slane %v5152, 4
    %v5154 = vrot.slane %v3782, 5
    %v5155 = vsel %vm2790, %v5153, %v5154
    %v5156 = vrot.slane %v5154, 4
    %v5157 = vrot.slane %v3783, 5
    %v5158 = vsel %vm2790, %v5156, %v5157
    %v5159 = vrot.slane %v4881, 5
    %v5160 = vrot.slane %v5159, 4
    %v5161 = vrot.slane %v3785, 5
    %v5162 = vsel %vm2790, %v5160, %v5161
    %v5163 = vrot.slane %v5161, 4
    %v5164 = vrot.slane %v3786, 5
    %v5165 = vsel %vm2790, %v5163, %v5164
    %v5166 = vrot.slane %v4882, 5
    %v5167 = vrot.slane %v5166, 4
    %v5168 = vrot.slane %v3788, 5
    %v5169 = vsel %vm2790, %v5167, %v5168
    %v5170 = vrot.slane %v5168, 4
    %v5171 = vrot.slane %v3789, 5
    %v5172 = vsel %vm2790, %v5170, %v5171
    %v5173 = vrot.slane %v4883, 5
    %v5174 = vrot.slane %v5173, 4
    %v5175 = vrot.slane %v3791, 5
    %v5176 = vsel %vm2790, %v5174, %v5175
    %v5177 = vrot.slane %v5175, 4
    %v5178 = vrot.slane %v3792, 5
    %v5179 = vsel %vm2790, %v5177, %v5178
    %v5180 = vrot.slane %v4884, 5
    %v5181 = vrot.slane %v5180, 4
    %v5182 = vrot.slane %v3794, 5
    %v5183 = vsel %vm2790, %v5181, %v5182
    %v5184 = vrot.slane %v5182, 4
    %v5185 = vrot.slane %v3795, 5
    %v5186 = vsel %vm2790, %v5184, %v5185
    %v5187 = vrot.slane %v4885, 5
    %v5188 = vrot.slane %v5187, 4
    %v5189 = vrot.slane %v3797, 5
    %v5190 = vsel %vm2790, %v5188, %v5189
    %v5191 = vrot.slane %v5189, 4
    %v5192 = vrot.slane %v3798, 5
    %v5193 = vsel %vm2790, %v5191, %v5192
    %v5194 = vrot.slane %v4886, 5
    %v5195 = vrot.slane %v5194, 4
    %v5196 = vrot.slane %v3800, 5
    %v5197 = vsel %vm2790, %v5195, %v5196
    %v5198 = vrot.slane %v5196, 4
    %v5199 = vrot.slane %v3801, 5
    %v5200 = vsel %vm2790, %v5198, %v5199
    %v5201 = vrot.slane %v4887, 5
    %v5202 = vrot.slane %v5201, 4
    %v5203 = vrot.slane %v3803, 5
    %v5204 = vsel %vm2790, %v5202, %v5203
    %v5205 = vrot.slane %v5203, 4
    %v5206 = vrot.slane %v3804, 5
    %v5207 = vsel %vm2790, %v5205, %v5206
    %5208 = vrot.lane.b32.xlu0 %v2070, 108
    %v5209 = vpop.permute.xlu0 %5208
    %v5210 = vunpack.c.l.b16 %v4987
    %v5211 = vunpack.c.l.b16 %v4990
    %v5212 = vunpack.c.l.b16 %v4994
    %v5213 = vunpack.c.l.b16 %v4997
    %v5214 = vunpack.c.l.b16 %v5001
    %v5215 = vunpack.c.l.b16 %v5004
    %v5216 = vunpack.c.l.b16 %v5008
    %v5217 = vunpack.c.l.b16 %v5011
    %v5218 = vunpack.c.l.b16 %v5015
    %v5219 = vunpack.c.l.b16 %v5018
    %v5220 = vunpack.c.l.b16 %v5022
    %v5221 = vunpack.c.l.b16 %v5025
    %v5222 = vunpack.c.l.b16 %v5029
    %v5223 = vunpack.c.l.b16 %v5032
    %v5224 = vunpack.c.l.b16 %v5036
    %v5225 = vunpack.c.l.b16 %v5039
    %v5226 = vunpack.c.l.b16 %v5043
    %v5227 = vunpack.c.l.b16 %v5046
    %v5228 = vunpack.c.l.b16 %v5050
    %v5229 = vunpack.c.l.b16 %v5053
    %v5230 = vunpack.c.l.b16 %v5057
    %v5231 = vunpack.c.l.b16 %v5060
    %v5232 = vunpack.c.l.b16 %v5064
    %v5233 = vunpack.c.l.b16 %v5067
    %v5234 = vunpack.c.l.b16 %v5071
    %v5235 = vunpack.c.l.b16 %v5074
    %v5236 = vunpack.c.l.b16 %v5078
    %v5237 = vunpack.c.l.b16 %v5081
    %v5238 = vunpack.c.l.b16 %v5085
    %v5239 = vunpack.c.l.b16 %v5088
    %v5240 = vunpack.c.l.b16 %v5092
    %v5241 = vunpack.c.l.b16 %v5095
    %v5242 = vunpack.c.l.b16 %v5099
    %v5243 = vunpack.c.l.b16 %v5102
    %v5244 = vunpack.c.l.b16 %v5106
    %v5245 = vunpack.c.l.b16 %v5109
    %v5246 = vunpack.c.l.b16 %v5113
    %v5247 = vunpack.c.l.b16 %v5116
    %v5248 = vunpack.c.l.b16 %v5120
    %v5249 = vunpack.c.l.b16 %v5123
    %v5250 = vunpack.c.l.b16 %v5127
    %v5251 = vunpack.c.l.b16 %v5130
    %v5252 = vunpack.c.l.b16 %v5134
    %v5253 = vunpack.c.l.b16 %v5137
    %v5254 = vunpack.c.l.b16 %v5141
    %v5255 = vunpack.c.l.b16 %v5144
    %v5256 = vunpack.c.l.b16 %v5148
    %v5257 = vunpack.c.l.b16 %v5151
    %v5258 = vunpack.c.l.b16 %v5155
    %v5259 = vunpack.c.l.b16 %v5158
    %v5260 = vunpack.c.l.b16 %v5162
    %v5261 = vunpack.c.l.b16 %v5165
    %v5262 = vunpack.c.l.b16 %v5169
    %v5263 = vunpack.c.l.b16 %v5172
    %v5264 = vunpack.c.l.b16 %v5176
    %v5265 = vunpack.c.l.b16 %v5179
    %v5266 = vunpack.c.l.b16 %v5183
    %v5267 = vunpack.c.l.b16 %v5186
    %v5268 = vunpack.c.l.b16 %v5190
    %v5269 = vunpack.c.l.b16 %v5193
    %v5270 = vunpack.c.l.b16 %v5197
    %v5271 = vunpack.c.l.b16 %v5200
    %v5272 = vunpack.c.l.b16 %v5204
    %v5273 = vunpack.c.l.b16 %v5207
    %v5274 = vpack.c.b16 %v5211, %v5210
    %v5275 = vpack.c.b16 %v5213, %v5212
    %v5276 = vpack.c.b16 %v5215, %v5214
    %v5277 = vpack.c.b16 %v5217, %v5216
    %v5278 = vpack.c.b16 %v5219, %v5218
    %v5279 = vpack.c.b16 %v5221, %v5220
    %v5280 = vpack.c.b16 %v5223, %v5222
    %v5281 = vpack.c.b16 %v5225, %v5224
    %v5282 = vpack.c.b16 %v5227, %v5226
    %v5283 = vpack.c.b16 %v5229, %v5228
    %v5284 = vpack.c.b16 %v5231, %v5230
    %v5285 = vpack.c.b16 %v5233, %v5232
    %v5286 = vpack.c.b16 %v5235, %v5234
    %v5287 = vpack.c.b16 %v5237, %v5236
    %v5288 = vpack.c.b16 %v5239, %v5238
    %v5289 = vpack.c.b16 %v5241, %v5240
    %v5290 = vpack.c.b16 %v5243, %v5242
    %v5291 = vpack.c.b16 %v5245, %v5244
    %v5292 = vpack.c.b16 %v5247, %v5246
    %v5293 = vpack.c.b16 %v5249, %v5248
    %v5294 = vpack.c.b16 %v5251, %v5250
    %v5295 = vpack.c.b16 %v5253, %v5252
    %v5296 = vpack.c.b16 %v5255, %v5254
    %v5297 = vpack.c.b16 %v5257, %v5256
    %v5298 = vpack.c.b16 %v5259, %v5258
    %v5299 = vpack.c.b16 %v5261, %v5260
    %v5300 = vpack.c.b16 %v5263, %v5262
    %v5301 = vpack.c.b16 %v5265, %v5264
    %v5302 = vpack.c.b16 %v5267, %v5266
    %v5303 = vpack.c.b16 %v5269, %v5268
    %v5304 = vpack.c.b16 %v5271, %v5270
    %v5305 = vpack.c.b16 %v5273, %v5272
    %v5307 = vsel %vm2169, %v5209, 0
    %v5310 = vsel %vm2169, %v5274, 0
    %v5313 = vsel %vm2169, %v5275, 0
    %v5316 = vsel %vm2169, %v5276, 0
    %v5319 = vsel %vm2169, %v5277, 0
    %v5322 = vsel %vm2169, %v5278, 0
    %v5325 = vsel %vm2169, %v5279, 0
    %v5328 = vsel %vm2169, %v5280, 0
    %v5331 = vsel %vm2169, %v5281, 0
    %v5334 = vsel %vm2169, %v5282, 0
    %v5337 = vsel %vm2169, %v5283, 0
    %v5340 = vsel %vm2169, %v5284, 0
    %v5343 = vsel %vm2169, %v5285, 0
    %v5346 = vsel %vm2169, %v5286, 0
    %v5349 = vsel %vm2169, %v5287, 0
    %v5352 = vsel %vm2169, %v5288, 0
    %v5355 = vsel %vm2169, %v5289, 0
    %v5358 = vsel %vm2169, %v5290, 0
    %v5361 = vsel %vm2169, %v5291, 0
    %v5364 = vsel %vm2169, %v5292, 0
    %v5367 = vsel %vm2169, %v5293, 0
    %v5370 = vsel %vm2169, %v5294, 0
    %v5373 = vsel %vm2169, %v5295, 0
    %v5376 = vsel %vm2169, %v5296, 0
    %v5379 = vsel %vm2169, %v5297, 0
    %v5382 = vsel %vm2169, %v5298, 0
    %v5385 = vsel %vm2169, %v5299, 0
    %v5388 = vsel %vm2169, %v5300, 0
    %v5391 = vsel %vm2169, %v5301, 0
    %v5394 = vsel %vm2169, %v5302, 0
    %v5397 = vsel %vm2169, %v5303, 0
    %v5400 = vsel %vm2169, %v5304, 0
    %v5403 = vsel %vm2169, %v5305, 0
    %5405 = vmatprep.subr.bf16.mxu0 0
    %5406 = vmatpush1.bf16.xpose.msra.mxu0 %v5310
    %5407 = vmatprep.subr.bf16.mxu0 0
    %5408 = vmatpush1.bf16.xpose.msra.mxu0 %v5313
    %5409 = vmatprep.subr.bf16.mxu0 0
    %5410 = vmatpush1.bf16.xpose.msra.mxu0 %v5316
    %5411 = vmatprep.subr.bf16.mxu0 0
    %5412 = vmatpush1.bf16.xpose.msra.mxu0 %v5319
    %5413 = vmatprep.subr.bf16.mxu0 0
    %5414 = vmatpush1.bf16.xpose.msra.mxu0 %v5322
    %5415 = vmatprep.subr.bf16.mxu0 0
    %5416 = vmatpush1.bf16.xpose.msra.mxu0 %v5325
    %5417 = vmatprep.subr.bf16.mxu0 0
    %5418 = vmatpush1.bf16.xpose.msra.mxu0 %v5328
    %5419 = vmatprep.subr.bf16.mxu0 0
    %5420 = vmatpush1.bf16.xpose.msra.mxu0 %v5331
    %5421 = vmatprep.subr.bf16.mxu0 0
    %5422 = vmatpush1.bf16.xpose.msra.mxu0 %v5334
    %5423 = vmatprep.subr.bf16.mxu0 0
    %5424 = vmatpush1.bf16.xpose.msra.mxu0 %v5337
    %5425 = vmatprep.subr.bf16.mxu0 0
    %5426 = vmatpush1.bf16.xpose.msra.mxu0 %v5340
    %5427 = vmatprep.subr.bf16.mxu0 0
    %5428 = vmatpush1.bf16.xpose.msra.mxu0 %v5343
    %5429 = vmatprep.subr.bf16.mxu0 0
    %5430 = vmatpush1.bf16.xpose.msra.mxu0 %v5346
    %5431 = vmatprep.subr.bf16.mxu0 0
    %5432 = vmatpush1.bf16.xpose.msra.mxu0 %v5349
    %5433 = vmatprep.subr.bf16.mxu0 0
    %5434 = vmatpush1.bf16.xpose.msra.mxu0 %v5352
    %5435 = vmatprep.subr.bf16.mxu0 0
    %5436 = vmatpush1.bf16.xpose.msra.mxu0 %v5355
    %5437 = vmatprep.mubr.bf16.mxu0 0
    %5438 = vmatmul.mubr.bf16.gmra.mrb[0].mxu0 %v5307
    %v5439 = vpop.f32.mrb[0].mxu0
    %v5440 = vadd.f32 0.0, %v5439
    %v5441 = vpop.f32.mrb[0].mxu0
    %v5442 = vadd.f32 0.0, %v5441
    %v5443 = vpop.f32.mrb[0].mxu0
    %v5444 = vpop.f32.mrb[0].mxu0
    %5445 = vdwg.mxu0
    %5446 = vmatprep.subr.bf16.mxu0 0
    %5447 = vmatpush1.bf16.xpose.msra.mxu0 %v5358
    %5448 = vmatprep.subr.bf16.mxu0 0
    %5449 = vmatpush1.bf16.xpose.msra.mxu0 %v5361
    %5450 = vmatprep.subr.bf16.mxu0 0
    %5451 = vmatpush1.bf16.xpose.msra.mxu0 %v5364
    %5452 = vmatprep.subr.bf16.mxu0 0
    %5453 = vmatpush1.bf16.xpose.msra.mxu0 %v5367
    %5454 = vmatprep.subr.bf16.mxu0 0
    %5455 = vmatpush1.bf16.xpose.msra.mxu0 %v5370
    %5456 = vmatprep.subr.bf16.mxu0 0
    %5457 = vmatpush1.bf16.xpose.msra.mxu0 %v5373
    %5458 = vmatprep.subr.bf16.mxu0 0
    %5459 = vmatpush1.bf16.xpose.msra.mxu0 %v5376
    %5460 = vmatprep.subr.bf16.mxu0 0
    %5461 = vmatpush1.bf16.xpose.msra.mxu0 %v5379
    %5462 = vmatprep.subr.bf16.mxu0 0
    %5463 = vmatpush1.bf16.xpose.msra.mxu0 %v5382
    %5464 = vmatprep.subr.bf16.mxu0 0
    %5465 = vmatpush1.bf16.xpose.msra.mxu0 %v5385
    %5466 = vmatprep.subr.bf16.mxu0 0
    %5467 = vmatpush1.bf16.xpose.msra.mxu0 %v5388
    %5468 = vmatprep.subr.bf16.mxu0 0
    %5469 = vmatpush1.bf16.xpose.msra.mxu0 %v5391
    %5470 = vmatprep.subr.bf16.mxu0 0
    %5471 = vmatpush1.bf16.xpose.msra.mxu0 %v5394
    %5472 = vmatprep.subr.bf16.mxu0 0
    %5473 = vmatpush1.bf16.xpose.msra.mxu0 %v5397
    %5474 = vmatprep.subr.bf16.mxu0 0
    %5475 = vmatpush1.bf16.xpose.msra.mxu0 %v5400
    %5476 = vmatprep.subr.bf16.mxu0 0
    %5477 = vmatpush1.bf16.xpose.msra.mxu0 %v5403
    %5478 = vmatprep.mubr.bf16.mxu0 0
    %5479 = vmatmul.mubr.bf16.gmra.mrb[0].mxu0 %v5307
    %v5480 = vpop.f32.mrb[0].mxu0
    %v5481 = vadd.f32 0.0, %v5480
    %v5482 = vpop.f32.mrb[0].mxu0
    %v5483 = vadd.f32 0.0, %v5482
    %v5484 = vpop.f32.mrb[0].mxu0
    %v5485 = vpop.f32.mrb[0].mxu0
    %5486 = vdwg.mxu0
    %v5487 = vadd.f32 %v4852, %v5440
    %v5488 = vadd.f32 %v4853, %v5442
    %v5489 = vadd.f32 %v4854, %v5481
    %v5490 = vadd.f32 %v4855, %v5483
    %s5491 = scalar_lea.vmem [#allocation2], 24
    %v5492 = vld [vmem:[%s5491] sm:$0xf]
    %v5493 = vld [vmem:[%s5491 + $0x4] sm:$0xf]
    %v5494 = vld [vmem:[%s5491 + $0xc] sm:$0xf]
    %v5495 = vld [vmem:[%s5491 + $0x10] sm:$0xf]
    %v5496 = vld [vmem:[%s5491 + $0x18] sm:$0xf]
    %v5497 = vld [vmem:[%s5491 + $0x1c] sm:$0xf]
    %v5498 = vld [vmem:[%s5491 + $0x24] sm:$0xf]
    %v5499 = vld [vmem:[%s5491 + $0x28] sm:$0xf]
    %v5500 = vld [vmem:[%s5491 + $0x30] sm:$0xf]
    %v5501 = vld [vmem:[%s5491 + $0x34] sm:$0xf]
    %v5502 = vld [vmem:[%s5491 + $0x3c] sm:$0xf]
    %v5503 = vld [vmem:[%s5491 + $0x40] sm:$0xf]
    %v5504 = vld [vmem:[%s5491 + $0x48] sm:$0xf]
    %v5505 = vld [vmem:[%s5491 + $0x4c] sm:$0xf]
    %v5506 = vld [vmem:[%s5491 + $0x54] sm:$0xf]
    %v5507 = vld [vmem:[%s5491 + $0x58] sm:$0xf]
    %v5508 = vld [vmem:[%s5491 + $0x60] sm:$0xf]
    %v5509 = vld [vmem:[%s5491 + $0x64] sm:$0xf]
    %v5510 = vld [vmem:[%s5491 + $0x6c] sm:$0xf]
    %v5511 = vld [vmem:[%s5491 + $0x70] sm:$0xf]
    %v5512 = vld [vmem:[%s5491 + $0x78] sm:$0xf]
    %v5513 = vld [vmem:[%s5491 + $0x7c] sm:$0xf]
    %v5514 = vld [vmem:[%s5491 + $0x84] sm:$0xf]
    %v5515 = vld [vmem:[%s5491 + $0x88] sm:$0xf]
    %v5516 = vld [vmem:[%s5491 + $0x90] sm:$0xf]
    %v5517 = vld [vmem:[%s5491 + $0x94] sm:$0xf]
    %v5518 = vld [vmem:[%s5491 + $0x9c] sm:$0xf]
    %v5519 = vld [vmem:[%s5491 + $0xa0] sm:$0xf]
    %v5520 = vld [vmem:[%s5491 + $0xa8] sm:$0xf]
    %v5521 = vld [vmem:[%s5491 + $0xac] sm:$0xf]
    %v5522 = vld [vmem:[%s5491 + $0xb4] sm:$0xf]
    %v5523 = vld [vmem:[%s5491 + $0xb8] sm:$0xf]
    %v5524 = vld [vmem:[%s5491 + $0xd8] sm:$0xf]
    %v5525 = vld [vmem:[%s5491 + $0xdc] sm:$0xf]
    %v5526 = vld [vmem:[%s5491 + $0xe4] sm:$0xf]
    %v5527 = vld [vmem:[%s5491 + $0xe8] sm:$0xf]
    %v5528 = vld [vmem:[%s5491 + $0xf0] sm:$0xf]
    %v5529 = vld [vmem:[%s5491 + $0xf4] sm:$0xf]
    %v5530 = vld [vmem:[%s5491 + $0xfc] sm:$0xf]
    %v5531 = vld [vmem:[%s5491 + $0x100] sm:$0xf]
    %v5532 = vld [vmem:[%s5491 + $0x108] sm:$0xf]
    %v5533 = vld [vmem:[%s5491 + $0x10c] sm:$0xf]
    %v5534 = vld [vmem:[%s5491 + $0x114] sm:$0xf]
    %v5535 = vld [vmem:[%s5491 + $0x118] sm:$0xf]
    %v5536 = vld [vmem:[%s5491 + $0x120] sm:$0xf]
    %v5537 = vld [vmem:[%s5491 + $0x124] sm:$0xf]
    %v5538 = vld [vmem:[%s5491 + $0x12c] sm:$0xf]
    %v5539 = vld [vmem:[%s5491 + $0x130] sm:$0xf]
    %v5540 = vld [vmem:[%s5491 + $0x138] sm:$0xf]
    %v5541 = vld [vmem:[%s5491 + $0x13c] sm:$0xf]
    %v5542 = vld [vmem:[%s5491 + $0x144] sm:$0xf]
    %v5543 = vld [vmem:[%s5491 + $0x148] sm:$0xf]
    %v5544 = vld [vmem:[%s5491 + $0x150] sm:$0xf]
    %v5545 = vld [vmem:[%s5491 + $0x154] sm:$0xf]
    %v5546 = vld [vmem:[%s5491 + $0x15c] sm:$0xf]
    %v5547 = vld [vmem:[%s5491 + $0x160] sm:$0xf]
    %v5548 = vld [vmem:[%s5491 + $0x168] sm:$0xf]
    %v5549 = vld [vmem:[%s5491 + $0x16c] sm:$0xf]
    %v5550 = vld [vmem:[%s5491 + $0x174] sm:$0xf]
    %v5551 = vld [vmem:[%s5491 + $0x178] sm:$0xf]
    %v5552 = vld [vmem:[%s5491 + $0x180] sm:$0xf]
    %v5553 = vld [vmem:[%s5491 + $0x184] sm:$0xf]
    %v5554 = vld [vmem:[%s5491 + $0x18c] sm:$0xf]
    %v5555 = vld [vmem:[%s5491 + $0x190] sm:$0xf]
    %5556 = vrot.lane.b32.xlu0 %v2070, 104
    %v5557 = vpop.permute.xlu0 %5556
    %v5622 = vunpack.c.l.b16 %v5492
    %v5623 = vunpack.c.l.b16 %v5493
    %v5624 = vunpack.c.l.b16 %v5494
    %v5625 = vunpack.c.l.b16 %v5495
    %v5626 = vunpack.c.l.b16 %v5496
    %v5627 = vunpack.c.l.b16 %v5497
    %v5628 = vunpack.c.l.b16 %v5498
    %v5629 = vunpack.c.l.b16 %v5499
    %v5630 = vunpack.c.l.b16 %v5500
    %v5631 = vunpack.c.l.b16 %v5501
    %v5632 = vunpack.c.l.b16 %v5502
    %v5633 = vunpack.c.l.b16 %v5503
    %v5634 = vunpack.c.l.b16 %v5504
    %v5635 = vunpack.c.l.b16 %v5505
    %v5636 = vunpack.c.l.b16 %v5506
    %v5637 = vunpack.c.l.b16 %v5507
    %v5638 = vunpack.c.l.b16 %v5508
    %v5639 = vunpack.c.l.b16 %v5509
    %v5640 = vunpack.c.l.b16 %v5510
    %v5641 = vunpack.c.l.b16 %v5511
    %v5642 = vunpack.c.l.b16 %v5512
    %v5643 = vunpack.c.l.b16 %v5513
    %v5644 = vunpack.c.l.b16 %v5514
    %v5645 = vunpack.c.l.b16 %v5515
    %v5646 = vunpack.c.l.b16 %v5516
    %v5647 = vunpack.c.l.b16 %v5517
    %v5648 = vunpack.c.l.b16 %v5518
    %v5649 = vunpack.c.l.b16 %v5519
    %v5650 = vunpack.c.l.b16 %v5520
    %v5651 = vunpack.c.l.b16 %v5521
    %v5652 = vunpack.c.l.b16 %v5522
    %v5653 = vunpack.c.l.b16 %v5523
    %v5654 = vunpack.c.l.b16 %v5524
    %v5655 = vunpack.c.l.b16 %v5525
    %v5656 = vunpack.c.l.b16 %v5526
    %v5657 = vunpack.c.l.b16 %v5527
    %v5658 = vunpack.c.l.b16 %v5528
    %v5659 = vunpack.c.l.b16 %v5529
    %v5660 = vunpack.c.l.b16 %v5530
    %v5661 = vunpack.c.l.b16 %v5531
    %v5662 = vunpack.c.l.b16 %v5532
    %v5663 = vunpack.c.l.b16 %v5533
    %v5664 = vunpack.c.l.b16 %v5534
    %v5665 = vunpack.c.l.b16 %v5535
    %v5666 = vunpack.c.l.b16 %v5536
    %v5667 = vunpack.c.l.b16 %v5537
    %v5668 = vunpack.c.l.b16 %v5538
    %v5669 = vunpack.c.l.b16 %v5539
    %v5670 = vunpack.c.l.b16 %v5540
    %v5671 = vunpack.c.l.b16 %v5541
    %v5672 = vunpack.c.l.b16 %v5542
    %v5673 = vunpack.c.l.b16 %v5543
    %v5674 = vunpack.c.l.b16 %v5544
    %v5675 = vunpack.c.l.b16 %v5545
    %v5676 = vunpack.c.l.b16 %v5546
    %v5677 = vunpack.c.l.b16 %v5547
    %v5678 = vunpack.c.l.b16 %v5548
    %v5679 = vunpack.c.l.b16 %v5549
    %v5680 = vunpack.c.l.b16 %v5550
    %v5681 = vunpack.c.l.b16 %v5551
    %v5682 = vunpack.c.l.b16 %v5552
    %v5683 = vunpack.c.l.b16 %v5553
    %v5684 = vunpack.c.l.b16 %v5554
    %v5685 = vunpack.c.l.b16 %v5555
    %v5686 = vpack.c.b16 %v5623, %v5622
    %v5687 = vpack.c.b16 %v5625, %v5624
    %v5688 = vpack.c.b16 %v5627, %v5626
    %v5689 = vpack.c.b16 %v5629, %v5628
    %v5690 = vpack.c.b16 %v5631, %v5630
    %v5691 = vpack.c.b16 %v5633, %v5632
    %v5692 = vpack.c.b16 %v5635, %v5634
    %v5693 = vpack.c.b16 %v5637, %v5636
    %v5694 = vpack.c.b16 %v5639, %v5638
    %v5695 = vpack.c.b16 %v5641, %v5640
    %v5696 = vpack.c.b16 %v5643, %v5642
    %v5697 = vpack.c.b16 %v5645, %v5644
    %v5698 = vpack.c.b16 %v5647, %v5646
    %v5699 = vpack.c.b16 %v5649, %v5648
    %v5700 = vpack.c.b16 %v5651, %v5650
    %v5701 = vpack.c.b16 %v5653, %v5652
    %v5702 = vpack.c.b16 %v5655, %v5654
    %v5703 = vpack.c.b16 %v5657, %v5656
    %v5704 = vpack.c.b16 %v5659, %v5658
    %v5705 = vpack.c.b16 %v5661, %v5660
    %v5706 = vpack.c.b16 %v5663, %v5662
    %v5707 = vpack.c.b16 %v5665, %v5664
    %v5708 = vpack.c.b16 %v5667, %v5666
    %v5709 = vpack.c.b16 %v5669, %v5668
    %v5710 = vpack.c.b16 %v5671, %v5670
    %v5711 = vpack.c.b16 %v5673, %v5672
    %v5712 = vpack.c.b16 %v5675, %v5674
    %v5713 = vpack.c.b16 %v5677, %v5676
    %v5714 = vpack.c.b16 %v5679, %v5678
    %v5715 = vpack.c.b16 %v5681, %v5680
    %v5716 = vpack.c.b16 %v5683, %v5682
    %v5717 = vpack.c.b16 %v5685, %v5684
    %v5719 = vsel %vm2169, %v5557, 0
    %v5722 = vsel %vm2169, %v5686, 0
    %v5725 = vsel %vm2169, %v5687, 0
    %v5728 = vsel %vm2169, %v5688, 0
    %v5731 = vsel %vm2169, %v5689, 0
    %v5734 = vsel %vm2169, %v5690, 0
    %v5737 = vsel %vm2169, %v5691, 0
    %v5740 = vsel %vm2169, %v5692, 0
    %v5743 = vsel %vm2169, %v5693, 0
    %v5746 = vsel %vm2169, %v5694, 0
    %v5749 = vsel %vm2169, %v5695, 0
    %v5752 = vsel %vm2169, %v5696, 0
    %v5755 = vsel %vm2169, %v5697, 0
    %v5758 = vsel %vm2169, %v5698, 0
    %v5761 = vsel %vm2169, %v5699, 0
    %v5764 = vsel %vm2169, %v5700, 0
    %v5767 = vsel %vm2169, %v5701, 0
    %v5770 = vsel %vm2169, %v5702, 0
    %v5773 = vsel %vm2169, %v5703, 0
    %v5776 = vsel %vm2169, %v5704, 0
    %v5779 = vsel %vm2169, %v5705, 0
    %v5782 = vsel %vm2169, %v5706, 0
    %v5785 = vsel %vm2169, %v5707, 0
    %v5788 = vsel %vm2169, %v5708, 0
    %v5791 = vsel %vm2169, %v5709, 0
    %v5794 = vsel %vm2169, %v5710, 0
    %v5797 = vsel %vm2169, %v5711, 0
    %v5800 = vsel %vm2169, %v5712, 0
    %v5803 = vsel %vm2169, %v5713, 0
    %v5806 = vsel %vm2169, %v5714, 0
    %v5809 = vsel %vm2169, %v5715, 0
    %v5812 = vsel %vm2169, %v5716, 0
    %v5815 = vsel %vm2169, %v5717, 0
    %5817 = vmatprep.subr.bf16.mxu0 0
    %5818 = vmatpush1.bf16.xpose.msra.mxu0 %v5722
    %5819 = vmatprep.subr.bf16.mxu0 0
    %5820 = vmatpush1.bf16.xpose.msra.mxu0 %v5725
    %5821 = vmatprep.subr.bf16.mxu0 0
    %5822 = vmatpush1.bf16.xpose.msra.mxu0 %v5728
    %5823 = vmatprep.subr.bf16.mxu0 0
    %5824 = vmatpush1.bf16.xpose.msra.mxu0 %v5731
    %5825 = vmatprep.subr.bf16.mxu0 0
    %5826 = vmatpush1.bf16.xpose.msra.mxu0 %v5734
    %5827 = vmatprep.subr.bf16.mxu0 0
    %5828 = vmatpush1.bf16.xpose.msra.mxu0 %v5737
    %5829 = vmatprep.subr.bf16.mxu0 0
    %5830 = vmatpush1.bf16.xpose.msra.mxu0 %v5740
    %5831 = vmatprep.subr.bf16.mxu0 0
    %5832 = vmatpush1.bf16.xpose.msra.mxu0 %v5743
    %5833 = vmatprep.subr.bf16.mxu0 0
    %5834 = vmatpush1.bf16.xpose.msra.mxu0 %v5746
    %5835 = vmatprep.subr.bf16.mxu0 0
    %5836 = vmatpush1.bf16.xpose.msra.mxu0 %v5749
    %5837 = vmatprep.subr.bf16.mxu0 0
    %5838 = vmatpush1.bf16.xpose.msra.mxu0 %v5752
    %5839 = vmatprep.subr.bf16.mxu0 0
    %5840 = vmatpush1.bf16.xpose.msra.mxu0 %v5755
    %5841 = vmatprep.subr.bf16.mxu0 0
    %5842 = vmatpush1.bf16.xpose.msra.mxu0 %v5758
    %5843 = vmatprep.subr.bf16.mxu0 0
    %5844 = vmatpush1.bf16.xpose.msra.mxu0 %v5761
    %5845 = vmatprep.subr.bf16.mxu0 0
    %5846 = vmatpush1.bf16.xpose.msra.mxu0 %v5764
    %5847 = vmatprep.subr.bf16.mxu0 0
    %5848 = vmatpush1.bf16.xpose.msra.mxu0 %v5767
    %5849 = vmatprep.mubr.bf16.mxu0 0
    %5850 = vmatmul.mubr.bf16.gmra.mrb[0].mxu0 %v5719
    %v5851 = vpop.f32.mrb[0].mxu0
    %v5852 = vadd.f32 0.0, %v5851
    %v5853 = vpop.f32.mrb[0].mxu0
    %v5854 = vadd.f32 0.0, %v5853
    %v5855 = vpop.f32.mrb[0].mxu0
    %v5856 = vpop.f32.mrb[0].mxu0
    %5857 = vdwg.mxu0
    %5858 = vmatprep.subr.bf16.mxu0 0
    %5859 = vmatpush1.bf16.xpose.msra.mxu0 %v5770
    %5860 = vmatprep.subr.bf16.mxu0 0
    %5861 = vmatpush1.bf16.xpose.msra.mxu0 %v5773
    %5862 = vmatprep.subr.bf16.mxu0 0
    %5863 = vmatpush1.bf16.xpose.msra.mxu0 %v5776
    %5864 = vmatprep.subr.bf16.mxu0 0
    %5865 = vmatpush1.bf16.xpose.msra.mxu0 %v5779
    %5866 = vmatprep.subr.bf16.mxu0 0
    %5867 = vmatpush1.bf16.xpose.msra.mxu0 %v5782
    %5868 = vmatprep.subr.bf16.mxu0 0
    %5869 = vmatpush1.bf16.xpose.msra.mxu0 %v5785
    %5870 = vmatprep.subr.bf16.mxu0 0
    %5871 = vmatpush1.bf16.xpose.msra.mxu0 %v5788
    %5872 = vmatprep.subr.bf16.mxu0 0
    %5873 = vmatpush1.bf16.xpose.msra.mxu0 %v5791
    %5874 = vmatprep.subr.bf16.mxu0 0
    %5875 = vmatpush1.bf16.xpose.msra.mxu0 %v5794
    %5876 = vmatprep.subr.bf16.mxu0 0
    %5877 = vmatpush1.bf16.xpose.msra.mxu0 %v5797
    %5878 = vmatprep.subr.bf16.mxu0 0
    %5879 = vmatpush1.bf16.xpose.msra.mxu0 %v5800
    %5880 = vmatprep.subr.bf16.mxu0 0
    %5881 = vmatpush1.bf16.xpose.msra.mxu0 %v5803
    %5882 = vmatprep.subr.bf16.mxu0 0
    %5883 = vmatpush1.bf16.xpose.msra.mxu0 %v5806
    %5884 = vmatprep.subr.bf16.mxu0 0
    %5885 = vmatpush1.bf16.xpose.msra.mxu0 %v5809
    %5886 = vmatprep.subr.bf16.mxu0 0
    %5887 = vmatpush1.bf16.xpose.msra.mxu0 %v5812
    %5888 = vmatprep.subr.bf16.mxu0 0
    %5889 = vmatpush1.bf16.xpose.msra.mxu0 %v5815
    %5890 = vmatprep.mubr.bf16.mxu0 0
    %5891 = vmatmul.mubr.bf16.gmra.mrb[0].mxu0 %v5719
    %v5892 = vpop.f32.mrb[0].mxu0
    %v5893 = vadd.f32 0.0, %v5892
    %v5894 = vpop.f32.mrb[0].mxu0
    %v5895 = vadd.f32 0.0, %v5894
    %v5896 = vpop.f32.mrb[0].mxu0
    %v5897 = vpop.f32.mrb[0].mxu0
    %5898 = vdwg.mxu0
    %v5899 = vadd.f32 %v5487, %v5852
    %v5900 = vadd.f32 %v5488, %v5854
    %v5901 = vadd.f32 %v5489, %v5893
    %v5902 = vadd.f32 %v5490, %v5895
    %v5903 = vld [vmem:[%s5491] sm:$0xf]
    %v5904 = vld [vmem:[%s5491 + $0x4] sm:$0xf]
    %v5905 = vld [vmem:[%s5491 + $0x8] sm:$0x1]
    %v5906 = vld [vmem:[%s5491 + $0xc] sm:$0xf]
    %v5907 = vld [vmem:[%s5491 + $0x10] sm:$0xf]
    %v5908 = vld [vmem:[%s5491 + $0x14] sm:$0x1]
    %v5909 = vld [vmem:[%s5491 + $0x18] sm:$0xf]
    %v5910 = vld [vmem:[%s5491 + $0x1c] sm:$0xf]
    %v5911 = vld [vmem:[%s5491 + $0x20] sm:$0x1]
    %v5912 = vld [vmem:[%s5491 + $0x24] sm:$0xf]
    %v5913 = vld [vmem:[%s5491 + $0x28] sm:$0xf]
    %v5914 = vld [vmem:[%s5491 + $0x2c] sm:$0x1]
    %v5915 = vld [vmem:[%s5491 + $0x30] sm:$0xf]
    %v5916 = vld [vmem:[%s5491 + $0x34] sm:$0xf]
    %v5917 = vld [vmem:[%s5491 + $0x38] sm:$0x1]
    %v5918 = vld [vmem:[%s5491 + $0x3c] sm:$0xf]
    %v5919 = vld [vmem:[%s5491 + $0x40] sm:$0xf]
    %v5920 = vld [vmem:[%s5491 + $0x44] sm:$0x1]
    %v5921 = vld [vmem:[%s5491 + $0x48] sm:$0xf]
    %v5922 = vld [vmem:[%s5491 + $0x4c] sm:$0xf]
    %v5923 = vld [vmem:[%s5491 + $0x50] sm:$0x1]
    %v5924 = vld [vmem:[%s5491 + $0x54] sm:$0xf]
    %v5925 = vld [vmem:[%s5491 + $0x58] sm:$0xf]
    %v5926 = vld [vmem:[%s5491 + $0x5c] sm:$0x1]
    %v5927 = vld [vmem:[%s5491 + $0x60] sm:$0xf]
    %v5928 = vld [vmem:[%s5491 + $0x64] sm:$0xf]
    %v5929 = vld [vmem:[%s5491 + $0x68] sm:$0x1]
    %v5930 = vld [vmem:[%s5491 + $0x6c] sm:$0xf]
    %v5931 = vld [vmem:[%s5491 + $0x70] sm:$0xf]
    %v5932 = vld [vmem:[%s5491 + $0x74] sm:$0x1]
    %v5933 = vld [vmem:[%s5491 + $0x78] sm:$0xf]
    %v5934 = vld [vmem:[%s5491 + $0x7c] sm:$0xf]
    %v5935 = vld [vmem:[%s5491 + $0x80] sm:$0x1]
    %v5936 = vld [vmem:[%s5491 + $0x84] sm:$0xf]
    %v5937 = vld [vmem:[%s5491 + $0x88] sm:$0xf]
    %v5938 = vld [vmem:[%s5491 + $0x8c] sm:$0x1]
    %v5939 = vld [vmem:[%s5491 + $0x90] sm:$0xf]
    %v5940 = vld [vmem:[%s5491 + $0x94] sm:$0xf]
    %v5941 = vld [vmem:[%s5491 + $0x98] sm:$0x1]
    %v5942 = vld [vmem:[%s5491 + $0x9c] sm:$0xf]
    %v5943 = vld [vmem:[%s5491 + $0xa0] sm:$0xf]
    %v5944 = vld [vmem:[%s5491 + $0xa4] sm:$0x1]
    %v5945 = vld [vmem:[%s5491 + $0xa8] sm:$0xf]
    %v5946 = vld [vmem:[%s5491 + $0xac] sm:$0xf]
    %v5947 = vld [vmem:[%s5491 + $0xb0] sm:$0x1]
    %v5948 = vld [vmem:[%s5491 + $0xb4] sm:$0xf]
    %v5949 = vld [vmem:[%s5491 + $0xb8] sm:$0xf]
    %v5950 = vld [vmem:[%s5491 + $0xbc] sm:$0x1]
    %v5951 = vld [vmem:[%s5491 + $0xd8] sm:$0xf]
    %v5952 = vld [vmem:[%s5491 + $0xdc] sm:$0xf]
    %v5953 = vld [vmem:[%s5491 + $0xe0] sm:$0x1]
    %v5954 = vld [vmem:[%s5491 + $0xe4] sm:$0xf]
    %v5955 = vld [vmem:[%s5491 + $0xe8] sm:$0xf]
    %v5956 = vld [vmem:[%s5491 + $0xec] sm:$0x1]
    %v5957 = vld [vmem:[%s5491 + $0xf0] sm:$0xf]
    %v5958 = vld [vmem:[%s5491 + $0xf4] sm:$0xf]
    %v5959 = vld [vmem:[%s5491 + $0xf8] sm:$0x1]
    %v5960 = vld [vmem:[%s5491 + $0xfc] sm:$0xf]
    %v5961 = vld [vmem:[%s5491 + $0x100] sm:$0xf]
    %v5962 = vld [vmem:[%s5491 + $0x104] sm:$0x1]
    %v5963 = vld [vmem:[%s5491 + $0x108] sm:$0xf]
    %v5964 = vld [vmem:[%s5491 + $0x10c] sm:$0xf]
    %v5965 = vld [vmem:[%s5491 + $0x110] sm:$0x1]
    %v5966 = vld [vmem:[%s5491 + $0x114] sm:$0xf]
    %v5967 = vld [vmem:[%s5491 + $0x118] sm:$0xf]
    %v5968 = vld [vmem:[%s5491 + $0x11c] sm:$0x1]
    %v5969 = vld [vmem:[%s5491 + $0x120] sm:$0xf]
    %v5970 = vld [vmem:[%s5491 + $0x124] sm:$0xf]
    %v5971 = vld [vmem:[%s5491 + $0x128] sm:$0x1]
    %v5972 = vld [vmem:[%s5491 + $0x12c] sm:$0xf]
    %v5973 = vld [vmem:[%s5491 + $0x130] sm:$0xf]
    %v5974 = vld [vmem:[%s5491 + $0x134] sm:$0x1]
    %v5975 = vld [vmem:[%s5491 + $0x138] sm:$0xf]
    %v5976 = vld [vmem:[%s5491 + $0x13c] sm:$0xf]
    %v5977 = vld [vmem:[%s5491 + $0x140] sm:$0x1]
    %v5978 = vld [vmem:[%s5491 + $0x144] sm:$0xf]
    %v5979 = vld [vmem:[%s5491 + $0x148] sm:$0xf]
    %v5980 = vld [vmem:[%s5491 + $0x14c] sm:$0x1]
    %v5981 = vld [vmem:[%s5491 + $0x150] sm:$0xf]
    %v5982 = vld [vmem:[%s5491 + $0x154] sm:$0xf]
    %v5983 = vld [vmem:[%s5491 + $0x158] sm:$0x1]
    %v5984 = vld [vmem:[%s5491 + $0x15c] sm:$0xf]
    %v5985 = vld [vmem:[%s5491 + $0x160] sm:$0xf]
    %v5986 = vld [vmem:[%s5491 + $0x164] sm:$0x1]
    %v5987 = vld [vmem:[%s5491 + $0x168] sm:$0xf]
    %v5988 = vld [vmem:[%s5491 + $0x16c] sm:$0xf]
    %v5989 = vld [vmem:[%s5491 + $0x170] sm:$0x1]
    %v5990 = vld [vmem:[%s5491 + $0x174] sm:$0xf]
    %v5991 = vld [vmem:[%s5491 + $0x178] sm:$0xf]
    %v5992 = vld [vmem:[%s5491 + $0x17c] sm:$0x1]
    %v5993 = vld [vmem:[%s5491 + $0x180] sm:$0xf]
    %v5994 = vld [vmem:[%s5491 + $0x184] sm:$0xf]
    %v5995 = vld [vmem:[%s5491 + $0x188] sm:$0x1]
    %v5996 = vld [vmem:[%s5491 + $0x18c] sm:$0xf]
    %v5997 = vld [vmem:[%s5491 + $0x190] sm:$0xf]
    %v5998 = vld [vmem:[%s5491 + $0x194] sm:$0x1]
    %v6000 = vshrl.u32 %v5903, 16
    %v6002 = vrot.slane %v6000, 4
    %v6003 = vshll.u32 %v5903, 16
    %v6005 = vrot.slane %v6003, 5
    %v6006 = vor.u32 %v6002, %v6005
    %v6007 = vrot.slane %v6006, 4
    %v6009 = vshll.u32 %v5904, 16
    %v6011 = vrot.slane %v6009, 5
    %v6012 = vsel %vm1299, %v6007, %v6011
    %v6013 = vshrl.u32 %v5904, 16
    %v6015 = vrot.slane %v6013, 4
    %v6016 = vor.u32 %v6015, %v6011
    %v6017 = vrot.slane %v6016, 4
    %v6019 = vshll.u32 %v5905, 16
    %v6021 = vrot.slane %v6019, 5
    %v6022 = vsel %vm1299, %v6017, %v6021
    %v6024 = vshrl.u32 %v5906, 16
    %v6026 = vrot.slane %v6024, 4
    %v6027 = vshll.u32 %v5906, 16
    %v6029 = vrot.slane %v6027, 5
    %v6030 = vor.u32 %v6026, %v6029
    %v6031 = vrot.slane %v6030, 4
    %v6033 = vshll.u32 %v5907, 16
    %v6035 = vrot.slane %v6033, 5
    %v6036 = vsel %vm1299, %v6031, %v6035
    %v6037 = vshrl.u32 %v5907, 16
    %v6039 = vrot.slane %v6037, 4
    %v6040 = vor.u32 %v6039, %v6035
    %v6041 = vrot.slane %v6040, 4
    %v6043 = vshll.u32 %v5908, 16
    %v6045 = vrot.slane %v6043, 5
    %v6046 = vsel %vm1299, %v6041, %v6045
    %v6048 = vshrl.u32 %v5909, 16
    %v6050 = vrot.slane %v6048, 4
    %v6051 = vshll.u32 %v5909, 16
    %v6053 = vrot.slane %v6051, 5
    %v6054 = vor.u32 %v6050, %v6053
    %v6055 = vrot.slane %v6054, 4
    %v6057 = vshll.u32 %v5910, 16
    %v6059 = vrot.slane %v6057, 5
    %v6060 = vsel %vm1299, %v6055, %v6059
    %v6061 = vshrl.u32 %v5910, 16
    %v6063 = vrot.slane %v6061, 4
    %v6064 = vor.u32 %v6063, %v6059
    %v6065 = vrot.slane %v6064, 4
    %v6067 = vshll.u32 %v5911, 16
    %v6069 = vrot.slane %v6067, 5
    %v6070 = vsel %vm1299, %v6065, %v6069
    %v6072 = vshrl.u32 %v5912, 16
    %v6074 = vrot.slane %v6072, 4
    %v6075 = vshll.u32 %v5912, 16
    %v6077 = vrot.slane %v6075, 5
    %v6078 = vor.u32 %v6074, %v6077
    %v6079 = vrot.slane %v6078, 4
    %v6081 = vshll.u32 %v5913, 16
    %v6083 = vrot.slane %v6081, 5
    %v6084 = vsel %vm1299, %v6079, %v6083
    %v6085 = vshrl.u32 %v5913, 16
    %v6087 = vrot.slane %v6085, 4
    %v6088 = vor.u32 %v6087, %v6083
    %v6089 = vrot.slane %v6088, 4
    %v6091 = vshll.u32 %v5914, 16
    %v6093 = vrot.slane %v6091, 5
    %v6094 = vsel %vm1299, %v6089, %v6093
    %v6096 = vshrl.u32 %v5915, 16
    %v6098 = vrot.slane %v6096, 4
    %v6099 = vshll.u32 %v5915, 16
    %v6101 = vrot.slane %v6099, 5
    %v6102 = vor.u32 %v6098, %v6101
    %v6103 = vrot.slane %v6102, 4
    %v6105 = vshll.u32 %v5916, 16
    %v6107 = vrot.slane %v6105, 5
    %v6108 = vsel %vm1299, %v6103, %v6107
    %v6109 = vshrl.u32 %v5916, 16
    %v6111 = vrot.slane %v6109, 4
    %v6112 = vor.u32 %v6111, %v6107
    %v6113 = vrot.slane %v6112, 4
    %v6115 = vshll.u32 %v5917, 16
    %v6117 = vrot.slane %v6115, 5
    %v6118 = vsel %vm1299, %v6113, %v6117
    %v6120 = vshrl.u32 %v5918, 16
    %v6122 = vrot.slane %v6120, 4
    %v6123 = vshll.u32 %v5918, 16
    %v6125 = vrot.slane %v6123, 5
    %v6126 = vor.u32 %v6122, %v6125
    %v6127 = vrot.slane %v6126, 4
    %v6129 = vshll.u32 %v5919, 16
    %v6131 = vrot.slane %v6129, 5
    %v6132 = vsel %vm1299, %v6127, %v6131
    %v6133 = vshrl.u32 %v5919, 16
    %v6135 = vrot.slane %v6133, 4
    %v6136 = vor.u32 %v6135, %v6131
    %v6137 = vrot.slane %v6136, 4
    %v6139 = vshll.u32 %v5920, 16
    %v6141 = vrot.slane %v6139, 5
    %v6142 = vsel %vm1299, %v6137, %v6141
    %v6144 = vshrl.u32 %v5921, 16
    %v6146 = vrot.slane %v6144, 4
    %v6147 = vshll.u32 %v5921, 16
    %v6149 = vrot.slane %v6147, 5
    %v6150 = vor.u32 %v6146, %v6149
    %v6151 = vrot.slane %v6150, 4
    %v6153 = vshll.u32 %v5922, 16
    %v6155 = vrot.slane %v6153, 5
    %v6156 = vsel %vm1299, %v6151, %v6155
    %v6157 = vshrl.u32 %v5922, 16
    %v6159 = vrot.slane %v6157, 4
    %v6160 = vor.u32 %v6159, %v6155
    %v6161 = vrot.slane %v6160, 4
    %v6163 = vshll.u32 %v5923, 16
    %v6165 = vrot.slane %v6163, 5
    %v6166 = vsel %vm1299, %v6161, %v6165
    %v6168 = vshrl.u32 %v5924, 16
    %v6170 = vrot.slane %v6168, 4
    %v6171 = vshll.u32 %v5924, 16
    %v6173 = vrot.slane %v6171, 5
    %v6174 = vor.u32 %v6170, %v6173
    %v6175 = vrot.slane %v6174, 4
    %v6177 = vshll.u32 %v5925, 16
    %v6179 = vrot.slane %v6177, 5
    %v6180 = vsel %vm1299, %v6175, %v6179
    %v6181 = vshrl.u32 %v5925, 16
    %v6183 = vrot.slane %v6181, 4
    %v6184 = vor.u32 %v6183, %v6179
    %v6185 = vrot.slane %v6184, 4
    %v6187 = vshll.u32 %v5926, 16
    %v6189 = vrot.slane %v6187, 5
    %v6190 = vsel %vm1299, %v6185, %v6189
    %v6192 = vshrl.u32 %v5927, 16
    %v6194 = vrot.slane %v6192, 4
    %v6195 = vshll.u32 %v5927, 16
    %v6197 = vrot.slane %v6195, 5
    %v6198 = vor.u32 %v6194, %v6197
    %v6199 = vrot.slane %v6198, 4
    %v6201 = vshll.u32 %v5928, 16
    %v6203 = vrot.slane %v6201, 5
    %v6204 = vsel %vm1299, %v6199, %v6203
    %v6205 = vshrl.u32 %v5928, 16
    %v6207 = vrot.slane %v6205, 4
    %v6208 = vor.u32 %v6207, %v6203
    %v6209 = vrot.slane %v6208, 4
    %v6211 = vshll.u32 %v5929, 16
    %v6213 = vrot.slane %v6211, 5
    %v6214 = vsel %vm1299, %v6209, %v6213
    %v6216 = vshrl.u32 %v5930, 16
    %v6218 = vrot.slane %v6216, 4
    %v6219 = vshll.u32 %v5930, 16
    %v6221 = vrot.slane %v6219, 5
    %v6222 = vor.u32 %v6218, %v6221
    %v6223 = vrot.slane %v6222, 4
    %v6225 = vshll.u32 %v5931, 16
    %v6227 = vrot.slane %v6225, 5
    %v6228 = vsel %vm1299, %v6223, %v6227
    %v6229 = vshrl.u32 %v5931, 16
    %v6231 = vrot.slane %v6229, 4
    %v6232 = vor.u32 %v6231, %v6227
    %v6233 = vrot.slane %v6232, 4
    %v6235 = vshll.u32 %v5932, 16
    %v6237 = vrot.slane %v6235, 5
    %v6238 = vsel %vm1299, %v6233, %v6237
    %v6240 = vshrl.u32 %v5933, 16
    %v6242 = vrot.slane %v6240, 4
    %v6243 = vshll.u32 %v5933, 16
    %v6245 = vrot.slane %v6243, 5
    %v6246 = vor.u32 %v6242, %v6245
    %v6247 = vrot.slane %v6246, 4
    %v6249 = vshll.u32 %v5934, 16
    %v6251 = vrot.slane %v6249, 5
    %v6252 = vsel %vm1299, %v6247, %v6251
    %v6253 = vshrl.u32 %v5934, 16
    %v6255 = vrot.slane %v6253, 4
    %v6256 = vor.u32 %v6255, %v6251
    %v6257 = vrot.slane %v6256, 4
    %v6259 = vshll.u32 %v5935, 16
    %v6261 = vrot.slane %v6259, 5
    %v6262 = vsel %vm1299, %v6257, %v6261
    %v6264 = vshrl.u32 %v5936, 16
    %v6266 = vrot.slane %v6264, 4
    %v6267 = vshll.u32 %v5936, 16
    %v6269 = vrot.slane %v6267, 5
    %v6270 = vor.u32 %v6266, %v6269
    %v6271 = vrot.slane %v6270, 4
    %v6273 = vshll.u32 %v5937, 16
    %v6275 = vrot.slane %v6273, 5
    %v6276 = vsel %vm1299, %v6271, %v6275
    %v6277 = vshrl.u32 %v5937, 16
    %v6279 = vrot.slane %v6277, 4
    %v6280 = vor.u32 %v6279, %v6275
    %v6281 = vrot.slane %v6280, 4
    %v6283 = vshll.u32 %v5938, 16
    %v6285 = vrot.slane %v6283, 5
    %v6286 = vsel %vm1299, %v6281, %v6285
    %v6288 = vshrl.u32 %v5939, 16
    %v6290 = vrot.slane %v6288, 4
    %v6291 = vshll.u32 %v5939, 16
    %v6293 = vrot.slane %v6291, 5
    %v6294 = vor.u32 %v6290, %v6293
    %v6295 = vrot.slane %v6294, 4
    %v6297 = vshll.u32 %v5940, 16
    %v6299 = vrot.slane %v6297, 5
    %v6300 = vsel %vm1299, %v6295, %v6299
    %v6301 = vshrl.u32 %v5940, 16
    %v6303 = vrot.slane %v6301, 4
    %v6304 = vor.u32 %v6303, %v6299
    %v6305 = vrot.slane %v6304, 4
    %v6307 = vshll.u32 %v5941, 16
    %v6309 = vrot.slane %v6307, 5
    %v6310 = vsel %vm1299, %v6305, %v6309
    %v6312 = vshrl.u32 %v5942, 16
    %v6314 = vrot.slane %v6312, 4
    %v6315 = vshll.u32 %v5942, 16
    %v6317 = vrot.slane %v6315, 5
    %v6318 = vor.u32 %v6314, %v6317
    %v6319 = vrot.slane %v6318, 4
    %v6321 = vshll.u32 %v5943, 16
    %v6323 = vrot.slane %v6321, 5
    %v6324 = vsel %vm1299, %v6319, %v6323
    %v6325 = vshrl.u32 %v5943, 16
    %v6327 = vrot.slane %v6325, 4
    %v6328 = vor.u32 %v6327, %v6323
    %v6329 = vrot.slane %v6328, 4
    %v6331 = vshll.u32 %v5944, 16
    %v6333 = vrot.slane %v6331, 5
    %v6334 = vsel %vm1299, %v6329, %v6333
    %v6336 = vshrl.u32 %v5945, 16
    %v6338 = vrot.slane %v6336, 4
    %v6339 = vshll.u32 %v5945, 16
    %v6341 = vrot.slane %v6339, 5
    %v6342 = vor.u32 %v6338, %v6341
    %v6343 = vrot.slane %v6342, 4
    %v6345 = vshll.u32 %v5946, 16
    %v6347 = vrot.slane %v6345, 5
    %v6348 = vsel %vm1299, %v6343, %v6347
    %v6349 = vshrl.u32 %v5946, 16
    %v6351 = vrot.slane %v6349, 4
    %v6352 = vor.u32 %v6351, %v6347
    %v6353 = vrot.slane %v6352, 4
    %v6355 = vshll.u32 %v5947, 16
    %v6357 = vrot.slane %v6355, 5
    %v6358 = vsel %vm1299, %v6353, %v6357
    %v6360 = vshrl.u32 %v5948, 16
    %v6362 = vrot.slane %v6360, 4
    %v6363 = vshll.u32 %v5948, 16
    %v6365 = vrot.slane %v6363, 5
    %v6366 = vor.u32 %v6362, %v6365
    %v6367 = vrot.slane %v6366, 4
    %v6369 = vshll.u32 %v5949, 16
    %v6371 = vrot.slane %v6369, 5
    %v6372 = vsel %vm1299, %v6367, %v6371
    %v6373 = vshrl.u32 %v5949, 16
    %v6375 = vrot.slane %v6373, 4
    %v6376 = vor.u32 %v6375, %v6371
    %v6377 = vrot.slane %v6376, 4
    %v6379 = vshll.u32 %v5950, 16
    %v6381 = vrot.slane %v6379, 5
    %v6382 = vsel %vm1299, %v6377, %v6381
    %v6384 = vshrl.u32 %v5951, 16
    %v6386 = vrot.slane %v6384, 4
    %v6387 = vshll.u32 %v5951, 16
    %v6389 = vrot.slane %v6387, 5
    %v6390 = vor.u32 %v6386, %v6389
    %v6391 = vrot.slane %v6390, 4
    %v6393 = vshll.u32 %v5952, 16
    %v6395 = vrot.slane %v6393, 5
    %v6396 = vsel %vm1299, %v6391, %v6395
    %v6397 = vshrl.u32 %v5952, 16
    %v6399 = vrot.slane %v6397, 4
    %v6400 = vor.u32 %v6399, %v6395
    %v6401 = vrot.slane %v6400, 4
    %v6403 = vshll.u32 %v5953, 16
    %v6405 = vrot.slane %v6403, 5
    %v6406 = vsel %vm1299, %v6401, %v6405
    %v6408 = vshrl.u32 %v5954, 16
    %v6410 = vrot.slane %v6408, 4
    %v6411 = vshll.u32 %v5954, 16
    %v6413 = vrot.slane %v6411, 5
    %v6414 = vor.u32 %v6410, %v6413
    %v6415 = vrot.slane %v6414, 4
    %v6417 = vshll.u32 %v5955, 16
    %v6419 = vrot.slane %v6417, 5
    %v6420 = vsel %vm1299, %v6415, %v6419
    %v6421 = vshrl.u32 %v5955, 16
    %v6423 = vrot.slane %v6421, 4
    %v6424 = vor.u32 %v6423, %v6419
    %v6425 = vrot.slane %v6424, 4
    %v6427 = vshll.u32 %v5956, 16
    %v6429 = vrot.slane %v6427, 5
    %v6430 = vsel %vm1299, %v6425, %v6429
    %v6432 = vshrl.u32 %v5957, 16
    %v6434 = vrot.slane %v6432, 4
    %v6435 = vshll.u32 %v5957, 16
    %v6437 = vrot.slane %v6435, 5
    %v6438 = vor.u32 %v6434, %v6437
    %v6439 = vrot.slane %v6438, 4
    %v6441 = vshll.u32 %v5958, 16
    %v6443 = vrot.slane %v6441, 5
    %v6444 = vsel %vm1299, %v6439, %v6443
    %v6445 = vshrl.u32 %v5958, 16
    %v6447 = vrot.slane %v6445, 4
    %v6448 = vor.u32 %v6447, %v6443
    %v6449 = vrot.slane %v6448, 4
    %v6451 = vshll.u32 %v5959, 16
    %v6453 = vrot.slane %v6451, 5
    %v6454 = vsel %vm1299, %v6449, %v6453
    %v6456 = vshrl.u32 %v5960, 16
    %v6458 = vrot.slane %v6456, 4
    %v6459 = vshll.u32 %v5960, 16
    %v6461 = vrot.slane %v6459, 5
    %v6462 = vor.u32 %v6458, %v6461
    %v6463 = vrot.slane %v6462, 4
    %v6465 = vshll.u32 %v5961, 16
    %v6467 = vrot.slane %v6465, 5
    %v6468 = vsel %vm1299, %v6463, %v6467
    %v6469 = vshrl.u32 %v5961, 16
    %v6471 = vrot.slane %v6469, 4
    %v6472 = vor.u32 %v6471, %v6467
    %v6473 = vrot.slane %v6472, 4
    %v6475 = vshll.u32 %v5962, 16
    %v6477 = vrot.slane %v6475, 5
    %v6478 = vsel %vm1299, %v6473, %v6477
    %v6480 = vshrl.u32 %v5963, 16
    %v6482 = vrot.slane %v6480, 4
    %v6483 = vshll.u32 %v5963, 16
    %v6485 = vrot.slane %v6483, 5
    %v6486 = vor.u32 %v6482, %v6485
    %v6487 = vrot.slane %v6486, 4
    %v6489 = vshll.u32 %v5964, 16
    %v6491 = vrot.slane %v6489, 5
    %v6492 = vsel %vm1299, %v6487, %v6491
    %v6493 = vshrl.u32 %v5964, 16
    %v6495 = vrot.slane %v6493, 4
    %v6496 = vor.u32 %v6495, %v6491
    %v6497 = vrot.slane %v6496, 4
    %v6499 = vshll.u32 %v5965, 16
    %v6501 = vrot.slane %v6499, 5
    %v6502 = vsel %vm1299, %v6497, %v6501
    %v6504 = vshrl.u32 %v5966, 16
    %v6506 = vrot.slane %v6504, 4
    %v6507 = vshll.u32 %v5966, 16
    %v6509 = vrot.slane %v6507, 5
    %v6510 = vor.u32 %v6506, %v6509
    %v6511 = vrot.slane %v6510, 4
    %v6513 = vshll.u32 %v5967, 16
    %v6515 = vrot.slane %v6513, 5
    %v6516 = vsel %vm1299, %v6511, %v6515
    %v6517 = vshrl.u32 %v5967, 16
    %v6519 = vrot.slane %v6517, 4
    %v6520 = vor.u32 %v6519, %v6515
    %v6521 = vrot.slane %v6520, 4
    %v6523 = vshll.u32 %v5968, 16
    %v6525 = vrot.slane %v6523, 5
    %v6526 = vsel %vm1299, %v6521, %v6525
    %v6528 = vshrl.u32 %v5969, 16
    %v6530 = vrot.slane %v6528, 4
    %v6531 = vshll.u32 %v5969, 16
    %v6533 = vrot.slane %v6531, 5
    %v6534 = vor.u32 %v6530, %v6533
    %v6535 = vrot.slane %v6534, 4
    %v6537 = vshll.u32 %v5970, 16
    %v6539 = vrot.slane %v6537, 5
    %v6540 = vsel %vm1299, %v6535, %v6539
    %v6541 = vshrl.u32 %v5970, 16
    %v6543 = vrot.slane %v6541, 4
    %v6544 = vor.u32 %v6543, %v6539
    %v6545 = vrot.slane %v6544, 4
    %v6547 = vshll.u32 %v5971, 16
    %v6549 = vrot.slane %v6547, 5
    %v6550 = vsel %vm1299, %v6545, %v6549
    %v6552 = vshrl.u32 %v5972, 16
    %v6554 = vrot.slane %v6552, 4
    %v6555 = vshll.u32 %v5972, 16
    %v6557 = vrot.slane %v6555, 5
    %v6558 = vor.u32 %v6554, %v6557
    %v6559 = vrot.slane %v6558, 4
    %v6561 = vshll.u32 %v5973, 16
    %v6563 = vrot.slane %v6561, 5
    %v6564 = vsel %vm1299, %v6559, %v6563
    %v6565 = vshrl.u32 %v5973, 16
    %v6567 = vrot.slane %v6565, 4
    %v6568 = vor.u32 %v6567, %v6563
    %v6569 = vrot.slane %v6568, 4
    %v6571 = vshll.u32 %v5974, 16
    %v6573 = vrot.slane %v6571, 5
    %v6574 = vsel %vm1299, %v6569, %v6573
    %v6576 = vshrl.u32 %v5975, 16
    %v6578 = vrot.slane %v6576, 4
    %v6579 = vshll.u32 %v5975, 16
    %v6581 = vrot.slane %v6579, 5
    %v6582 = vor.u32 %v6578, %v6581
    %v6583 = vrot.slane %v6582, 4
    %v6585 = vshll.u32 %v5976, 16
    %v6587 = vrot.slane %v6585, 5
    %v6588 = vsel %vm1299, %v6583, %v6587
    %v6589 = vshrl.u32 %v5976, 16
    %v6591 = vrot.slane %v6589, 4
    %v6592 = vor.u32 %v6591, %v6587
    %v6593 = vrot.slane %v6592, 4
    %v6595 = vshll.u32 %v5977, 16
    %v6597 = vrot.slane %v6595, 5
    %v6598 = vsel %vm1299, %v6593, %v6597
    %v6600 = vshrl.u32 %v5978, 16
    %v6602 = vrot.slane %v6600, 4
    %v6603 = vshll.u32 %v5978, 16
    %v6605 = vrot.slane %v6603, 5
    %v6606 = vor.u32 %v6602, %v6605
    %v6607 = vrot.slane %v6606, 4
    %v6609 = vshll.u32 %v5979, 16
    %v6611 = vrot.slane %v6609, 5
    %v6612 = vsel %vm1299, %v6607, %v6611
    %v6613 = vshrl.u32 %v5979, 16
    %v6615 = vrot.slane %v6613, 4
    %v6616 = vor.u32 %v6615, %v6611
    %v6617 = vrot.slane %v6616, 4
    %v6619 = vshll.u32 %v5980, 16
    %v6621 = vrot.slane %v6619, 5
    %v6622 = vsel %vm1299, %v6617, %v6621
    %v6624 = vshrl.u32 %v5981, 16
    %v6626 = vrot.slane %v6624, 4
    %v6627 = vshll.u32 %v5981, 16
    %v6629 = vrot.slane %v6627, 5
    %v6630 = vor.u32 %v6626, %v6629
    %v6631 = vrot.slane %v6630, 4
    %v6633 = vshll.u32 %v5982, 16
    %v6635 = vrot.slane %v6633, 5
    %v6636 = vsel %vm1299, %v6631, %v6635
    %v6637 = vshrl.u32 %v5982, 16
    %v6639 = vrot.slane %v6637, 4
    %v6640 = vor.u32 %v6639, %v6635
    %v6641 = vrot.slane %v6640, 4
    %v6643 = vshll.u32 %v5983, 16
    %v6645 = vrot.slane %v6643, 5
    %v6646 = vsel %vm1299, %v6641, %v6645
    %v6648 = vshrl.u32 %v5984, 16
    %v6650 = vrot.slane %v6648, 4
    %v6651 = vshll.u32 %v5984, 16
    %v6653 = vrot.slane %v6651, 5
    %v6654 = vor.u32 %v6650, %v6653
    %v6655 = vrot.slane %v6654, 4
    %v6657 = vshll.u32 %v5985, 16
    %v6659 = vrot.slane %v6657, 5
    %v6660 = vsel %vm1299, %v6655, %v6659
    %v6661 = vshrl.u32 %v5985, 16
    %v6663 = vrot.slane %v6661, 4
    %v6664 = vor.u32 %v6663, %v6659
    %v6665 = vrot.slane %v6664, 4
    %v6667 = vshll.u32 %v5986, 16
    %v6669 = vrot.slane %v6667, 5
    %v6670 = vsel %vm1299, %v6665, %v6669
    %v6672 = vshrl.u32 %v5987, 16
    %v6674 = vrot.slane %v6672, 4
    %v6675 = vshll.u32 %v5987, 16
    %v6677 = vrot.slane %v6675, 5
    %v6678 = vor.u32 %v6674, %v6677
    %v6679 = vrot.slane %v6678, 4
    %v6681 = vshll.u32 %v5988, 16
    %v6683 = vrot.slane %v6681, 5
    %v6684 = vsel %vm1299, %v6679, %v6683
    %v6685 = vshrl.u32 %v5988, 16
    %v6687 = vrot.slane %v6685, 4
    %v6688 = vor.u32 %v6687, %v6683
    %v6689 = vrot.slane %v6688, 4
    %v6691 = vshll.u32 %v5989, 16
    %v6693 = vrot.slane %v6691, 5
    %v6694 = vsel %vm1299, %v6689, %v6693
    %v6696 = vshrl.u32 %v5990, 16
    %v6698 = vrot.slane %v6696, 4
    %v6699 = vshll.u32 %v5990, 16
    %v6701 = vrot.slane %v6699, 5
    %v6702 = vor.u32 %v6698, %v6701
    %v6703 = vrot.slane %v6702, 4
    %v6705 = vshll.u32 %v5991, 16
    %v6707 = vrot.slane %v6705, 5
    %v6708 = vsel %vm1299, %v6703, %v6707
    %v6709 = vshrl.u32 %v5991, 16
    %v6711 = vrot.slane %v6709, 4
    %v6712 = vor.u32 %v6711, %v6707
    %v6713 = vrot.slane %v6712, 4
    %v6715 = vshll.u32 %v5992, 16
    %v6717 = vrot.slane %v6715, 5
    %v6718 = vsel %vm1299, %v6713, %v6717
    %v6720 = vshrl.u32 %v5993, 16
    %v6722 = vrot.slane %v6720, 4
    %v6723 = vshll.u32 %v5993, 16
    %v6725 = vrot.slane %v6723, 5
    %v6726 = vor.u32 %v6722, %v6725
    %v6727 = vrot.slane %v6726, 4
    %v6729 = vshll.u32 %v5994, 16
    %v6731 = vrot.slane %v6729, 5
    %v6732 = vsel %vm1299, %v6727, %v6731
    %v6733 = vshrl.u32 %v5994, 16
    %v6735 = vrot.slane %v6733, 4
    %v6736 = vor.u32 %v6735, %v6731
    %v6737 = vrot.slane %v6736, 4
    %v6739 = vshll.u32 %v5995, 16
    %v6741 = vrot.slane %v6739, 5
    %v6742 = vsel %vm1299, %v6737, %v6741
    %v6744 = vshrl.u32 %v5996, 16
    %v6746 = vrot.slane %v6744, 4
    %v6747 = vshll.u32 %v5996, 16
    %v6749 = vrot.slane %v6747, 5
    %v6750 = vor.u32 %v6746, %v6749
    %v6751 = vrot.slane %v6750, 4
    %v6753 = vshll.u32 %v5997, 16
    %v6755 = vrot.slane %v6753, 5
    %v6756 = vsel %vm1299, %v6751, %v6755
    %v6757 = vshrl.u32 %v5997, 16
    %v6759 = vrot.slane %v6757, 4
    %v6760 = vor.u32 %v6759, %v6755
    %v6761 = vrot.slane %v6760, 4
    %v6763 = vshll.u32 %v5998, 16
    %v6765 = vrot.slane %v6763, 5
    %v6766 = vsel %vm1299, %v6761, %v6765
    %6767 = vrot.lane.b32.xlu0 %v2070, 100
    %v6768 = vpop.permute.xlu0 %6767
    %v6769 = vunpack.c.l.b16 %v6012
    %v6770 = vunpack.c.l.b16 %v6022
    %v6771 = vunpack.c.l.b16 %v6036
    %v6772 = vunpack.c.l.b16 %v6046
    %v6773 = vunpack.c.l.b16 %v6060
    %v6774 = vunpack.c.l.b16 %v6070
    %v6775 = vunpack.c.l.b16 %v6084
    %v6776 = vunpack.c.l.b16 %v6094
    %v6777 = vunpack.c.l.b16 %v6108
    %v6778 = vunpack.c.l.b16 %v6118
    %v6779 = vunpack.c.l.b16 %v6132
    %v6780 = vunpack.c.l.b16 %v6142
    %v6781 = vunpack.c.l.b16 %v6156
    %v6782 = vunpack.c.l.b16 %v6166
    %v6783 = vunpack.c.l.b16 %v6180
    %v6784 = vunpack.c.l.b16 %v6190
    %v6785 = vunpack.c.l.b16 %v6204
    %v6786 = vunpack.c.l.b16 %v6214
    %v6787 = vunpack.c.l.b16 %v6228
    %v6788 = vunpack.c.l.b16 %v6238
    %v6789 = vunpack.c.l.b16 %v6252
    %v6790 = vunpack.c.l.b16 %v6262
    %v6791 = vunpack.c.l.b16 %v6276
    %v6792 = vunpack.c.l.b16 %v6286
    %v6793 = vunpack.c.l.b16 %v6300
    %v6794 = vunpack.c.l.b16 %v6310
    %v6795 = vunpack.c.l.b16 %v6324
    %v6796 = vunpack.c.l.b16 %v6334
    %v6797 = vunpack.c.l.b16 %v6348
    %v6798 = vunpack.c.l.b16 %v6358
    %v6799 = vunpack.c.l.b16 %v6372
    %v6800 = vunpack.c.l.b16 %v6382
    %v6801 = vunpack.c.l.b16 %v6396
    %v6802 = vunpack.c.l.b16 %v6406
    %v6803 = vunpack.c.l.b16 %v6420
    %v6804 = vunpack.c.l.b16 %v6430
    %v6805 = vunpack.c.l.b16 %v6444
    %v6806 = vunpack.c.l.b16 %v6454
    %v6807 = vunpack.c.l.b16 %v6468
    %v6808 = vunpack.c.l.b16 %v6478
    %v6809 = vunpack.c.l.b16 %v6492
    %v6810 = vunpack.c.l.b16 %v6502
    %v6811 = vunpack.c.l.b16 %v6516
    %v6812 = vunpack.c.l.b16 %v6526
    %v6813 = vunpack.c.l.b16 %v6540
    %v6814 = vunpack.c.l.b16 %v6550
    %v6815 = vunpack.c.l.b16 %v6564
    %v6816 = vunpack.c.l.b16 %v6574
    %v6817 = vunpack.c.l.b16 %v6588
    %v6818 = vunpack.c.l.b16 %v6598
    %v6819 = vunpack.c.l.b16 %v6612
    %v6820 = vunpack.c.l.b16 %v6622
    %v6821 = vunpack.c.l.b16 %v6636
    %v6822 = vunpack.c.l.b16 %v6646
    %v6823 = vunpack.c.l.b16 %v6660
    %v6824 = vunpack.c.l.b16 %v6670
    %v6825 = vunpack.c.l.b16 %v6684
    %v6826 = vunpack.c.l.b16 %v6694
    %v6827 = vunpack.c.l.b16 %v6708
    %v6828 = vunpack.c.l.b16 %v6718
    %v6829 = vunpack.c.l.b16 %v6732
    %v6830 = vunpack.c.l.b16 %v6742
    %v6831 = vunpack.c.l.b16 %v6756
    %v6832 = vunpack.c.l.b16 %v6766
    %v6833 = vpack.c.b16 %v6770, %v6769
    %v6834 = vpack.c.b16 %v6772, %v6771
    %v6835 = vpack.c.b16 %v6774, %v6773
    %v6836 = vpack.c.b16 %v6776, %v6775
    %v6837 = vpack.c.b16 %v6778, %v6777
    %v6838 = vpack.c.b16 %v6780, %v6779
    %v6839 = vpack.c.b16 %v6782, %v6781
    %v6840 = vpack.c.b16 %v6784, %v6783
    %v6841 = vpack.c.b16 %v6786, %v6785
    %v6842 = vpack.c.b16 %v6788, %v6787
    %v6843 = vpack.c.b16 %v6790, %v6789
    %v6844 = vpack.c.b16 %v6792, %v6791
    %v6845 = vpack.c.b16 %v6794, %v6793
    %v6846 = vpack.c.b16 %v6796, %v6795
    %v6847 = vpack.c.b16 %v6798, %v6797
    %v6848 = vpack.c.b16 %v6800, %v6799
    %v6849 = vpack.c.b16 %v6802, %v6801
    %v6850 = vpack.c.b16 %v6804, %v6803
    %v6851 = vpack.c.b16 %v6806, %v6805
    %v6852 = vpack.c.b16 %v6808, %v6807
    %v6853 = vpack.c.b16 %v6810, %v6809
    %v6854 = vpack.c.b16 %v6812, %v6811
    %v6855 = vpack.c.b16 %v6814, %v6813
    %v6856 = vpack.c.b16 %v6816, %v6815
    %v6857 = vpack.c.b16 %v6818, %v6817
    %v6858 = vpack.c.b16 %v6820, %v6819
    %v6859 = vpack.c.b16 %v6822, %v6821
    %v6860 = vpack.c.b16 %v6824, %v6823
    %v6861 = vpack.c.b16 %v6826, %v6825
    %v6862 = vpack.c.b16 %v6828, %v6827
    %v6863 = vpack.c.b16 %v6830, %v6829
    %v6864 = vpack.c.b16 %v6832, %v6831
    %v6866 = vsel %vm2169, %v6768, 0
    %v6869 = vsel %vm2169, %v6833, 0
    %v6872 = vsel %vm2169, %v6834, 0
    %v6875 = vsel %vm2169, %v6835, 0
    %v6878 = vsel %vm2169, %v6836, 0
    %v6881 = vsel %vm2169, %v6837, 0
    %v6884 = vsel %vm2169, %v6838, 0
    %v6887 = vsel %vm2169, %v6839, 0
    %v6890 = vsel %vm2169, %v6840, 0
    %v6893 = vsel %vm2169, %v6841, 0
    %v6896 = vsel %vm2169, %v6842, 0
    %v6899 = vsel %vm2169, %v6843, 0
    %v6902 = vsel %vm2169, %v6844, 0
    %v6905 = vsel %vm2169, %v6845, 0
    %v6908 = vsel %vm2169, %v6846, 0
    %v6911 = vsel %vm2169, %v6847, 0
    %v6914 = vsel %vm2169, %v6848, 0
    %v6917 = vsel %vm2169, %v6849, 0
    %v6920 = vsel %vm2169, %v6850, 0
    %v6923 = vsel %vm2169, %v6851, 0
    %v6926 = vsel %vm2169, %v6852, 0
    %v6929 = vsel %vm2169, %v6853, 0
    %v6932 = vsel %vm2169, %v6854, 0
    %v6935 = vsel %vm2169, %v6855, 0
    %v6938 = vsel %vm2169, %v6856, 0
    %v6941 = vsel %vm2169, %v6857, 0
    %v6944 = vsel %vm2169, %v6858, 0
    %v6947 = vsel %vm2169, %v6859, 0
    %v6950 = vsel %vm2169, %v6860, 0
    %v6953 = vsel %vm2169, %v6861, 0
    %v6956 = vsel %vm2169, %v6862, 0
    %v6959 = vsel %vm2169, %v6863, 0
    %v6962 = vsel %vm2169, %v6864, 0
    %6964 = vmatprep.subr.bf16.mxu0 0
    %6965 = vmatpush1.bf16.xpose.msra.mxu0 %v6869
    %6966 = vmatprep.subr.bf16.mxu0 0
    %6967 = vmatpush1.bf16.xpose.msra.mxu0 %v6872
    %6968 = vmatprep.subr.bf16.mxu0 0
    %6969 = vmatpush1.bf16.xpose.msra.mxu0 %v6875
    %6970 = vmatprep.subr.bf16.mxu0 0
    %6971 = vmatpush1.bf16.xpose.msra.mxu0 %v6878
    %6972 = vmatprep.subr.bf16.mxu0 0
    %6973 = vmatpush1.bf16.xpose.msra.mxu0 %v6881
    %6974 = vmatprep.subr.bf16.mxu0 0
    %6975 = vmatpush1.bf16.xpose.msra.mxu0 %v6884
    %6976 = vmatprep.subr.bf16.mxu0 0
    %6977 = vmatpush1.bf16.xpose.msra.mxu0 %v6887
    %6978 = vmatprep.subr.bf16.mxu0 0
    %6979 = vmatpush1.bf16.xpose.msra.mxu0 %v6890
    %6980 = vmatprep.subr.bf16.mxu0 0
    %6981 = vmatpush1.bf16.xpose.msra.mxu0 %v6893
    %6982 = vmatprep.subr.bf16.mxu0 0
    %6983 = vmatpush1.bf16.xpose.msra.mxu0 %v6896
    %6984 = vmatprep.subr.bf16.mxu0 0
    %6985 = vmatpush1.bf16.xpose.msra.mxu0 %v6899
    %6986 = vmatprep.subr.bf16.mxu0 0
    %6987 = vmatpush1.bf16.xpose.msra.mxu0 %v6902
    %6988 = vmatprep.subr.bf16.mxu0 0
    %6989 = vmatpush1.bf16.xpose.msra.mxu0 %v6905
    %6990 = vmatprep.subr.bf16.mxu0 0
    %6991 = vmatpush1.bf16.xpose.msra.mxu0 %v6908
    %6992 = vmatprep.subr.bf16.mxu0 0
    %6993 = vmatpush1.bf16.xpose.msra.mxu0 %v6911
    %6994 = vmatprep.subr.bf16.mxu0 0
    %6995 = vmatpush1.bf16.xpose.msra.mxu0 %v6914
    %6996 = vmatprep.mubr.bf16.mxu0 0
    %6997 = vmatmul.mubr.bf16.gmra.mrb[0].mxu0 %v6866
    %v6998 = vpop.f32.mrb[0].mxu0
    %v6999 = vadd.f32 0.0, %v6998
    %v7000 = vpop.f32.mrb[0].mxu0
    %v7001 = vadd.f32 0.0, %v7000
    %v7002 = vpop.f32.mrb[0].mxu0
    %v7003 = vpop.f32.mrb[0].mxu0
    %7004 = vdwg.mxu0
    %7005 = vmatprep.subr.bf16.mxu0 0
    %7006 = vmatpush1.bf16.xpose.msra.mxu0 %v6917
    %7007 = vmatprep.subr.bf16.mxu0 0
    %7008 = vmatpush1.bf16.xpose.msra.mxu0 %v6920
    %7009 = vmatprep.subr.bf16.mxu0 0
    %7010 = vmatpush1.bf16.xpose.msra.mxu0 %v6923
    %7011 = vmatprep.subr.bf16.mxu0 0
    %7012 = vmatpush1.bf16.xpose.msra.mxu0 %v6926
    %7013 = vmatprep.subr.bf16.mxu0 0
    %7014 = vmatpush1.bf16.xpose.msra.mxu0 %v6929
    %7015 = vmatprep.subr.bf16.mxu0 0
    %7016 = vmatpush1.bf16.xpose.msra.mxu0 %v6932
    %7017 = vmatprep.subr.bf16.mxu0 0
    %7018 = vmatpush1.bf16.xpose.msra.mxu0 %v6935
    %7019 = vmatprep.subr.bf16.mxu0 0
    %7020 = vmatpush1.bf16.xpose.msra.mxu0 %v6938
    %7021 = vmatprep.subr.bf16.mxu0 0
    %7022 = vmatpush1.bf16.xpose.msra.mxu0 %v6941
    %7023 = vmatprep.subr.bf16.mxu0 0
    %7024 = vmatpush1.bf16.xpose.msra.mxu0 %v6944
    %7025 = vmatprep.subr.bf16.mxu0 0
    %7026 = vmatpush1.bf16.xpose.msra.mxu0 %v6947
    %7027 = vmatprep.subr.bf16.mxu0 0
    %7028 = vmatpush1.bf16.xpose.msra.mxu0 %v6950
    %7029 = vmatprep.subr.bf16.mxu0 0
    %7030 = vmatpush1.bf16.xpose.msra.mxu0 %v6953
    %7031 = vmatprep.subr.bf16.mxu0 0
    %7032 = vmatpush1.bf16.xpose.msra.mxu0 %v6956
    %7033 = vmatprep.subr.bf16.mxu0 0
    %7034 = vmatpush1.bf16.xpose.msra.mxu0 %v6959
    %7035 = vmatprep.subr.bf16.mxu0 0
    %7036 = vmatpush1.bf16.xpose.msra.mxu0 %v6962
    %7037 = vmatprep.mubr.bf16.mxu0 0
    %7038 = vmatmul.mubr.bf16.gmra.mrb[0].mxu0 %v6866
    %v7039 = vpop.f32.mrb[0].mxu0
    %v7040 = vadd.f32 0.0, %v7039
    %v7041 = vpop.f32.mrb[0].mxu0
    %v7042 = vadd.f32 0.0, %v7041
    %v7043 = vpop.f32.mrb[0].mxu0
    %v7044 = vpop.f32.mrb[0].mxu0
    %7045 = vdwg.mxu0
    %v7046 = vadd.f32 %v5899, %v6999
    %v7047 = vadd.f32 %v5900, %v7001
    %v7048 = vadd.f32 %v5901, %v7040
    %v7049 = vadd.f32 %v5902, %v7042
    %v7050 = vld [vmem:[%s5491] sm:$0xe]
    %v7051 = vld [vmem:[%s5491 + $0xc] sm:$0xe]
    %v7052 = vld [vmem:[%s5491 + $0x18] sm:$0xe]
    %v7053 = vld [vmem:[%s5491 + $0x24] sm:$0xe]
    %v7054 = vld [vmem:[%s5491 + $0x30] sm:$0xe]
    %v7055 = vld [vmem:[%s5491 + $0x3c] sm:$0xe]
    %v7056 = vld [vmem:[%s5491 + $0x48] sm:$0xe]
    %v7057 = vld [vmem:[%s5491 + $0x54] sm:$0xe]
    %v7058 = vld [vmem:[%s5491 + $0x60] sm:$0xe]
    %v7059 = vld [vmem:[%s5491 + $0x6c] sm:$0xe]
    %v7060 = vld [vmem:[%s5491 + $0x78] sm:$0xe]
    %v7061 = vld [vmem:[%s5491 + $0x84] sm:$0xe]
    %v7062 = vld [vmem:[%s5491 + $0x90] sm:$0xe]
    %v7063 = vld [vmem:[%s5491 + $0x9c] sm:$0xe]
    %v7064 = vld [vmem:[%s5491 + $0xa8] sm:$0xe]
    %v7065 = vld [vmem:[%s5491 + $0xb4] sm:$0xe]
    %v7066 = vld [vmem:[%s5491 + $0xd8] sm:$0xe]
    %v7067 = vld [vmem:[%s5491 + $0xe4] sm:$0xe]
    %v7068 = vld [vmem:[%s5491 + $0xf0] sm:$0xe]
    %v7069 = vld [vmem:[%s5491 + $0xfc] sm:$0xe]
    %v7070 = vld [vmem:[%s5491 + $0x108] sm:$0xe]
    %v7071 = vld [vmem:[%s5491 + $0x114] sm:$0xe]
    %v7072 = vld [vmem:[%s5491 + $0x120] sm:$0xe]
    %v7073 = vld [vmem:[%s5491 + $0x12c] sm:$0xe]
    %v7074 = vld [vmem:[%s5491 + $0x138] sm:$0xe]
    %v7075 = vld [vmem:[%s5491 + $0x144] sm:$0xe]
    %v7076 = vld [vmem:[%s5491 + $0x150] sm:$0xe]
    %v7077 = vld [vmem:[%s5491 + $0x15c] sm:$0xe]
    %v7078 = vld [vmem:[%s5491 + $0x168] sm:$0xe]
    %v7079 = vld [vmem:[%s5491 + $0x174] sm:$0xe]
    %v7080 = vld [vmem:[%s5491 + $0x180] sm:$0xe]
    %v7081 = vld [vmem:[%s5491 + $0x18c] sm:$0xe]
    %v7178 = vrot.slane %v7050, 5
    %v7179 = vrot.slane %v7178, 4
    %v7180 = vrot.slane %v5904, 5
    %v7181 = vsel %vm2790, %v7179, %v7180
    %v7182 = vrot.slane %v7180, 4
    %v7183 = vrot.slane %v5905, 5
    %v7184 = vsel %vm2790, %v7182, %v7183
    %v7185 = vrot.slane %v7051, 5
    %v7186 = vrot.slane %v7185, 4
    %v7187 = vrot.slane %v5907, 5
    %v7188 = vsel %vm2790, %v7186, %v7187
    %v7189 = vrot.slane %v7187, 4
    %v7190 = vrot.slane %v5908, 5
    %v7191 = vsel %vm2790, %v7189, %v7190
    %v7192 = vrot.slane %v7052, 5
    %v7193 = vrot.slane %v7192, 4
    %v7194 = vrot.slane %v5910, 5
    %v7195 = vsel %vm2790, %v7193, %v7194
    %v7196 = vrot.slane %v7194, 4
    %v7197 = vrot.slane %v5911, 5
    %v7198 = vsel %vm2790, %v7196, %v7197
    %v7199 = vrot.slane %v7053, 5
    %v7200 = vrot.slane %v7199, 4
    %v7201 = vrot.slane %v5913, 5
    %v7202 = vsel %vm2790, %v7200, %v7201
    %v7203 = vrot.slane %v7201, 4
    %v7204 = vrot.slane %v5914, 5
    %v7205 = vsel %vm2790, %v7203, %v7204
    %v7206 = vrot.slane %v7054, 5
    %v7207 = vrot.slane %v7206, 4
    %v7208 = vrot.slane %v5916, 5
    %v7209 = vsel %vm2790, %v7207, %v7208
    %v7210 = vrot.slane %v7208, 4
    %v7211 = vrot.slane %v5917, 5
    %v7212 = vsel %vm2790, %v7210, %v7211
    %v7213 = vrot.slane %v7055, 5
    %v7214 = vrot.slane %v7213, 4
    %v7215 = vrot.slane %v5919, 5
    %v7216 = vsel %vm2790, %v7214, %v7215
    %v7217 = vrot.slane %v7215, 4
    %v7218 = vrot.slane %v5920, 5
    %v7219 = vsel %vm2790, %v7217, %v7218
    %v7220 = vrot.slane %v7056, 5
    %v7221 = vrot.slane %v7220, 4
    %v7222 = vrot.slane %v5922, 5
    %v7223 = vsel %vm2790, %v7221, %v7222
    %v7224 = vrot.slane %v7222, 4
    %v7225 = vrot.slane %v5923, 5
    %v7226 = vsel %vm2790, %v7224, %v7225
    %v7227 = vrot.slane %v7057, 5
    %v7228 = vrot.slane %v7227, 4
    %v7229 = vrot.slane %v5925, 5
    %v7230 = vsel %vm2790, %v7228, %v7229
    %v7231 = vrot.slane %v7229, 4
    %v7232 = vrot.slane %v5926, 5
    %v7233 = vsel %vm2790, %v7231, %v7232
    %v7234 = vrot.slane %v7058, 5
    %v7235 = vrot.slane %v7234, 4
    %v7236 = vrot.slane %v5928, 5
    %v7237 = vsel %vm2790, %v7235, %v7236
    %v7238 = vrot.slane %v7236, 4
    %v7239 = vrot.slane %v5929, 5
    %v7240 = vsel %vm2790, %v7238, %v7239
    %v7241 = vrot.slane %v7059, 5
    %v7242 = vrot.slane %v7241, 4
    %v7243 = vrot.slane %v5931, 5
    %v7244 = vsel %vm2790, %v7242, %v7243
    %v7245 = vrot.slane %v7243, 4
    %v7246 = vrot.slane %v5932, 5
    %v7247 = vsel %vm2790, %v7245, %v7246
    %v7248 = vrot.slane %v7060, 5
    %v7249 = vrot.slane %v7248, 4
    %v7250 = vrot.slane %v5934, 5
    %v7251 = vsel %vm2790, %v7249, %v7250
    %v7252 = vrot.slane %v7250, 4
    %v7253 = vrot.slane %v5935, 5
    %v7254 = vsel %vm2790, %v7252, %v7253
    %v7255 = vrot.slane %v7061, 5
    %v7256 = vrot.slane %v7255, 4
    %v7257 = vrot.slane %v5937, 5
    %v7258 = vsel %vm2790, %v7256, %v7257
    %v7259 = vrot.slane %v7257, 4
    %v7260 = vrot.slane %v5938, 5
    %v7261 = vsel %vm2790, %v7259, %v7260
    %v7262 = vrot.slane %v7062, 5
    %v7263 = vrot.slane %v7262, 4
    %v7264 = vrot.slane %v5940, 5
    %v7265 = vsel %vm2790, %v7263, %v7264
    %v7266 = vrot.slane %v7264, 4
    %v7267 = vrot.slane %v5941, 5
    %v7268 = vsel %vm2790, %v7266, %v7267
    %v7269 = vrot.slane %v7063, 5
    %v7270 = vrot.slane %v7269, 4
    %v7271 = vrot.slane %v5943, 5
    %v7272 = vsel %vm2790, %v7270, %v7271
    %v7273 = vrot.slane %v7271, 4
    %v7274 = vrot.slane %v5944, 5
    %v7275 = vsel %vm2790, %v7273, %v7274
    %v7276 = vrot.slane %v7064, 5
    %v7277 = vrot.slane %v7276, 4
    %v7278 = vrot.slane %v5946, 5
    %v7279 = vsel %vm2790, %v7277, %v7278
    %v7280 = vrot.slane %v7278, 4
    %v7281 = vrot.slane %v5947, 5
    %v7282 = vsel %vm2790, %v7280, %v7281
    %v7283 = vrot.slane %v7065, 5
    %v7284 = vrot.slane %v7283, 4
    %v7285 = vrot.slane %v5949, 5
    %v7286 = vsel %vm2790, %v7284, %v7285
    %v7287 = vrot.slane %v7285, 4
    %v7288 = vrot.slane %v5950, 5
    %v7289 = vsel %vm2790, %v7287, %v7288
    %v7290 = vrot.slane %v7066, 5
    %v7291 = vrot.slane %v7290, 4
    %v7292 = vrot.slane %v5952, 5
    %v7293 = vsel %vm2790, %v7291, %v7292
    %v7294 = vrot.slane %v7292, 4
    %v7295 = vrot.slane %v5953, 5
    %v7296 = vsel %vm2790, %v7294, %v7295
    %v7297 = vrot.slane %v7067, 5
    %v7298 = vrot.slane %v7297, 4
    %v7299 = vrot.slane %v5955, 5
    %v7300 = vsel %vm2790, %v7298, %v7299
    %v7301 = vrot.slane %v7299, 4
    %v7302 = vrot.slane %v5956, 5
    %v7303 = vsel %vm2790, %v7301, %v7302
    %v7304 = vrot.slane %v7068, 5
    %v7305 = vrot.slane %v7304, 4
    %v7306 = vrot.slane %v5958, 5
    %v7307 = vsel %vm2790, %v7305, %v7306
    %v7308 = vrot.slane %v7306, 4
    %v7309 = vrot.slane %v5959, 5
    %v7310 = vsel %vm2790, %v7308, %v7309
    %v7311 = vrot.slane %v7069, 5
    %v7312 = vrot.slane %v7311, 4
    %v7313 = vrot.slane %v5961, 5
    %v7314 = vsel %vm2790, %v7312, %v7313
    %v7315 = vrot.slane %v7313, 4
    %v7316 = vrot.slane %v5962, 5
    %v7317 = vsel %vm2790, %v7315, %v7316
    %v7318 = vrot.slane %v7070, 5
    %v7319 = vrot.slane %v7318, 4
    %v7320 = vrot.slane %v5964, 5
    %v7321 = vsel %vm2790, %v7319, %v7320
    %v7322 = vrot.slane %v7320, 4
    %v7323 = vrot.slane %v5965, 5
    %v7324 = vsel %vm2790, %v7322, %v7323
    %v7325 = vrot.slane %v7071, 5
    %v7326 = vrot.slane %v7325, 4
    %v7327 = vrot.slane %v5967, 5
    %v7328 = vsel %vm2790, %v7326, %v7327
    %v7329 = vrot.slane %v7327, 4
    %v7330 = vrot.slane %v5968, 5
    %v7331 = vsel %vm2790, %v7329, %v7330
    %v7332 = vrot.slane %v7072, 5
    %v7333 = vrot.slane %v7332, 4
    %v7334 = vrot.slane %v5970, 5
    %v7335 = vsel %vm2790, %v7333, %v7334
    %v7336 = vrot.slane %v7334, 4
    %v7337 = vrot.slane %v5971, 5
    %v7338 = vsel %vm2790, %v7336, %v7337
    %v7339 = vrot.slane %v7073, 5
    %v7340 = vrot.slane %v7339, 4
    %v7341 = vrot.slane %v5973, 5
    %v7342 = vsel %vm2790, %v7340, %v7341
    %v7343 = vrot.slane %v7341, 4
    %v7344 = vrot.slane %v5974, 5
    %v7345 = vsel %vm2790, %v7343, %v7344
    %v7346 = vrot.slane %v7074, 5
    %v7347 = vrot.slane %v7346, 4
    %v7348 = vrot.slane %v5976, 5
    %v7349 = vsel %vm2790, %v7347, %v7348
    %v7350 = vrot.slane %v7348, 4
    %v7351 = vrot.slane %v5977, 5
    %v7352 = vsel %vm2790, %v7350, %v7351
    %v7353 = vrot.slane %v7075, 5
    %v7354 = vrot.slane %v7353, 4
    %v7355 = vrot.slane %v5979, 5
    %v7356 = vsel %vm2790, %v7354, %v7355
    %v7357 = vrot.slane %v7355, 4
    %v7358 = vrot.slane %v5980, 5
    %v7359 = vsel %vm2790, %v7357, %v7358
    %v7360 = vrot.slane %v7076, 5
    %v7361 = vrot.slane %v7360, 4
    %v7362 = vrot.slane %v5982, 5
    %v7363 = vsel %vm2790, %v7361, %v7362
    %v7364 = vrot.slane %v7362, 4
    %v7365 = vrot.slane %v5983, 5
    %v7366 = vsel %vm2790, %v7364, %v7365
    %v7367 = vrot.slane %v7077, 5
    %v7368 = vrot.slane %v7367, 4
    %v7369 = vrot.slane %v5985, 5
    %v7370 = vsel %vm2790, %v7368, %v7369
    %v7371 = vrot.slane %v7369, 4
    %v7372 = vrot.slane %v5986, 5
    %v7373 = vsel %vm2790, %v7371, %v7372
    %v7374 = vrot.slane %v7078, 5
    %v7375 = vrot.slane %v7374, 4
    %v7376 = vrot.slane %v5988, 5
    %v7377 = vsel %vm2790, %v7375, %v7376
    %v7378 = vrot.slane %v7376, 4
    %v7379 = vrot.slane %v5989, 5
    %v7380 = vsel %vm2790, %v7378, %v7379
    %v7381 = vrot.slane %v7079, 5
    %v7382 = vrot.slane %v7381, 4
    %v7383 = vrot.slane %v5991, 5
    %v7384 = vsel %vm2790, %v7382, %v7383
    %v7385 = vrot.slane %v7383, 4
    %v7386 = vrot.slane %v5992, 5
    %v7387 = vsel %vm2790, %v7385, %v7386
    %v7388 = vrot.slane %v7080, 5
    %v7389 = vrot.slane %v7388, 4
    %v7390 = vrot.slane %v5994, 5
    %v7391 = vsel %vm2790, %v7389, %v7390
    %v7392 = vrot.slane %v7390, 4
    %v7393 = vrot.slane %v5995, 5
    %v7394 = vsel %vm2790, %v7392, %v7393
    %v7395 = vrot.slane %v7081, 5
    %v7396 = vrot.slane %v7395, 4
    %v7397 = vrot.slane %v5997, 5
    %v7398 = vsel %vm2790, %v7396, %v7397
    %v7399 = vrot.slane %v7397, 4
    %v7400 = vrot.slane %v5998, 5
    %v7401 = vsel %vm2790, %v7399, %v7400
    %7402 = vrot.lane.b32.xlu0 %v2070, 96
    %v7403 = vpop.permute.xlu0 %7402
    %v7404 = vunpack.c.l.b16 %v7181
    %v7405 = vunpack.c.l.b16 %v7184
    %v7406 = vunpack.c.l.b16 %v7188
    %v7407 = vunpack.c.l.b16 %v7191
    %v7408 = vunpack.c.l.b16 %v7195
    %v7409 = vunpack.c.l.b16 %v7198
    %v7410 = vunpack.c.l.b16 %v7202
    %v7411 = vunpack.c.l.b16 %v7205
    %v7412 = vunpack.c.l.b16 %v7209
    %v7413 = vunpack.c.l.b16 %v7212
    %v7414 = vunpack.c.l.b16 %v7216
    %v7415 = vunpack.c.l.b16 %v7219
    %v7416 = vunpack.c.l.b16 %v7223
    %v7417 = vunpack.c.l.b16 %v7226
    %v7418 = vunpack.c.l.b16 %v7230
    %v7419 = vunpack.c.l.b16 %v7233
    %v7420 = vunpack.c.l.b16 %v7237
    %v7421 = vunpack.c.l.b16 %v7240
    %v7422 = vunpack.c.l.b16 %v7244
    %v7423 = vunpack.c.l.b16 %v7247
    %v7424 = vunpack.c.l.b16 %v7251
    %v7425 = vunpack.c.l.b16 %v7254
    %v7426 = vunpack.c.l.b16 %v7258
    %v7427 = vunpack.c.l.b16 %v7261
    %v7428 = vunpack.c.l.b16 %v7265
    %v7429 = vunpack.c.l.b16 %v7268
    %v7430 = vunpack.c.l.b16 %v7272
    %v7431 = vunpack.c.l.b16 %v7275
    %v7432 = vunpack.c.l.b16 %v7279
    %v7433 = vunpack.c.l.b16 %v7282
    %v7434 = vunpack.c.l.b16 %v7286
    %v7435 = vunpack.c.l.b16 %v7289
    %v7436 = vunpack.c.l.b16 %v7293
    %v7437 = vunpack.c.l.b16 %v7296
    %v7438 = vunpack.c.l.b16 %v7300
    %v7439 = vunpack.c.l.b16 %v7303
    %v7440 = vunpack.c.l.b16 %v7307
    %v7441 = vunpack.c.l.b16 %v7310
    %v7442 = vunpack.c.l.b16 %v7314
    %v7443 = vunpack.c.l.b16 %v7317
    %v7444 = vunpack.c.l.b16 %v7321
    %v7445 = vunpack.c.l.b16 %v7324
    %v7446 = vunpack.c.l.b16 %v7328
    %v7447 = vunpack.c.l.b16 %v7331
    %v7448 = vunpack.c.l.b16 %v7335
    %v7449 = vunpack.c.l.b16 %v7338
    %v7450 = vunpack.c.l.b16 %v7342
    %v7451 = vunpack.c.l.b16 %v7345
    %v7452 = vunpack.c.l.b16 %v7349
    %v7453 = vunpack.c.l.b16 %v7352
    %v7454 = vunpack.c.l.b16 %v7356
    %v7455 = vunpack.c.l.b16 %v7359
    %v7456 = vunpack.c.l.b16 %v7363
    %v7457 = vunpack.c.l.b16 %v7366
    %v7458 = vunpack.c.l.b16 %v7370
    %v7459 = vunpack.c.l.b16 %v7373
    %v7460 = vunpack.c.l.b16 %v7377
    %v7461 = vunpack.c.l.b16 %v7380
    %v7462 = vunpack.c.l.b16 %v7384
    %v7463 = vunpack.c.l.b16 %v7387
    %v7464 = vunpack.c.l.b16 %v7391
    %v7465 = vunpack.c.l.b16 %v7394
    %v7466 = vunpack.c.l.b16 %v7398
    %v7467 = vunpack.c.l.b16 %v7401
    %v7468 = vpack.c.b16 %v7405, %v7404
    %v7469 = vpack.c.b16 %v7407, %v7406
    %v7470 = vpack.c.b16 %v7409, %v7408
    %v7471 = vpack.c.b16 %v7411, %v7410
    %v7472 = vpack.c.b16 %v7413, %v7412
    %v7473 = vpack.c.b16 %v7415, %v7414
    %v7474 = vpack.c.b16 %v7417, %v7416
    %v7475 = vpack.c.b16 %v7419, %v7418
    %v7476 = vpack.c.b16 %v7421, %v7420
    %v7477 = vpack.c.b16 %v7423, %v7422
    %v7478 = vpack.c.b16 %v7425, %v7424
    %v7479 = vpack.c.b16 %v7427, %v7426
    %v7480 = vpack.c.b16 %v7429, %v7428
    %v7481 = vpack.c.b16 %v7431, %v7430
    %v7482 = vpack.c.b16 %v7433, %v7432
    %v7483 = vpack.c.b16 %v7435, %v7434
    %v7484 = vpack.c.b16 %v7437, %v7436
    %v7485 = vpack.c.b16 %v7439, %v7438
    %v7486 = vpack.c.b16 %v7441, %v7440
    %v7487 = vpack.c.b16 %v7443, %v7442
    %v7488 = vpack.c.b16 %v7445, %v7444
    %v7489 = vpack.c.b16 %v7447, %v7446
    %v7490 = vpack.c.b16 %v7449, %v7448
    %v7491 = vpack.c.b16 %v7451, %v7450
    %v7492 = vpack.c.b16 %v7453, %v7452
    %v7493 = vpack.c.b16 %v7455, %v7454
    %v7494 = vpack.c.b16 %v7457, %v7456
    %v7495 = vpack.c.b16 %v7459, %v7458
    %v7496 = vpack.c.b16 %v7461, %v7460
    %v7497 = vpack.c.b16 %v7463, %v7462
    %v7498 = vpack.c.b16 %v7465, %v7464
    %v7499 = vpack.c.b16 %v7467, %v7466
    %v7501 = vsel %vm2169, %v7403, 0
    %v7504 = vsel %vm2169, %v7468, 0
    %v7507 = vsel %vm2169, %v7469, 0
    %v7510 = vsel %vm2169, %v7470, 0
    %v7513 = vsel %vm2169, %v7471, 0
    %v7516 = vsel %vm2169, %v7472, 0
    %v7519 = vsel %vm2169, %v7473, 0
    %v7522 = vsel %vm2169, %v7474, 0
    %v7525 = vsel %vm2169, %v7475, 0
    %v7528 = vsel %vm2169, %v7476, 0
    %v7531 = vsel %vm2169, %v7477, 0
    %v7534 = vsel %vm2169, %v7478, 0
    %v7537 = vsel %vm2169, %v7479, 0
    %v7540 = vsel %vm2169, %v7480, 0
    %v7543 = vsel %vm2169, %v7481, 0
    %v7546 = vsel %vm2169, %v7482, 0
    %v7549 = vsel %vm2169, %v7483, 0
    %v7552 = vsel %vm2169, %v7484, 0
    %v7555 = vsel %vm2169, %v7485, 0
    %v7558 = vsel %vm2169, %v7486, 0
    %v7561 = vsel %vm2169, %v7487, 0
    %v7564 = vsel %vm2169, %v7488, 0
    %v7567 = vsel %vm2169, %v7489, 0
    %v7570 = vsel %vm2169, %v7490, 0
    %v7573 = vsel %vm2169, %v7491, 0
    %v7576 = vsel %vm2169, %v7492, 0
    %v7579 = vsel %vm2169, %v7493, 0
    %v7582 = vsel %vm2169, %v7494, 0
    %v7585 = vsel %vm2169, %v7495, 0
    %v7588 = vsel %vm2169, %v7496, 0
    %v7591 = vsel %vm2169, %v7497, 0
    %v7594 = vsel %vm2169, %v7498, 0
    %v7597 = vsel %vm2169, %v7499, 0
    %7599 = vmatprep.subr.bf16.mxu0 0
    %7600 = vmatpush1.bf16.xpose.msra.mxu0 %v7504
    %7601 = vmatprep.subr.bf16.mxu0 0
    %7602 = vmatpush1.bf16.xpose.msra.mxu0 %v7507
    %7603 = vmatprep.subr.bf16.mxu0 0
    %7604 = vmatpush1.bf16.xpose.msra.mxu0 %v7510
    %7605 = vmatprep.subr.bf16.mxu0 0
    %7606 = vmatpush1.bf16.xpose.msra.mxu0 %v7513
    %7607 = vmatprep.subr.bf16.mxu0 0
    %7608 = vmatpush1.bf16.xpose.msra.mxu0 %v7516
    %7609 = vmatprep.subr.bf16.mxu0 0
    %7610 = vmatpush1.bf16.xpose.msra.mxu0 %v7519
    %7611 = vmatprep.subr.bf16.mxu0 0
    %7612 = vmatpush1.bf16.xpose.msra.mxu0 %v7522
    %7613 = vmatprep.subr.bf16.mxu0 0
    %7614 = vmatpush1.bf16.xpose.msra.mxu0 %v7525
    %7615 = vmatprep.subr.bf16.mxu0 0
    %7616 = vmatpush1.bf16.xpose.msra.mxu0 %v7528
    %7617 = vmatprep.subr.bf16.mxu0 0
    %7618 = vmatpush1.bf16.xpose.msra.mxu0 %v7531
    %7619 = vmatprep.subr.bf16.mxu0 0
    %7620 = vmatpush1.bf16.xpose.msra.mxu0 %v7534
    %7621 = vmatprep.subr.bf16.mxu0 0
    %7622 = vmatpush1.bf16.xpose.msra.mxu0 %v7537
    %7623 = vmatprep.subr.bf16.mxu0 0
    %7624 = vmatpush1.bf16.xpose.msra.mxu0 %v7540
    %7625 = vmatprep.subr.bf16.mxu0 0
    %7626 = vmatpush1.bf16.xpose.msra.mxu0 %v7543
    %7627 = vmatprep.subr.bf16.mxu0 0
    %7628 = vmatpush1.bf16.xpose.msra.mxu0 %v7546
    %7629 = vmatprep.subr.bf16.mxu0 0
    %7630 = vmatpush1.bf16.xpose.msra.mxu0 %v7549
    %7631 = vmatprep.mubr.bf16.mxu0 0
    %7632 = vmatmul.mubr.bf16.gmra.mrb[0].mxu0 %v7501
    %v7633 = vpop.f32.mrb[0].mxu0
    %v7634 = vadd.f32 0.0, %v7633
    %v7635 = vpop.f32.mrb[0].mxu0
    %v7636 = vadd.f32 0.0, %v7635
    %v7637 = vpop.f32.mrb[0].mxu0
    %v7638 = vpop.f32.mrb[0].mxu0
    %7639 = vdwg.mxu0
    %7640 = vmatprep.subr.bf16.mxu0 0
    %7641 = vmatpush1.bf16.xpose.msra.mxu0 %v7552
    %7642 = vmatprep.subr.bf16.mxu0 0
    %7643 = vmatpush1.bf16.xpose.msra.mxu0 %v7555
    %7644 = vmatprep.subr.bf16.mxu0 0
    %7645 = vmatpush1.bf16.xpose.msra.mxu0 %v7558
    %7646 = vmatprep.subr.bf16.mxu0 0
    %7647 = vmatpush1.bf16.xpose.msra.mxu0 %v7561
    %7648 = vmatprep.subr.bf16.mxu0 0
    %7649 = vmatpush1.bf16.xpose.msra.mxu0 %v7564
    %7650 = vmatprep.subr.bf16.mxu0 0
    %7651 = vmatpush1.bf16.xpose.msra.mxu0 %v7567
    %7652 = vmatprep.subr.bf16.mxu0 0
    %7653 = vmatpush1.bf16.xpose.msra.mxu0 %v7570
    %7654 = vmatprep.subr.bf16.mxu0 0
    %7655 = vmatpush1.bf16.xpose.msra.mxu0 %v7573
    %7656 = vmatprep.subr.bf16.mxu0 0
    %7657 = vmatpush1.bf16.xpose.msra.mxu0 %v7576
    %7658 = vmatprep.subr.bf16.mxu0 0
    %7659 = vmatpush1.bf16.xpose.msra.mxu0 %v7579
    %7660 = vmatprep.subr.bf16.mxu0 0
    %7661 = vmatpush1.bf16.xpose.msra.mxu0 %v7582
    %7662 = vmatprep.subr.bf16.mxu0 0
    %7663 = vmatpush1.bf16.xpose.msra.mxu0 %v7585
    %7664 = vmatprep.subr.bf16.mxu0 0
    %7665 = vmatpush1.bf16.xpose.msra.mxu0 %v7588
    %7666 = vmatprep.subr.bf16.mxu0 0
    %7667 = vmatpush1.bf16.xpose.msra.mxu0 %v7591
    %7668 = vmatprep.subr.bf16.mxu0 0
    %7669 = vmatpush1.bf16.xpose.msra.mxu0 %v7594
    %7670 = vmatprep.subr.bf16.mxu0 0
    %7671 = vmatpush1.bf16.xpose.msra.mxu0 %v7597
    %7672 = vmatprep.mubr.bf16.mxu0 0
    %7673 = vmatmul.mubr.bf16.gmra.mrb[0].mxu0 %v7501
    %v7674 = vpop.f32.mrb[0].mxu0
    %v7675 = vadd.f32 0.0, %v7674
    %v7676 = vpop.f32.mrb[0].mxu0
    %v7677 = vadd.f32 0.0, %v7676
    %v7678 = vpop.f32.mrb[0].mxu0
    %v7679 = vpop.f32.mrb[0].mxu0
    %7680 = vdwg.mxu0
    %v7681 = vadd.f32 %v7046, %v7634
    %v7682 = vadd.f32 %v7047, %v7636
    %v7683 = vadd.f32 %v7048, %v7675
    %v7684 = vadd.f32 %v7049, %v7677
    %v7685 = vadd.f32 %v7681, %v7682
    %v7686 = vadd.f32 %v7685, %v7683
    %v7687 = vadd.f32 %v7686, %v7684
    %7688 = vadd.xlane.f32.xlu0 %v7687
    %v7689 = vpop.xlane.xlu0 %7688
    %v7690 = vmul.f32 %v7689, 0.001953125
    %v7691 = vmul.f32 %v7681, %v7681
    %v7692 = vmul.f32 %v7682, %v7682
    %v7693 = vmul.f32 %v7683, %v7683
    %v7694 = vmul.f32 %v7684, %v7684
    %v7695 = vadd.f32 %v7691, %v7692
    %v7696 = vadd.f32 %v7695, %v7693
    %v7697 = vadd.f32 %v7696, %v7694
    %7698 = vadd.xlane.f32.xlu0 %v7697
    %v7699 = vpop.xlane.xlu0 %7698
    %v7700 = vmul.f32 %v7699, 0.001953125
    %v7701 = vmul.f32 %v7690, %v7690
    %v7702 = vsub.f32 %v7700, %v7701
    %v7703 = vadd.f32 %v7702, 1e-05
    %v7704 = vrsqrt.pop %v7703
    %v7705 = vld [vmem:[%s2] sm:$0xff]
    %v7706 = vmul.f32 %v7704, %v7705
    %v7707 = vld [vmem:[%s3] sm:$0xff]
    %v7708 = vmul.f32 %v7690, %v7706
    %v7709 = vsub.f32 %v7707, %v7708
    %7711 = vset.pattern.permute.xlu0 0
    %7712 = vperm.xlu0 %7711, %v7706
    %v7713 = vpop.permute.xlu0 %7712
    %v7715 = vmul.f32 %v7681, %v7713
    %v7716 = vmul.f32 %v7682, %v7713
    %v7717 = vmul.f32 %v7683, %v7713
    %v7718 = vmul.f32 %v7684, %v7713
    %7720 = vset.pattern.permute.xlu0 0
    %7721 = vperm.xlu0 %7720, %v7709
    %v7722 = vpop.permute.xlu0 %7721
    %v7724 = vadd.f32 %v7715, %v7722
    %v7725 = vadd.f32 %v7716, %v7722
    %v7726 = vadd.f32 %v7717, %v7722
    %v7727 = vadd.f32 %v7718, %v7722
    %v7728 = vmax.f32 %v7724, 0.0
    %v7729 = vmax.f32 %v7725, 0.0
    %v7730 = vmax.f32 %v7726, 0.0
    %v7731 = vmax.f32 %v7727, 0.0
    %7732 = vxpose.xlu0.b32.start [1/16] %v7728, 128
    %7733 = vxpose.xlu0.b32.cont [2/16] 0.0, 128
    %7734 = vxpose.xlu0.b32.cont [3/16] 0.0, 128
    %7735 = vxpose.xlu0.b32.cont [4/16] 0.0, 128
    %7736 = vxpose.xlu0.b32.cont [5/16] 0.0, 128
    %7737 = vxpose.xlu0.b32.cont [6/16] 0.0, 128
    %7738 = vxpose.xlu0.b32.cont [7/16] 0.0, 128
    %7739 = vxpose.xlu0.b32.cont [8/16] 0.0, 128
    %7740 = vxpose.xlu0.b32.cont [9/16] 0.0, 128
    %7741 = vxpose.xlu0.b32.cont [10/16] 0.0, 128
    %7742 = vxpose.xlu0.b32.cont [11/16] 0.0, 128
    %7743 = vxpose.xlu0.b32.cont [12/16] 0.0, 128
    %7744 = vxpose.xlu0.b32.cont [13/16] 0.0, 128
    %7745 = vxpose.xlu0.b32.cont [14/16] 0.0, 128
    %7746 = vxpose.xlu0.b32.cont [15/16] 0.0, 128
    %7747 = vxpose.xlu0.b32.end [16/16] 0.0, 128
    %v7748 = vpop.trf.xlu0
    %v7749 = vpop.trf.xlu0
    %v7750 = vpop.trf.xlu0
    %v7751 = vpop.trf.xlu0
    %v7752 = vpop.trf.xlu0
    %v7753 = vpop.trf.xlu0
    %v7754 = vpop.trf.xlu0
    %v7755 = vpop.trf.xlu0
    %v7756 = vpop.trf.xlu0
    %v7757 = vpop.trf.xlu0
    %v7758 = vpop.trf.xlu0
    %v7759 = vpop.trf.xlu0
    %v7760 = vpop.trf.xlu0
    %v7761 = vpop.trf.xlu0
    %v7762 = vpop.trf.xlu0
    %v7763 = vpop.trf.xlu0
    %7764 = vxpose.xlu0.b32.start [1/16] %v7729, 128
    %7765 = vxpose.xlu0.b32.cont [2/16] 0.0, 128
    %7766 = vxpose.xlu0.b32.cont [3/16] 0.0, 128
    %7767 = vxpose.xlu0.b32.cont [4/16] 0.0, 128
    %7768 = vxpose.xlu0.b32.cont [5/16] 0.0, 128
    %7769 = vxpose.xlu0.b32.cont [6/16] 0.0, 128
    %7770 = vxpose.xlu0.b32.cont [7/16] 0.0, 128
    %7771 = vxpose.xlu0.b32.cont [8/16] 0.0, 128
    %7772 = vxpose.xlu0.b32.cont [9/16] 0.0, 128
    %7773 = vxpose.xlu0.b32.cont [10/16] 0.0, 128
    %7774 = vxpose.xlu0.b32.cont [11/16] 0.0, 128
    %7775 = vxpose.xlu0.b32.cont [12/16] 0.0, 128
    %7776 = vxpose.xlu0.b32.cont [13/16] 0.0, 128
    %7777 = vxpose.xlu0.b32.cont [14/16] 0.0, 128
    %7778 = vxpose.xlu0.b32.cont [15/16] 0.0, 128
    %7779 = vxpose.xlu0.b32.end [16/16] 0.0, 128
    %v7780 = vpop.trf.xlu0
    %v7781 = vpop.trf.xlu0
    %v7782 = vpop.trf.xlu0
    %v7783 = vpop.trf.xlu0
    %v7784 = vpop.trf.xlu0
    %v7785 = vpop.trf.xlu0
    %v7786 = vpop.trf.xlu0
    %v7787 = vpop.trf.xlu0
    %v7788 = vpop.trf.xlu0
    %v7789 = vpop.trf.xlu0
    %v7790 = vpop.trf.xlu0
    %v7791 = vpop.trf.xlu0
    %v7792 = vpop.trf.xlu0
    %v7793 = vpop.trf.xlu0
    %v7794 = vpop.trf.xlu0
    %v7795 = vpop.trf.xlu0
    %7796 = vxpose.xlu0.b32.start [1/16] %v7730, 128
    %7797 = vxpose.xlu0.b32.cont [2/16] 0.0, 128
    %7798 = vxpose.xlu0.b32.cont [3/16] 0.0, 128
    %7799 = vxpose.xlu0.b32.cont [4/16] 0.0, 128
    %7800 = vxpose.xlu0.b32.cont [5/16] 0.0, 128
    %7801 = vxpose.xlu0.b32.cont [6/16] 0.0, 128
    %7802 = vxpose.xlu0.b32.cont [7/16] 0.0, 128
    %7803 = vxpose.xlu0.b32.cont [8/16] 0.0, 128
    %7804 = vxpose.xlu0.b32.cont [9/16] 0.0, 128
    %7805 = vxpose.xlu0.b32.cont [10/16] 0.0, 128
    %7806 = vxpose.xlu0.b32.cont [11/16] 0.0, 128
    %7807 = vxpose.xlu0.b32.cont [12/16] 0.0, 128
    %7808 = vxpose.xlu0.b32.cont [13/16] 0.0, 128
    %7809 = vxpose.xlu0.b32.cont [14/16] 0.0, 128
    %7810 = vxpose.xlu0.b32.cont [15/16] 0.0, 128
    %7811 = vxpose.xlu0.b32.end [16/16] 0.0, 128
    %v7812 = vpop.trf.xlu0
    %v7813 = vpop.trf.xlu0
    %v7814 = vpop.trf.xlu0
    %v7815 = vpop.trf.xlu0
    %v7816 = vpop.trf.xlu0
    %v7817 = vpop.trf.xlu0
    %v7818 = vpop.trf.xlu0
    %v7819 = vpop.trf.xlu0
    %v7820 = vpop.trf.xlu0
    %v7821 = vpop.trf.xlu0
    %v7822 = vpop.trf.xlu0
    %v7823 = vpop.trf.xlu0
    %v7824 = vpop.trf.xlu0
    %v7825 = vpop.trf.xlu0
    %v7826 = vpop.trf.xlu0
    %v7827 = vpop.trf.xlu0
    %7828 = vxpose.xlu0.b32.start [1/16] %v7731, 128
    %7829 = vxpose.xlu0.b32.cont [2/16] 0.0, 128
    %7830 = vxpose.xlu0.b32.cont [3/16] 0.0, 128
    %7831 = vxpose.xlu0.b32.cont [4/16] 0.0, 128
    %7832 = vxpose.xlu0.b32.cont [5/16] 0.0, 128
    %7833 = vxpose.xlu0.b32.cont [6/16] 0.0, 128
    %7834 = vxpose.xlu0.b32.cont [7/16] 0.0, 128
    %7835 = vxpose.xlu0.b32.cont [8/16] 0.0, 128
    %7836 = vxpose.xlu0.b32.cont [9/16] 0.0, 128
    %7837 = vxpose.xlu0.b32.cont [10/16] 0.0, 128
    %7838 = vxpose.xlu0.b32.cont [11/16] 0.0, 128
    %7839 = vxpose.xlu0.b32.cont [12/16] 0.0, 128
    %7840 = vxpose.xlu0.b32.cont [13/16] 0.0, 128
    %7841 = vxpose.xlu0.b32.cont [14/16] 0.0, 128
    %7842 = vxpose.xlu0.b32.cont [15/16] 0.0, 128
    %7843 = vxpose.xlu0.b32.end [16/16] 0.0, 128
    %v7844 = vpop.trf.xlu0
    %v7845 = vpop.trf.xlu0
    %v7846 = vpop.trf.xlu0
    %v7847 = vpop.trf.xlu0
    %v7848 = vpop.trf.xlu0
    %v7849 = vpop.trf.xlu0
    %v7850 = vpop.trf.xlu0
    %v7851 = vpop.trf.xlu0
    %v7852 = vpop.trf.xlu0
    %v7853 = vpop.trf.xlu0
    %v7854 = vpop.trf.xlu0
    %v7855 = vpop.trf.xlu0
    %v7856 = vpop.trf.xlu0
    %v7857 = vpop.trf.xlu0
    %v7858 = vpop.trf.xlu0
    %v7859 = vpop.trf.xlu0
    %v7860 = vpack.c.bf16 %v7749, %v7748
    %v7861 = vpack.c.bf16 %v7751, %v7750
    %v7862 = vpack.c.bf16 %v7753, %v7752
    %v7863 = vpack.c.bf16 %v7755, %v7754
    %v7864 = vpack.c.bf16 %v7757, %v7756
    %v7865 = vpack.c.bf16 %v7759, %v7758
    %v7866 = vpack.c.bf16 %v7761, %v7760
    %v7867 = vpack.c.bf16 %v7763, %v7762
    %v7868 = vpack.c.bf16 %v7781, %v7780
    %v7869 = vpack.c.bf16 %v7783, %v7782
    %v7870 = vpack.c.bf16 %v7785, %v7784
    %v7871 = vpack.c.bf16 %v7787, %v7786
    %v7872 = vpack.c.bf16 %v7789, %v7788
    %v7873 = vpack.c.bf16 %v7791, %v7790
    %v7874 = vpack.c.bf16 %v7793, %v7792
    %v7875 = vpack.c.bf16 %v7795, %v7794
    %v7876 = vpack.c.bf16 %v7813, %v7812
    %v7877 = vpack.c.bf16 %v7815, %v7814
    %v7878 = vpack.c.bf16 %v7817, %v7816
    %v7879 = vpack.c.bf16 %v7819, %v7818
    %v7880 = vpack.c.bf16 %v7821, %v7820
    %v7881 = vpack.c.bf16 %v7823, %v7822
    %v7882 = vpack.c.bf16 %v7825, %v7824
    %v7883 = vpack.c.bf16 %v7827, %v7826
    %v7884 = vpack.c.bf16 %v7845, %v7844
    %v7885 = vpack.c.bf16 %v7847, %v7846
    %v7886 = vpack.c.bf16 %v7849, %v7848
    %v7887 = vpack.c.bf16 %v7851, %v7850
    %v7888 = vpack.c.bf16 %v7853, %v7852
    %v7889 = vpack.c.bf16 %v7855, %v7854
    %v7890 = vpack.c.bf16 %v7857, %v7856
    %v7891 = vpack.c.bf16 %v7859, %v7858
    %v7924 = vunpack.c.l.b16 %v7860
    %v7925 = vunpack.c.h.b16 %v7860
    %v7926 = vunpack.c.l.b16 %v7861
    %v7927 = vunpack.c.h.b16 %v7861
    %v7928 = vunpack.c.l.b16 %v7862
    %v7929 = vunpack.c.h.b16 %v7862
    %v7930 = vunpack.c.l.b16 %v7863
    %v7931 = vunpack.c.h.b16 %v7863
    %v7932 = vunpack.c.l.b16 %v7864
    %v7933 = vunpack.c.h.b16 %v7864
    %v7934 = vunpack.c.l.b16 %v7865
    %v7935 = vunpack.c.h.b16 %v7865
    %v7936 = vunpack.c.l.b16 %v7866
    %v7937 = vunpack.c.h.b16 %v7866
    %v7938 = vunpack.c.l.b16 %v7867
    %v7939 = vunpack.c.h.b16 %v7867
    %v7940 = vunpack.c.l.b16 %v7868
    %v7941 = vunpack.c.h.b16 %v7868
    %v7942 = vunpack.c.l.b16 %v7869
    %v7943 = vunpack.c.h.b16 %v7869
    %v7944 = vunpack.c.l.b16 %v7870
    %v7945 = vunpack.c.h.b16 %v7870
    %v7946 = vunpack.c.l.b16 %v7871
    %v7947 = vunpack.c.h.b16 %v7871
    %v7948 = vunpack.c.l.b16 %v7872
    %v7949 = vunpack.c.h.b16 %v7872
    %v7950 = vunpack.c.l.b16 %v7873
    %v7951 = vunpack.c.h.b16 %v7873
    %v7952 = vunpack.c.l.b16 %v7874
    %v7953 = vunpack.c.h.b16 %v7874
    %v7954 = vunpack.c.l.b16 %v7875
    %v7955 = vunpack.c.h.b16 %v7875
    %v7956 = vunpack.c.l.b16 %v7876
    %v7957 = vunpack.c.h.b16 %v7876
    %v7958 = vunpack.c.l.b16 %v7877
    %v7959 = vunpack.c.h.b16 %v7877
    %v7960 = vunpack.c.l.b16 %v7878
    %v7961 = vunpack.c.h.b16 %v7878
    %v7962 = vunpack.c.l.b16 %v7879
    %v7963 = vunpack.c.h.b16 %v7879
    %v7964 = vunpack.c.l.b16 %v7880
    %v7965 = vunpack.c.h.b16 %v7880
    %v7966 = vunpack.c.l.b16 %v7881
    %v7967 = vunpack.c.h.b16 %v7881
    %v7968 = vunpack.c.l.b16 %v7882
    %v7969 = vunpack.c.h.b16 %v7882
    %v7970 = vunpack.c.l.b16 %v7883
    %v7971 = vunpack.c.h.b16 %v7883
    %v7972 = vunpack.c.l.b16 %v7884
    %v7973 = vunpack.c.h.b16 %v7884
    %v7974 = vunpack.c.l.b16 %v7885
    %v7975 = vunpack.c.h.b16 %v7885
    %v7976 = vunpack.c.l.b16 %v7886
    %v7977 = vunpack.c.h.b16 %v7886
    %v7978 = vunpack.c.l.b16 %v7887
    %v7979 = vunpack.c.h.b16 %v7887
    %v7980 = vunpack.c.l.b16 %v7888
    %v7981 = vunpack.c.h.b16 %v7888
    %v7982 = vunpack.c.l.b16 %v7889
    %v7983 = vunpack.c.h.b16 %v7889
    %v7984 = vunpack.c.l.b16 %v7890
    %v7985 = vunpack.c.h.b16 %v7890
    %v7986 = vunpack.c.l.b16 %v7891
    %v7987 = vunpack.c.h.b16 %v7891
    %v7988 = vpack.c.b16 %v7924, %v7924
    %v7989 = vpack.c.b16 %v7925, %v7925
    %v7990 = vpack.c.b16 %v7926, %v7926
    %v7991 = vpack.c.b16 %v7927, %v7927
    %v7992 = vpack.c.b16 %v7928, %v7928
    %v7993 = vpack.c.b16 %v7929, %v7929
    %v7994 = vpack.c.b16 %v7930, %v7930
    %v7995 = vpack.c.b16 %v7931, %v7931
    %v7996 = vpack.c.b16 %v7932, %v7932
    %v7997 = vpack.c.b16 %v7933, %v7933
    %v7998 = vpack.c.b16 %v7934, %v7934
    %v7999 = vpack.c.b16 %v7935, %v7935
    %v8000 = vpack.c.b16 %v7936, %v7936
    %v8001 = vpack.c.b16 %v7937, %v7937
    %v8002 = vpack.c.b16 %v7938, %v7938
    %v8003 = vpack.c.b16 %v7939, %v7939
    %v8004 = vpack.c.b16 %v7940, %v7940
    %v8005 = vpack.c.b16 %v7941, %v7941
    %v8006 = vpack.c.b16 %v7942, %v7942
    %v8007 = vpack.c.b16 %v7943, %v7943
    %v8008 = vpack.c.b16 %v7944, %v7944
    %v8009 = vpack.c.b16 %v7945, %v7945
    %v8010 = vpack.c.b16 %v7946, %v7946
    %v8011 = vpack.c.b16 %v7947, %v7947
    %v8012 = vpack.c.b16 %v7948, %v7948
    %v8013 = vpack.c.b16 %v7949, %v7949
    %v8014 = vpack.c.b16 %v7950, %v7950
    %v8015 = vpack.c.b16 %v7951, %v7951
    %v8016 = vpack.c.b16 %v7952, %v7952
    %v8017 = vpack.c.b16 %v7953, %v7953
    %v8018 = vpack.c.b16 %v7954, %v7954
    %v8019 = vpack.c.b16 %v7955, %v7955
    %v8020 = vpack.c.b16 %v7956, %v7956
    %v8021 = vpack.c.b16 %v7957, %v7957
    %v8022 = vpack.c.b16 %v7958, %v7958
    %v8023 = vpack.c.b16 %v7959, %v7959
    %v8024 = vpack.c.b16 %v7960, %v7960
    %v8025 = vpack.c.b16 %v7961, %v7961
    %v8026 = vpack.c.b16 %v7962, %v7962
    %v8027 = vpack.c.b16 %v7963, %v7963
    %v8028 = vpack.c.b16 %v7964, %v7964
    %v8029 = vpack.c.b16 %v7965, %v7965
    %v8030 = vpack.c.b16 %v7966, %v7966
    %v8031 = vpack.c.b16 %v7967, %v7967
    %v8032 = vpack.c.b16 %v7968, %v7968
    %v8033 = vpack.c.b16 %v7969, %v7969
    %v8034 = vpack.c.b16 %v7970, %v7970
    %v8035 = vpack.c.b16 %v7971, %v7971
    %v8036 = vpack.c.b16 %v7972, %v7972
    %v8037 = vpack.c.b16 %v7973, %v7973
    %v8038 = vpack.c.b16 %v7974, %v7974
    %v8039 = vpack.c.b16 %v7975, %v7975
    %v8040 = vpack.c.b16 %v7976, %v7976
    %v8041 = vpack.c.b16 %v7977, %v7977
    %v8042 = vpack.c.b16 %v7978, %v7978
    %v8043 = vpack.c.b16 %v7979, %v7979
    %v8044 = vpack.c.b16 %v7980, %v7980
    %v8045 = vpack.c.b16 %v7981, %v7981
    %v8046 = vpack.c.b16 %v7982, %v7982
    %v8047 = vpack.c.b16 %v7983, %v7983
    %v8048 = vpack.c.b16 %v7984, %v7984
    %v8049 = vpack.c.b16 %v7985, %v7985
    %v8050 = vpack.c.b16 %v7986, %v7986
    %v8051 = vpack.c.b16 %v7987, %v7987
    %v8053 = vshrl.u32 %v7988, 16
    %v8055 = vrot.slane %v8053, 7
    %v8056 = vshll.u32 %v7988, 16
    %v8058 = vor.u32 %v8055, %v8056
    %v8059 = vrot.slane %v8055, 4
    %v8061 = vshrl.u32 %v7989, 16
    %v8063 = vrot.slane %v8061, 7
    %v8064 = vshll.u32 %v7989, 16
    %v8066 = vor.u32 %v8063, %v8064
    %v8067 = vsel %vm329, %v8059, %v8066
    %v8068 = vrot.slane %v8063, 4
    %v8070 = vshrl.u32 %v7990, 16
    %v8072 = vrot.slane %v8070, 7
    %v8073 = vshll.u32 %v7990, 16
    %v8075 = vor.u32 %v8072, %v8073
    %v8076 = vrot.slane %v8072, 4
    %v8078 = vshrl.u32 %v7991, 16
    %v8080 = vrot.slane %v8078, 7
    %v8081 = vshll.u32 %v7991, 16
    %v8083 = vor.u32 %v8080, %v8081
    %v8084 = vsel %vm329, %v8076, %v8083
    %v8085 = vrot.slane %v8080, 4
    %v8087 = vshrl.u32 %v7992, 16
    %v8089 = vrot.slane %v8087, 7
    %v8090 = vshll.u32 %v7992, 16
    %v8092 = vor.u32 %v8089, %v8090
    %v8093 = vrot.slane %v8089, 4
    %v8095 = vshrl.u32 %v7993, 16
    %v8097 = vrot.slane %v8095, 7
    %v8098 = vshll.u32 %v7993, 16
    %v8100 = vor.u32 %v8097, %v8098
    %v8101 = vsel %vm329, %v8093, %v8100
    %v8102 = vrot.slane %v8097, 4
    %v8104 = vshrl.u32 %v7994, 16
    %v8106 = vrot.slane %v8104, 7
    %v8107 = vshll.u32 %v7994, 16
    %v8109 = vor.u32 %v8106, %v8107
    %v8110 = vrot.slane %v8106, 4
    %v8112 = vshrl.u32 %v7995, 16
    %v8114 = vrot.slane %v8112, 7
    %v8115 = vshll.u32 %v7995, 16
    %v8117 = vor.u32 %v8114, %v8115
    %v8118 = vsel %vm329, %v8110, %v8117
    %v8119 = vrot.slane %v8114, 4
    %v8121 = vshrl.u32 %v7996, 16
    %v8123 = vrot.slane %v8121, 7
    %v8124 = vshll.u32 %v7996, 16
    %v8126 = vor.u32 %v8123, %v8124
    %v8127 = vrot.slane %v8123, 4
    %v8129 = vshrl.u32 %v7997, 16
    %v8131 = vrot.slane %v8129, 7
    %v8132 = vshll.u32 %v7997, 16
    %v8134 = vor.u32 %v8131, %v8132
    %v8135 = vsel %vm329, %v8127, %v8134
    %v8136 = vrot.slane %v8131, 4
    %v8138 = vshrl.u32 %v7998, 16
    %v8140 = vrot.slane %v8138, 7
    %v8141 = vshll.u32 %v7998, 16
    %v8143 = vor.u32 %v8140, %v8141
    %v8144 = vrot.slane %v8140, 4
    %v8146 = vshrl.u32 %v7999, 16
    %v8148 = vrot.slane %v8146, 7
    %v8149 = vshll.u32 %v7999, 16
    %v8151 = vor.u32 %v8148, %v8149
    %v8152 = vsel %vm329, %v8144, %v8151
    %v8153 = vrot.slane %v8148, 4
    %v8155 = vshrl.u32 %v8000, 16
    %v8157 = vrot.slane %v8155, 7
    %v8158 = vshll.u32 %v8000, 16
    %v8160 = vor.u32 %v8157, %v8158
    %v8161 = vrot.slane %v8157, 4
    %v8163 = vshrl.u32 %v8001, 16
    %v8165 = vrot.slane %v8163, 7
    %v8166 = vshll.u32 %v8001, 16
    %v8168 = vor.u32 %v8165, %v8166
    %v8169 = vsel %vm329, %v8161, %v8168
    %v8170 = vrot.slane %v8165, 4
    %v8172 = vshrl.u32 %v8002, 16
    %v8174 = vrot.slane %v8172, 7
    %v8175 = vshll.u32 %v8002, 16
    %v8177 = vor.u32 %v8174, %v8175
    %v8178 = vrot.slane %v8174, 4
    %v8180 = vshrl.u32 %v8003, 16
    %v8182 = vrot.slane %v8180, 7
    %v8183 = vshll.u32 %v8003, 16
    %v8185 = vor.u32 %v8182, %v8183
    %v8186 = vsel %vm329, %v8178, %v8185
    %v8187 = vrot.slane %v8182, 4
    %v8189 = vshrl.u32 %v8004, 16
    %v8191 = vrot.slane %v8189, 7
    %v8192 = vshll.u32 %v8004, 16
    %v8194 = vor.u32 %v8191, %v8192
    %v8195 = vrot.slane %v8191, 4
    %v8197 = vshrl.u32 %v8005, 16
    %v8199 = vrot.slane %v8197, 7
    %v8200 = vshll.u32 %v8005, 16
    %v8202 = vor.u32 %v8199, %v8200
    %v8203 = vsel %vm329, %v8195, %v8202
    %v8204 = vrot.slane %v8199, 4
    %v8206 = vshrl.u32 %v8006, 16
    %v8208 = vrot.slane %v8206, 7
    %v8209 = vshll.u32 %v8006, 16
    %v8211 = vor.u32 %v8208, %v8209
    %v8212 = vrot.slane %v8208, 4
    %v8214 = vshrl.u32 %v8007, 16
    %v8216 = vrot.slane %v8214, 7
    %v8217 = vshll.u32 %v8007, 16
    %v8219 = vor.u32 %v8216, %v8217
    %v8220 = vsel %vm329, %v8212, %v8219
    %v8221 = vrot.slane %v8216, 4
    %v8223 = vshrl.u32 %v8008, 16
    %v8225 = vrot.slane %v8223, 7
    %v8226 = vshll.u32 %v8008, 16
    %v8228 = vor.u32 %v8225, %v8226
    %v8229 = vrot.slane %v8225, 4
    %v8231 = vshrl.u32 %v8009, 16
    %v8233 = vrot.slane %v8231, 7
    %v8234 = vshll.u32 %v8009, 16
    %v8236 = vor.u32 %v8233, %v8234
    %v8237 = vsel %vm329, %v8229, %v8236
    %v8238 = vrot.slane %v8233, 4
    %v8240 = vshrl.u32 %v8010, 16
    %v8242 = vrot.slane %v8240, 7
    %v8243 = vshll.u32 %v8010, 16
    %v8245 = vor.u32 %v8242, %v8243
    %v8246 = vrot.slane %v8242, 4
    %v8248 = vshrl.u32 %v8011, 16
    %v8250 = vrot.slane %v8248, 7
    %v8251 = vshll.u32 %v8011, 16
    %v8253 = vor.u32 %v8250, %v8251
    %v8254 = vsel %vm329, %v8246, %v8253
    %v8255 = vrot.slane %v8250, 4
    %v8257 = vshrl.u32 %v8012, 16
    %v8259 = vrot.slane %v8257, 7
    %v8260 = vshll.u32 %v8012, 16
    %v8262 = vor.u32 %v8259, %v8260
    %v8263 = vrot.slane %v8259, 4
    %v8265 = vshrl.u32 %v8013, 16
    %v8267 = vrot.slane %v8265, 7
    %v8268 = vshll.u32 %v8013, 16
    %v8270 = vor.u32 %v8267, %v8268
    %v8271 = vsel %vm329, %v8263, %v8270
    %v8272 = vrot.slane %v8267, 4
    %v8274 = vshrl.u32 %v8014, 16
    %v8276 = vrot.slane %v8274, 7
    %v8277 = vshll.u32 %v8014, 16
    %v8279 = vor.u32 %v8276, %v8277
    %v8280 = vrot.slane %v8276, 4
    %v8282 = vshrl.u32 %v8015, 16
    %v8284 = vrot.slane %v8282, 7
    %v8285 = vshll.u32 %v8015, 16
    %v8287 = vor.u32 %v8284, %v8285
    %v8288 = vsel %vm329, %v8280, %v8287
    %v8289 = vrot.slane %v8284, 4
    %v8291 = vshrl.u32 %v8016, 16
    %v8293 = vrot.slane %v8291, 7
    %v8294 = vshll.u32 %v8016, 16
    %v8296 = vor.u32 %v8293, %v8294
    %v8297 = vrot.slane %v8293, 4
    %v8299 = vshrl.u32 %v8017, 16
    %v8301 = vrot.slane %v8299, 7
    %v8302 = vshll.u32 %v8017, 16
    %v8304 = vor.u32 %v8301, %v8302
    %v8305 = vsel %vm329, %v8297, %v8304
    %v8306 = vrot.slane %v8301, 4
    %v8308 = vshrl.u32 %v8018, 16
    %v8310 = vrot.slane %v8308, 7
    %v8311 = vshll.u32 %v8018, 16
    %v8313 = vor.u32 %v8310, %v8311
    %v8314 = vrot.slane %v8310, 4
    %v8316 = vshrl.u32 %v8019, 16
    %v8318 = vrot.slane %v8316, 7
    %v8319 = vshll.u32 %v8019, 16
    %v8321 = vor.u32 %v8318, %v8319
    %v8322 = vsel %vm329, %v8314, %v8321
    %v8323 = vrot.slane %v8318, 4
    %v8325 = vshrl.u32 %v8020, 16
    %v8327 = vrot.slane %v8325, 7
    %v8328 = vshll.u32 %v8020, 16
    %v8330 = vor.u32 %v8327, %v8328
    %v8331 = vrot.slane %v8327, 4
    %v8333 = vshrl.u32 %v8021, 16
    %v8335 = vrot.slane %v8333, 7
    %v8336 = vshll.u32 %v8021, 16
    %v8338 = vor.u32 %v8335, %v8336
    %v8339 = vsel %vm329, %v8331, %v8338
    %v8340 = vrot.slane %v8335, 4
    %v8342 = vshrl.u32 %v8022, 16
    %v8344 = vrot.slane %v8342, 7
    %v8345 = vshll.u32 %v8022, 16
    %v8347 = vor.u32 %v8344, %v8345
    %v8348 = vrot.slane %v8344, 4
    %v8350 = vshrl.u32 %v8023, 16
    %v8352 = vrot.slane %v8350, 7
    %v8353 = vshll.u32 %v8023, 16
    %v8355 = vor.u32 %v8352, %v8353
    %v8356 = vsel %vm329, %v8348, %v8355
    %v8357 = vrot.slane %v8352, 4
    %v8359 = vshrl.u32 %v8024, 16
    %v8361 = vrot.slane %v8359, 7
    %v8362 = vshll.u32 %v8024, 16
    %v8364 = vor.u32 %v8361, %v8362
    %v8365 = vrot.slane %v8361, 4
    %v8367 = vshrl.u32 %v8025, 16
    %v8369 = vrot.slane %v8367, 7
    %v8370 = vshll.u32 %v8025, 16
    %v8372 = vor.u32 %v8369, %v8370
    %v8373 = vsel %vm329, %v8365, %v8372
    %v8374 = vrot.slane %v8369, 4
    %v8376 = vshrl.u32 %v8026, 16
    %v8378 = vrot.slane %v8376, 7
    %v8379 = vshll.u32 %v8026, 16
    %v8381 = vor.u32 %v8378, %v8379
    %v8382 = vrot.slane %v8378, 4
    %v8384 = vshrl.u32 %v8027, 16
    %v8386 = vrot.slane %v8384, 7
    %v8387 = vshll.u32 %v8027, 16
    %v8389 = vor.u32 %v8386, %v8387
    %v8390 = vsel %vm329, %v8382, %v8389
    %v8391 = vrot.slane %v8386, 4
    %v8393 = vshrl.u32 %v8028, 16
    %v8395 = vrot.slane %v8393, 7
    %v8396 = vshll.u32 %v8028, 16
    %v8398 = vor.u32 %v8395, %v8396
    %v8399 = vrot.slane %v8395, 4
    %v8401 = vshrl.u32 %v8029, 16
    %v8403 = vrot.slane %v8401, 7
    %v8404 = vshll.u32 %v8029, 16
    %v8406 = vor.u32 %v8403, %v8404
    %v8407 = vsel %vm329, %v8399, %v8406
    %v8408 = vrot.slane %v8403, 4
    %v8410 = vshrl.u32 %v8030, 16
    %v8412 = vrot.slane %v8410, 7
    %v8413 = vshll.u32 %v8030, 16
    %v8415 = vor.u32 %v8412, %v8413
    %v8416 = vrot.slane %v8412, 4
    %v8418 = vshrl.u32 %v8031, 16
    %v8420 = vrot.slane %v8418, 7
    %v8421 = vshll.u32 %v8031, 16
    %v8423 = vor.u32 %v8420, %v8421
    %v8424 = vsel %vm329, %v8416, %v8423
    %v8425 = vrot.slane %v8420, 4
    %v8427 = vshrl.u32 %v8032, 16
    %v8429 = vrot.slane %v8427, 7
    %v8430 = vshll.u32 %v8032, 16
    %v8432 = vor.u32 %v8429, %v8430
    %v8433 = vrot.slane %v8429, 4
    %v8435 = vshrl.u32 %v8033, 16
    %v8437 = vrot.slane %v8435, 7
    %v8438 = vshll.u32 %v8033, 16
    %v8440 = vor.u32 %v8437, %v8438
    %v8441 = vsel %vm329, %v8433, %v8440
    %v8442 = vrot.slane %v8437, 4
    %v8444 = vshrl.u32 %v8034, 16
    %v8446 = vrot.slane %v8444, 7
    %v8447 = vshll.u32 %v8034, 16
    %v8449 = vor.u32 %v8446, %v8447
    %v8450 = vrot.slane %v8446, 4
    %v8452 = vshrl.u32 %v8035, 16
    %v8454 = vrot.slane %v8452, 7
    %v8455 = vshll.u32 %v8035, 16
    %v8457 = vor.u32 %v8454, %v8455
    %v8458 = vsel %vm329, %v8450, %v8457
    %v8459 = vrot.slane %v8454, 4
    %v8461 = vshrl.u32 %v8036, 16
    %v8463 = vrot.slane %v8461, 7
    %v8464 = vshll.u32 %v8036, 16
    %v8466 = vor.u32 %v8463, %v8464
    %v8467 = vrot.slane %v8463, 4
    %v8469 = vshrl.u32 %v8037, 16
    %v8471 = vrot.slane %v8469, 7
    %v8472 = vshll.u32 %v8037, 16
    %v8474 = vor.u32 %v8471, %v8472
    %v8475 = vsel %vm329, %v8467, %v8474
    %v8476 = vrot.slane %v8471, 4
    %v8478 = vshrl.u32 %v8038, 16
    %v8480 = vrot.slane %v8478, 7
    %v8481 = vshll.u32 %v8038, 16
    %v8483 = vor.u32 %v8480, %v8481
    %v8484 = vrot.slane %v8480, 4
    %v8486 = vshrl.u32 %v8039, 16
    %v8488 = vrot.slane %v8486, 7
    %v8489 = vshll.u32 %v8039, 16
    %v8491 = vor.u32 %v8488, %v8489
    %v8492 = vsel %vm329, %v8484, %v8491
    %v8493 = vrot.slane %v8488, 4
    %v8495 = vshrl.u32 %v8040, 16
    %v8497 = vrot.slane %v8495, 7
    %v8498 = vshll.u32 %v8040, 16
    %v8500 = vor.u32 %v8497, %v8498
    %v8501 = vrot.slane %v8497, 4
    %v8503 = vshrl.u32 %v8041, 16
    %v8505 = vrot.slane %v8503, 7
    %v8506 = vshll.u32 %v8041, 16
    %v8508 = vor.u32 %v8505, %v8506
    %v8509 = vsel %vm329, %v8501, %v8508
    %v8510 = vrot.slane %v8505, 4
    %v8512 = vshrl.u32 %v8042, 16
    %v8514 = vrot.slane %v8512, 7
    %v8515 = vshll.u32 %v8042, 16
    %v8517 = vor.u32 %v8514, %v8515
    %v8518 = vrot.slane %v8514, 4
    %v8520 = vshrl.u32 %v8043, 16
    %v8522 = vrot.slane %v8520, 7
    %v8523 = vshll.u32 %v8043, 16
    %v8525 = vor.u32 %v8522, %v8523
    %v8526 = vsel %vm329, %v8518, %v8525
    %v8527 = vrot.slane %v8522, 4
    %v8529 = vshrl.u32 %v8044, 16
    %v8531 = vrot.slane %v8529, 7
    %v8532 = vshll.u32 %v8044, 16
    %v8534 = vor.u32 %v8531, %v8532
    %v8535 = vrot.slane %v8531, 4
    %v8537 = vshrl.u32 %v8045, 16
    %v8539 = vrot.slane %v8537, 7
    %v8540 = vshll.u32 %v8045, 16
    %v8542 = vor.u32 %v8539, %v8540
    %v8543 = vsel %vm329, %v8535, %v8542
    %v8544 = vrot.slane %v8539, 4
    %v8546 = vshrl.u32 %v8046, 16
    %v8548 = vrot.slane %v8546, 7
    %v8549 = vshll.u32 %v8046, 16
    %v8551 = vor.u32 %v8548, %v8549
    %v8552 = vrot.slane %v8548, 4
    %v8554 = vshrl.u32 %v8047, 16
    %v8556 = vrot.slane %v8554, 7
    %v8557 = vshll.u32 %v8047, 16
    %v8559 = vor.u32 %v8556, %v8557
    %v8560 = vsel %vm329, %v8552, %v8559
    %v8561 = vrot.slane %v8556, 4
    %v8563 = vshrl.u32 %v8048, 16
    %v8565 = vrot.slane %v8563, 7
    %v8566 = vshll.u32 %v8048, 16
    %v8568 = vor.u32 %v8565, %v8566
    %v8569 = vrot.slane %v8565, 4
    %v8571 = vshrl.u32 %v8049, 16
    %v8573 = vrot.slane %v8571, 7
    %v8574 = vshll.u32 %v8049, 16
    %v8576 = vor.u32 %v8573, %v8574
    %v8577 = vsel %vm329, %v8569, %v8576
    %v8578 = vrot.slane %v8573, 4
    %v8580 = vshrl.u32 %v8050, 16
    %v8582 = vrot.slane %v8580, 7
    %v8583 = vshll.u32 %v8050, 16
    %v8585 = vor.u32 %v8582, %v8583
    %v8586 = vrot.slane %v8582, 4
    %v8588 = vshrl.u32 %v8051, 16
    %v8590 = vrot.slane %v8588, 7
    %v8591 = vshll.u32 %v8051, 16
    %v8593 = vor.u32 %v8590, %v8591
    %v8594 = vsel %vm329, %v8586, %v8593
    %v8595 = vrot.slane %v8590, 4
    %vm8692 = vcmask 60416
    %vm8693 = vmand %vm8692, %vm154
    %v8694 = vsel %vm8693, %v8058, %v3709
    %8695 = vst [vmem:[%s970] sm:$0xf] %v8694
    %8696 = vst.msk [vmem:[%s970 + $0x4] sm:$0xf] %vm28, %v8067
    %v8697 = vld [vmem:[%s970 + $0x8] sm:$0x1]
    %v8698 = vsel %vm45, %v8068, %v8697
    %8699 = vst [vmem:[%s970 + $0x8] sm:$0x1] %v8698
    %v8700 = vld [vmem:[%s970 + $0xc] sm:$0xf]
    %v8701 = vsel %vm8693, %v8075, %v8700
    %8702 = vst [vmem:[%s970 + $0xc] sm:$0xf] %v8701
    %8703 = vst.msk [vmem:[%s970 + $0x10] sm:$0xf] %vm28, %v8084
    %v8704 = vld [vmem:[%s970 + $0x14] sm:$0x1]
    %v8705 = vsel %vm45, %v8085, %v8704
    %8706 = vst [vmem:[%s970 + $0x14] sm:$0x1] %v8705
    %v8707 = vld [vmem:[%s970 + $0x18] sm:$0xf]
    %v8708 = vsel %vm8693, %v8092, %v8707
    %8709 = vst [vmem:[%s970 + $0x18] sm:$0xf] %v8708
    %8710 = vst.msk [vmem:[%s970 + $0x1c] sm:$0xf] %vm28, %v8101
    %v8711 = vld [vmem:[%s970 + $0x20] sm:$0x1]
    %v8712 = vsel %vm45, %v8102, %v8711
    %8713 = vst [vmem:[%s970 + $0x20] sm:$0x1] %v8712
    %v8714 = vld [vmem:[%s970 + $0x24] sm:$0xf]
    %v8715 = vsel %vm8693, %v8109, %v8714
    %8716 = vst [vmem:[%s970 + $0x24] sm:$0xf] %v8715
    %8717 = vst.msk [vmem:[%s970 + $0x28] sm:$0xf] %vm28, %v8118
    %v8718 = vld [vmem:[%s970 + $0x2c] sm:$0x1]
    %v8719 = vsel %vm45, %v8119, %v8718
    %8720 = vst [vmem:[%s970 + $0x2c] sm:$0x1] %v8719
    %v8721 = vld [vmem:[%s970 + $0x30] sm:$0xf]
    %v8722 = vsel %vm8693, %v8126, %v8721
    %8723 = vst [vmem:[%s970 + $0x30] sm:$0xf] %v8722
    %8724 = vst.msk [vmem:[%s970 + $0x34] sm:$0xf] %vm28, %v8135
    %v8725 = vld [vmem:[%s970 + $0x38] sm:$0x1]
    %v8726 = vsel %vm45, %v8136, %v8725
    %8727 = vst [vmem:[%s970 + $0x38] sm:$0x1] %v8726
    %v8728 = vld [vmem:[%s970 + $0x3c] sm:$0xf]
    %v8729 = vsel %vm8693, %v8143, %v8728
    %8730 = vst [vmem:[%s970 + $0x3c] sm:$0xf] %v8729
    %8731 = vst.msk [vmem:[%s970 + $0x40] sm:$0xf] %vm28, %v8152
    %v8732 = vld [vmem:[%s970 + $0x44] sm:$0x1]
    %v8733 = vsel %vm45, %v8153, %v8732
    %8734 = vst [vmem:[%s970 + $0x44] sm:$0x1] %v8733
    %v8735 = vld [vmem:[%s970 + $0x48] sm:$0xf]
    %v8736 = vsel %vm8693, %v8160, %v8735
    %8737 = vst [vmem:[%s970 + $0x48] sm:$0xf] %v8736
    %8738 = vst.msk [vmem:[%s970 + $0x4c] sm:$0xf] %vm28, %v8169
    %v8739 = vld [vmem:[%s970 + $0x50] sm:$0x1]
    %v8740 = vsel %vm45, %v8170, %v8739
    %8741 = vst [vmem:[%s970 + $0x50] sm:$0x1] %v8740
    %v8742 = vld [vmem:[%s970 + $0x54] sm:$0xf]
    %v8743 = vsel %vm8693, %v8177, %v8742
    %8744 = vst [vmem:[%s970 + $0x54] sm:$0xf] %v8743
    %8745 = vst.msk [vmem:[%s970 + $0x58] sm:$0xf] %vm28, %v8186
    %v8746 = vld [vmem:[%s970 + $0x5c] sm:$0x1]
    %v8747 = vsel %vm45, %v8187, %v8746
    %8748 = vst [vmem:[%s970 + $0x5c] sm:$0x1] %v8747
    %v8749 = vld [vmem:[%s970 + $0x60] sm:$0xf]
    %v8750 = vsel %vm8693, %v8194, %v8749
    %8751 = vst [vmem:[%s970 + $0x60] sm:$0xf] %v8750
    %8752 = vst.msk [vmem:[%s970 + $0x64] sm:$0xf] %vm28, %v8203
    %v8753 = vld [vmem:[%s970 + $0x68] sm:$0x1]
    %v8754 = vsel %vm45, %v8204, %v8753
    %8755 = vst [vmem:[%s970 + $0x68] sm:$0x1] %v8754
    %v8756 = vld [vmem:[%s970 + $0x6c] sm:$0xf]
    %v8757 = vsel %vm8693, %v8211, %v8756
    %8758 = vst [vmem:[%s970 + $0x6c] sm:$0xf] %v8757
    %8759 = vst.msk [vmem:[%s970 + $0x70] sm:$0xf] %vm28, %v8220
    %v8760 = vld [vmem:[%s970 + $0x74] sm:$0x1]
    %v8761 = vsel %vm45, %v8221, %v8760
    %8762 = vst [vmem:[%s970 + $0x74] sm:$0x1] %v8761
    %v8763 = vld [vmem:[%s970 + $0x78] sm:$0xf]
    %v8764 = vsel %vm8693, %v8228, %v8763
    %8765 = vst [vmem:[%s970 + $0x78] sm:$0xf] %v8764
    %8766 = vst.msk [vmem:[%s970 + $0x7c] sm:$0xf] %vm28, %v8237
    %v8767 = vld [vmem:[%s970 + $0x80] sm:$0x1]
    %v8768 = vsel %vm45, %v8238, %v8767
    %8769 = vst [vmem:[%s970 + $0x80] sm:$0x1] %v8768
    %v8770 = vld [vmem:[%s970 + $0x84] sm:$0xf]
    %v8771 = vsel %vm8693, %v8245, %v8770
    %8772 = vst [vmem:[%s970 + $0x84] sm:$0xf] %v8771
    %8773 = vst.msk [vmem:[%s970 + $0x88] sm:$0xf] %vm28, %v8254
    %v8774 = vld [vmem:[%s970 + $0x8c] sm:$0x1]
    %v8775 = vsel %vm45, %v8255, %v8774
    %8776 = vst [vmem:[%s970 + $0x8c] sm:$0x1] %v8775
    %v8777 = vld [vmem:[%s970 + $0x90] sm:$0xf]
    %v8778 = vsel %vm8693, %v8262, %v8777
    %8779 = vst [vmem:[%s970 + $0x90] sm:$0xf] %v8778
    %8780 = vst.msk [vmem:[%s970 + $0x94] sm:$0xf] %vm28, %v8271
    %v8781 = vld [vmem:[%s970 + $0x98] sm:$0x1]
    %v8782 = vsel %vm45, %v8272, %v8781
    %8783 = vst [vmem:[%s970 + $0x98] sm:$0x1] %v8782
    %v8784 = vld [vmem:[%s970 + $0x9c] sm:$0xf]
    %v8785 = vsel %vm8693, %v8279, %v8784
    %8786 = vst [vmem:[%s970 + $0x9c] sm:$0xf] %v8785
    %8787 = vst.msk [vmem:[%s970 + $0xa0] sm:$0xf] %vm28, %v8288
    %v8788 = vld [vmem:[%s970 + $0xa4] sm:$0x1]
    %v8789 = vsel %vm45, %v8289, %v8788
    %8790 = vst [vmem:[%s970 + $0xa4] sm:$0x1] %v8789
    %v8791 = vld [vmem:[%s970 + $0xa8] sm:$0xf]
    %v8792 = vsel %vm8693, %v8296, %v8791
    %8793 = vst [vmem:[%s970 + $0xa8] sm:$0xf] %v8792
    %8794 = vst.msk [vmem:[%s970 + $0xac] sm:$0xf] %vm28, %v8305
    %v8795 = vld [vmem:[%s970 + $0xb0] sm:$0x1]
    %v8796 = vsel %vm45, %v8306, %v8795
    %8797 = vst [vmem:[%s970 + $0xb0] sm:$0x1] %v8796
    %v8798 = vld [vmem:[%s970 + $0xb4] sm:$0xf]
    %v8799 = vsel %vm8693, %v8313, %v8798
    %8800 = vst [vmem:[%s970 + $0xb4] sm:$0xf] %v8799
    %8801 = vst.msk [vmem:[%s970 + $0xb8] sm:$0xf] %vm28, %v8322
    %v8802 = vld [vmem:[%s970 + $0xbc] sm:$0x1]
    %v8803 = vsel %vm45, %v8323, %v8802
    %8804 = vst [vmem:[%s970 + $0xbc] sm:$0x1] %v8803
    %v8805 = vld [vmem:[%s970 + $0xd8] sm:$0xf]
    %v8806 = vsel %vm8693, %v8330, %v8805
    %8807 = vst [vmem:[%s970 + $0xd8] sm:$0xf] %v8806
    %8808 = vst.msk [vmem:[%s970 + $0xdc] sm:$0xf] %vm28, %v8339
    %v8809 = vld [vmem:[%s970 + $0xe0] sm:$0x1]
    %v8810 = vsel %vm45, %v8340, %v8809
    %8811 = vst [vmem:[%s970 + $0xe0] sm:$0x1] %v8810
    %v8812 = vld [vmem:[%s970 + $0xe4] sm:$0xf]
    %v8813 = vsel %vm8693, %v8347, %v8812
    %8814 = vst [vmem:[%s970 + $0xe4] sm:$0xf] %v8813
    %8815 = vst.msk [vmem:[%s970 + $0xe8] sm:$0xf] %vm28, %v8356
    %v8816 = vld [vmem:[%s970 + $0xec] sm:$0x1]
    %v8817 = vsel %vm45, %v8357, %v8816
    %8818 = vst [vmem:[%s970 + $0xec] sm:$0x1] %v8817
    %v8819 = vld [vmem:[%s970 + $0xf0] sm:$0xf]
    %v8820 = vsel %vm8693, %v8364, %v8819
    %8821 = vst [vmem:[%s970 + $0xf0] sm:$0xf] %v8820
    %8822 = vst.msk [vmem:[%s970 + $0xf4] sm:$0xf] %vm28, %v8373
    %v8823 = vld [vmem:[%s970 + $0xf8] sm:$0x1]
    %v8824 = vsel %vm45, %v8374, %v8823
    %8825 = vst [vmem:[%s970 + $0xf8] sm:$0x1] %v8824
    %v8826 = vld [vmem:[%s970 + $0xfc] sm:$0xf]
    %v8827 = vsel %vm8693, %v8381, %v8826
    %8828 = vst [vmem:[%s970 + $0xfc] sm:$0xf] %v8827
    %8829 = vst.msk [vmem:[%s970 + $0x100] sm:$0xf] %vm28, %v8390
    %v8830 = vld [vmem:[%s970 + $0x104] sm:$0x1]
    %v8831 = vsel %vm45, %v8391, %v8830
    %8832 = vst [vmem:[%s970 + $0x104] sm:$0x1] %v8831
    %v8833 = vld [vmem:[%s970 + $0x108] sm:$0xf]
    %v8834 = vsel %vm8693, %v8398, %v8833
    %8835 = vst [vmem:[%s970 + $0x108] sm:$0xf] %v8834
    %8836 = vst.msk [vmem:[%s970 + $0x10c] sm:$0xf] %vm28, %v8407
    %v8837 = vld [vmem:[%s970 + $0x110] sm:$0x1]
    %v8838 = vsel %vm45, %v8408, %v8837
    %8839 = vst [vmem:[%s970 + $0x110] sm:$0x1] %v8838
    %v8840 = vld [vmem:[%s970 + $0x114] sm:$0xf]
    %v8841 = vsel %vm8693, %v8415, %v8840
    %8842 = vst [vmem:[%s970 + $0x114] sm:$0xf] %v8841
    %8843 = vst.msk [vmem:[%s970 + $0x118] sm:$0xf] %vm28, %v8424
    %v8844 = vld [vmem:[%s970 + $0x11c] sm:$0x1]
    %v8845 = vsel %vm45, %v8425, %v8844
    %8846 = vst [vmem:[%s970 + $0x11c] sm:$0x1] %v8845
    %v8847 = vld [vmem:[%s970 + $0x120] sm:$0xf]
    %v8848 = vsel %vm8693, %v8432, %v8847
    %8849 = vst [vmem:[%s970 + $0x120] sm:$0xf] %v8848
    %8850 = vst.msk [vmem:[%s970 + $0x124] sm:$0xf] %vm28, %v8441
    %v8851 = vld [vmem:[%s970 + $0x128] sm:$0x1]
    %v8852 = vsel %vm45, %v8442, %v8851
    %8853 = vst [vmem:[%s970 + $0x128] sm:$0x1] %v8852
    %v8854 = vld [vmem:[%s970 + $0x12c] sm:$0xf]
    %v8855 = vsel %vm8693, %v8449, %v8854
    %8856 = vst [vmem:[%s970 + $0x12c] sm:$0xf] %v8855
    %8857 = vst.msk [vmem:[%s970 + $0x130] sm:$0xf] %vm28, %v8458
    %v8858 = vld [vmem:[%s970 + $0x134] sm:$0x1]
    %v8859 = vsel %vm45, %v8459, %v8858
    %8860 = vst [vmem:[%s970 + $0x134] sm:$0x1] %v8859
    %v8861 = vld [vmem:[%s970 + $0x138] sm:$0xf]
    %v8862 = vsel %vm8693, %v8466, %v8861
    %8863 = vst [vmem:[%s970 + $0x138] sm:$0xf] %v8862
    %8864 = vst.msk [vmem:[%s970 + $0x13c] sm:$0xf] %vm28, %v8475
    %v8865 = vld [vmem:[%s970 + $0x140] sm:$0x1]
    %v8866 = vsel %vm45, %v8476, %v8865
    %8867 = vst [vmem:[%s970 + $0x140] sm:$0x1] %v8866
    %v8868 = vld [vmem:[%s970 + $0x144] sm:$0xf]
    %v8869 = vsel %vm8693, %v8483, %v8868
    %8870 = vst [vmem:[%s970 + $0x144] sm:$0xf] %v8869
    %8871 = vst.msk [vmem:[%s970 + $0x148] sm:$0xf] %vm28, %v8492
    %v8872 = vld [vmem:[%s970 + $0x14c] sm:$0x1]
    %v8873 = vsel %vm45, %v8493, %v8872
    %8874 = vst [vmem:[%s970 + $0x14c] sm:$0x1] %v8873
    %v8875 = vld [vmem:[%s970 + $0x150] sm:$0xf]
    %v8876 = vsel %vm8693, %v8500, %v8875
    %8877 = vst [vmem:[%s970 + $0x150] sm:$0xf] %v8876
    %8878 = vst.msk [vmem:[%s970 + $0x154] sm:$0xf] %vm28, %v8509
    %v8879 = vld [vmem:[%s970 + $0x158] sm:$0x1]
    %v8880 = vsel %vm45, %v8510, %v8879
    %8881 = vst [vmem:[%s970 + $0x158] sm:$0x1] %v8880
    %v8882 = vld [vmem:[%s970 + $0x15c] sm:$0xf]
    %v8883 = vsel %vm8693, %v8517, %v8882
    %8884 = vst [vmem:[%s970 + $0x15c] sm:$0xf] %v8883
    %8885 = vst.msk [vmem:[%s970 + $0x160] sm:$0xf] %vm28, %v8526
    %v8886 = vld [vmem:[%s970 + $0x164] sm:$0x1]
    %v8887 = vsel %vm45, %v8527, %v8886
    %8888 = vst [vmem:[%s970 + $0x164] sm:$0x1] %v8887
    %v8889 = vld [vmem:[%s970 + $0x168] sm:$0xf]
    %v8890 = vsel %vm8693, %v8534, %v8889
    %8891 = vst [vmem:[%s970 + $0x168] sm:$0xf] %v8890
    %8892 = vst.msk [vmem:[%s970 + $0x16c] sm:$0xf] %vm28, %v8543
    %v8893 = vld [vmem:[%s970 + $0x170] sm:$0x1]
    %v8894 = vsel %vm45, %v8544, %v8893
    %8895 = vst [vmem:[%s970 + $0x170] sm:$0x1] %v8894
    %v8896 = vld [vmem:[%s970 + $0x174] sm:$0xf]
    %v8897 = vsel %vm8693, %v8551, %v8896
    %8898 = vst [vmem:[%s970 + $0x174] sm:$0xf] %v8897
    %8899 = vst.msk [vmem:[%s970 + $0x178] sm:$0xf] %vm28, %v8560
    %v8900 = vld [vmem:[%s970 + $0x17c] sm:$0x1]
    %v8901 = vsel %vm45, %v8561, %v8900
    %8902 = vst [vmem:[%s970 + $0x17c] sm:$0x1] %v8901
    %v8903 = vld [vmem:[%s970 + $0x180] sm:$0xf]
    %v8904 = vsel %vm8693, %v8568, %v8903
    %8905 = vst [vmem:[%s970 + $0x180] sm:$0xf] %v8904
    %8906 = vst.msk [vmem:[%s970 + $0x184] sm:$0xf] %vm28, %v8577
    %v8907 = vld [vmem:[%s970 + $0x188] sm:$0x1]
    %v8908 = vsel %vm45, %v8578, %v8907
    %8909 = vst [vmem:[%s970 + $0x188] sm:$0x1] %v8908
    %v8910 = vld [vmem:[%s970 + $0x18c] sm:$0xf]
    %v8911 = vsel %vm8693, %v8585, %v8910
    %8912 = vst [vmem:[%s970 + $0x18c] sm:$0xf] %v8911
    %8913 = vst.msk [vmem:[%s970 + $0x190] sm:$0xf] %vm28, %v8594
    %v8914 = vld [vmem:[%s970 + $0x194] sm:$0x1]
    %v8915 = vsel %vm45, %v8595, %v8914
    %8916 = vst [vmem:[%s970 + $0x194] sm:$0x1] %v8915
    %v8917 = vld [vmem:[#allocation2] sm:$0xf]
    %v8918 = vld [vmem:[#allocation2 + $0x4] sm:$0xf]
    %v8919 = vld [vmem:[#allocation2 + $0xc] sm:$0xf]
    %v8920 = vld [vmem:[#allocation2 + $0x10] sm:$0xf]
    %v8921 = vld [vmem:[#allocation2 + $0x18] sm:$0xf]
    %v8922 = vld [vmem:[#allocation2 + $0x1c] sm:$0xf]
    %v8923 = vld [vmem:[#allocation2 + $0x24] sm:$0xf]
    %v8924 = vld [vmem:[#allocation2 + $0x28] sm:$0xf]
    %v8925 = vld [vmem:[#allocation2 + $0x30] sm:$0xf]
    %v8926 = vld [vmem:[#allocation2 + $0x34] sm:$0xf]
    %v8927 = vld [vmem:[#allocation2 + $0x3c] sm:$0xf]
    %v8928 = vld [vmem:[#allocation2 + $0x40] sm:$0xf]
    %v8929 = vld [vmem:[#allocation2 + $0x48] sm:$0xf]
    %v8930 = vld [vmem:[#allocation2 + $0x4c] sm:$0xf]
    %v8931 = vld [vmem:[#allocation2 + $0x54] sm:$0xf]
    %v8932 = vld [vmem:[#allocation2 + $0x58] sm:$0xf]
    %v8933 = vld [vmem:[#allocation2 + $0x60] sm:$0xf]
    %v8934 = vld [vmem:[#allocation2 + $0x64] sm:$0xf]
    %v8935 = vld [vmem:[#allocation2 + $0x6c] sm:$0xf]
    %v8936 = vld [vmem:[#allocation2 + $0x70] sm:$0xf]
    %v8937 = vld [vmem:[#allocation2 + $0x78] sm:$0xf]
    %v8938 = vld [vmem:[#allocation2 + $0x7c] sm:$0xf]
    %v8939 = vld [vmem:[#allocation2 + $0x84] sm:$0xf]
    %v8940 = vld [vmem:[#allocation2 + $0x88] sm:$0xf]
    %v8941 = vld [vmem:[#allocation2 + $0x90] sm:$0xf]
    %v8942 = vld [vmem:[#allocation2 + $0x94] sm:$0xf]
    %v8943 = vld [vmem:[#allocation2 + $0x9c] sm:$0xf]
    %v8944 = vld [vmem:[#allocation2 + $0xa0] sm:$0xf]
    %v8945 = vld [vmem:[#allocation2 + $0xa8] sm:$0xf]
    %v8946 = vld [vmem:[#allocation2 + $0xac] sm:$0xf]
    %v8947 = vld [vmem:[#allocation2 + $0xb4] sm:$0xf]
    %v8948 = vld [vmem:[#allocation2 + $0xb8] sm:$0xf]
    %v8949 = vld [vmem:[#allocation2 + $0xd8] sm:$0xf]
    %v8950 = vld [vmem:[#allocation2 + $0xdc] sm:$0xf]
    %v8951 = vld [vmem:[#allocation2 + $0xe4] sm:$0xf]
    %v8952 = vld [vmem:[#allocation2 + $0xe8] sm:$0xf]
    %v8953 = vld [vmem:[#allocation2 + $0xf0] sm:$0xf]
    %v8954 = vld [vmem:[#allocation2 + $0xf4] sm:$0xf]
    %v8955 = vld [vmem:[#allocation2 + $0xfc] sm:$0xf]
    %v8956 = vld [vmem:[#allocation2 + $0x100] sm:$0xf]
    %v8957 = vld [vmem:[#allocation2 + $0x108] sm:$0xf]
    %v8958 = vld [vmem:[#allocation2 + $0x10c] sm:$0xf]
    %v8959 = vld [vmem:[#allocation2 + $0x114] sm:$0xf]
    %v8960 = vld [vmem:[#allocation2 + $0x118] sm:$0xf]
    %v8961 = vld [vmem:[#allocation2 + $0x120] sm:$0xf]
    %v8962 = vld [vmem:[#allocation2 + $0x124] sm:$0xf]
    %v8963 = vld [vmem:[#allocation2 + $0x12c] sm:$0xf]
    %v8964 = vld [vmem:[#allocation2 + $0x130] sm:$0xf]
    %v8965 = vld [vmem:[#allocation2 + $0x138] sm:$0xf]
    %v8966 = vld [vmem:[#allocation2 + $0x13c] sm:$0xf]
    %v8967 = vld [vmem:[#allocation2 + $0x144] sm:$0xf]
    %v8968 = vld [vmem:[#allocation2 + $0x148] sm:$0xf]
    %v8969 = vld [vmem:[#allocation2 + $0x150] sm:$0xf]
    %v8970 = vld [vmem:[#allocation2 + $0x154] sm:$0xf]
    %v8971 = vld [vmem:[#allocation2 + $0x15c] sm:$0xf]
    %v8972 = vld [vmem:[#allocation2 + $0x160] sm:$0xf]
    %v8973 = vld [vmem:[#allocation2 + $0x168] sm:$0xf]
    %v8974 = vld [vmem:[#allocation2 + $0x16c] sm:$0xf]
    %v8975 = vld [vmem:[#allocation2 + $0x174] sm:$0xf]
    %v8976 = vld [vmem:[#allocation2 + $0x178] sm:$0xf]
    %v8977 = vld [vmem:[#allocation2 + $0x180] sm:$0xf]
    %v8978 = vld [vmem:[#allocation2 + $0x184] sm:$0xf]
    %v8979 = vld [vmem:[#allocation2 + $0x18c] sm:$0xf]
    %v8980 = vld [vmem:[#allocation2 + $0x190] sm:$0xf]
    %v8981 = vld [vmem:[%s4] sm:$0xf]
    %v8982 = vld [vmem:[#allocation2 + $0x8] sm:$0x1]
    %v8983 = vld [vmem:[#allocation2 + $0x14] sm:$0x1]
    %v8984 = vld [vmem:[#allocation2 + $0x20] sm:$0x1]
    %v8985 = vld [vmem:[#allocation2 + $0x2c] sm:$0x1]
    %v8986 = vld [vmem:[#allocation2 + $0x38] sm:$0x1]
    %v8987 = vld [vmem:[#allocation2 + $0x44] sm:$0x1]
    %v8988 = vld [vmem:[#allocation2 + $0x50] sm:$0x1]
    %v8989 = vld [vmem:[#allocation2 + $0x5c] sm:$0x1]
    %v8990 = vld [vmem:[#allocation2 + $0x68] sm:$0x1]
    %v8991 = vld [vmem:[#allocation2 + $0x74] sm:$0x1]
    %v8992 = vld [vmem:[#allocation2 + $0x80] sm:$0x1]
    %v8993 = vld [vmem:[#allocation2 + $0x8c] sm:$0x1]
    %v8994 = vld [vmem:[#allocation2 + $0x98] sm:$0x1]
    %v8995 = vld [vmem:[#allocation2 + $0xa4] sm:$0x1]
    %v8996 = vld [vmem:[#allocation2 + $0xb0] sm:$0x1]
    %v8997 = vld [vmem:[#allocation2 + $0xbc] sm:$0x1]
    %v8998 = vld [vmem:[#allocation2 + $0xe0] sm:$0x1]
    %v8999 = vld [vmem:[#allocation2 + $0xec] sm:$0x1]
    %v9000 = vld [vmem:[#allocation2 + $0xf8] sm:$0x1]
    %v9001 = vld [vmem:[#allocation2 + $0x104] sm:$0x1]
    %v9002 = vld [vmem:[#allocation2 + $0x110] sm:$0x1]
    %v9003 = vld [vmem:[#allocation2 + $0x11c] sm:$0x1]
    %v9004 = vld [vmem:[#allocation2 + $0x128] sm:$0x1]
    %v9005 = vld [vmem:[#allocation2 + $0x134] sm:$0x1]
    %v9006 = vld [vmem:[#allocation2 + $0x140] sm:$0x1]
    %v9007 = vld [vmem:[#allocation2 + $0x14c] sm:$0x1]
    %v9008 = vld [vmem:[#allocation2 + $0x158] sm:$0x1]
    %v9009 = vld [vmem:[#allocation2 + $0x164] sm:$0x1]
    %v9010 = vld [vmem:[#allocation2 + $0x170] sm:$0x1]
    %v9011 = vld [vmem:[#allocation2 + $0x17c] sm:$0x1]
    %v9012 = vld [vmem:[#allocation2 + $0x188] sm:$0x1]
    %v9013 = vld [vmem:[#allocation2 + $0x194] sm:$0x1]
    %v9015 = vshrl.u32 %v8917, 16
    %v9017 = vrot.slane %v9015, 4
    %v9018 = vshll.u32 %v8917, 16
    %v9020 = vrot.slane %v9018, 5
    %v9021 = vor.u32 %v9017, %v9020
    %v9022 = vrot.slane %v9021, 4
    %v9024 = vshll.u32 %v8918, 16
    %v9026 = vrot.slane %v9024, 5
    %v9027 = vsel %vm1299, %v9022, %v9026
    %v9028 = vshrl.u32 %v8918, 16
    %v9030 = vrot.slane %v9028, 4
    %v9031 = vor.u32 %v9030, %v9026
    %v9032 = vrot.slane %v9031, 4
    %v9034 = vshll.u32 %v8982, 16
    %v9036 = vrot.slane %v9034, 5
    %v9037 = vsel %vm1299, %v9032, %v9036
    %v9039 = vshrl.u32 %v8919, 16
    %v9041 = vrot.slane %v9039, 4
    %v9042 = vshll.u32 %v8919, 16
    %v9044 = vrot.slane %v9042, 5
    %v9045 = vor.u32 %v9041, %v9044
    %v9046 = vrot.slane %v9045, 4
    %v9048 = vshll.u32 %v8920, 16
    %v9050 = vrot.slane %v9048, 5
    %v9051 = vsel %vm1299, %v9046, %v9050
    %v9052 = vshrl.u32 %v8920, 16
    %v9054 = vrot.slane %v9052, 4
    %v9055 = vor.u32 %v9054, %v9050
    %v9056 = vrot.slane %v9055, 4
    %v9058 = vshll.u32 %v8983, 16
    %v9060 = vrot.slane %v9058, 5
    %v9061 = vsel %vm1299, %v9056, %v9060
    %v9063 = vshrl.u32 %v8921, 16
    %v9065 = vrot.slane %v9063, 4
    %v9066 = vshll.u32 %v8921, 16
    %v9068 = vrot.slane %v9066, 5
    %v9069 = vor.u32 %v9065, %v9068
    %v9070 = vrot.slane %v9069, 4
    %v9072 = vshll.u32 %v8922, 16
    %v9074 = vrot.slane %v9072, 5
    %v9075 = vsel %vm1299, %v9070, %v9074
    %v9076 = vshrl.u32 %v8922, 16
    %v9078 = vrot.slane %v9076, 4
    %v9079 = vor.u32 %v9078, %v9074
    %v9080 = vrot.slane %v9079, 4
    %v9082 = vshll.u32 %v8984, 16
    %v9084 = vrot.slane %v9082, 5
    %v9085 = vsel %vm1299, %v9080, %v9084
    %v9087 = vshrl.u32 %v8923, 16
    %v9089 = vrot.slane %v9087, 4
    %v9090 = vshll.u32 %v8923, 16
    %v9092 = vrot.slane %v9090, 5
    %v9093 = vor.u32 %v9089, %v9092
    %v9094 = vrot.slane %v9093, 4
    %v9096 = vshll.u32 %v8924, 16
    %v9098 = vrot.slane %v9096, 5
    %v9099 = vsel %vm1299, %v9094, %v9098
    %v9100 = vshrl.u32 %v8924, 16
    %v9102 = vrot.slane %v9100, 4
    %v9103 = vor.u32 %v9102, %v9098
    %v9104 = vrot.slane %v9103, 4
    %v9106 = vshll.u32 %v8985, 16
    %v9108 = vrot.slane %v9106, 5
    %v9109 = vsel %vm1299, %v9104, %v9108
    %v9111 = vshrl.u32 %v8925, 16
    %v9113 = vrot.slane %v9111, 4
    %v9114 = vshll.u32 %v8925, 16
    %v9116 = vrot.slane %v9114, 5
    %v9117 = vor.u32 %v9113, %v9116
    %v9118 = vrot.slane %v9117, 4
    %v9120 = vshll.u32 %v8926, 16
    %v9122 = vrot.slane %v9120, 5
    %v9123 = vsel %vm1299, %v9118, %v9122
    %v9124 = vshrl.u32 %v8926, 16
    %v9126 = vrot.slane %v9124, 4
    %v9127 = vor.u32 %v9126, %v9122
    %v9128 = vrot.slane %v9127, 4
    %v9130 = vshll.u32 %v8986, 16
    %v9132 = vrot.slane %v9130, 5
    %v9133 = vsel %vm1299, %v9128, %v9132
    %v9135 = vshrl.u32 %v8927, 16
    %v9137 = vrot.slane %v9135, 4
    %v9138 = vshll.u32 %v8927, 16
    %v9140 = vrot.slane %v9138, 5
    %v9141 = vor.u32 %v9137, %v9140
    %v9142 = vrot.slane %v9141, 4
    %v9144 = vshll.u32 %v8928, 16
    %v9146 = vrot.slane %v9144, 5
    %v9147 = vsel %vm1299, %v9142, %v9146
    %v9148 = vshrl.u32 %v8928, 16
    %v9150 = vrot.slane %v9148, 4
    %v9151 = vor.u32 %v9150, %v9146
    %v9152 = vrot.slane %v9151, 4
    %v9154 = vshll.u32 %v8987, 16
    %v9156 = vrot.slane %v9154, 5
    %v9157 = vsel %vm1299, %v9152, %v9156
    %v9159 = vshrl.u32 %v8929, 16
    %v9161 = vrot.slane %v9159, 4
    %v9162 = vshll.u32 %v8929, 16
    %v9164 = vrot.slane %v9162, 5
    %v9165 = vor.u32 %v9161, %v9164
    %v9166 = vrot.slane %v9165, 4
    %v9168 = vshll.u32 %v8930, 16
    %v9170 = vrot.slane %v9168, 5
    %v9171 = vsel %vm1299, %v9166, %v9170
    %v9172 = vshrl.u32 %v8930, 16
    %v9174 = vrot.slane %v9172, 4
    %v9175 = vor.u32 %v9174, %v9170
    %v9176 = vrot.slane %v9175, 4
    %v9178 = vshll.u32 %v8988, 16
    %v9180 = vrot.slane %v9178, 5
    %v9181 = vsel %vm1299, %v9176, %v9180
    %v9183 = vshrl.u32 %v8931, 16
    %v9185 = vrot.slane %v9183, 4
    %v9186 = vshll.u32 %v8931, 16
    %v9188 = vrot.slane %v9186, 5
    %v9189 = vor.u32 %v9185, %v9188
    %v9190 = vrot.slane %v9189, 4
    %v9192 = vshll.u32 %v8932, 16
    %v9194 = vrot.slane %v9192, 5
    %v9195 = vsel %vm1299, %v9190, %v9194
    %v9196 = vshrl.u32 %v8932, 16
    %v9198 = vrot.slane %v9196, 4
    %v9199 = vor.u32 %v9198, %v9194
    %v9200 = vrot.slane %v9199, 4
    %v9202 = vshll.u32 %v8989, 16
    %v9204 = vrot.slane %v9202, 5
    %v9205 = vsel %vm1299, %v9200, %v9204
    %v9207 = vshrl.u32 %v8933, 16
    %v9209 = vrot.slane %v9207, 4
    %v9210 = vshll.u32 %v8933, 16
    %v9212 = vrot.slane %v9210, 5
    %v9213 = vor.u32 %v9209, %v9212
    %v9214 = vrot.slane %v9213, 4
    %v9216 = vshll.u32 %v8934, 16
    %v9218 = vrot.slane %v9216, 5
    %v9219 = vsel %vm1299, %v9214, %v9218
    %v9220 = vshrl.u32 %v8934, 16
    %v9222 = vrot.slane %v9220, 4
    %v9223 = vor.u32 %v9222, %v9218
    %v9224 = vrot.slane %v9223, 4
    %v9226 = vshll.u32 %v8990, 16
    %v9228 = vrot.slane %v9226, 5
    %v9229 = vsel %vm1299, %v9224, %v9228
    %v9231 = vshrl.u32 %v8935, 16
    %v9233 = vrot.slane %v9231, 4
    %v9234 = vshll.u32 %v8935, 16
    %v9236 = vrot.slane %v9234, 5
    %v9237 = vor.u32 %v9233, %v9236
    %v9238 = vrot.slane %v9237, 4
    %v9240 = vshll.u32 %v8936, 16
    %v9242 = vrot.slane %v9240, 5
    %v9243 = vsel %vm1299, %v9238, %v9242
    %v9244 = vshrl.u32 %v8936, 16
    %v9246 = vrot.slane %v9244, 4
    %v9247 = vor.u32 %v9246, %v9242
    %v9248 = vrot.slane %v9247, 4
    %v9250 = vshll.u32 %v8991, 16
    %v9252 = vrot.slane %v9250, 5
    %v9253 = vsel %vm1299, %v9248, %v9252
    %v9255 = vshrl.u32 %v8937, 16
    %v9257 = vrot.slane %v9255, 4
    %v9258 = vshll.u32 %v8937, 16
    %v9260 = vrot.slane %v9258, 5
    %v9261 = vor.u32 %v9257, %v9260
    %v9262 = vrot.slane %v9261, 4
    %v9264 = vshll.u32 %v8938, 16
    %v9266 = vrot.slane %v9264, 5
    %v9267 = vsel %vm1299, %v9262, %v9266
    %v9268 = vshrl.u32 %v8938, 16
    %v9270 = vrot.slane %v9268, 4
    %v9271 = vor.u32 %v9270, %v9266
    %v9272 = vrot.slane %v9271, 4
    %v9274 = vshll.u32 %v8992, 16
    %v9276 = vrot.slane %v9274, 5
    %v9277 = vsel %vm1299, %v9272, %v9276
    %v9279 = vshrl.u32 %v8939, 16
    %v9281 = vrot.slane %v9279, 4
    %v9282 = vshll.u32 %v8939, 16
    %v9284 = vrot.slane %v9282, 5
    %v9285 = vor.u32 %v9281, %v9284
    %v9286 = vrot.slane %v9285, 4
    %v9288 = vshll.u32 %v8940, 16
    %v9290 = vrot.slane %v9288, 5
    %v9291 = vsel %vm1299, %v9286, %v9290
    %v9292 = vshrl.u32 %v8940, 16
    %v9294 = vrot.slane %v9292, 4
    %v9295 = vor.u32 %v9294, %v9290
    %v9296 = vrot.slane %v9295, 4
    %v9298 = vshll.u32 %v8993, 16
    %v9300 = vrot.slane %v9298, 5
    %v9301 = vsel %vm1299, %v9296, %v9300
    %v9303 = vshrl.u32 %v8941, 16
    %v9305 = vrot.slane %v9303, 4
    %v9306 = vshll.u32 %v8941, 16
    %v9308 = vrot.slane %v9306, 5
    %v9309 = vor.u32 %v9305, %v9308
    %v9310 = vrot.slane %v9309, 4
    %v9312 = vshll.u32 %v8942, 16
    %v9314 = vrot.slane %v9312, 5
    %v9315 = vsel %vm1299, %v9310, %v9314
    %v9316 = vshrl.u32 %v8942, 16
    %v9318 = vrot.slane %v9316, 4
    %v9319 = vor.u32 %v9318, %v9314
    %v9320 = vrot.slane %v9319, 4
    %v9322 = vshll.u32 %v8994, 16
    %v9324 = vrot.slane %v9322, 5
    %v9325 = vsel %vm1299, %v9320, %v9324
    %v9327 = vshrl.u32 %v8943, 16
    %v9329 = vrot.slane %v9327, 4
    %v9330 = vshll.u32 %v8943, 16
    %v9332 = vrot.slane %v9330, 5
    %v9333 = vor.u32 %v9329, %v9332
    %v9334 = vrot.slane %v9333, 4
    %v9336 = vshll.u32 %v8944, 16
    %v9338 = vrot.slane %v9336, 5
    %v9339 = vsel %vm1299, %v9334, %v9338
    %v9340 = vshrl.u32 %v8944, 16
    %v9342 = vrot.slane %v9340, 4
    %v9343 = vor.u32 %v9342, %v9338
    %v9344 = vrot.slane %v9343, 4
    %v9346 = vshll.u32 %v8995, 16
    %v9348 = vrot.slane %v9346, 5
    %v9349 = vsel %vm1299, %v9344, %v9348
    %v9351 = vshrl.u32 %v8945, 16
    %v9353 = vrot.slane %v9351, 4
    %v9354 = vshll.u32 %v8945, 16
    %v9356 = vrot.slane %v9354, 5
    %v9357 = vor.u32 %v9353, %v9356
    %v9358 = vrot.slane %v9357, 4
    %v9360 = vshll.u32 %v8946, 16
    %v9362 = vrot.slane %v9360, 5
    %v9363 = vsel %vm1299, %v9358, %v9362
    %v9364 = vshrl.u32 %v8946, 16
    %v9366 = vrot.slane %v9364, 4
    %v9367 = vor.u32 %v9366, %v9362
    %v9368 = vrot.slane %v9367, 4
    %v9370 = vshll.u32 %v8996, 16
    %v9372 = vrot.slane %v9370, 5
    %v9373 = vsel %vm1299, %v9368, %v9372
    %v9375 = vshrl.u32 %v8947, 16
    %v9377 = vrot.slane %v9375, 4
    %v9378 = vshll.u32 %v8947, 16
    %v9380 = vrot.slane %v9378, 5
    %v9381 = vor.u32 %v9377, %v9380
    %v9382 = vrot.slane %v9381, 4
    %v9384 = vshll.u32 %v8948, 16
    %v9386 = vrot.slane %v9384, 5
    %v9387 = vsel %vm1299, %v9382, %v9386
    %v9388 = vshrl.u32 %v8948, 16
    %v9390 = vrot.slane %v9388, 4
    %v9391 = vor.u32 %v9390, %v9386
    %v9392 = vrot.slane %v9391, 4
    %v9394 = vshll.u32 %v8997, 16
    %v9396 = vrot.slane %v9394, 5
    %v9397 = vsel %vm1299, %v9392, %v9396
    %v9399 = vshrl.u32 %v8949, 16
    %v9401 = vrot.slane %v9399, 4
    %v9402 = vshll.u32 %v8949, 16
    %v9404 = vrot.slane %v9402, 5
    %v9405 = vor.u32 %v9401, %v9404
    %v9406 = vrot.slane %v9405, 4
    %v9408 = vshll.u32 %v8950, 16
    %v9410 = vrot.slane %v9408, 5
    %v9411 = vsel %vm1299, %v9406, %v9410
    %v9412 = vshrl.u32 %v8950, 16
    %v9414 = vrot.slane %v9412, 4
    %v9415 = vor.u32 %v9414, %v9410
    %v9416 = vrot.slane %v9415, 4
    %v9418 = vshll.u32 %v8998, 16
    %v9420 = vrot.slane %v9418, 5
    %v9421 = vsel %vm1299, %v9416, %v9420
    %v9423 = vshrl.u32 %v8951, 16
    %v9425 = vrot.slane %v9423, 4
    %v9426 = vshll.u32 %v8951, 16
    %v9428 = vrot.slane %v9426, 5
    %v9429 = vor.u32 %v9425, %v9428
    %v9430 = vrot.slane %v9429, 4
    %v9432 = vshll.u32 %v8952, 16
    %v9434 = vrot.slane %v9432, 5
    %v9435 = vsel %vm1299, %v9430, %v9434
    %v9436 = vshrl.u32 %v8952, 16
    %v9438 = vrot.slane %v9436, 4
    %v9439 = vor.u32 %v9438, %v9434
    %v9440 = vrot.slane %v9439, 4
    %v9442 = vshll.u32 %v8999, 16
    %v9444 = vrot.slane %v9442, 5
    %v9445 = vsel %vm1299, %v9440, %v9444
    %v9447 = vshrl.u32 %v8953, 16
    %v9449 = vrot.slane %v9447, 4
    %v9450 = vshll.u32 %v8953, 16
    %v9452 = vrot.slane %v9450, 5
    %v9453 = vor.u32 %v9449, %v9452
    %v9454 = vrot.slane %v9453, 4
    %v9456 = vshll.u32 %v8954, 16
    %v9458 = vrot.slane %v9456, 5
    %v9459 = vsel %vm1299, %v9454, %v9458
    %v9460 = vshrl.u32 %v8954, 16
    %v9462 = vrot.slane %v9460, 4
    %v9463 = vor.u32 %v9462, %v9458
    %v9464 = vrot.slane %v9463, 4
    %v9466 = vshll.u32 %v9000, 16
    %v9468 = vrot.slane %v9466, 5
    %v9469 = vsel %vm1299, %v9464, %v9468
    %v9471 = vshrl.u32 %v8955, 16
    %v9473 = vrot.slane %v9471, 4
    %v9474 = vshll.u32 %v8955, 16
    %v9476 = vrot.slane %v9474, 5
    %v9477 = vor.u32 %v9473, %v9476
    %v9478 = vrot.slane %v9477, 4
    %v9480 = vshll.u32 %v8956, 16
    %v9482 = vrot.slane %v9480, 5
    %v9483 = vsel %vm1299, %v9478, %v9482
    %v9484 = vshrl.u32 %v8956, 16
    %v9486 = vrot.slane %v9484, 4
    %v9487 = vor.u32 %v9486, %v9482
    %v9488 = vrot.slane %v9487, 4
    %v9490 = vshll.u32 %v9001, 16
    %v9492 = vrot.slane %v9490, 5
    %v9493 = vsel %vm1299, %v9488, %v9492
    %v9495 = vshrl.u32 %v8957, 16
    %v9497 = vrot.slane %v9495, 4
    %v9498 = vshll.u32 %v8957, 16
    %v9500 = vrot.slane %v9498, 5
    %v9501 = vor.u32 %v9497, %v9500
    %v9502 = vrot.slane %v9501, 4
    %v9504 = vshll.u32 %v8958, 16
    %v9506 = vrot.slane %v9504, 5
    %v9507 = vsel %vm1299, %v9502, %v9506
    %v9508 = vshrl.u32 %v8958, 16
    %v9510 = vrot.slane %v9508, 4
    %v9511 = vor.u32 %v9510, %v9506
    %v9512 = vrot.slane %v9511, 4
    %v9514 = vshll.u32 %v9002, 16
    %v9516 = vrot.slane %v9514, 5
    %v9517 = vsel %vm1299, %v9512, %v9516
    %v9519 = vshrl.u32 %v8959, 16
    %v9521 = vrot.slane %v9519, 4
    %v9522 = vshll.u32 %v8959, 16
    %v9524 = vrot.slane %v9522, 5
    %v9525 = vor.u32 %v9521, %v9524
    %v9526 = vrot.slane %v9525, 4
    %v9528 = vshll.u32 %v8960, 16
    %v9530 = vrot.slane %v9528, 5
    %v9531 = vsel %vm1299, %v9526, %v9530
    %v9532 = vshrl.u32 %v8960, 16
    %v9534 = vrot.slane %v9532, 4
    %v9535 = vor.u32 %v9534, %v9530
    %v9536 = vrot.slane %v9535, 4
    %v9538 = vshll.u32 %v9003, 16
    %v9540 = vrot.slane %v9538, 5
    %v9541 = vsel %vm1299, %v9536, %v9540
    %v9543 = vshrl.u32 %v8961, 16
    %v9545 = vrot.slane %v9543, 4
    %v9546 = vshll.u32 %v8961, 16
    %v9548 = vrot.slane %v9546, 5
    %v9549 = vor.u32 %v9545, %v9548
    %v9550 = vrot.slane %v9549, 4
    %v9552 = vshll.u32 %v8962, 16
    %v9554 = vrot.slane %v9552, 5
    %v9555 = vsel %vm1299, %v9550, %v9554
    %v9556 = vshrl.u32 %v8962, 16
    %v9558 = vrot.slane %v9556, 4
    %v9559 = vor.u32 %v9558, %v9554
    %v9560 = vrot.slane %v9559, 4
    %v9562 = vshll.u32 %v9004, 16
    %v9564 = vrot.slane %v9562, 5
    %v9565 = vsel %vm1299, %v9560, %v9564
    %v9567 = vshrl.u32 %v8963, 16
    %v9569 = vrot.slane %v9567, 4
    %v9570 = vshll.u32 %v8963, 16
    %v9572 = vrot.slane %v9570, 5
    %v9573 = vor.u32 %v9569, %v9572
    %v9574 = vrot.slane %v9573, 4
    %v9576 = vshll.u32 %v8964, 16
    %v9578 = vrot.slane %v9576, 5
    %v9579 = vsel %vm1299, %v9574, %v9578
    %v9580 = vshrl.u32 %v8964, 16
    %v9582 = vrot.slane %v9580, 4
    %v9583 = vor.u32 %v9582, %v9578
    %v9584 = vrot.slane %v9583, 4
    %v9586 = vshll.u32 %v9005, 16
    %v9588 = vrot.slane %v9586, 5
    %v9589 = vsel %vm1299, %v9584, %v9588
    %v9591 = vshrl.u32 %v8965, 16
    %v9593 = vrot.slane %v9591, 4
    %v9594 = vshll.u32 %v8965, 16
    %v9596 = vrot.slane %v9594, 5
    %v9597 = vor.u32 %v9593, %v9596
    %v9598 = vrot.slane %v9597, 4
    %v9600 = vshll.u32 %v8966, 16
    %v9602 = vrot.slane %v9600, 5
    %v9603 = vsel %vm1299, %v9598, %v9602
    %v9604 = vshrl.u32 %v8966, 16
    %v9606 = vrot.slane %v9604, 4
    %v9607 = vor.u32 %v9606, %v9602
    %v9608 = vrot.slane %v9607, 4
    %v9610 = vshll.u32 %v9006, 16
    %v9612 = vrot.slane %v9610, 5
    %v9613 = vsel %vm1299, %v9608, %v9612
    %v9615 = vshrl.u32 %v8967, 16
    %v9617 = vrot.slane %v9615, 4
    %v9618 = vshll.u32 %v8967, 16
    %v9620 = vrot.slane %v9618, 5
    %v9621 = vor.u32 %v9617, %v9620
    %v9622 = vrot.slane %v9621, 4
    %v9624 = vshll.u32 %v8968, 16
    %v9626 = vrot.slane %v9624, 5
    %v9627 = vsel %vm1299, %v9622, %v9626
    %v9628 = vshrl.u32 %v8968, 16
    %v9630 = vrot.slane %v9628, 4
    %v9631 = vor.u32 %v9630, %v9626
    %v9632 = vrot.slane %v9631, 4
    %v9634 = vshll.u32 %v9007, 16
    %v9636 = vrot.slane %v9634, 5
    %v9637 = vsel %vm1299, %v9632, %v9636
    %v9639 = vshrl.u32 %v8969, 16
    %v9641 = vrot.slane %v9639, 4
    %v9642 = vshll.u32 %v8969, 16
    %v9644 = vrot.slane %v9642, 5
    %v9645 = vor.u32 %v9641, %v9644
    %v9646 = vrot.slane %v9645, 4
    %v9648 = vshll.u32 %v8970, 16
    %v9650 = vrot.slane %v9648, 5
    %v9651 = vsel %vm1299, %v9646, %v9650
    %v9652 = vshrl.u32 %v8970, 16
    %v9654 = vrot.slane %v9652, 4
    %v9655 = vor.u32 %v9654, %v9650
    %v9656 = vrot.slane %v9655, 4
    %v9658 = vshll.u32 %v9008, 16
    %v9660 = vrot.slane %v9658, 5
    %v9661 = vsel %vm1299, %v9656, %v9660
    %v9663 = vshrl.u32 %v8971, 16
    %v9665 = vrot.slane %v9663, 4
    %v9666 = vshll.u32 %v8971, 16
    %v9668 = vrot.slane %v9666, 5
    %v9669 = vor.u32 %v9665, %v9668
    %v9670 = vrot.slane %v9669, 4
    %v9672 = vshll.u32 %v8972, 16
    %v9674 = vrot.slane %v9672, 5
    %v9675 = vsel %vm1299, %v9670, %v9674
    %v9676 = vshrl.u32 %v8972, 16
    %v9678 = vrot.slane %v9676, 4
    %v9679 = vor.u32 %v9678, %v9674
    %v9680 = vrot.slane %v9679, 4
    %v9682 = vshll.u32 %v9009, 16
    %v9684 = vrot.slane %v9682, 5
    %v9685 = vsel %vm1299, %v9680, %v9684
    %v9687 = vshrl.u32 %v8973, 16
    %v9689 = vrot.slane %v9687, 4
    %v9690 = vshll.u32 %v8973, 16
    %v9692 = vrot.slane %v9690, 5
    %v9693 = vor.u32 %v9689, %v9692
    %v9694 = vrot.slane %v9693, 4
    %v9696 = vshll.u32 %v8974, 16
    %v9698 = vrot.slane %v9696, 5
    %v9699 = vsel %vm1299, %v9694, %v9698
    %v9700 = vshrl.u32 %v8974, 16
    %v9702 = vrot.slane %v9700, 4
    %v9703 = vor.u32 %v9702, %v9698
    %v9704 = vrot.slane %v9703, 4
    %v9706 = vshll.u32 %v9010, 16
    %v9708 = vrot.slane %v9706, 5
    %v9709 = vsel %vm1299, %v9704, %v9708
    %v9711 = vshrl.u32 %v8975, 16
    %v9713 = vrot.slane %v9711, 4
    %v9714 = vshll.u32 %v8975, 16
    %v9716 = vrot.slane %v9714, 5
    %v9717 = vor.u32 %v9713, %v9716
    %v9718 = vrot.slane %v9717, 4
    %v9720 = vshll.u32 %v8976, 16
    %v9722 = vrot.slane %v9720, 5
    %v9723 = vsel %vm1299, %v9718, %v9722
    %v9724 = vshrl.u32 %v8976, 16
    %v9726 = vrot.slane %v9724, 4
    %v9727 = vor.u32 %v9726, %v9722
    %v9728 = vrot.slane %v9727, 4
    %v9730 = vshll.u32 %v9011, 16
    %v9732 = vrot.slane %v9730, 5
    %v9733 = vsel %vm1299, %v9728, %v9732
    %v9735 = vshrl.u32 %v8977, 16
    %v9737 = vrot.slane %v9735, 4
    %v9738 = vshll.u32 %v8977, 16
    %v9740 = vrot.slane %v9738, 5
    %v9741 = vor.u32 %v9737, %v9740
    %v9742 = vrot.slane %v9741, 4
    %v9744 = vshll.u32 %v8978, 16
    %v9746 = vrot.slane %v9744, 5
    %v9747 = vsel %vm1299, %v9742, %v9746
    %v9748 = vshrl.u32 %v8978, 16
    %v9750 = vrot.slane %v9748, 4
    %v9751 = vor.u32 %v9750, %v9746
    %v9752 = vrot.slane %v9751, 4
    %v9754 = vshll.u32 %v9012, 16
    %v9756 = vrot.slane %v9754, 5
    %v9757 = vsel %vm1299, %v9752, %v9756
    %v9759 = vshrl.u32 %v8979, 16
    %v9761 = vrot.slane %v9759, 4
    %v9762 = vshll.u32 %v8979, 16
    %v9764 = vrot.slane %v9762, 5
    %v9765 = vor.u32 %v9761, %v9764
    %v9766 = vrot.slane %v9765, 4
    %v9768 = vshll.u32 %v8980, 16
    %v9770 = vrot.slane %v9768, 5
    %v9771 = vsel %vm1299, %v9766, %v9770
    %v9772 = vshrl.u32 %v8980, 16
    %v9774 = vrot.slane %v9772, 4
    %v9775 = vor.u32 %v9774, %v9770
    %v9776 = vrot.slane %v9775, 4
    %v9778 = vshll.u32 %v9013, 16
    %v9780 = vrot.slane %v9778, 5
    %v9781 = vsel %vm1299, %v9776, %v9780
    %v9783 = vunpack.c.l.b16 %v8981
    %v9784 = vpack.c.b16 %v9783, %v9783
    %9785 = vrot.lane.b32.xlu0 %v9784, 120
    %v9786 = vpop.permute.xlu0 %9785
    %v9787 = vunpack.c.l.b16 %v9027
    %v9788 = vunpack.c.l.b16 %v9037
    %v9789 = vunpack.c.l.b16 %v9051
    %v9790 = vunpack.c.l.b16 %v9061
    %v9791 = vunpack.c.l.b16 %v9075
    %v9792 = vunpack.c.l.b16 %v9085
    %v9793 = vunpack.c.l.b16 %v9099
    %v9794 = vunpack.c.l.b16 %v9109
    %v9795 = vunpack.c.l.b16 %v9123
    %v9796 = vunpack.c.l.b16 %v9133
    %v9797 = vunpack.c.l.b16 %v9147
    %v9798 = vunpack.c.l.b16 %v9157
    %v9799 = vunpack.c.l.b16 %v9171
    %v9800 = vunpack.c.l.b16 %v9181
    %v9801 = vunpack.c.l.b16 %v9195
    %v9802 = vunpack.c.l.b16 %v9205
    %v9803 = vunpack.c.l.b16 %v9219
    %v9804 = vunpack.c.l.b16 %v9229
    %v9805 = vunpack.c.l.b16 %v9243
    %v9806 = vunpack.c.l.b16 %v9253
    %v9807 = vunpack.c.l.b16 %v9267
    %v9808 = vunpack.c.l.b16 %v9277
    %v9809 = vunpack.c.l.b16 %v9291
    %v9810 = vunpack.c.l.b16 %v9301
    %v9811 = vunpack.c.l.b16 %v9315
    %v9812 = vunpack.c.l.b16 %v9325
    %v9813 = vunpack.c.l.b16 %v9339
    %v9814 = vunpack.c.l.b16 %v9349
    %v9815 = vunpack.c.l.b16 %v9363
    %v9816 = vunpack.c.l.b16 %v9373
    %v9817 = vunpack.c.l.b16 %v9387
    %v9818 = vunpack.c.l.b16 %v9397
    %v9819 = vunpack.c.l.b16 %v9411
    %v9820 = vunpack.c.l.b16 %v9421
    %v9821 = vunpack.c.l.b16 %v9435
    %v9822 = vunpack.c.l.b16 %v9445
    %v9823 = vunpack.c.l.b16 %v9459
    %v9824 = vunpack.c.l.b16 %v9469
    %v9825 = vunpack.c.l.b16 %v9483
    %v9826 = vunpack.c.l.b16 %v9493
    %v9827 = vunpack.c.l.b16 %v9507
    %v9828 = vunpack.c.l.b16 %v9517
    %v9829 = vunpack.c.l.b16 %v9531
    %v9830 = vunpack.c.l.b16 %v9541
    %v9831 = vunpack.c.l.b16 %v9555
    %v9832 = vunpack.c.l.b16 %v9565
    %v9833 = vunpack.c.l.b16 %v9579
    %v9834 = vunpack.c.l.b16 %v9589
    %v9835 = vunpack.c.l.b16 %v9603
    %v9836 = vunpack.c.l.b16 %v9613
    %v9837 = vunpack.c.l.b16 %v9627
    %v9838 = vunpack.c.l.b16 %v9637
    %v9839 = vunpack.c.l.b16 %v9651
    %v9840 = vunpack.c.l.b16 %v9661
    %v9841 = vunpack.c.l.b16 %v9675
    %v9842 = vunpack.c.l.b16 %v9685
    %v9843 = vunpack.c.l.b16 %v9699
    %v9844 = vunpack.c.l.b16 %v9709
    %v9845 = vunpack.c.l.b16 %v9723
    %v9846 = vunpack.c.l.b16 %v9733
    %v9847 = vunpack.c.l.b16 %v9747
    %v9848 = vunpack.c.l.b16 %v9757
    %v9849 = vunpack.c.l.b16 %v9771
    %v9850 = vunpack.c.l.b16 %v9781
    %v9851 = vpack.c.b16 %v9788, %v9787
    %v9852 = vpack.c.b16 %v9790, %v9789
    %v9853 = vpack.c.b16 %v9792, %v9791
    %v9854 = vpack.c.b16 %v9794, %v9793
    %v9855 = vpack.c.b16 %v9796, %v9795
    %v9856 = vpack.c.b16 %v9798, %v9797
    %v9857 = vpack.c.b16 %v9800, %v9799
    %v9858 = vpack.c.b16 %v9802, %v9801
    %v9859 = vpack.c.b16 %v9804, %v9803
    %v9860 = vpack.c.b16 %v9806, %v9805
    %v9861 = vpack.c.b16 %v9808, %v9807
    %v9862 = vpack.c.b16 %v9810, %v9809
    %v9863 = vpack.c.b16 %v9812, %v9811
    %v9864 = vpack.c.b16 %v9814, %v9813
    %v9865 = vpack.c.b16 %v9816, %v9815
    %v9866 = vpack.c.b16 %v9818, %v9817
    %v9867 = vpack.c.b16 %v9820, %v9819
    %v9868 = vpack.c.b16 %v9822, %v9821
    %v9869 = vpack.c.b16 %v9824, %v9823
    %v9870 = vpack.c.b16 %v9826, %v9825
    %v9871 = vpack.c.b16 %v9828, %v9827
    %v9872 = vpack.c.b16 %v9830, %v9829
    %v9873 = vpack.c.b16 %v9832, %v9831
    %v9874 = vpack.c.b16 %v9834, %v9833
    %v9875 = vpack.c.b16 %v9836, %v9835
    %v9876 = vpack.c.b16 %v9838, %v9837
    %v9877 = vpack.c.b16 %v9840, %v9839
    %v9878 = vpack.c.b16 %v9842, %v9841
    %v9879 = vpack.c.b16 %v9844, %v9843
    %v9880 = vpack.c.b16 %v9846, %v9845
    %v9881 = vpack.c.b16 %v9848, %v9847
    %v9882 = vpack.c.b16 %v9850, %v9849
    %vm9883 = vcmask 64512
    %v9885 = vsel %vm9883, %v9786, 0
    %v9888 = vsel %vm9883, %v9851, 0
    %v9891 = vsel %vm9883, %v9852, 0
    %v9894 = vsel %vm9883, %v9853, 0
    %v9897 = vsel %vm9883, %v9854, 0
    %v9900 = vsel %vm9883, %v9855, 0
    %v9903 = vsel %vm9883, %v9856, 0
    %v9906 = vsel %vm9883, %v9857, 0
    %v9909 = vsel %vm9883, %v9858, 0
    %v9912 = vsel %vm9883, %v9859, 0
    %v9915 = vsel %vm9883, %v9860, 0
    %v9918 = vsel %vm9883, %v9861, 0
    %v9921 = vsel %vm9883, %v9862, 0
    %v9924 = vsel %vm9883, %v9863, 0
    %v9927 = vsel %vm9883, %v9864, 0
    %v9930 = vsel %vm9883, %v9865, 0
    %v9933 = vsel %vm9883, %v9866, 0
    %v9936 = vsel %vm9883, %v9867, 0
    %v9939 = vsel %vm9883, %v9868, 0
    %v9942 = vsel %vm9883, %v9869, 0
    %v9945 = vsel %vm9883, %v9870, 0
    %v9948 = vsel %vm9883, %v9871, 0
    %v9951 = vsel %vm9883, %v9872, 0
    %v9954 = vsel %vm9883, %v9873, 0
    %v9957 = vsel %vm9883, %v9874, 0
    %v9960 = vsel %vm9883, %v9875, 0
    %v9963 = vsel %vm9883, %v9876, 0
    %v9966 = vsel %vm9883, %v9877, 0
    %v9969 = vsel %vm9883, %v9878, 0
    %v9972 = vsel %vm9883, %v9879, 0
    %v9975 = vsel %vm9883, %v9880, 0
    %v9978 = vsel %vm9883, %v9881, 0
    %v9981 = vsel %vm9883, %v9882, 0
    %9983 = vmatprep.subr.bf16.mxu0 0
    %9984 = vmatpush1.bf16.xpose.msra.mxu0 %v9888
    %9985 = vmatprep.subr.bf16.mxu0 0
    %9986 = vmatpush1.bf16.xpose.msra.mxu0 %v9891
    %9987 = vmatprep.subr.bf16.mxu0 0
    %9988 = vmatpush1.bf16.xpose.msra.mxu0 %v9894
    %9989 = vmatprep.subr.bf16.mxu0 0
    %9990 = vmatpush1.bf16.xpose.msra.mxu0 %v9897
    %9991 = vmatprep.subr.bf16.mxu0 0
    %9992 = vmatpush1.bf16.xpose.msra.mxu0 %v9900
    %9993 = vmatprep.subr.bf16.mxu0 0
    %9994 = vmatpush1.bf16.xpose.msra.mxu0 %v9903
    %9995 = vmatprep.subr.bf16.mxu0 0
    %9996 = vmatpush1.bf16.xpose.msra.mxu0 %v9906
    %9997 = vmatprep.subr.bf16.mxu0 0
    %9998 = vmatpush1.bf16.xpose.msra.mxu0 %v9909
    %9999 = vmatprep.subr.bf16.mxu0 0
    %10000 = vmatpush1.bf16.xpose.msra.mxu0 %v9912
    %10001 = vmatprep.subr.bf16.mxu0 0
    %10002 = vmatpush1.bf16.xpose.msra.mxu0 %v9915
    %10003 = vmatprep.subr.bf16.mxu0 0
    %10004 = vmatpush1.bf16.xpose.msra.mxu0 %v9918
    %10005 = vmatprep.subr.bf16.mxu0 0
    %10006 = vmatpush1.bf16.xpose.msra.mxu0 %v9921
    %10007 = vmatprep.subr.bf16.mxu0 0
    %10008 = vmatpush1.bf16.xpose.msra.mxu0 %v9924
    %10009 = vmatprep.subr.bf16.mxu0 0
    %10010 = vmatpush1.bf16.xpose.msra.mxu0 %v9927
    %10011 = vmatprep.subr.bf16.mxu0 0
    %10012 = vmatpush1.bf16.xpose.msra.mxu0 %v9930
    %10013 = vmatprep.subr.bf16.mxu0 0
    %10014 = vmatpush1.bf16.xpose.msra.mxu0 %v9933
    %10015 = vmatprep.mubr.bf16.mxu0 0
    %10016 = vmatmul.mubr.bf16.gmra.mrb[0].mxu0 %v9885
    %v10017 = vpop.f32.mrb[0].mxu0
    %v10018 = vadd.f32 0.0, %v10017
    %v10019 = vpop.f32.mrb[0].mxu0
    %v10020 = vadd.f32 0.0, %v10019
    %v10021 = vpop.f32.mrb[0].mxu0
    %v10022 = vpop.f32.mrb[0].mxu0
    %10023 = vdwg.mxu0
    %10024 = vmatprep.subr.bf16.mxu0 0
    %10025 = vmatpush1.bf16.xpose.msra.mxu0 %v9936
    %10026 = vmatprep.subr.bf16.mxu0 0
    %10027 = vmatpush1.bf16.xpose.msra.mxu0 %v9939
    %10028 = vmatprep.subr.bf16.mxu0 0
    %10029 = vmatpush1.bf16.xpose.msra.mxu0 %v9942
    %10030 = vmatprep.subr.bf16.mxu0 0
    %10031 = vmatpush1.bf16.xpose.msra.mxu0 %v9945
    %10032 = vmatprep.subr.bf16.mxu0 0
    %10033 = vmatpush1.bf16.xpose.msra.mxu0 %v9948
    %10034 = vmatprep.subr.bf16.mxu0 0
    %10035 = vmatpush1.bf16.xpose.msra.mxu0 %v9951
    %10036 = vmatprep.subr.bf16.mxu0 0
    %10037 = vmatpush1.bf16.xpose.msra.mxu0 %v9954
    %10038 = vmatprep.subr.bf16.mxu0 0
    %10039 = vmatpush1.bf16.xpose.msra.mxu0 %v9957
    %10040 = vmatprep.subr.bf16.mxu0 0
    %10041 = vmatpush1.bf16.xpose.msra.mxu0 %v9960
    %10042 = vmatprep.subr.bf16.mxu0 0
    %10043 = vmatpush1.bf16.xpose.msra.mxu0 %v9963
    %10044 = vmatprep.subr.bf16.mxu0 0
    %10045 = vmatpush1.bf16.xpose.msra.mxu0 %v9966
    %10046 = vmatprep.subr.bf16.mxu0 0
    %10047 = vmatpush1.bf16.xpose.msra.mxu0 %v9969
    %10048 = vmatprep.subr.bf16.mxu0 0
    %10049 = vmatpush1.bf16.xpose.msra.mxu0 %v9972
    %10050 = vmatprep.subr.bf16.mxu0 0
    %10051 = vmatpush1.bf16.xpose.msra.mxu0 %v9975
    %10052 = vmatprep.subr.bf16.mxu0 0
    %10053 = vmatpush1.bf16.xpose.msra.mxu0 %v9978
    %10054 = vmatprep.subr.bf16.mxu0 0
    %10055 = vmatpush1.bf16.xpose.msra.mxu0 %v9981
    %10056 = vmatprep.mubr.bf16.mxu0 0
    %10057 = vmatmul.mubr.bf16.gmra.mrb[0].mxu0 %v9885
    %v10058 = vpop.f32.mrb[0].mxu0
    %v10059 = vadd.f32 0.0, %v10058
    %v10060 = vpop.f32.mrb[0].mxu0
    %v10061 = vadd.f32 0.0, %v10060
    %v10062 = vpop.f32.mrb[0].mxu0
    %v10063 = vpop.f32.mrb[0].mxu0
    %10064 = vdwg.mxu0
    %v10129 = vunpack.c.l.b16 %v8917
    %v10130 = vunpack.c.l.b16 %v8918
    %v10131 = vunpack.c.l.b16 %v8919
    %v10132 = vunpack.c.l.b16 %v8920
    %v10133 = vunpack.c.l.b16 %v8921
    %v10134 = vunpack.c.l.b16 %v8922
    %v10135 = vunpack.c.l.b16 %v8923
    %v10136 = vunpack.c.l.b16 %v8924
    %v10137 = vunpack.c.l.b16 %v8925
    %v10138 = vunpack.c.l.b16 %v8926
    %v10139 = vunpack.c.l.b16 %v8927
    %v10140 = vunpack.c.l.b16 %v8928
    %v10141 = vunpack.c.l.b16 %v8929
    %v10142 = vunpack.c.l.b16 %v8930
    %v10143 = vunpack.c.l.b16 %v8931
    %v10144 = vunpack.c.l.b16 %v8932
    %v10145 = vunpack.c.l.b16 %v8933
    %v10146 = vunpack.c.l.b16 %v8934
    %v10147 = vunpack.c.l.b16 %v8935
    %v10148 = vunpack.c.l.b16 %v8936
    %v10149 = vunpack.c.l.b16 %v8937
    %v10150 = vunpack.c.l.b16 %v8938
    %v10151 = vunpack.c.l.b16 %v8939
    %v10152 = vunpack.c.l.b16 %v8940
    %v10153 = vunpack.c.l.b16 %v8941
    %v10154 = vunpack.c.l.b16 %v8942
    %v10155 = vunpack.c.l.b16 %v8943
    %v10156 = vunpack.c.l.b16 %v8944
    %v10157 = vunpack.c.l.b16 %v8945
    %v10158 = vunpack.c.l.b16 %v8946
    %v10159 = vunpack.c.l.b16 %v8947
    %v10160 = vunpack.c.l.b16 %v8948
    %v10161 = vunpack.c.l.b16 %v8949
    %v10162 = vunpack.c.l.b16 %v8950
    %v10163 = vunpack.c.l.b16 %v8951
    %v10164 = vunpack.c.l.b16 %v8952
    %v10165 = vunpack.c.l.b16 %v8953
    %v10166 = vunpack.c.l.b16 %v8954
    %v10167 = vunpack.c.l.b16 %v8955
    %v10168 = vunpack.c.l.b16 %v8956
    %v10169 = vunpack.c.l.b16 %v8957
    %v10170 = vunpack.c.l.b16 %v8958
    %v10171 = vunpack.c.l.b16 %v8959
    %v10172 = vunpack.c.l.b16 %v8960
    %v10173 = vunpack.c.l.b16 %v8961
    %v10174 = vunpack.c.l.b16 %v8962
    %v10175 = vunpack.c.l.b16 %v8963
    %v10176 = vunpack.c.l.b16 %v8964
    %v10177 = vunpack.c.l.b16 %v8965
    %v10178 = vunpack.c.l.b16 %v8966
    %v10179 = vunpack.c.l.b16 %v8967
    %v10180 = vunpack.c.l.b16 %v8968
    %v10181 = vunpack.c.l.b16 %v8969
    %v10182 = vunpack.c.l.b16 %v8970
    %v10183 = vunpack.c.l.b16 %v8971
    %v10184 = vunpack.c.l.b16 %v8972
    %v10185 = vunpack.c.l.b16 %v8973
    %v10186 = vunpack.c.l.b16 %v8974
    %v10187 = vunpack.c.l.b16 %v8975
    %v10188 = vunpack.c.l.b16 %v8976
    %v10189 = vunpack.c.l.b16 %v8977
    %v10190 = vunpack.c.l.b16 %v8978
    %v10191 = vunpack.c.l.b16 %v8979
    %v10192 = vunpack.c.l.b16 %v8980
    %v10193 = vpack.c.b16 %v10130, %v10129
    %v10194 = vpack.c.b16 %v10132, %v10131
    %v10195 = vpack.c.b16 %v10134, %v10133
    %v10196 = vpack.c.b16 %v10136, %v10135
    %v10197 = vpack.c.b16 %v10138, %v10137
    %v10198 = vpack.c.b16 %v10140, %v10139
    %v10199 = vpack.c.b16 %v10142, %v10141
    %v10200 = vpack.c.b16 %v10144, %v10143
    %v10201 = vpack.c.b16 %v10146, %v10145
    %v10202 = vpack.c.b16 %v10148, %v10147
    %v10203 = vpack.c.b16 %v10150, %v10149
    %v10204 = vpack.c.b16 %v10152, %v10151
    %v10205 = vpack.c.b16 %v10154, %v10153
    %v10206 = vpack.c.b16 %v10156, %v10155
    %v10207 = vpack.c.b16 %v10158, %v10157
    %v10208 = vpack.c.b16 %v10160, %v10159
    %v10209 = vpack.c.b16 %v10162, %v10161
    %v10210 = vpack.c.b16 %v10164, %v10163
    %v10211 = vpack.c.b16 %v10166, %v10165
    %v10212 = vpack.c.b16 %v10168, %v10167
    %v10213 = vpack.c.b16 %v10170, %v10169
    %v10214 = vpack.c.b16 %v10172, %v10171
    %v10215 = vpack.c.b16 %v10174, %v10173
    %v10216 = vpack.c.b16 %v10176, %v10175
    %v10217 = vpack.c.b16 %v10178, %v10177
    %v10218 = vpack.c.b16 %v10180, %v10179
    %v10219 = vpack.c.b16 %v10182, %v10181
    %v10220 = vpack.c.b16 %v10184, %v10183
    %v10221 = vpack.c.b16 %v10186, %v10185
    %v10222 = vpack.c.b16 %v10188, %v10187
    %v10223 = vpack.c.b16 %v10190, %v10189
    %v10224 = vpack.c.b16 %v10192, %v10191
    %v10226 = vsel %vm9883, %v8981, 0
    %v10229 = vsel %vm9883, %v10193, 0
    %v10232 = vsel %vm9883, %v10194, 0
    %v10235 = vsel %vm9883, %v10195, 0
    %v10238 = vsel %vm9883, %v10196, 0
    %v10241 = vsel %vm9883, %v10197, 0
    %v10244 = vsel %vm9883, %v10198, 0
    %v10247 = vsel %vm9883, %v10199, 0
    %v10250 = vsel %vm9883, %v10200, 0
    %v10253 = vsel %vm9883, %v10201, 0
    %v10256 = vsel %vm9883, %v10202, 0
    %v10259 = vsel %vm9883, %v10203, 0
    %v10262 = vsel %vm9883, %v10204, 0
    %v10265 = vsel %vm9883, %v10205, 0
    %v10268 = vsel %vm9883, %v10206, 0
    %v10271 = vsel %vm9883, %v10207, 0
    %v10274 = vsel %vm9883, %v10208, 0
    %v10277 = vsel %vm9883, %v10209, 0
    %v10280 = vsel %vm9883, %v10210, 0
    %v10283 = vsel %vm9883, %v10211, 0
    %v10286 = vsel %vm9883, %v10212, 0
    %v10289 = vsel %vm9883, %v10213, 0
    %v10292 = vsel %vm9883, %v10214, 0
    %v10295 = vsel %vm9883, %v10215, 0
    %v10298 = vsel %vm9883, %v10216, 0
    %v10301 = vsel %vm9883, %v10217, 0
    %v10304 = vsel %vm9883, %v10218, 0
    %v10307 = vsel %vm9883, %v10219, 0
    %v10310 = vsel %vm9883, %v10220, 0
    %v10313 = vsel %vm9883, %v10221, 0
    %v10316 = vsel %vm9883, %v10222, 0
    %v10319 = vsel %vm9883, %v10223, 0
    %v10322 = vsel %vm9883, %v10224, 0
    %10324 = vmatprep.subr.bf16.mxu0 0
    %10325 = vmatpush1.bf16.xpose.msra.mxu0 %v10229
    %10326 = vmatprep.subr.bf16.mxu0 0
    %10327 = vmatpush1.bf16.xpose.msra.mxu0 %v10232
    %10328 = vmatprep.subr.bf16.mxu0 0
    %10329 = vmatpush1.bf16.xpose.msra.mxu0 %v10235
    %10330 = vmatprep.subr.bf16.mxu0 0
    %10331 = vmatpush1.bf16.xpose.msra.mxu0 %v10238
    %10332 = vmatprep.subr.bf16.mxu0 0
    %10333 = vmatpush1.bf16.xpose.msra.mxu0 %v10241
    %10334 = vmatprep.subr.bf16.mxu0 0
    %10335 = vmatpush1.bf16.xpose.msra.mxu0 %v10244
    %10336 = vmatprep.subr.bf16.mxu0 0
    %10337 = vmatpush1.bf16.xpose.msra.mxu0 %v10247
    %10338 = vmatprep.subr.bf16.mxu0 0
    %10339 = vmatpush1.bf16.xpose.msra.mxu0 %v10250
    %10340 = vmatprep.subr.bf16.mxu0 0
    %10341 = vmatpush1.bf16.xpose.msra.mxu0 %v10253
    %10342 = vmatprep.subr.bf16.mxu0 0
    %10343 = vmatpush1.bf16.xpose.msra.mxu0 %v10256
    %10344 = vmatprep.subr.bf16.mxu0 0
    %10345 = vmatpush1.bf16.xpose.msra.mxu0 %v10259
    %10346 = vmatprep.subr.bf16.mxu0 0
    %10347 = vmatpush1.bf16.xpose.msra.mxu0 %v10262
    %10348 = vmatprep.subr.bf16.mxu0 0
    %10349 = vmatpush1.bf16.xpose.msra.mxu0 %v10265
    %10350 = vmatprep.subr.bf16.mxu0 0
    %10351 = vmatpush1.bf16.xpose.msra.mxu0 %v10268
    %10352 = vmatprep.subr.bf16.mxu0 0
    %10353 = vmatpush1.bf16.xpose.msra.mxu0 %v10271
    %10354 = vmatprep.subr.bf16.mxu0 0
    %10355 = vmatpush1.bf16.xpose.msra.mxu0 %v10274
    %10356 = vmatprep.mubr.bf16.mxu0 0
    %10357 = vmatmul.mubr.bf16.gmra.mrb[0].mxu0 %v10226
    %v10358 = vpop.f32.mrb[0].mxu0
    %v10359 = vadd.f32 %v10018, %v10358
    %v10360 = vpop.f32.mrb[0].mxu0
    %v10361 = vadd.f32 %v10020, %v10360
    %v10362 = vpop.f32.mrb[0].mxu0
    %v10363 = vpop.f32.mrb[0].mxu0
    %10364 = vdwg.mxu0
    %10365 = vmatprep.subr.bf16.mxu0 0
    %10366 = vmatpush1.bf16.xpose.msra.mxu0 %v10277
    %10367 = vmatprep.subr.bf16.mxu0 0
    %10368 = vmatpush1.bf16.xpose.msra.mxu0 %v10280
    %10369 = vmatprep.subr.bf16.mxu0 0
    %10370 = vmatpush1.bf16.xpose.msra.mxu0 %v10283
    %10371 = vmatprep.subr.bf16.mxu0 0
    %10372 = vmatpush1.bf16.xpose.msra.mxu0 %v10286
    %10373 = vmatprep.subr.bf16.mxu0 0
    %10374 = vmatpush1.bf16.xpose.msra.mxu0 %v10289
    %10375 = vmatprep.subr.bf16.mxu0 0
    %10376 = vmatpush1.bf16.xpose.msra.mxu0 %v10292
    %10377 = vmatprep.subr.bf16.mxu0 0
    %10378 = vmatpush1.bf16.xpose.msra.mxu0 %v10295
    %10379 = vmatprep.subr.bf16.mxu0 0
    %10380 = vmatpush1.bf16.xpose.msra.mxu0 %v10298
    %10381 = vmatprep.subr.bf16.mxu0 0
    %10382 = vmatpush1.bf16.xpose.msra.mxu0 %v10301
    %10383 = vmatprep.subr.bf16.mxu0 0
    %10384 = vmatpush1.bf16.xpose.msra.mxu0 %v10304
    %10385 = vmatprep.subr.bf16.mxu0 0
    %10386 = vmatpush1.bf16.xpose.msra.mxu0 %v10307
    %10387 = vmatprep.subr.bf16.mxu0 0
    %10388 = vmatpush1.bf16.xpose.msra.mxu0 %v10310
    %10389 = vmatprep.subr.bf16.mxu0 0
    %10390 = vmatpush1.bf16.xpose.msra.mxu0 %v10313
    %10391 = vmatprep.subr.bf16.mxu0 0
    %10392 = vmatpush1.bf16.xpose.msra.mxu0 %v10316
    %10393 = vmatprep.subr.bf16.mxu0 0
    %10394 = vmatpush1.bf16.xpose.msra.mxu0 %v10319
    %10395 = vmatprep.subr.bf16.mxu0 0
    %10396 = vmatpush1.bf16.xpose.msra.mxu0 %v10322
    %10397 = vmatprep.mubr.bf16.mxu0 0
    %10398 = vmatmul.mubr.bf16.gmra.mrb[0].mxu0 %v10226
    %v10399 = vpop.f32.mrb[0].mxu0
    %v10400 = vadd.f32 %v10059, %v10399
    %v10401 = vpop.f32.mrb[0].mxu0
    %v10402 = vadd.f32 %v10061, %v10401
    %v10403 = vpop.f32.mrb[0].mxu0
    %v10404 = vpop.f32.mrb[0].mxu0
    %10405 = vdwg.mxu0
    %v10406 = vld [vmem:[#allocation2] sm:$0xe]
    %v10407 = vld [vmem:[#allocation2 + $0xc] sm:$0xe]
    %v10408 = vld [vmem:[#allocation2 + $0x18] sm:$0xe]
    %v10409 = vld [vmem:[#allocation2 + $0x24] sm:$0xe]
    %v10410 = vld [vmem:[#allocation2 + $0x30] sm:$0xe]
    %v10411 = vld [vmem:[#allocation2 + $0x3c] sm:$0xe]
    %v10412 = vld [vmem:[#allocation2 + $0x48] sm:$0xe]
    %v10413 = vld [vmem:[#allocation2 + $0x54] sm:$0xe]
    %v10414 = vld [vmem:[#allocation2 + $0x60] sm:$0xe]
    %v10415 = vld [vmem:[#allocation2 + $0x6c] sm:$0xe]
    %v10416 = vld [vmem:[#allocation2 + $0x78] sm:$0xe]
    %v10417 = vld [vmem:[#allocation2 + $0x84] sm:$0xe]
    %v10418 = vld [vmem:[#allocation2 + $0x90] sm:$0xe]
    %v10419 = vld [vmem:[#allocation2 + $0x9c] sm:$0xe]
    %v10420 = vld [vmem:[#allocation2 + $0xa8] sm:$0xe]
    %v10421 = vld [vmem:[#allocation2 + $0xb4] sm:$0xe]
    %v10422 = vld [vmem:[#allocation2 + $0xd8] sm:$0xe]
    %v10423 = vld [vmem:[#allocation2 + $0xe4] sm:$0xe]
    %v10424 = vld [vmem:[#allocation2 + $0xf0] sm:$0xe]
    %v10425 = vld [vmem:[#allocation2 + $0xfc] sm:$0xe]
    %v10426 = vld [vmem:[#allocation2 + $0x108] sm:$0xe]
    %v10427 = vld [vmem:[#allocation2 + $0x114] sm:$0xe]
    %v10428 = vld [vmem:[#allocation2 + $0x120] sm:$0xe]
    %v10429 = vld [vmem:[#allocation2 + $0x12c] sm:$0xe]
    %v10430 = vld [vmem:[#allocation2 + $0x138] sm:$0xe]
    %v10431 = vld [vmem:[#allocation2 + $0x144] sm:$0xe]
    %v10432 = vld [vmem:[#allocation2 + $0x150] sm:$0xe]
    %v10433 = vld [vmem:[#allocation2 + $0x15c] sm:$0xe]
    %v10434 = vld [vmem:[#allocation2 + $0x168] sm:$0xe]
    %v10435 = vld [vmem:[#allocation2 + $0x174] sm:$0xe]
    %v10436 = vld [vmem:[#allocation2 + $0x180] sm:$0xe]
    %v10437 = vld [vmem:[#allocation2 + $0x18c] sm:$0xe]
    %v10502 = vrot.slane %v10406, 5
    %v10503 = vrot.slane %v10502, 4
    %v10504 = vrot.slane %v8918, 5
    %v10505 = vsel %vm2790, %v10503, %v10504
    %v10506 = vrot.slane %v10504, 4
    %v10507 = vrot.slane %v8982, 5
    %v10508 = vsel %vm2790, %v10506, %v10507
    %v10509 = vrot.slane %v10407, 5
    %v10510 = vrot.slane %v10509, 4
    %v10511 = vrot.slane %v8920, 5
    %v10512 = vsel %vm2790, %v10510, %v10511
    %v10513 = vrot.slane %v10511, 4
    %v10514 = vrot.slane %v8983, 5
    %v10515 = vsel %vm2790, %v10513, %v10514
    %v10516 = vrot.slane %v10408, 5
    %v10517 = vrot.slane %v10516, 4
    %v10518 = vrot.slane %v8922, 5
    %v10519 = vsel %vm2790, %v10517, %v10518
    %v10520 = vrot.slane %v10518, 4
    %v10521 = vrot.slane %v8984, 5
    %v10522 = vsel %vm2790, %v10520, %v10521
    %v10523 = vrot.slane %v10409, 5
    %v10524 = vrot.slane %v10523, 4
    %v10525 = vrot.slane %v8924, 5
    %v10526 = vsel %vm2790, %v10524, %v10525
    %v10527 = vrot.slane %v10525, 4
    %v10528 = vrot.slane %v8985, 5
    %v10529 = vsel %vm2790, %v10527, %v10528
    %v10530 = vrot.slane %v10410, 5
    %v10531 = vrot.slane %v10530, 4
    %v10532 = vrot.slane %v8926, 5
    %v10533 = vsel %vm2790, %v10531, %v10532
    %v10534 = vrot.slane %v10532, 4
    %v10535 = vrot.slane %v8986, 5
    %v10536 = vsel %vm2790, %v10534, %v10535
    %v10537 = vrot.slane %v10411, 5
    %v10538 = vrot.slane %v10537, 4
    %v10539 = vrot.slane %v8928, 5
    %v10540 = vsel %vm2790, %v10538, %v10539
    %v10541 = vrot.slane %v10539, 4
    %v10542 = vrot.slane %v8987, 5
    %v10543 = vsel %vm2790, %v10541, %v10542
    %v10544 = vrot.slane %v10412, 5
    %v10545 = vrot.slane %v10544, 4
    %v10546 = vrot.slane %v8930, 5
    %v10547 = vsel %vm2790, %v10545, %v10546
    %v10548 = vrot.slane %v10546, 4
    %v10549 = vrot.slane %v8988, 5
    %v10550 = vsel %vm2790, %v10548, %v10549
    %v10551 = vrot.slane %v10413, 5
    %v10552 = vrot.slane %v10551, 4
    %v10553 = vrot.slane %v8932, 5
    %v10554 = vsel %vm2790, %v10552, %v10553
    %v10555 = vrot.slane %v10553, 4
    %v10556 = vrot.slane %v8989, 5
    %v10557 = vsel %vm2790, %v10555, %v10556
    %v10558 = vrot.slane %v10414, 5
    %v10559 = vrot.slane %v10558, 4
    %v10560 = vrot.slane %v8934, 5
    %v10561 = vsel %vm2790, %v10559, %v10560
    %v10562 = vrot.slane %v10560, 4
    %v10563 = vrot.slane %v8990, 5
    %v10564 = vsel %vm2790, %v10562, %v10563
    %v10565 = vrot.slane %v10415, 5
    %v10566 = vrot.slane %v10565, 4
    %v10567 = vrot.slane %v8936, 5
    %v10568 = vsel %vm2790, %v10566, %v10567
    %v10569 = vrot.slane %v10567, 4
    %v10570 = vrot.slane %v8991, 5
    %v10571 = vsel %vm2790, %v10569, %v10570
    %v10572 = vrot.slane %v10416, 5
    %v10573 = vrot.slane %v10572, 4
    %v10574 = vrot.slane %v8938, 5
    %v10575 = vsel %vm2790, %v10573, %v10574
    %v10576 = vrot.slane %v10574, 4
    %v10577 = vrot.slane %v8992, 5
    %v10578 = vsel %vm2790, %v10576, %v10577
    %v10579 = vrot.slane %v10417, 5
    %v10580 = vrot.slane %v10579, 4
    %v10581 = vrot.slane %v8940, 5
    %v10582 = vsel %vm2790, %v10580, %v10581
    %v10583 = vrot.slane %v10581, 4
    %v10584 = vrot.slane %v8993, 5
    %v10585 = vsel %vm2790, %v10583, %v10584
    %v10586 = vrot.slane %v10418, 5
    %v10587 = vrot.slane %v10586, 4
    %v10588 = vrot.slane %v8942, 5
    %v10589 = vsel %vm2790, %v10587, %v10588
    %v10590 = vrot.slane %v10588, 4
    %v10591 = vrot.slane %v8994, 5
    %v10592 = vsel %vm2790, %v10590, %v10591
    %v10593 = vrot.slane %v10419, 5
    %v10594 = vrot.slane %v10593, 4
    %v10595 = vrot.slane %v8944, 5
    %v10596 = vsel %vm2790, %v10594, %v10595
    %v10597 = vrot.slane %v10595, 4
    %v10598 = vrot.slane %v8995, 5
    %v10599 = vsel %vm2790, %v10597, %v10598
    %v10600 = vrot.slane %v10420, 5
    %v10601 = vrot.slane %v10600, 4
    %v10602 = vrot.slane %v8946, 5
    %v10603 = vsel %vm2790, %v10601, %v10602
    %v10604 = vrot.slane %v10602, 4
    %v10605 = vrot.slane %v8996, 5
    %v10606 = vsel %vm2790, %v10604, %v10605
    %v10607 = vrot.slane %v10421, 5
    %v10608 = vrot.slane %v10607, 4
    %v10609 = vrot.slane %v8948, 5
    %v10610 = vsel %vm2790, %v10608, %v10609
    %v10611 = vrot.slane %v10609, 4
    %v10612 = vrot.slane %v8997, 5
    %v10613 = vsel %vm2790, %v10611, %v10612
    %v10614 = vrot.slane %v10422, 5
    %v10615 = vrot.slane %v10614, 4
    %v10616 = vrot.slane %v8950, 5
    %v10617 = vsel %vm2790, %v10615, %v10616
    %v10618 = vrot.slane %v10616, 4
    %v10619 = vrot.slane %v8998, 5
    %v10620 = vsel %vm2790, %v10618, %v10619
    %v10621 = vrot.slane %v10423, 5
    %v10622 = vrot.slane %v10621, 4
    %v10623 = vrot.slane %v8952, 5
    %v10624 = vsel %vm2790, %v10622, %v10623
    %v10625 = vrot.slane %v10623, 4
    %v10626 = vrot.slane %v8999, 5
    %v10627 = vsel %vm2790, %v10625, %v10626
    %v10628 = vrot.slane %v10424, 5
    %v10629 = vrot.slane %v10628, 4
    %v10630 = vrot.slane %v8954, 5
    %v10631 = vsel %vm2790, %v10629, %v10630
    %v10632 = vrot.slane %v10630, 4
    %v10633 = vrot.slane %v9000, 5
    %v10634 = vsel %vm2790, %v10632, %v10633
    %v10635 = vrot.slane %v10425, 5
    %v10636 = vrot.slane %v10635, 4
    %v10637 = vrot.slane %v8956, 5
    %v10638 = vsel %vm2790, %v10636, %v10637
    %v10639 = vrot.slane %v10637, 4
    %v10640 = vrot.slane %v9001, 5
    %v10641 = vsel %vm2790, %v10639, %v10640
    %v10642 = vrot.slane %v10426, 5
    %v10643 = vrot.slane %v10642, 4
    %v10644 = vrot.slane %v8958, 5
    %v10645 = vsel %vm2790, %v10643, %v10644
    %v10646 = vrot.slane %v10644, 4
    %v10647 = vrot.slane %v9002, 5
    %v10648 = vsel %vm2790, %v10646, %v10647
    %v10649 = vrot.slane %v10427, 5
    %v10650 = vrot.slane %v10649, 4
    %v10651 = vrot.slane %v8960, 5
    %v10652 = vsel %vm2790, %v10650, %v10651
    %v10653 = vrot.slane %v10651, 4
    %v10654 = vrot.slane %v9003, 5
    %v10655 = vsel %vm2790, %v10653, %v10654
    %v10656 = vrot.slane %v10428, 5
    %v10657 = vrot.slane %v10656, 4
    %v10658 = vrot.slane %v8962, 5
    %v10659 = vsel %vm2790, %v10657, %v10658
    %v10660 = vrot.slane %v10658, 4
    %v10661 = vrot.slane %v9004, 5
    %v10662 = vsel %vm2790, %v10660, %v10661
    %v10663 = vrot.slane %v10429, 5
    %v10664 = vrot.slane %v10663, 4
    %v10665 = vrot.slane %v8964, 5
    %v10666 = vsel %vm2790, %v10664, %v10665
    %v10667 = vrot.slane %v10665, 4
    %v10668 = vrot.slane %v9005, 5
    %v10669 = vsel %vm2790, %v10667, %v10668
    %v10670 = vrot.slane %v10430, 5
    %v10671 = vrot.slane %v10670, 4
    %v10672 = vrot.slane %v8966, 5
    %v10673 = vsel %vm2790, %v10671, %v10672
    %v10674 = vrot.slane %v10672, 4
    %v10675 = vrot.slane %v9006, 5
    %v10676 = vsel %vm2790, %v10674, %v10675
    %v10677 = vrot.slane %v10431, 5
    %v10678 = vrot.slane %v10677, 4
    %v10679 = vrot.slane %v8968, 5
    %v10680 = vsel %vm2790, %v10678, %v10679
    %v10681 = vrot.slane %v10679, 4
    %v10682 = vrot.slane %v9007, 5
    %v10683 = vsel %vm2790, %v10681, %v10682
    %v10684 = vrot.slane %v10432, 5
    %v10685 = vrot.slane %v10684, 4
    %v10686 = vrot.slane %v8970, 5
    %v10687 = vsel %vm2790, %v10685, %v10686
    %v10688 = vrot.slane %v10686, 4
    %v10689 = vrot.slane %v9008, 5
    %v10690 = vsel %vm2790, %v10688, %v10689
    %v10691 = vrot.slane %v10433, 5
    %v10692 = vrot.slane %v10691, 4
    %v10693 = vrot.slane %v8972, 5
    %v10694 = vsel %vm2790, %v10692, %v10693
    %v10695 = vrot.slane %v10693, 4
    %v10696 = vrot.slane %v9009, 5
    %v10697 = vsel %vm2790, %v10695, %v10696
    %v10698 = vrot.slane %v10434, 5
    %v10699 = vrot.slane %v10698, 4
    %v10700 = vrot.slane %v8974, 5
    %v10701 = vsel %vm2790, %v10699, %v10700
    %v10702 = vrot.slane %v10700, 4
    %v10703 = vrot.slane %v9010, 5
    %v10704 = vsel %vm2790, %v10702, %v10703
    %v10705 = vrot.slane %v10435, 5
    %v10706 = vrot.slane %v10705, 4
    %v10707 = vrot.slane %v8976, 5
    %v10708 = vsel %vm2790, %v10706, %v10707
    %v10709 = vrot.slane %v10707, 4
    %v10710 = vrot.slane %v9011, 5
    %v10711 = vsel %vm2790, %v10709, %v10710
    %v10712 = vrot.slane %v10436, 5
    %v10713 = vrot.slane %v10712, 4
    %v10714 = vrot.slane %v8978, 5
    %v10715 = vsel %vm2790, %v10713, %v10714
    %v10716 = vrot.slane %v10714, 4
    %v10717 = vrot.slane %v9012, 5
    %v10718 = vsel %vm2790, %v10716, %v10717
    %v10719 = vrot.slane %v10437, 5
    %v10720 = vrot.slane %v10719, 4
    %v10721 = vrot.slane %v8980, 5
    %v10722 = vsel %vm2790, %v10720, %v10721
    %v10723 = vrot.slane %v10721, 4
    %v10724 = vrot.slane %v9013, 5
    %v10725 = vsel %vm2790, %v10723, %v10724
    %10726 = vrot.lane.b32.xlu0 %v9784, 112
    %v10727 = vpop.permute.xlu0 %10726
    %v10728 = vunpack.c.l.b16 %v10505
    %v10729 = vunpack.c.l.b16 %v10508
    %v10730 = vunpack.c.l.b16 %v10512
    %v10731 = vunpack.c.l.b16 %v10515
    %v10732 = vunpack.c.l.b16 %v10519
    %v10733 = vunpack.c.l.b16 %v10522
    %v10734 = vunpack.c.l.b16 %v10526
    %v10735 = vunpack.c.l.b16 %v10529
    %v10736 = vunpack.c.l.b16 %v10533
    %v10737 = vunpack.c.l.b16 %v10536
    %v10738 = vunpack.c.l.b16 %v10540
    %v10739 = vunpack.c.l.b16 %v10543
    %v10740 = vunpack.c.l.b16 %v10547
    %v10741 = vunpack.c.l.b16 %v10550
    %v10742 = vunpack.c.l.b16 %v10554
    %v10743 = vunpack.c.l.b16 %v10557
    %v10744 = vunpack.c.l.b16 %v10561
    %v10745 = vunpack.c.l.b16 %v10564
    %v10746 = vunpack.c.l.b16 %v10568
    %v10747 = vunpack.c.l.b16 %v10571
    %v10748 = vunpack.c.l.b16 %v10575
    %v10749 = vunpack.c.l.b16 %v10578
    %v10750 = vunpack.c.l.b16 %v10582
    %v10751 = vunpack.c.l.b16 %v10585
    %v10752 = vunpack.c.l.b16 %v10589
    %v10753 = vunpack.c.l.b16 %v10592
    %v10754 = vunpack.c.l.b16 %v10596
    %v10755 = vunpack.c.l.b16 %v10599
    %v10756 = vunpack.c.l.b16 %v10603
    %v10757 = vunpack.c.l.b16 %v10606
    %v10758 = vunpack.c.l.b16 %v10610
    %v10759 = vunpack.c.l.b16 %v10613
    %v10760 = vunpack.c.l.b16 %v10617
    %v10761 = vunpack.c.l.b16 %v10620
    %v10762 = vunpack.c.l.b16 %v10624
    %v10763 = vunpack.c.l.b16 %v10627
    %v10764 = vunpack.c.l.b16 %v10631
    %v10765 = vunpack.c.l.b16 %v10634
    %v10766 = vunpack.c.l.b16 %v10638
    %v10767 = vunpack.c.l.b16 %v10641
    %v10768 = vunpack.c.l.b16 %v10645
    %v10769 = vunpack.c.l.b16 %v10648
    %v10770 = vunpack.c.l.b16 %v10652
    %v10771 = vunpack.c.l.b16 %v10655
    %v10772 = vunpack.c.l.b16 %v10659
    %v10773 = vunpack.c.l.b16 %v10662
    %v10774 = vunpack.c.l.b16 %v10666
    %v10775 = vunpack.c.l.b16 %v10669
    %v10776 = vunpack.c.l.b16 %v10673
    %v10777 = vunpack.c.l.b16 %v10676
    %v10778 = vunpack.c.l.b16 %v10680
    %v10779 = vunpack.c.l.b16 %v10683
    %v10780 = vunpack.c.l.b16 %v10687
    %v10781 = vunpack.c.l.b16 %v10690
    %v10782 = vunpack.c.l.b16 %v10694
    %v10783 = vunpack.c.l.b16 %v10697
    %v10784 = vunpack.c.l.b16 %v10701
    %v10785 = vunpack.c.l.b16 %v10704
    %v10786 = vunpack.c.l.b16 %v10708
    %v10787 = vunpack.c.l.b16 %v10711
    %v10788 = vunpack.c.l.b16 %v10715
    %v10789 = vunpack.c.l.b16 %v10718
    %v10790 = vunpack.c.l.b16 %v10722
    %v10791 = vunpack.c.l.b16 %v10725
    %v10792 = vpack.c.b16 %v10729, %v10728
    %v10793 = vpack.c.b16 %v10731, %v10730
    %v10794 = vpack.c.b16 %v10733, %v10732
    %v10795 = vpack.c.b16 %v10735, %v10734
    %v10796 = vpack.c.b16 %v10737, %v10736
    %v10797 = vpack.c.b16 %v10739, %v10738
    %v10798 = vpack.c.b16 %v10741, %v10740
    %v10799 = vpack.c.b16 %v10743, %v10742
    %v10800 = vpack.c.b16 %v10745, %v10744
    %v10801 = vpack.c.b16 %v10747, %v10746
    %v10802 = vpack.c.b16 %v10749, %v10748
    %v10803 = vpack.c.b16 %v10751, %v10750
    %v10804 = vpack.c.b16 %v10753, %v10752
    %v10805 = vpack.c.b16 %v10755, %v10754
    %v10806 = vpack.c.b16 %v10757, %v10756
    %v10807 = vpack.c.b16 %v10759, %v10758
    %v10808 = vpack.c.b16 %v10761, %v10760
    %v10809 = vpack.c.b16 %v10763, %v10762
    %v10810 = vpack.c.b16 %v10765, %v10764
    %v10811 = vpack.c.b16 %v10767, %v10766
    %v10812 = vpack.c.b16 %v10769, %v10768
    %v10813 = vpack.c.b16 %v10771, %v10770
    %v10814 = vpack.c.b16 %v10773, %v10772
    %v10815 = vpack.c.b16 %v10775, %v10774
    %v10816 = vpack.c.b16 %v10777, %v10776
    %v10817 = vpack.c.b16 %v10779, %v10778
    %v10818 = vpack.c.b16 %v10781, %v10780
    %v10819 = vpack.c.b16 %v10783, %v10782
    %v10820 = vpack.c.b16 %v10785, %v10784
    %v10821 = vpack.c.b16 %v10787, %v10786
    %v10822 = vpack.c.b16 %v10789, %v10788
    %v10823 = vpack.c.b16 %v10791, %v10790
    %v10825 = vsel %vm9883, %v10727, 0
    %v10828 = vsel %vm9883, %v10792, 0
    %v10831 = vsel %vm9883, %v10793, 0
    %v10834 = vsel %vm9883, %v10794, 0
    %v10837 = vsel %vm9883, %v10795, 0
    %v10840 = vsel %vm9883, %v10796, 0
    %v10843 = vsel %vm9883, %v10797, 0
    %v10846 = vsel %vm9883, %v10798, 0
    %v10849 = vsel %vm9883, %v10799, 0
    %v10852 = vsel %vm9883, %v10800, 0
    %v10855 = vsel %vm9883, %v10801, 0
    %v10858 = vsel %vm9883, %v10802, 0
    %v10861 = vsel %vm9883, %v10803, 0
    %v10864 = vsel %vm9883, %v10804, 0
    %v10867 = vsel %vm9883, %v10805, 0
    %v10870 = vsel %vm9883, %v10806, 0
    %v10873 = vsel %vm9883, %v10807, 0
    %v10876 = vsel %vm9883, %v10808, 0
    %v10879 = vsel %vm9883, %v10809, 0
    %v10882 = vsel %vm9883, %v10810, 0
    %v10885 = vsel %vm9883, %v10811, 0
    %v10888 = vsel %vm9883, %v10812, 0
    %v10891 = vsel %vm9883, %v10813, 0
    %v10894 = vsel %vm9883, %v10814, 0
    %v10897 = vsel %vm9883, %v10815, 0
    %v10900 = vsel %vm9883, %v10816, 0
    %v10903 = vsel %vm9883, %v10817, 0
    %v10906 = vsel %vm9883, %v10818, 0
    %v10909 = vsel %vm9883, %v10819, 0
    %v10912 = vsel %vm9883, %v10820, 0
    %v10915 = vsel %vm9883, %v10821, 0
    %v10918 = vsel %vm9883, %v10822, 0
    %v10921 = vsel %vm9883, %v10823, 0
    %10923 = vmatprep.subr.bf16.mxu0 0
    %10924 = vmatpush1.bf16.xpose.msra.mxu0 %v10828
    %10925 = vmatprep.subr.bf16.mxu0 0
    %10926 = vmatpush1.bf16.xpose.msra.mxu0 %v10831
    %10927 = vmatprep.subr.bf16.mxu0 0
    %10928 = vmatpush1.bf16.xpose.msra.mxu0 %v10834
    %10929 = vmatprep.subr.bf16.mxu0 0
    %10930 = vmatpush1.bf16.xpose.msra.mxu0 %v10837
    %10931 = vmatprep.subr.bf16.mxu0 0
    %10932 = vmatpush1.bf16.xpose.msra.mxu0 %v10840
    %10933 = vmatprep.subr.bf16.mxu0 0
    %10934 = vmatpush1.bf16.xpose.msra.mxu0 %v10843
    %10935 = vmatprep.subr.bf16.mxu0 0
    %10936 = vmatpush1.bf16.xpose.msra.mxu0 %v10846
    %10937 = vmatprep.subr.bf16.mxu0 0
    %10938 = vmatpush1.bf16.xpose.msra.mxu0 %v10849
    %10939 = vmatprep.subr.bf16.mxu0 0
    %10940 = vmatpush1.bf16.xpose.msra.mxu0 %v10852
    %10941 = vmatprep.subr.bf16.mxu0 0
    %10942 = vmatpush1.bf16.xpose.msra.mxu0 %v10855
    %10943 = vmatprep.subr.bf16.mxu0 0
    %10944 = vmatpush1.bf16.xpose.msra.mxu0 %v10858
    %10945 = vmatprep.subr.bf16.mxu0 0
    %10946 = vmatpush1.bf16.xpose.msra.mxu0 %v10861
    %10947 = vmatprep.subr.bf16.mxu0 0
    %10948 = vmatpush1.bf16.xpose.msra.mxu0 %v10864
    %10949 = vmatprep.subr.bf16.mxu0 0
    %10950 = vmatpush1.bf16.xpose.msra.mxu0 %v10867
    %10951 = vmatprep.subr.bf16.mxu0 0
    %10952 = vmatpush1.bf16.xpose.msra.mxu0 %v10870
    %10953 = vmatprep.subr.bf16.mxu0 0
    %10954 = vmatpush1.bf16.xpose.msra.mxu0 %v10873
    %10955 = vmatprep.mubr.bf16.mxu0 0
    %10956 = vmatmul.mubr.bf16.gmra.mrb[0].mxu0 %v10825
    %v10957 = vpop.f32.mrb[0].mxu0
    %v10958 = vadd.f32 0.0, %v10957
    %v10959 = vpop.f32.mrb[0].mxu0
    %v10960 = vadd.f32 0.0, %v10959
    %v10961 = vpop.f32.mrb[0].mxu0
    %v10962 = vpop.f32.mrb[0].mxu0
    %10963 = vdwg.mxu0
    %10964 = vmatprep.subr.bf16.mxu0 0
    %10965 = vmatpush1.bf16.xpose.msra.mxu0 %v10876
    %10966 = vmatprep.subr.bf16.mxu0 0
    %10967 = vmatpush1.bf16.xpose.msra.mxu0 %v10879
    %10968 = vmatprep.subr.bf16.mxu0 0
    %10969 = vmatpush1.bf16.xpose.msra.mxu0 %v10882
    %10970 = vmatprep.subr.bf16.mxu0 0
    %10971 = vmatpush1.bf16.xpose.msra.mxu0 %v10885
    %10972 = vmatprep.subr.bf16.mxu0 0
    %10973 = vmatpush1.bf16.xpose.msra.mxu0 %v10888
    %10974 = vmatprep.subr.bf16.mxu0 0
    %10975 = vmatpush1.bf16.xpose.msra.mxu0 %v10891
    %10976 = vmatprep.subr.bf16.mxu0 0
    %10977 = vmatpush1.bf16.xpose.msra.mxu0 %v10894
    %10978 = vmatprep.subr.bf16.mxu0 0
    %10979 = vmatpush1.bf16.xpose.msra.mxu0 %v10897
    %10980 = vmatprep.subr.bf16.mxu0 0
    %10981 = vmatpush1.bf16.xpose.msra.mxu0 %v10900
    %10982 = vmatprep.subr.bf16.mxu0 0
    %10983 = vmatpush1.bf16.xpose.msra.mxu0 %v10903
    %10984 = vmatprep.subr.bf16.mxu0 0
    %10985 = vmatpush1.bf16.xpose.msra.mxu0 %v10906
    %10986 = vmatprep.subr.bf16.mxu0 0
    %10987 = vmatpush1.bf16.xpose.msra.mxu0 %v10909
    %10988 = vmatprep.subr.bf16.mxu0 0
    %10989 = vmatpush1.bf16.xpose.msra.mxu0 %v10912
    %10990 = vmatprep.subr.bf16.mxu0 0
    %10991 = vmatpush1.bf16.xpose.msra.mxu0 %v10915
    %10992 = vmatprep.subr.bf16.mxu0 0
    %10993 = vmatpush1.bf16.xpose.msra.mxu0 %v10918
    %10994 = vmatprep.subr.bf16.mxu0 0
    %10995 = vmatpush1.bf16.xpose.msra.mxu0 %v10921
    %10996 = vmatprep.mubr.bf16.mxu0 0
    %10997 = vmatmul.mubr.bf16.gmra.mrb[0].mxu0 %v10825
    %v10998 = vpop.f32.mrb[0].mxu0
    %v10999 = vadd.f32 0.0, %v10998
    %v11000 = vpop.f32.mrb[0].mxu0
    %v11001 = vadd.f32 0.0, %v11000
    %v11002 = vpop.f32.mrb[0].mxu0
    %v11003 = vpop.f32.mrb[0].mxu0
    %11004 = vdwg.mxu0
    %v11005 = vadd.f32 %v10359, %v10958
    %v11006 = vadd.f32 %v10361, %v10960
    %v11007 = vadd.f32 %v10400, %v10999
    %v11008 = vadd.f32 %v10402, %v11001
    %v11009 = vld [vmem:[%s970] sm:$0xf]
    %v11010 = vld [vmem:[%s970 + $0x4] sm:$0xf]
    %v11011 = vld [vmem:[%s970 + $0xc] sm:$0xf]
    %v11012 = vld [vmem:[%s970 + $0x10] sm:$0xf]
    %v11013 = vld [vmem:[%s970 + $0x18] sm:$0xf]
    %v11014 = vld [vmem:[%s970 + $0x1c] sm:$0xf]
    %v11015 = vld [vmem:[%s970 + $0x24] sm:$0xf]
    %v11016 = vld [vmem:[%s970 + $0x28] sm:$0xf]
    %v11017 = vld [vmem:[%s970 + $0x30] sm:$0xf]
    %v11018 = vld [vmem:[%s970 + $0x34] sm:$0xf]
    %v11019 = vld [vmem:[%s970 + $0x3c] sm:$0xf]
    %v11020 = vld [vmem:[%s970 + $0x40] sm:$0xf]
    %v11021 = vld [vmem:[%s970 + $0x48] sm:$0xf]
    %v11022 = vld [vmem:[%s970 + $0x4c] sm:$0xf]
    %v11023 = vld [vmem:[%s970 + $0x54] sm:$0xf]
    %v11024 = vld [vmem:[%s970 + $0x58] sm:$0xf]
    %v11025 = vld [vmem:[%s970 + $0x60] sm:$0xf]
    %v11026 = vld [vmem:[%s970 + $0x64] sm:$0xf]
    %v11027 = vld [vmem:[%s970 + $0x6c] sm:$0xf]
    %v11028 = vld [vmem:[%s970 + $0x70] sm:$0xf]
    %v11029 = vld [vmem:[%s970 + $0x78] sm:$0xf]
    %v11030 = vld [vmem:[%s970 + $0x7c] sm:$0xf]
    %v11031 = vld [vmem:[%s970 + $0x84] sm:$0xf]
    %v11032 = vld [vmem:[%s970 + $0x88] sm:$0xf]
    %v11033 = vld [vmem:[%s970 + $0x90] sm:$0xf]
    %v11034 = vld [vmem:[%s970 + $0x94] sm:$0xf]
    %v11035 = vld [vmem:[%s970 + $0x9c] sm:$0xf]
    %v11036 = vld [vmem:[%s970 + $0xa0] sm:$0xf]
    %v11037 = vld [vmem:[%s970 + $0xa8] sm:$0xf]
    %v11038 = vld [vmem:[%s970 + $0xac] sm:$0xf]
    %v11039 = vld [vmem:[%s970 + $0xb4] sm:$0xf]
    %v11040 = vld [vmem:[%s970 + $0xb8] sm:$0xf]
    %v11041 = vld [vmem:[%s970 + $0xd8] sm:$0xf]
    %v11042 = vld [vmem:[%s970 + $0xdc] sm:$0xf]
    %v11043 = vld [vmem:[%s970 + $0xe4] sm:$0xf]
    %v11044 = vld [vmem:[%s970 + $0xe8] sm:$0xf]
    %v11045 = vld [vmem:[%s970 + $0xf0] sm:$0xf]
    %v11046 = vld [vmem:[%s970 + $0xf4] sm:$0xf]
    %v11047 = vld [vmem:[%s970 + $0xfc] sm:$0xf]
    %v11048 = vld [vmem:[%s970 + $0x100] sm:$0xf]
    %v11049 = vld [vmem:[%s970 + $0x108] sm:$0xf]
    %v11050 = vld [vmem:[%s970 + $0x10c] sm:$0xf]
    %v11051 = vld [vmem:[%s970 + $0x114] sm:$0xf]
    %v11052 = vld [vmem:[%s970 + $0x118] sm:$0xf]
    %v11053 = vld [vmem:[%s970 + $0x120] sm:$0xf]
    %v11054 = vld [vmem:[%s970 + $0x124] sm:$0xf]
    %v11055 = vld [vmem:[%s970 + $0x12c] sm:$0xf]
    %v11056 = vld [vmem:[%s970 + $0x130] sm:$0xf]
    %v11057 = vld [vmem:[%s970 + $0x138] sm:$0xf]
    %v11058 = vld [vmem:[%s970 + $0x13c] sm:$0xf]
    %v11059 = vld [vmem:[%s970 + $0x144] sm:$0xf]
    %v11060 = vld [vmem:[%s970 + $0x148] sm:$0xf]
    %v11061 = vld [vmem:[%s970 + $0x150] sm:$0xf]
    %v11062 = vld [vmem:[%s970 + $0x154] sm:$0xf]
    %v11063 = vld [vmem:[%s970 + $0x15c] sm:$0xf]
    %v11064 = vld [vmem:[%s970 + $0x160] sm:$0xf]
    %v11065 = vld [vmem:[%s970 + $0x168] sm:$0xf]
    %v11066 = vld [vmem:[%s970 + $0x16c] sm:$0xf]
    %v11067 = vld [vmem:[%s970 + $0x174] sm:$0xf]
    %v11068 = vld [vmem:[%s970 + $0x178] sm:$0xf]
    %v11069 = vld [vmem:[%s970 + $0x180] sm:$0xf]
    %v11070 = vld [vmem:[%s970 + $0x184] sm:$0xf]
    %v11071 = vld [vmem:[%s970 + $0x18c] sm:$0xf]
    %v11072 = vld [vmem:[%s970 + $0x190] sm:$0xf]
    %11073 = vrot.lane.b32.xlu0 %v9784, 104
    %v11074 = vpop.permute.xlu0 %11073
    %v11139 = vunpack.c.l.b16 %v11009
    %v11140 = vunpack.c.l.b16 %v11010
    %v11141 = vunpack.c.l.b16 %v11011
    %v11142 = vunpack.c.l.b16 %v11012
    %v11143 = vunpack.c.l.b16 %v11013
    %v11144 = vunpack.c.l.b16 %v11014
    %v11145 = vunpack.c.l.b16 %v11015
    %v11146 = vunpack.c.l.b16 %v11016
    %v11147 = vunpack.c.l.b16 %v11017
    %v11148 = vunpack.c.l.b16 %v11018
    %v11149 = vunpack.c.l.b16 %v11019
    %v11150 = vunpack.c.l.b16 %v11020
    %v11151 = vunpack.c.l.b16 %v11021
    %v11152 = vunpack.c.l.b16 %v11022
    %v11153 = vunpack.c.l.b16 %v11023
    %v11154 = vunpack.c.l.b16 %v11024
    %v11155 = vunpack.c.l.b16 %v11025
    %v11156 = vunpack.c.l.b16 %v11026
    %v11157 = vunpack.c.l.b16 %v11027
    %v11158 = vunpack.c.l.b16 %v11028
    %v11159 = vunpack.c.l.b16 %v11029
    %v11160 = vunpack.c.l.b16 %v11030
    %v11161 = vunpack.c.l.b16 %v11031
    %v11162 = vunpack.c.l.b16 %v11032
    %v11163 = vunpack.c.l.b16 %v11033
    %v11164 = vunpack.c.l.b16 %v11034
    %v11165 = vunpack.c.l.b16 %v11035
    %v11166 = vunpack.c.l.b16 %v11036
    %v11167 = vunpack.c.l.b16 %v11037
    %v11168 = vunpack.c.l.b16 %v11038
    %v11169 = vunpack.c.l.b16 %v11039
    %v11170 = vunpack.c.l.b16 %v11040
    %v11171 = vunpack.c.l.b16 %v11041
    %v11172 = vunpack.c.l.b16 %v11042
    %v11173 = vunpack.c.l.b16 %v11043
    %v11174 = vunpack.c.l.b16 %v11044
    %v11175 = vunpack.c.l.b16 %v11045
    %v11176 = vunpack.c.l.b16 %v11046
    %v11177 = vunpack.c.l.b16 %v11047
    %v11178 = vunpack.c.l.b16 %v11048
    %v11179 = vunpack.c.l.b16 %v11049
    %v11180 = vunpack.c.l.b16 %v11050
    %v11181 = vunpack.c.l.b16 %v11051
    %v11182 = vunpack.c.l.b16 %v11052
    %v11183 = vunpack.c.l.b16 %v11053
    %v11184 = vunpack.c.l.b16 %v11054
    %v11185 = vunpack.c.l.b16 %v11055
    %v11186 = vunpack.c.l.b16 %v11056
    %v11187 = vunpack.c.l.b16 %v11057
    %v11188 = vunpack.c.l.b16 %v11058
    %v11189 = vunpack.c.l.b16 %v11059
    %v11190 = vunpack.c.l.b16 %v11060
    %v11191 = vunpack.c.l.b16 %v11061
    %v11192 = vunpack.c.l.b16 %v11062
    %v11193 = vunpack.c.l.b16 %v11063
    %v11194 = vunpack.c.l.b16 %v11064
    %v11195 = vunpack.c.l.b16 %v11065
    %v11196 = vunpack.c.l.b16 %v11066
    %v11197 = vunpack.c.l.b16 %v11067
    %v11198 = vunpack.c.l.b16 %v11068
    %v11199 = vunpack.c.l.b16 %v11069
    %v11200 = vunpack.c.l.b16 %v11070
    %v11201 = vunpack.c.l.b16 %v11071
    %v11202 = vunpack.c.l.b16 %v11072
    %v11203 = vpack.c.b16 %v11140, %v11139
    %v11204 = vpack.c.b16 %v11142, %v11141
    %v11205 = vpack.c.b16 %v11144, %v11143
    %v11206 = vpack.c.b16 %v11146, %v11145
    %v11207 = vpack.c.b16 %v11148, %v11147
    %v11208 = vpack.c.b16 %v11150, %v11149
    %v11209 = vpack.c.b16 %v11152, %v11151
    %v11210 = vpack.c.b16 %v11154, %v11153
    %v11211 = vpack.c.b16 %v11156, %v11155
    %v11212 = vpack.c.b16 %v11158, %v11157
    %v11213 = vpack.c.b16 %v11160, %v11159
    %v11214 = vpack.c.b16 %v11162, %v11161
    %v11215 = vpack.c.b16 %v11164, %v11163
    %v11216 = vpack.c.b16 %v11166, %v11165
    %v11217 = vpack.c.b16 %v11168, %v11167
    %v11218 = vpack.c.b16 %v11170, %v11169
    %v11219 = vpack.c.b16 %v11172, %v11171
    %v11220 = vpack.c.b16 %v11174, %v11173
    %v11221 = vpack.c.b16 %v11176, %v11175
    %v11222 = vpack.c.b16 %v11178, %v11177
    %v11223 = vpack.c.b16 %v11180, %v11179
    %v11224 = vpack.c.b16 %v11182, %v11181
    %v11225 = vpack.c.b16 %v11184, %v11183
    %v11226 = vpack.c.b16 %v11186, %v11185
    %v11227 = vpack.c.b16 %v11188, %v11187
    %v11228 = vpack.c.b16 %v11190, %v11189
    %v11229 = vpack.c.b16 %v11192, %v11191
    %v11230 = vpack.c.b16 %v11194, %v11193
    %v11231 = vpack.c.b16 %v11196, %v11195
    %v11232 = vpack.c.b16 %v11198, %v11197
    %v11233 = vpack.c.b16 %v11200, %v11199
    %v11234 = vpack.c.b16 %v11202, %v11201
    %v11236 = vsel %vm9883, %v11074, 0
    %v11239 = vsel %vm9883, %v11203, 0
    %v11242 = vsel %vm9883, %v11204, 0
    %v11245 = vsel %vm9883, %v11205, 0
    %v11248 = vsel %vm9883, %v11206, 0
    %v11251 = vsel %vm9883, %v11207, 0
    %v11254 = vsel %vm9883, %v11208, 0
    %v11257 = vsel %vm9883, %v11209, 0
    %v11260 = vsel %vm9883, %v11210, 0
    %v11263 = vsel %vm9883, %v11211, 0
    %v11266 = vsel %vm9883, %v11212, 0
    %v11269 = vsel %vm9883, %v11213, 0
    %v11272 = vsel %vm9883, %v11214, 0
    %v11275 = vsel %vm9883, %v11215, 0
    %v11278 = vsel %vm9883, %v11216, 0
    %v11281 = vsel %vm9883, %v11217, 0
    %v11284 = vsel %vm9883, %v11218, 0
    %v11287 = vsel %vm9883, %v11219, 0
    %v11290 = vsel %vm9883, %v11220, 0
    %v11293 = vsel %vm9883, %v11221, 0
    %v11296 = vsel %vm9883, %v11222, 0
    %v11299 = vsel %vm9883, %v11223, 0
    %v11302 = vsel %vm9883, %v11224, 0
    %v11305 = vsel %vm9883, %v11225, 0
    %v11308 = vsel %vm9883, %v11226, 0
    %v11311 = vsel %vm9883, %v11227, 0
    %v11314 = vsel %vm9883, %v11228, 0
    %v11317 = vsel %vm9883, %v11229, 0
    %v11320 = vsel %vm9883, %v11230, 0
    %v11323 = vsel %vm9883, %v11231, 0
    %v11326 = vsel %vm9883, %v11232, 0
    %v11329 = vsel %vm9883, %v11233, 0
    %v11332 = vsel %vm9883, %v11234, 0
    %11334 = vmatprep.subr.bf16.mxu0 0
    %11335 = vmatpush1.bf16.xpose.msra.mxu0 %v11239
    %11336 = vmatprep.subr.bf16.mxu0 0
    %11337 = vmatpush1.bf16.xpose.msra.mxu0 %v11242
    %11338 = vmatprep.subr.bf16.mxu0 0
    %11339 = vmatpush1.bf16.xpose.msra.mxu0 %v11245
    %11340 = vmatprep.subr.bf16.mxu0 0
    %11341 = vmatpush1.bf16.xpose.msra.mxu0 %v11248
    %11342 = vmatprep.subr.bf16.mxu0 0
    %11343 = vmatpush1.bf16.xpose.msra.mxu0 %v11251
    %11344 = vmatprep.subr.bf16.mxu0 0
    %11345 = vmatpush1.bf16.xpose.msra.mxu0 %v11254
    %11346 = vmatprep.subr.bf16.mxu0 0
    %11347 = vmatpush1.bf16.xpose.msra.mxu0 %v11257
    %11348 = vmatprep.subr.bf16.mxu0 0
    %11349 = vmatpush1.bf16.xpose.msra.mxu0 %v11260
    %11350 = vmatprep.subr.bf16.mxu0 0
    %11351 = vmatpush1.bf16.xpose.msra.mxu0 %v11263
    %11352 = vmatprep.subr.bf16.mxu0 0
    %11353 = vmatpush1.bf16.xpose.msra.mxu0 %v11266
    %11354 = vmatprep.subr.bf16.mxu0 0
    %11355 = vmatpush1.bf16.xpose.msra.mxu0 %v11269
    %11356 = vmatprep.subr.bf16.mxu0 0
    %11357 = vmatpush1.bf16.xpose.msra.mxu0 %v11272
    %11358 = vmatprep.subr.bf16.mxu0 0
    %11359 = vmatpush1.bf16.xpose.msra.mxu0 %v11275
    %11360 = vmatprep.subr.bf16.mxu0 0
    %11361 = vmatpush1.bf16.xpose.msra.mxu0 %v11278
    %11362 = vmatprep.subr.bf16.mxu0 0
    %11363 = vmatpush1.bf16.xpose.msra.mxu0 %v11281
    %11364 = vmatprep.subr.bf16.mxu0 0
    %11365 = vmatpush1.bf16.xpose.msra.mxu0 %v11284
    %11366 = vmatprep.mubr.bf16.mxu0 0
    %11367 = vmatmul.mubr.bf16.gmra.mrb[0].mxu0 %v11236
    %v11368 = vpop.f32.mrb[0].mxu0
    %v11369 = vadd.f32 0.0, %v11368
    %v11370 = vpop.f32.mrb[0].mxu0
    %v11371 = vadd.f32 0.0, %v11370
    %v11372 = vpop.f32.mrb[0].mxu0
    %v11373 = vpop.f32.mrb[0].mxu0
    %11374 = vdwg.mxu0
    %11375 = vmatprep.subr.bf16.mxu0 0
    %11376 = vmatpush1.bf16.xpose.msra.mxu0 %v11287
    %11377 = vmatprep.subr.bf16.mxu0 0
    %11378 = vmatpush1.bf16.xpose.msra.mxu0 %v11290
    %11379 = vmatprep.subr.bf16.mxu0 0
    %11380 = vmatpush1.bf16.xpose.msra.mxu0 %v11293
    %11381 = vmatprep.subr.bf16.mxu0 0
    %11382 = vmatpush1.bf16.xpose.msra.mxu0 %v11296
    %11383 = vmatprep.subr.bf16.mxu0 0
    %11384 = vmatpush1.bf16.xpose.msra.mxu0 %v11299
    %11385 = vmatprep.subr.bf16.mxu0 0
    %11386 = vmatpush1.bf16.xpose.msra.mxu0 %v11302
    %11387 = vmatprep.subr.bf16.mxu0 0
    %11388 = vmatpush1.bf16.xpose.msra.mxu0 %v11305
    %11389 = vmatprep.subr.bf16.mxu0 0
    %11390 = vmatpush1.bf16.xpose.msra.mxu0 %v11308
    %11391 = vmatprep.subr.bf16.mxu0 0
    %11392 = vmatpush1.bf16.xpose.msra.mxu0 %v11311
    %11393 = vmatprep.subr.bf16.mxu0 0
    %11394 = vmatpush1.bf16.xpose.msra.mxu0 %v11314
    %11395 = vmatprep.subr.bf16.mxu0 0
    %11396 = vmatpush1.bf16.xpose.msra.mxu0 %v11317
    %11397 = vmatprep.subr.bf16.mxu0 0
    %11398 = vmatpush1.bf16.xpose.msra.mxu0 %v11320
    %11399 = vmatprep.subr.bf16.mxu0 0
    %11400 = vmatpush1.bf16.xpose.msra.mxu0 %v11323
    %11401 = vmatprep.subr.bf16.mxu0 0
    %11402 = vmatpush1.bf16.xpose.msra.mxu0 %v11326
    %11403 = vmatprep.subr.bf16.mxu0 0
    %11404 = vmatpush1.bf16.xpose.msra.mxu0 %v11329
    %11405 = vmatprep.subr.bf16.mxu0 0
    %11406 = vmatpush1.bf16.xpose.msra.mxu0 %v11332
    %11407 = vmatprep.mubr.bf16.mxu0 0
    %11408 = vmatmul.mubr.bf16.gmra.mrb[0].mxu0 %v11236
    %v11409 = vpop.f32.mrb[0].mxu0
    %v11410 = vadd.f32 0.0, %v11409
    %v11411 = vpop.f32.mrb[0].mxu0
    %v11412 = vadd.f32 0.0, %v11411
    %v11413 = vpop.f32.mrb[0].mxu0
    %v11414 = vpop.f32.mrb[0].mxu0
    %11415 = vdwg.mxu0
    %v11416 = vadd.f32 %v11005, %v11369
    %v11417 = vadd.f32 %v11006, %v11371
    %v11418 = vadd.f32 %v11007, %v11410
    %v11419 = vadd.f32 %v11008, %v11412
    %v11420 = vld [vmem:[%s970] sm:$0xf]
    %v11421 = vld [vmem:[%s970 + $0x4] sm:$0xf]
    %v11422 = vld [vmem:[%s970 + $0x8] sm:$0x1]
    %v11423 = vld [vmem:[%s970 + $0xc] sm:$0xf]
    %v11424 = vld [vmem:[%s970 + $0x10] sm:$0xf]
    %v11425 = vld [vmem:[%s970 + $0x14] sm:$0x1]
    %v11426 = vld [vmem:[%s970 + $0x18] sm:$0xf]
    %v11427 = vld [vmem:[%s970 + $0x1c] sm:$0xf]
    %v11428 = vld [vmem:[%s970 + $0x20] sm:$0x1]
    %v11429 = vld [vmem:[%s970 + $0x24] sm:$0xf]
    %v11430 = vld [vmem:[%s970 + $0x28] sm:$0xf]
    %v11431 = vld [vmem:[%s970 + $0x2c] sm:$0x1]
    %v11432 = vld [vmem:[%s970 + $0x30] sm:$0xf]
    %v11433 = vld [vmem:[%s970 + $0x34] sm:$0xf]
    %v11434 = vld [vmem:[%s970 + $0x38] sm:$0x1]
    %v11435 = vld [vmem:[%s970 + $0x3c] sm:$0xf]
    %v11436 = vld [vmem:[%s970 + $0x40] sm:$0xf]
    %v11437 = vld [vmem:[%s970 + $0x44] sm:$0x1]
    %v11438 = vld [vmem:[%s970 + $0x48] sm:$0xf]
    %v11439 = vld [vmem:[%s970 + $0x4c] sm:$0xf]
    %v11440 = vld [vmem:[%s970 + $0x50] sm:$0x1]
    %v11441 = vld [vmem:[%s970 + $0x54] sm:$0xf]
    %v11442 = vld [vmem:[%s970 + $0x58] sm:$0xf]
    %v11443 = vld [vmem:[%s970 + $0x5c] sm:$0x1]
    %v11444 = vld [vmem:[%s970 + $0x60] sm:$0xf]
    %v11445 = vld [vmem:[%s970 + $0x64] sm:$0xf]
    %v11446 = vld [vmem:[%s970 + $0x68] sm:$0x1]
    %v11447 = vld [vmem:[%s970 + $0x6c] sm:$0xf]
    %v11448 = vld [vmem:[%s970 + $0x70] sm:$0xf]
    %v11449 = vld [vmem:[%s970 + $0x74] sm:$0x1]
    %v11450 = vld [vmem:[%s970 + $0x78] sm:$0xf]
    %v11451 = vld [vmem:[%s970 + $0x7c] sm:$0xf]
    %v11452 = vld [vmem:[%s970 + $0x80] sm:$0x1]
    %v11453 = vld [vmem:[%s970 + $0x84] sm:$0xf]
    %v11454 = vld [vmem:[%s970 + $0x88] sm:$0xf]
    %v11455 = vld [vmem:[%s970 + $0x8c] sm:$0x1]
    %v11456 = vld [vmem:[%s970 + $0x90] sm:$0xf]
    %v11457 = vld [vmem:[%s970 + $0x94] sm:$0xf]
    %v11458 = vld [vmem:[%s970 + $0x98] sm:$0x1]
    %v11459 = vld [vmem:[%s970 + $0x9c] sm:$0xf]
    %v11460 = vld [vmem:[%s970 + $0xa0] sm:$0xf]
    %v11461 = vld [vmem:[%s970 + $0xa4] sm:$0x1]
    %v11462 = vld [vmem:[%s970 + $0xa8] sm:$0xf]
    %v11463 = vld [vmem:[%s970 + $0xac] sm:$0xf]
    %v11464 = vld [vmem:[%s970 + $0xb0] sm:$0x1]
    %v11465 = vld [vmem:[%s970 + $0xb4] sm:$0xf]
    %v11466 = vld [vmem:[%s970 + $0xb8] sm:$0xf]
    %v11467 = vld [vmem:[%s970 + $0xbc] sm:$0x1]
    %v11468 = vld [vmem:[%s970 + $0xd8] sm:$0xf]
    %v11469 = vld [vmem:[%s970 + $0xdc] sm:$0xf]
    %v11470 = vld [vmem:[%s970 + $0xe0] sm:$0x1]
    %v11471 = vld [vmem:[%s970 + $0xe4] sm:$0xf]
    %v11472 = vld [vmem:[%s970 + $0xe8] sm:$0xf]
    %v11473 = vld [vmem:[%s970 + $0xec] sm:$0x1]
    %v11474 = vld [vmem:[%s970 + $0xf0] sm:$0xf]
    %v11475 = vld [vmem:[%s970 + $0xf4] sm:$0xf]
    %v11476 = vld [vmem:[%s970 + $0xf8] sm:$0x1]
    %v11477 = vld [vmem:[%s970 + $0xfc] sm:$0xf]
    %v11478 = vld [vmem:[%s970 + $0x100] sm:$0xf]
    %v11479 = vld [vmem:[%s970 + $0x104] sm:$0x1]
    %v11480 = vld [vmem:[%s970 + $0x108] sm:$0xf]
    %v11481 = vld [vmem:[%s970 + $0x10c] sm:$0xf]
    %v11482 = vld [vmem:[%s970 + $0x110] sm:$0x1]
    %v11483 = vld [vmem:[%s970 + $0x114] sm:$0xf]
    %v11484 = vld [vmem:[%s970 + $0x118] sm:$0xf]
    %v11485 = vld [vmem:[%s970 + $0x11c] sm:$0x1]
    %v11486 = vld [vmem:[%s970 + $0x120] sm:$0xf]
    %v11487 = vld [vmem:[%s970 + $0x124] sm:$0xf]
    %v11488 = vld [vmem:[%s970 + $0x128] sm:$0x1]
    %v11489 = vld [vmem:[%s970 + $0x12c] sm:$0xf]
    %v11490 = vld [vmem:[%s970 + $0x130] sm:$0xf]
    %v11491 = vld [vmem:[%s970 + $0x134] sm:$0x1]
    %v11492 = vld [vmem:[%s970 + $0x138] sm:$0xf]
    %v11493 = vld [vmem:[%s970 + $0x13c] sm:$0xf]
    %v11494 = vld [vmem:[%s970 + $0x140] sm:$0x1]
    %v11495 = vld [vmem:[%s970 + $0x144] sm:$0xf]
    %v11496 = vld [vmem:[%s970 + $0x148] sm:$0xf]
    %v11497 = vld [vmem:[%s970 + $0x14c] sm:$0x1]
    %v11498 = vld [vmem:[%s970 + $0x150] sm:$0xf]
    %v11499 = vld [vmem:[%s970 + $0x154] sm:$0xf]
    %v11500 = vld [vmem:[%s970 + $0x158] sm:$0x1]
    %v11501 = vld [vmem:[%s970 + $0x15c] sm:$0xf]
    %v11502 = vld [vmem:[%s970 + $0x160] sm:$0xf]
    %v11503 = vld [vmem:[%s970 + $0x164] sm:$0x1]
    %v11504 = vld [vmem:[%s970 + $0x168] sm:$0xf]
    %v11505 = vld [vmem:[%s970 + $0x16c] sm:$0xf]
    %v11506 = vld [vmem:[%s970 + $0x170] sm:$0x1]
    %v11507 = vld [vmem:[%s970 + $0x174] sm:$0xf]
    %v11508 = vld [vmem:[%s970 + $0x178] sm:$0xf]
    %v11509 = vld [vmem:[%s970 + $0x17c] sm:$0x1]
    %v11510 = vld [vmem:[%s970 + $0x180] sm:$0xf]
    %v11511 = vld [vmem:[%s970 + $0x184] sm:$0xf]
    %v11512 = vld [vmem:[%s970 + $0x188] sm:$0x1]
    %v11513 = vld [vmem:[%s970 + $0x18c] sm:$0xf]
    %v11514 = vld [vmem:[%s970 + $0x190] sm:$0xf]
    %v11515 = vld [vmem:[%s970 + $0x194] sm:$0x1]
    %v11517 = vshrl.u32 %v11420, 16
    %v11519 = vrot.slane %v11517, 4
    %v11520 = vshll.u32 %v11420, 16
    %v11522 = vrot.slane %v11520, 5
    %v11523 = vor.u32 %v11519, %v11522
    %v11524 = vrot.slane %v11523, 4
    %v11526 = vshll.u32 %v11421, 16
    %v11528 = vrot.slane %v11526, 5
    %v11529 = vsel %vm1299, %v11524, %v11528
    %v11530 = vshrl.u32 %v11421, 16
    %v11532 = vrot.slane %v11530, 4
    %v11533 = vor.u32 %v11532, %v11528
    %v11534 = vrot.slane %v11533, 4
    %v11536 = vshll.u32 %v11422, 16
    %v11538 = vrot.slane %v11536, 5
    %v11539 = vsel %vm1299, %v11534, %v11538
    %v11541 = vshrl.u32 %v11423, 16
    %v11543 = vrot.slane %v11541, 4
    %v11544 = vshll.u32 %v11423, 16
    %v11546 = vrot.slane %v11544, 5
    %v11547 = vor.u32 %v11543, %v11546
    %v11548 = vrot.slane %v11547, 4
    %v11550 = vshll.u32 %v11424, 16
    %v11552 = vrot.slane %v11550, 5
    %v11553 = vsel %vm1299, %v11548, %v11552
    %v11554 = vshrl.u32 %v11424, 16
    %v11556 = vrot.slane %v11554, 4
    %v11557 = vor.u32 %v11556, %v11552
    %v11558 = vrot.slane %v11557, 4
    %v11560 = vshll.u32 %v11425, 16
    %v11562 = vrot.slane %v11560, 5
    %v11563 = vsel %vm1299, %v11558, %v11562
    %v11565 = vshrl.u32 %v11426, 16
    %v11567 = vrot.slane %v11565, 4
    %v11568 = vshll.u32 %v11426, 16
    %v11570 = vrot.slane %v11568, 5
    %v11571 = vor.u32 %v11567, %v11570
    %v11572 = vrot.slane %v11571, 4
    %v11574 = vshll.u32 %v11427, 16
    %v11576 = vrot.slane %v11574, 5
    %v11577 = vsel %vm1299, %v11572, %v11576
    %v11578 = vshrl.u32 %v11427, 16
    %v11580 = vrot.slane %v11578, 4
    %v11581 = vor.u32 %v11580, %v11576
    %v11582 = vrot.slane %v11581, 4
    %v11584 = vshll.u32 %v11428, 16
    %v11586 = vrot.slane %v11584, 5
    %v11587 = vsel %vm1299, %v11582, %v11586
    %v11589 = vshrl.u32 %v11429, 16
    %v11591 = vrot.slane %v11589, 4
    %v11592 = vshll.u32 %v11429, 16
    %v11594 = vrot.slane %v11592, 5
    %v11595 = vor.u32 %v11591, %v11594
    %v11596 = vrot.slane %v11595, 4
    %v11598 = vshll.u32 %v11430, 16
    %v11600 = vrot.slane %v11598, 5
    %v11601 = vsel %vm1299, %v11596, %v11600
    %v11602 = vshrl.u32 %v11430, 16
    %v11604 = vrot.slane %v11602, 4
    %v11605 = vor.u32 %v11604, %v11600
    %v11606 = vrot.slane %v11605, 4
    %v11608 = vshll.u32 %v11431, 16
    %v11610 = vrot.slane %v11608, 5
    %v11611 = vsel %vm1299, %v11606, %v11610
    %v11613 = vshrl.u32 %v11432, 16
    %v11615 = vrot.slane %v11613, 4
    %v11616 = vshll.u32 %v11432, 16
    %v11618 = vrot.slane %v11616, 5
    %v11619 = vor.u32 %v11615, %v11618
    %v11620 = vrot.slane %v11619, 4
    %v11622 = vshll.u32 %v11433, 16
    %v11624 = vrot.slane %v11622, 5
    %v11625 = vsel %vm1299, %v11620, %v11624
    %v11626 = vshrl.u32 %v11433, 16
    %v11628 = vrot.slane %v11626, 4
    %v11629 = vor.u32 %v11628, %v11624
    %v11630 = vrot.slane %v11629, 4
    %v11632 = vshll.u32 %v11434, 16
    %v11634 = vrot.slane %v11632, 5
    %v11635 = vsel %vm1299, %v11630, %v11634
    %v11637 = vshrl.u32 %v11435, 16
    %v11639 = vrot.slane %v11637, 4
    %v11640 = vshll.u32 %v11435, 16
    %v11642 = vrot.slane %v11640, 5
    %v11643 = vor.u32 %v11639, %v11642
    %v11644 = vrot.slane %v11643, 4
    %v11646 = vshll.u32 %v11436, 16
    %v11648 = vrot.slane %v11646, 5
    %v11649 = vsel %vm1299, %v11644, %v11648
    %v11650 = vshrl.u32 %v11436, 16
    %v11652 = vrot.slane %v11650, 4
    %v11653 = vor.u32 %v11652, %v11648
    %v11654 = vrot.slane %v11653, 4
    %v11656 = vshll.u32 %v11437, 16
    %v11658 = vrot.slane %v11656, 5
    %v11659 = vsel %vm1299, %v11654, %v11658
    %v11661 = vshrl.u32 %v11438, 16
    %v11663 = vrot.slane %v11661, 4
    %v11664 = vshll.u32 %v11438, 16
    %v11666 = vrot.slane %v11664, 5
    %v11667 = vor.u32 %v11663, %v11666
    %v11668 = vrot.slane %v11667, 4
    %v11670 = vshll.u32 %v11439, 16
    %v11672 = vrot.slane %v11670, 5
    %v11673 = vsel %vm1299, %v11668, %v11672
    %v11674 = vshrl.u32 %v11439, 16
    %v11676 = vrot.slane %v11674, 4
    %v11677 = vor.u32 %v11676, %v11672
    %v11678 = vrot.slane %v11677, 4
    %v11680 = vshll.u32 %v11440, 16
    %v11682 = vrot.slane %v11680, 5
    %v11683 = vsel %vm1299, %v11678, %v11682
    %v11685 = vshrl.u32 %v11441, 16
    %v11687 = vrot.slane %v11685, 4
    %v11688 = vshll.u32 %v11441, 16
    %v11690 = vrot.slane %v11688, 5
    %v11691 = vor.u32 %v11687, %v11690
    %v11692 = vrot.slane %v11691, 4
    %v11694 = vshll.u32 %v11442, 16
    %v11696 = vrot.slane %v11694, 5
    %v11697 = vsel %vm1299, %v11692, %v11696
    %v11698 = vshrl.u32 %v11442, 16
    %v11700 = vrot.slane %v11698, 4
    %v11701 = vor.u32 %v11700, %v11696
    %v11702 = vrot.slane %v11701, 4
    %v11704 = vshll.u32 %v11443, 16
    %v11706 = vrot.slane %v11704, 5
    %v11707 = vsel %vm1299, %v11702, %v11706
    %v11709 = vshrl.u32 %v11444, 16
    %v11711 = vrot.slane %v11709, 4
    %v11712 = vshll.u32 %v11444, 16
    %v11714 = vrot.slane %v11712, 5
    %v11715 = vor.u32 %v11711, %v11714
    %v11716 = vrot.slane %v11715, 4
    %v11718 = vshll.u32 %v11445, 16
    %v11720 = vrot.slane %v11718, 5
    %v11721 = vsel %vm1299, %v11716, %v11720
    %v11722 = vshrl.u32 %v11445, 16
    %v11724 = vrot.slane %v11722, 4
    %v11725 = vor.u32 %v11724, %v11720
    %v11726 = vrot.slane %v11725, 4
    %v11728 = vshll.u32 %v11446, 16
    %v11730 = vrot.slane %v11728, 5
    %v11731 = vsel %vm1299, %v11726, %v11730
    %v11733 = vshrl.u32 %v11447, 16
    %v11735 = vrot.slane %v11733, 4
    %v11736 = vshll.u32 %v11447, 16
    %v11738 = vrot.slane %v11736, 5
    %v11739 = vor.u32 %v11735, %v11738
    %v11740 = vrot.slane %v11739, 4
    %v11742 = vshll.u32 %v11448, 16
    %v11744 = vrot.slane %v11742, 5
    %v11745 = vsel %vm1299, %v11740, %v11744
    %v11746 = vshrl.u32 %v11448, 16
    %v11748 = vrot.slane %v11746, 4
    %v11749 = vor.u32 %v11748, %v11744
    %v11750 = vrot.slane %v11749, 4
    %v11752 = vshll.u32 %v11449, 16
    %v11754 = vrot.slane %v11752, 5
    %v11755 = vsel %vm1299, %v11750, %v11754
    %v11757 = vshrl.u32 %v11450, 16
    %v11759 = vrot.slane %v11757, 4
    %v11760 = vshll.u32 %v11450, 16
    %v11762 = vrot.slane %v11760, 5
    %v11763 = vor.u32 %v11759, %v11762
    %v11764 = vrot.slane %v11763, 4
    %v11766 = vshll.u32 %v11451, 16
    %v11768 = vrot.slane %v11766, 5
    %v11769 = vsel %vm1299, %v11764, %v11768
    %v11770 = vshrl.u32 %v11451, 16
    %v11772 = vrot.slane %v11770, 4
    %v11773 = vor.u32 %v11772, %v11768
    %v11774 = vrot.slane %v11773, 4
    %v11776 = vshll.u32 %v11452, 16
    %v11778 = vrot.slane %v11776, 5
    %v11779 = vsel %vm1299, %v11774, %v11778
    %v11781 = vshrl.u32 %v11453, 16
    %v11783 = vrot.slane %v11781, 4
    %v11784 = vshll.u32 %v11453, 16
    %v11786 = vrot.slane %v11784, 5
    %v11787 = vor.u32 %v11783, %v11786
    %v11788 = vrot.slane %v11787, 4
    %v11790 = vshll.u32 %v11454, 16
    %v11792 = vrot.slane %v11790, 5
    %v11793 = vsel %vm1299, %v11788, %v11792
    %v11794 = vshrl.u32 %v11454, 16
    %v11796 = vrot.slane %v11794, 4
    %v11797 = vor.u32 %v11796, %v11792
    %v11798 = vrot.slane %v11797, 4
    %v11800 = vshll.u32 %v11455, 16
    %v11802 = vrot.slane %v11800, 5
    %v11803 = vsel %vm1299, %v11798, %v11802
    %v11805 = vshrl.u32 %v11456, 16
    %v11807 = vrot.slane %v11805, 4
    %v11808 = vshll.u32 %v11456, 16
    %v11810 = vrot.slane %v11808, 5
    %v11811 = vor.u32 %v11807, %v11810
    %v11812 = vrot.slane %v11811, 4
    %v11814 = vshll.u32 %v11457, 16
    %v11816 = vrot.slane %v11814, 5
    %v11817 = vsel %vm1299, %v11812, %v11816
    %v11818 = vshrl.u32 %v11457, 16
    %v11820 = vrot.slane %v11818, 4
    %v11821 = vor.u32 %v11820, %v11816
    %v11822 = vrot.slane %v11821, 4
    %v11824 = vshll.u32 %v11458, 16
    %v11826 = vrot.slane %v11824, 5
    %v11827 = vsel %vm1299, %v11822, %v11826
    %v11829 = vshrl.u32 %v11459, 16
    %v11831 = vrot.slane %v11829, 4
    %v11832 = vshll.u32 %v11459, 16
    %v11834 = vrot.slane %v11832, 5
    %v11835 = vor.u32 %v11831, %v11834
    %v11836 = vrot.slane %v11835, 4
    %v11838 = vshll.u32 %v11460, 16
    %v11840 = vrot.slane %v11838, 5
    %v11841 = vsel %vm1299, %v11836, %v11840
    %v11842 = vshrl.u32 %v11460, 16
    %v11844 = vrot.slane %v11842, 4
    %v11845 = vor.u32 %v11844, %v11840
    %v11846 = vrot.slane %v11845, 4
    %v11848 = vshll.u32 %v11461, 16
    %v11850 = vrot.slane %v11848, 5
    %v11851 = vsel %vm1299, %v11846, %v11850
    %v11853 = vshrl.u32 %v11462, 16
    %v11855 = vrot.slane %v11853, 4
    %v11856 = vshll.u32 %v11462, 16
    %v11858 = vrot.slane %v11856, 5
    %v11859 = vor.u32 %v11855, %v11858
    %v11860 = vrot.slane %v11859, 4
    %v11862 = vshll.u32 %v11463, 16
    %v11864 = vrot.slane %v11862, 5
    %v11865 = vsel %vm1299, %v11860, %v11864
    %v11866 = vshrl.u32 %v11463, 16
    %v11868 = vrot.slane %v11866, 4
    %v11869 = vor.u32 %v11868, %v11864
    %v11870 = vrot.slane %v11869, 4
    %v11872 = vshll.u32 %v11464, 16
    %v11874 = vrot.slane %v11872, 5
    %v11875 = vsel %vm1299, %v11870, %v11874
    %v11877 = vshrl.u32 %v11465, 16
    %v11879 = vrot.slane %v11877, 4
    %v11880 = vshll.u32 %v11465, 16
    %v11882 = vrot.slane %v11880, 5
    %v11883 = vor.u32 %v11879, %v11882
    %v11884 = vrot.slane %v11883, 4
    %v11886 = vshll.u32 %v11466, 16
    %v11888 = vrot.slane %v11886, 5
    %v11889 = vsel %vm1299, %v11884, %v11888
    %v11890 = vshrl.u32 %v11466, 16
    %v11892 = vrot.slane %v11890, 4
    %v11893 = vor.u32 %v11892, %v11888
    %v11894 = vrot.slane %v11893, 4
    %v11896 = vshll.u32 %v11467, 16
    %v11898 = vrot.slane %v11896, 5
    %v11899 = vsel %vm1299, %v11894, %v11898
    %v11901 = vshrl.u32 %v11468, 16
    %v11903 = vrot.slane %v11901, 4
    %v11904 = vshll.u32 %v11468, 16
    %v11906 = vrot.slane %v11904, 5
    %v11907 = vor.u32 %v11903, %v11906
    %v11908 = vrot.slane %v11907, 4
    %v11910 = vshll.u32 %v11469, 16
    %v11912 = vrot.slane %v11910, 5
    %v11913 = vsel %vm1299, %v11908, %v11912
    %v11914 = vshrl.u32 %v11469, 16
    %v11916 = vrot.slane %v11914, 4
    %v11917 = vor.u32 %v11916, %v11912
    %v11918 = vrot.slane %v11917, 4
    %v11920 = vshll.u32 %v11470, 16
    %v11922 = vrot.slane %v11920, 5
    %v11923 = vsel %vm1299, %v11918, %v11922
    %v11925 = vshrl.u32 %v11471, 16
    %v11927 = vrot.slane %v11925, 4
    %v11928 = vshll.u32 %v11471, 16
    %v11930 = vrot.slane %v11928, 5
    %v11931 = vor.u32 %v11927, %v11930
    %v11932 = vrot.slane %v11931, 4
    %v11934 = vshll.u32 %v11472, 16
    %v11936 = vrot.slane %v11934, 5
    %v11937 = vsel %vm1299, %v11932, %v11936
    %v11938 = vshrl.u32 %v11472, 16
    %v11940 = vrot.slane %v11938, 4
    %v11941 = vor.u32 %v11940, %v11936
    %v11942 = vrot.slane %v11941, 4
    %v11944 = vshll.u32 %v11473, 16
    %v11946 = vrot.slane %v11944, 5
    %v11947 = vsel %vm1299, %v11942, %v11946
    %v11949 = vshrl.u32 %v11474, 16
    %v11951 = vrot.slane %v11949, 4
    %v11952 = vshll.u32 %v11474, 16
    %v11954 = vrot.slane %v11952, 5
    %v11955 = vor.u32 %v11951, %v11954
    %v11956 = vrot.slane %v11955, 4
    %v11958 = vshll.u32 %v11475, 16
    %v11960 = vrot.slane %v11958, 5
    %v11961 = vsel %vm1299, %v11956, %v11960
    %v11962 = vshrl.u32 %v11475, 16
    %v11964 = vrot.slane %v11962, 4
    %v11965 = vor.u32 %v11964, %v11960
    %v11966 = vrot.slane %v11965, 4
    %v11968 = vshll.u32 %v11476, 16
    %v11970 = vrot.slane %v11968, 5
    %v11971 = vsel %vm1299, %v11966, %v11970
    %v11973 = vshrl.u32 %v11477, 16
    %v11975 = vrot.slane %v11973, 4
    %v11976 = vshll.u32 %v11477, 16
    %v11978 = vrot.slane %v11976, 5
    %v11979 = vor.u32 %v11975, %v11978
    %v11980 = vrot.slane %v11979, 4
    %v11982 = vshll.u32 %v11478, 16
    %v11984 = vrot.slane %v11982, 5
    %v11985 = vsel %vm1299, %v11980, %v11984
    %v11986 = vshrl.u32 %v11478, 16
    %v11988 = vrot.slane %v11986, 4
    %v11989 = vor.u32 %v11988, %v11984
    %v11990 = vrot.slane %v11989, 4
    %v11992 = vshll.u32 %v11479, 16
    %v11994 = vrot.slane %v11992, 5
    %v11995 = vsel %vm1299, %v11990, %v11994
    %v11997 = vshrl.u32 %v11480, 16
    %v11999 = vrot.slane %v11997, 4
    %v12000 = vshll.u32 %v11480, 16
    %v12002 = vrot.slane %v12000, 5
    %v12003 = vor.u32 %v11999, %v12002
    %v12004 = vrot.slane %v12003, 4
    %v12006 = vshll.u32 %v11481, 16
    %v12008 = vrot.slane %v12006, 5
    %v12009 = vsel %vm1299, %v12004, %v12008
    %v12010 = vshrl.u32 %v11481, 16
    %v12012 = vrot.slane %v12010, 4
    %v12013 = vor.u32 %v12012, %v12008
    %v12014 = vrot.slane %v12013, 4
    %v12016 = vshll.u32 %v11482, 16
    %v12018 = vrot.slane %v12016, 5
    %v12019 = vsel %vm1299, %v12014, %v12018
    %v12021 = vshrl.u32 %v11483, 16
    %v12023 = vrot.slane %v12021, 4
    %v12024 = vshll.u32 %v11483, 16
    %v12026 = vrot.slane %v12024, 5
    %v12027 = vor.u32 %v12023, %v12026
    %v12028 = vrot.slane %v12027, 4
    %v12030 = vshll.u32 %v11484, 16
    %v12032 = vrot.slane %v12030, 5
    %v12033 = vsel %vm1299, %v12028, %v12032
    %v12034 = vshrl.u32 %v11484, 16
    %v12036 = vrot.slane %v12034, 4
    %v12037 = vor.u32 %v12036, %v12032
    %v12038 = vrot.slane %v12037, 4
    %v12040 = vshll.u32 %v11485, 16
    %v12042 = vrot.slane %v12040, 5
    %v12043 = vsel %vm1299, %v12038, %v12042
    %v12045 = vshrl.u32 %v11486, 16
    %v12047 = vrot.slane %v12045, 4
    %v12048 = vshll.u32 %v11486, 16
    %v12050 = vrot.slane %v12048, 5
    %v12051 = vor.u32 %v12047, %v12050
    %v12052 = vrot.slane %v12051, 4
    %v12054 = vshll.u32 %v11487, 16
    %v12056 = vrot.slane %v12054, 5
    %v12057 = vsel %vm1299, %v12052, %v12056
    %v12058 = vshrl.u32 %v11487, 16
    %v12060 = vrot.slane %v12058, 4
    %v12061 = vor.u32 %v12060, %v12056
    %v12062 = vrot.slane %v12061, 4
    %v12064 = vshll.u32 %v11488, 16
    %v12066 = vrot.slane %v12064, 5
    %v12067 = vsel %vm1299, %v12062, %v12066
    %v12069 = vshrl.u32 %v11489, 16
    %v12071 = vrot.slane %v12069, 4
    %v12072 = vshll.u32 %v11489, 16
    %v12074 = vrot.slane %v12072, 5
    %v12075 = vor.u32 %v12071, %v12074
    %v12076 = vrot.slane %v12075, 4
    %v12078 = vshll.u32 %v11490, 16
    %v12080 = vrot.slane %v12078, 5
    %v12081 = vsel %vm1299, %v12076, %v12080
    %v12082 = vshrl.u32 %v11490, 16
    %v12084 = vrot.slane %v12082, 4
    %v12085 = vor.u32 %v12084, %v12080
    %v12086 = vrot.slane %v12085, 4
    %v12088 = vshll.u32 %v11491, 16
    %v12090 = vrot.slane %v12088, 5
    %v12091 = vsel %vm1299, %v12086, %v12090
    %v12093 = vshrl.u32 %v11492, 16
    %v12095 = vrot.slane %v12093, 4
    %v12096 = vshll.u32 %v11492, 16
    %v12098 = vrot.slane %v12096, 5
    %v12099 = vor.u32 %v12095, %v12098
    %v12100 = vrot.slane %v12099, 4
    %v12102 = vshll.u32 %v11493, 16
    %v12104 = vrot.slane %v12102, 5
    %v12105 = vsel %vm1299, %v12100, %v12104
    %v12106 = vshrl.u32 %v11493, 16
    %v12108 = vrot.slane %v12106, 4
    %v12109 = vor.u32 %v12108, %v12104
    %v12110 = vrot.slane %v12109, 4
    %v12112 = vshll.u32 %v11494, 16
    %v12114 = vrot.slane %v12112, 5
    %v12115 = vsel %vm1299, %v12110, %v12114
    %v12117 = vshrl.u32 %v11495, 16
    %v12119 = vrot.slane %v12117, 4
    %v12120 = vshll.u32 %v11495, 16
    %v12122 = vrot.slane %v12120, 5
    %v12123 = vor.u32 %v12119, %v12122
    %v12124 = vrot.slane %v12123, 4
    %v12126 = vshll.u32 %v11496, 16
    %v12128 = vrot.slane %v12126, 5
    %v12129 = vsel %vm1299, %v12124, %v12128
    %v12130 = vshrl.u32 %v11496, 16
    %v12132 = vrot.slane %v12130, 4
    %v12133 = vor.u32 %v12132, %v12128
    %v12134 = vrot.slane %v12133, 4
    %v12136 = vshll.u32 %v11497, 16
    %v12138 = vrot.slane %v12136, 5
    %v12139 = vsel %vm1299, %v12134, %v12138
    %v12141 = vshrl.u32 %v11498, 16
    %v12143 = vrot.slane %v12141, 4
    %v12144 = vshll.u32 %v11498, 16
    %v12146 = vrot.slane %v12144, 5
    %v12147 = vor.u32 %v12143, %v12146
    %v12148 = vrot.slane %v12147, 4
    %v12150 = vshll.u32 %v11499, 16
    %v12152 = vrot.slane %v12150, 5
    %v12153 = vsel %vm1299, %v12148, %v12152
    %v12154 = vshrl.u32 %v11499, 16
    %v12156 = vrot.slane %v12154, 4
    %v12157 = vor.u32 %v12156, %v12152
    %v12158 = vrot.slane %v12157, 4
    %v12160 = vshll.u32 %v11500, 16
    %v12162 = vrot.slane %v12160, 5
    %v12163 = vsel %vm1299, %v12158, %v12162
    %v12165 = vshrl.u32 %v11501, 16
    %v12167 = vrot.slane %v12165, 4
    %v12168 = vshll.u32 %v11501, 16
    %v12170 = vrot.slane %v12168, 5
    %v12171 = vor.u32 %v12167, %v12170
    %v12172 = vrot.slane %v12171, 4
    %v12174 = vshll.u32 %v11502, 16
    %v12176 = vrot.slane %v12174, 5
    %v12177 = vsel %vm1299, %v12172, %v12176
    %v12178 = vshrl.u32 %v11502, 16
    %v12180 = vrot.slane %v12178, 4
    %v12181 = vor.u32 %v12180, %v12176
    %v12182 = vrot.slane %v12181, 4
    %v12184 = vshll.u32 %v11503, 16
    %v12186 = vrot.slane %v12184, 5
    %v12187 = vsel %vm1299, %v12182, %v12186
    %v12189 = vshrl.u32 %v11504, 16
    %v12191 = vrot.slane %v12189, 4
    %v12192 = vshll.u32 %v11504, 16
    %v12194 = vrot.slane %v12192, 5
    %v12195 = vor.u32 %v12191, %v12194
    %v12196 = vrot.slane %v12195, 4
    %v12198 = vshll.u32 %v11505, 16
    %v12200 = vrot.slane %v12198, 5
    %v12201 = vsel %vm1299, %v12196, %v12200
    %v12202 = vshrl.u32 %v11505, 16
    %v12204 = vrot.slane %v12202, 4
    %v12205 = vor.u32 %v12204, %v12200
    %v12206 = vrot.slane %v12205, 4
    %v12208 = vshll.u32 %v11506, 16
    %v12210 = vrot.slane %v12208, 5
    %v12211 = vsel %vm1299, %v12206, %v12210
    %v12213 = vshrl.u32 %v11507, 16
    %v12215 = vrot.slane %v12213, 4
    %v12216 = vshll.u32 %v11507, 16
    %v12218 = vrot.slane %v12216, 5
    %v12219 = vor.u32 %v12215, %v12218
    %v12220 = vrot.slane %v12219, 4
    %v12222 = vshll.u32 %v11508, 16
    %v12224 = vrot.slane %v12222, 5
    %v12225 = vsel %vm1299, %v12220, %v12224
    %v12226 = vshrl.u32 %v11508, 16
    %v12228 = vrot.slane %v12226, 4
    %v12229 = vor.u32 %v12228, %v12224
    %v12230 = vrot.slane %v12229, 4
    %v12232 = vshll.u32 %v11509, 16
    %v12234 = vrot.slane %v12232, 5
    %v12235 = vsel %vm1299, %v12230, %v12234
    %v12237 = vshrl.u32 %v11510, 16
    %v12239 = vrot.slane %v12237, 4
    %v12240 = vshll.u32 %v11510, 16
    %v12242 = vrot.slane %v12240, 5
    %v12243 = vor.u32 %v12239, %v12242
    %v12244 = vrot.slane %v12243, 4
    %v12246 = vshll.u32 %v11511, 16
    %v12248 = vrot.slane %v12246, 5
    %v12249 = vsel %vm1299, %v12244, %v12248
    %v12250 = vshrl.u32 %v11511, 16
    %v12252 = vrot.slane %v12250, 4
    %v12253 = vor.u32 %v12252, %v12248
    %v12254 = vrot.slane %v12253, 4
    %v12256 = vshll.u32 %v11512, 16
    %v12258 = vrot.slane %v12256, 5
    %v12259 = vsel %vm1299, %v12254, %v12258
    %v12261 = vshrl.u32 %v11513, 16
    %v12263 = vrot.slane %v12261, 4
    %v12264 = vshll.u32 %v11513, 16
    %v12266 = vrot.slane %v12264, 5
    %v12267 = vor.u32 %v12263, %v12266
    %v12268 = vrot.slane %v12267, 4
    %v12270 = vshll.u32 %v11514, 16
    %v12272 = vrot.slane %v12270, 5
    %v12273 = vsel %vm1299, %v12268, %v12272
    %v12274 = vshrl.u32 %v11514, 16
    %v12276 = vrot.slane %v12274, 4
    %v12277 = vor.u32 %v12276, %v12272
    %v12278 = vrot.slane %v12277, 4
    %v12280 = vshll.u32 %v11515, 16
    %v12282 = vrot.slane %v12280, 5
    %v12283 = vsel %vm1299, %v12278, %v12282
    %12284 = vrot.lane.b32.xlu0 %v9784, 96
    %v12285 = vpop.permute.xlu0 %12284
    %v12286 = vunpack.c.l.b16 %v11529
    %v12287 = vunpack.c.l.b16 %v11539
    %v12288 = vunpack.c.l.b16 %v11553
    %v12289 = vunpack.c.l.b16 %v11563
    %v12290 = vunpack.c.l.b16 %v11577
    %v12291 = vunpack.c.l.b16 %v11587
    %v12292 = vunpack.c.l.b16 %v11601
    %v12293 = vunpack.c.l.b16 %v11611
    %v12294 = vunpack.c.l.b16 %v11625
    %v12295 = vunpack.c.l.b16 %v11635
    %v12296 = vunpack.c.l.b16 %v11649
    %v12297 = vunpack.c.l.b16 %v11659
    %v12298 = vunpack.c.l.b16 %v11673
    %v12299 = vunpack.c.l.b16 %v11683
    %v12300 = vunpack.c.l.b16 %v11697
    %v12301 = vunpack.c.l.b16 %v11707
    %v12302 = vunpack.c.l.b16 %v11721
    %v12303 = vunpack.c.l.b16 %v11731
    %v12304 = vunpack.c.l.b16 %v11745
    %v12305 = vunpack.c.l.b16 %v11755
    %v12306 = vunpack.c.l.b16 %v11769
    %v12307 = vunpack.c.l.b16 %v11779
    %v12308 = vunpack.c.l.b16 %v11793
    %v12309 = vunpack.c.l.b16 %v11803
    %v12310 = vunpack.c.l.b16 %v11817
    %v12311 = vunpack.c.l.b16 %v11827
    %v12312 = vunpack.c.l.b16 %v11841
    %v12313 = vunpack.c.l.b16 %v11851
    %v12314 = vunpack.c.l.b16 %v11865
    %v12315 = vunpack.c.l.b16 %v11875
    %v12316 = vunpack.c.l.b16 %v11889
    %v12317 = vunpack.c.l.b16 %v11899
    %v12318 = vunpack.c.l.b16 %v11913
    %v12319 = vunpack.c.l.b16 %v11923
    %v12320 = vunpack.c.l.b16 %v11937
    %v12321 = vunpack.c.l.b16 %v11947
    %v12322 = vunpack.c.l.b16 %v11961
    %v12323 = vunpack.c.l.b16 %v11971
    %v12324 = vunpack.c.l.b16 %v11985
    %v12325 = vunpack.c.l.b16 %v11995
    %v12326 = vunpack.c.l.b16 %v12009
    %v12327 = vunpack.c.l.b16 %v12019
    %v12328 = vunpack.c.l.b16 %v12033
    %v12329 = vunpack.c.l.b16 %v12043
    %v12330 = vunpack.c.l.b16 %v12057
    %v12331 = vunpack.c.l.b16 %v12067
    %v12332 = vunpack.c.l.b16 %v12081
    %v12333 = vunpack.c.l.b16 %v12091
    %v12334 = vunpack.c.l.b16 %v12105
    %v12335 = vunpack.c.l.b16 %v12115
    %v12336 = vunpack.c.l.b16 %v12129
    %v12337 = vunpack.c.l.b16 %v12139
    %v12338 = vunpack.c.l.b16 %v12153
    %v12339 = vunpack.c.l.b16 %v12163
    %v12340 = vunpack.c.l.b16 %v12177
    %v12341 = vunpack.c.l.b16 %v12187
    %v12342 = vunpack.c.l.b16 %v12201
    %v12343 = vunpack.c.l.b16 %v12211
    %v12344 = vunpack.c.l.b16 %v12225
    %v12345 = vunpack.c.l.b16 %v12235
    %v12346 = vunpack.c.l.b16 %v12249
    %v12347 = vunpack.c.l.b16 %v12259
    %v12348 = vunpack.c.l.b16 %v12273
    %v12349 = vunpack.c.l.b16 %v12283
    %v12350 = vpack.c.b16 %v12287, %v12286
    %v12351 = vpack.c.b16 %v12289, %v12288
    %v12352 = vpack.c.b16 %v12291, %v12290
    %v12353 = vpack.c.b16 %v12293, %v12292
    %v12354 = vpack.c.b16 %v12295, %v12294
    %v12355 = vpack.c.b16 %v12297, %v12296
    %v12356 = vpack.c.b16 %v12299, %v12298
    %v12357 = vpack.c.b16 %v12301, %v12300
    %v12358 = vpack.c.b16 %v12303, %v12302
    %v12359 = vpack.c.b16 %v12305, %v12304
    %v12360 = vpack.c.b16 %v12307, %v12306
    %v12361 = vpack.c.b16 %v12309, %v12308
    %v12362 = vpack.c.b16 %v12311, %v12310
    %v12363 = vpack.c.b16 %v12313, %v12312
    %v12364 = vpack.c.b16 %v12315, %v12314
    %v12365 = vpack.c.b16 %v12317, %v12316
    %v12366 = vpack.c.b16 %v12319, %v12318
    %v12367 = vpack.c.b16 %v12321, %v12320
    %v12368 = vpack.c.b16 %v12323, %v12322
    %v12369 = vpack.c.b16 %v12325, %v12324
    %v12370 = vpack.c.b16 %v12327, %v12326
    %v12371 = vpack.c.b16 %v12329, %v12328
    %v12372 = vpack.c.b16 %v12331, %v12330
    %v12373 = vpack.c.b16 %v12333, %v12332
    %v12374 = vpack.c.b16 %v12335, %v12334
    %v12375 = vpack.c.b16 %v12337, %v12336
    %v12376 = vpack.c.b16 %v12339, %v12338
    %v12377 = vpack.c.b16 %v12341, %v12340
    %v12378 = vpack.c.b16 %v12343, %v12342
    %v12379 = vpack.c.b16 %v12345, %v12344
    %v12380 = vpack.c.b16 %v12347, %v12346
    %v12381 = vpack.c.b16 %v12349, %v12348
    %v12383 = vsel %vm9883, %v12285, 0
    %v12386 = vsel %vm9883, %v12350, 0
    %v12389 = vsel %vm9883, %v12351, 0
    %v12392 = vsel %vm9883, %v12352, 0
    %v12395 = vsel %vm9883, %v12353, 0
    %v12398 = vsel %vm9883, %v12354, 0
    %v12401 = vsel %vm9883, %v12355, 0
    %v12404 = vsel %vm9883, %v12356, 0
    %v12407 = vsel %vm9883, %v12357, 0
    %v12410 = vsel %vm9883, %v12358, 0
    %v12413 = vsel %vm9883, %v12359, 0
    %v12416 = vsel %vm9883, %v12360, 0
    %v12419 = vsel %vm9883, %v12361, 0
    %v12422 = vsel %vm9883, %v12362, 0
    %v12425 = vsel %vm9883, %v12363, 0
    %v12428 = vsel %vm9883, %v12364, 0
    %v12431 = vsel %vm9883, %v12365, 0
    %v12434 = vsel %vm9883, %v12366, 0
    %v12437 = vsel %vm9883, %v12367, 0
    %v12440 = vsel %vm9883, %v12368, 0
    %v12443 = vsel %vm9883, %v12369, 0
    %v12446 = vsel %vm9883, %v12370, 0
    %v12449 = vsel %vm9883, %v12371, 0
    %v12452 = vsel %vm9883, %v12372, 0
    %v12455 = vsel %vm9883, %v12373, 0
    %v12458 = vsel %vm9883, %v12374, 0
    %v12461 = vsel %vm9883, %v12375, 0
    %v12464 = vsel %vm9883, %v12376, 0
    %v12467 = vsel %vm9883, %v12377, 0
    %v12470 = vsel %vm9883, %v12378, 0
    %v12473 = vsel %vm9883, %v12379, 0
    %v12476 = vsel %vm9883, %v12380, 0
    %v12479 = vsel %vm9883, %v12381, 0
    %12481 = vmatprep.subr.bf16.mxu0 0
    %12482 = vmatpush1.bf16.xpose.msra.mxu0 %v12386
    %12483 = vmatprep.subr.bf16.mxu0 0
    %12484 = vmatpush1.bf16.xpose.msra.mxu0 %v12389
    %12485 = vmatprep.subr.bf16.mxu0 0
    %12486 = vmatpush1.bf16.xpose.msra.mxu0 %v12392
    %12487 = vmatprep.subr.bf16.mxu0 0
    %12488 = vmatpush1.bf16.xpose.msra.mxu0 %v12395
    %12489 = vmatprep.subr.bf16.mxu0 0
    %12490 = vmatpush1.bf16.xpose.msra.mxu0 %v12398
    %12491 = vmatprep.subr.bf16.mxu0 0
    %12492 = vmatpush1.bf16.xpose.msra.mxu0 %v12401
    %12493 = vmatprep.subr.bf16.mxu0 0
    %12494 = vmatpush1.bf16.xpose.msra.mxu0 %v12404
    %12495 = vmatprep.subr.bf16.mxu0 0
    %12496 = vmatpush1.bf16.xpose.msra.mxu0 %v12407
    %12497 = vmatprep.subr.bf16.mxu0 0
    %12498 = vmatpush1.bf16.xpose.msra.mxu0 %v12410
    %12499 = vmatprep.subr.bf16.mxu0 0
    %12500 = vmatpush1.bf16.xpose.msra.mxu0 %v12413
    %12501 = vmatprep.subr.bf16.mxu0 0
    %12502 = vmatpush1.bf16.xpose.msra.mxu0 %v12416
    %12503 = vmatprep.subr.bf16.mxu0 0
    %12504 = vmatpush1.bf16.xpose.msra.mxu0 %v12419
    %12505 = vmatprep.subr.bf16.mxu0 0
    %12506 = vmatpush1.bf16.xpose.msra.mxu0 %v12422
    %12507 = vmatprep.subr.bf16.mxu0 0
    %12508 = vmatpush1.bf16.xpose.msra.mxu0 %v12425
    %12509 = vmatprep.subr.bf16.mxu0 0
    %12510 = vmatpush1.bf16.xpose.msra.mxu0 %v12428
    %12511 = vmatprep.subr.bf16.mxu0 0
    %12512 = vmatpush1.bf16.xpose.msra.mxu0 %v12431
    %12513 = vmatprep.mubr.bf16.mxu0 0
    %12514 = vmatmul.mubr.bf16.gmra.mrb[0].mxu0 %v12383
    %v12515 = vpop.f32.mrb[0].mxu0
    %v12516 = vadd.f32 0.0, %v12515
    %v12517 = vpop.f32.mrb[0].mxu0
    %v12518 = vadd.f32 0.0, %v12517
    %v12519 = vpop.f32.mrb[0].mxu0
    %v12520 = vpop.f32.mrb[0].mxu0
    %12521 = vdwg.mxu0
    %12522 = vmatprep.subr.bf16.mxu0 0
    %12523 = vmatpush1.bf16.xpose.msra.mxu0 %v12434
    %12524 = vmatprep.subr.bf16.mxu0 0
    %12525 = vmatpush1.bf16.xpose.msra.mxu0 %v12437
    %12526 = vmatprep.subr.bf16.mxu0 0
    %12527 = vmatpush1.bf16.xpose.msra.mxu0 %v12440
    %12528 = vmatprep.subr.bf16.mxu0 0
    %12529 = vmatpush1.bf16.xpose.msra.mxu0 %v12443
    %12530 = vmatprep.subr.bf16.mxu0 0
    %12531 = vmatpush1.bf16.xpose.msra.mxu0 %v12446
    %12532 = vmatprep.subr.bf16.mxu0 0
    %12533 = vmatpush1.bf16.xpose.msra.mxu0 %v12449
    %12534 = vmatprep.subr.bf16.mxu0 0
    %12535 = vmatpush1.bf16.xpose.msra.mxu0 %v12452
    %12536 = vmatprep.subr.bf16.mxu0 0
    %12537 = vmatpush1.bf16.xpose.msra.mxu0 %v12455
    %12538 = vmatprep.subr.bf16.mxu0 0
    %12539 = vmatpush1.bf16.xpose.msra.mxu0 %v12458
    %12540 = vmatprep.subr.bf16.mxu0 0
    %12541 = vmatpush1.bf16.xpose.msra.mxu0 %v12461
    %12542 = vmatprep.subr.bf16.mxu0 0
    %12543 = vmatpush1.bf16.xpose.msra.mxu0 %v12464
    %12544 = vmatprep.subr.bf16.mxu0 0
    %12545 = vmatpush1.bf16.xpose.msra.mxu0 %v12467
    %12546 = vmatprep.subr.bf16.mxu0 0
    %12547 = vmatpush1.bf16.xpose.msra.mxu0 %v12470
    %12548 = vmatprep.subr.bf16.mxu0 0
    %12549 = vmatpush1.bf16.xpose.msra.mxu0 %v12473
    %12550 = vmatprep.subr.bf16.mxu0 0
    %12551 = vmatpush1.bf16.xpose.msra.mxu0 %v12476
    %12552 = vmatprep.subr.bf16.mxu0 0
    %12553 = vmatpush1.bf16.xpose.msra.mxu0 %v12479
    %12554 = vmatprep.mubr.bf16.mxu0 0
    %12555 = vmatmul.mubr.bf16.gmra.mrb[0].mxu0 %v12383
    %v12556 = vpop.f32.mrb[0].mxu0
    %v12557 = vadd.f32 0.0, %v12556
    %v12558 = vpop.f32.mrb[0].mxu0
    %v12559 = vadd.f32 0.0, %v12558
    %v12560 = vpop.f32.mrb[0].mxu0
    %v12561 = vpop.f32.mrb[0].mxu0
    %12562 = vdwg.mxu0
    %v12563 = vadd.f32 %v11416, %v12516
    %v12564 = vadd.f32 %v11417, %v12518
    %v12565 = vadd.f32 %v11418, %v12557
    %v12566 = vadd.f32 %v11419, %v12559
    %v12567 = vld [vmem:[%s970] sm:$0xe]
    %v12568 = vld [vmem:[%s970 + $0xc] sm:$0xe]
    %v12569 = vld [vmem:[%s970 + $0x18] sm:$0xe]
    %v12570 = vld [vmem:[%s970 + $0x24] sm:$0xe]
    %v12571 = vld [vmem:[%s970 + $0x30] sm:$0xe]
    %v12572 = vld [vmem:[%s970 + $0x3c] sm:$0xe]
    %v12573 = vld [vmem:[%s970 + $0x48] sm:$0xe]
    %v12574 = vld [vmem:[%s970 + $0x54] sm:$0xe]
    %v12575 = vld [vmem:[%s970 + $0x60] sm:$0xe]
    %v12576 = vld [vmem:[%s970 + $0x6c] sm:$0xe]
    %v12577 = vld [vmem:[%s970 + $0x78] sm:$0xe]
    %v12578 = vld [vmem:[%s970 + $0x84] sm:$0xe]
    %v12579 = vld [vmem:[%s970 + $0x90] sm:$0xe]
    %v12580 = vld [vmem:[%s970 + $0x9c] sm:$0xe]
    %v12581 = vld [vmem:[%s970 + $0xa8] sm:$0xe]
    %v12582 = vld [vmem:[%s970 + $0xb4] sm:$0xe]
    %v12583 = vld [vmem:[%s970 + $0xd8] sm:$0xe]
    %v12584 = vld [vmem:[%s970 + $0xe4] sm:$0xe]
    %v12585 = vld [vmem:[%s970 + $0xf0] sm:$0xe]
    %v12586 = vld [vmem:[%s970 + $0xfc] sm:$0xe]
    %v12587 = vld [vmem:[%s970 + $0x108] sm:$0xe]
    %v12588 = vld [vmem:[%s970 + $0x114] sm:$0xe]
    %v12589 = vld [vmem:[%s970 + $0x120] sm:$0xe]
    %v12590 = vld [vmem:[%s970 + $0x12c] sm:$0xe]
    %v12591 = vld [vmem:[%s970 + $0x138] sm:$0xe]
    %v12592 = vld [vmem:[%s970 + $0x144] sm:$0xe]
    %v12593 = vld [vmem:[%s970 + $0x150] sm:$0xe]
    %v12594 = vld [vmem:[%s970 + $0x15c] sm:$0xe]
    %v12595 = vld [vmem:[%s970 + $0x168] sm:$0xe]
    %v12596 = vld [vmem:[%s970 + $0x174] sm:$0xe]
    %v12597 = vld [vmem:[%s970 + $0x180] sm:$0xe]
    %v12598 = vld [vmem:[%s970 + $0x18c] sm:$0xe]
    %v12695 = vrot.slane %v12567, 5
    %v12696 = vrot.slane %v12695, 4
    %v12697 = vrot.slane %v11421, 5
    %v12698 = vsel %vm2790, %v12696, %v12697
    %v12699 = vrot.slane %v12697, 4
    %v12700 = vrot.slane %v11422, 5
    %v12701 = vsel %vm2790, %v12699, %v12700
    %v12702 = vrot.slane %v12568, 5
    %v12703 = vrot.slane %v12702, 4
    %v12704 = vrot.slane %v11424, 5
    %v12705 = vsel %vm2790, %v12703, %v12704
    %v12706 = vrot.slane %v12704, 4
    %v12707 = vrot.slane %v11425, 5
    %v12708 = vsel %vm2790, %v12706, %v12707
    %v12709 = vrot.slane %v12569, 5
    %v12710 = vrot.slane %v12709, 4
    %v12711 = vrot.slane %v11427, 5
    %v12712 = vsel %vm2790, %v12710, %v12711
    %v12713 = vrot.slane %v12711, 4
    %v12714 = vrot.slane %v11428, 5
    %v12715 = vsel %vm2790, %v12713, %v12714
    %v12716 = vrot.slane %v12570, 5
    %v12717 = vrot.slane %v12716, 4
    %v12718 = vrot.slane %v11430, 5
    %v12719 = vsel %vm2790, %v12717, %v12718
    %v12720 = vrot.slane %v12718, 4
    %v12721 = vrot.slane %v11431, 5
    %v12722 = vsel %vm2790, %v12720, %v12721
    %v12723 = vrot.slane %v12571, 5
    %v12724 = vrot.slane %v12723, 4
    %v12725 = vrot.slane %v11433, 5
    %v12726 = vsel %vm2790, %v12724, %v12725
    %v12727 = vrot.slane %v12725, 4
    %v12728 = vrot.slane %v11434, 5
    %v12729 = vsel %vm2790, %v12727, %v12728
    %v12730 = vrot.slane %v12572, 5
    %v12731 = vrot.slane %v12730, 4
    %v12732 = vrot.slane %v11436, 5
    %v12733 = vsel %vm2790, %v12731, %v12732
    %v12734 = vrot.slane %v12732, 4
    %v12735 = vrot.slane %v11437, 5
    %v12736 = vsel %vm2790, %v12734, %v12735
    %v12737 = vrot.slane %v12573, 5
    %v12738 = vrot.slane %v12737, 4
    %v12739 = vrot.slane %v11439, 5
    %v12740 = vsel %vm2790, %v12738, %v12739
    %v12741 = vrot.slane %v12739, 4
    %v12742 = vrot.slane %v11440, 5
    %v12743 = vsel %vm2790, %v12741, %v12742
    %v12744 = vrot.slane %v12574, 5
    %v12745 = vrot.slane %v12744, 4
    %v12746 = vrot.slane %v11442, 5
    %v12747 = vsel %vm2790, %v12745, %v12746
    %v12748 = vrot.slane %v12746, 4
    %v12749 = vrot.slane %v11443, 5
    %v12750 = vsel %vm2790, %v12748, %v12749
    %v12751 = vrot.slane %v12575, 5
    %v12752 = vrot.slane %v12751, 4
    %v12753 = vrot.slane %v11445, 5
    %v12754 = vsel %vm2790, %v12752, %v12753
    %v12755 = vrot.slane %v12753, 4
    %v12756 = vrot.slane %v11446, 5
    %v12757 = vsel %vm2790, %v12755, %v12756
    %v12758 = vrot.slane %v12576, 5
    %v12759 = vrot.slane %v12758, 4
    %v12760 = vrot.slane %v11448, 5
    %v12761 = vsel %vm2790, %v12759, %v12760
    %v12762 = vrot.slane %v12760, 4
    %v12763 = vrot.slane %v11449, 5
    %v12764 = vsel %vm2790, %v12762, %v12763
    %v12765 = vrot.slane %v12577, 5
    %v12766 = vrot.slane %v12765, 4
    %v12767 = vrot.slane %v11451, 5
    %v12768 = vsel %vm2790, %v12766, %v12767
    %v12769 = vrot.slane %v12767, 4
    %v12770 = vrot.slane %v11452, 5
    %v12771 = vsel %vm2790, %v12769, %v12770
    %v12772 = vrot.slane %v12578, 5
    %v12773 = vrot.slane %v12772, 4
    %v12774 = vrot.slane %v11454, 5
    %v12775 = vsel %vm2790, %v12773, %v12774
    %v12776 = vrot.slane %v12774, 4
    %v12777 = vrot.slane %v11455, 5
    %v12778 = vsel %vm2790, %v12776, %v12777
    %v12779 = vrot.slane %v12579, 5
    %v12780 = vrot.slane %v12779, 4
    %v12781 = vrot.slane %v11457, 5
    %v12782 = vsel %vm2790, %v12780, %v12781
    %v12783 = vrot.slane %v12781, 4
    %v12784 = vrot.slane %v11458, 5
    %v12785 = vsel %vm2790, %v12783, %v12784
    %v12786 = vrot.slane %v12580, 5
    %v12787 = vrot.slane %v12786, 4
    %v12788 = vrot.slane %v11460, 5
    %v12789 = vsel %vm2790, %v12787, %v12788
    %v12790 = vrot.slane %v12788, 4
    %v12791 = vrot.slane %v11461, 5
    %v12792 = vsel %vm2790, %v12790, %v12791
    %v12793 = vrot.slane %v12581, 5
    %v12794 = vrot.slane %v12793, 4
    %v12795 = vrot.slane %v11463, 5
    %v12796 = vsel %vm2790, %v12794, %v12795
    %v12797 = vrot.slane %v12795, 4
    %v12798 = vrot.slane %v11464, 5
    %v12799 = vsel %vm2790, %v12797, %v12798
    %v12800 = vrot.slane %v12582, 5
    %v12801 = vrot.slane %v12800, 4
    %v12802 = vrot.slane %v11466, 5
    %v12803 = vsel %vm2790, %v12801, %v12802
    %v12804 = vrot.slane %v12802, 4
    %v12805 = vrot.slane %v11467, 5
    %v12806 = vsel %vm2790, %v12804, %v12805
    %v12807 = vrot.slane %v12583, 5
    %v12808 = vrot.slane %v12807, 4
    %v12809 = vrot.slane %v11469, 5
    %v12810 = vsel %vm2790, %v12808, %v12809
    %v12811 = vrot.slane %v12809, 4
    %v12812 = vrot.slane %v11470, 5
    %v12813 = vsel %vm2790, %v12811, %v12812
    %v12814 = vrot.slane %v12584, 5
    %v12815 = vrot.slane %v12814, 4
    %v12816 = vrot.slane %v11472, 5
    %v12817 = vsel %vm2790, %v12815, %v12816
    %v12818 = vrot.slane %v12816, 4
    %v12819 = vrot.slane %v11473, 5
    %v12820 = vsel %vm2790, %v12818, %v12819
    %v12821 = vrot.slane %v12585, 5
    %v12822 = vrot.slane %v12821, 4
    %v12823 = vrot.slane %v11475, 5
    %v12824 = vsel %vm2790, %v12822, %v12823
    %v12825 = vrot.slane %v12823, 4
    %v12826 = vrot.slane %v11476, 5
    %v12827 = vsel %vm2790, %v12825, %v12826
    %v12828 = vrot.slane %v12586, 5
    %v12829 = vrot.slane %v12828, 4
    %v12830 = vrot.slane %v11478, 5
    %v12831 = vsel %vm2790, %v12829, %v12830
    %v12832 = vrot.slane %v12830, 4
    %v12833 = vrot.slane %v11479, 5
    %v12834 = vsel %vm2790, %v12832, %v12833
    %v12835 = vrot.slane %v12587, 5
    %v12836 = vrot.slane %v12835, 4
    %v12837 = vrot.slane %v11481, 5
    %v12838 = vsel %vm2790, %v12836, %v12837
    %v12839 = vrot.slane %v12837, 4
    %v12840 = vrot.slane %v11482, 5
    %v12841 = vsel %vm2790, %v12839, %v12840
    %v12842 = vrot.slane %v12588, 5
    %v12843 = vrot.slane %v12842, 4
    %v12844 = vrot.slane %v11484, 5
    %v12845 = vsel %vm2790, %v12843, %v12844
    %v12846 = vrot.slane %v12844, 4
    %v12847 = vrot.slane %v11485, 5
    %v12848 = vsel %vm2790, %v12846, %v12847
    %v12849 = vrot.slane %v12589, 5
    %v12850 = vrot.slane %v12849, 4
    %v12851 = vrot.slane %v11487, 5
    %v12852 = vsel %vm2790, %v12850, %v12851
    %v12853 = vrot.slane %v12851, 4
    %v12854 = vrot.slane %v11488, 5
    %v12855 = vsel %vm2790, %v12853, %v12854
    %v12856 = vrot.slane %v12590, 5
    %v12857 = vrot.slane %v12856, 4
    %v12858 = vrot.slane %v11490, 5
    %v12859 = vsel %vm2790, %v12857, %v12858
    %v12860 = vrot.slane %v12858, 4
    %v12861 = vrot.slane %v11491, 5
    %v12862 = vsel %vm2790, %v12860, %v12861
    %v12863 = vrot.slane %v12591, 5
    %v12864 = vrot.slane %v12863, 4
    %v12865 = vrot.slane %v11493, 5
    %v12866 = vsel %vm2790, %v12864, %v12865
    %v12867 = vrot.slane %v12865, 4
    %v12868 = vrot.slane %v11494, 5
    %v12869 = vsel %vm2790, %v12867, %v12868
    %v12870 = vrot.slane %v12592, 5
    %v12871 = vrot.slane %v12870, 4
    %v12872 = vrot.slane %v11496, 5
    %v12873 = vsel %vm2790, %v12871, %v12872
    %v12874 = vrot.slane %v12872, 4
    %v12875 = vrot.slane %v11497, 5
    %v12876 = vsel %vm2790, %v12874, %v12875
    %v12877 = vrot.slane %v12593, 5
    %v12878 = vrot.slane %v12877, 4
    %v12879 = vrot.slane %v11499, 5
    %v12880 = vsel %vm2790, %v12878, %v12879
    %v12881 = vrot.slane %v12879, 4
    %v12882 = vrot.slane %v11500, 5
    %v12883 = vsel %vm2790, %v12881, %v12882
    %v12884 = vrot.slane %v12594, 5
    %v12885 = vrot.slane %v12884, 4
    %v12886 = vrot.slane %v11502, 5
    %v12887 = vsel %vm2790, %v12885, %v12886
    %v12888 = vrot.slane %v12886, 4
    %v12889 = vrot.slane %v11503, 5
    %v12890 = vsel %vm2790, %v12888, %v12889
    %v12891 = vrot.slane %v12595, 5
    %v12892 = vrot.slane %v12891, 4
    %v12893 = vrot.slane %v11505, 5
    %v12894 = vsel %vm2790, %v12892, %v12893
    %v12895 = vrot.slane %v12893, 4
    %v12896 = vrot.slane %v11506, 5
    %v12897 = vsel %vm2790, %v12895, %v12896
    %v12898 = vrot.slane %v12596, 5
    %v12899 = vrot.slane %v12898, 4
    %v12900 = vrot.slane %v11508, 5
    %v12901 = vsel %vm2790, %v12899, %v12900
    %v12902 = vrot.slane %v12900, 4
    %v12903 = vrot.slane %v11509, 5
    %v12904 = vsel %vm2790, %v12902, %v12903
    %v12905 = vrot.slane %v12597, 5
    %v12906 = vrot.slane %v12905, 4
    %v12907 = vrot.slane %v11511, 5
    %v12908 = vsel %vm2790, %v12906, %v12907
    %v12909 = vrot.slane %v12907, 4
    %v12910 = vrot.slane %v11512, 5
    %v12911 = vsel %vm2790, %v12909, %v12910
    %v12912 = vrot.slane %v12598, 5
    %v12913 = vrot.slane %v12912, 4
    %v12914 = vrot.slane %v11514, 5
    %v12915 = vsel %vm2790, %v12913, %v12914
    %v12916 = vrot.slane %v12914, 4
    %v12917 = vrot.slane %v11515, 5
    %v12918 = vsel %vm2790, %v12916, %v12917
    %12919 = vrot.lane.b32.xlu0 %v9784, 88
    %v12920 = vpop.permute.xlu0 %12919
    %v12921 = vunpack.c.l.b16 %v12698
    %v12922 = vunpack.c.l.b16 %v12701
    %v12923 = vunpack.c.l.b16 %v12705
    %v12924 = vunpack.c.l.b16 %v12708
    %v12925 = vunpack.c.l.b16 %v12712
    %v12926 = vunpack.c.l.b16 %v12715
    %v12927 = vunpack.c.l.b16 %v12719
    %v12928 = vunpack.c.l.b16 %v12722
    %v12929 = vunpack.c.l.b16 %v12726
    %v12930 = vunpack.c.l.b16 %v12729
    %v12931 = vunpack.c.l.b16 %v12733
    %v12932 = vunpack.c.l.b16 %v12736
    %v12933 = vunpack.c.l.b16 %v12740
    %v12934 = vunpack.c.l.b16 %v12743
    %v12935 = vunpack.c.l.b16 %v12747
    %v12936 = vunpack.c.l.b16 %v12750
    %v12937 = vunpack.c.l.b16 %v12754
    %v12938 = vunpack.c.l.b16 %v12757
    %v12939 = vunpack.c.l.b16 %v12761
    %v12940 = vunpack.c.l.b16 %v12764
    %v12941 = vunpack.c.l.b16 %v12768
    %v12942 = vunpack.c.l.b16 %v12771
    %v12943 = vunpack.c.l.b16 %v12775
    %v12944 = vunpack.c.l.b16 %v12778
    %v12945 = vunpack.c.l.b16 %v12782
    %v12946 = vunpack.c.l.b16 %v12785
    %v12947 = vunpack.c.l.b16 %v12789
    %v12948 = vunpack.c.l.b16 %v12792
    %v12949 = vunpack.c.l.b16 %v12796
    %v12950 = vunpack.c.l.b16 %v12799
    %v12951 = vunpack.c.l.b16 %v12803
    %v12952 = vunpack.c.l.b16 %v12806
    %v12953 = vunpack.c.l.b16 %v12810
    %v12954 = vunpack.c.l.b16 %v12813
    %v12955 = vunpack.c.l.b16 %v12817
    %v12956 = vunpack.c.l.b16 %v12820
    %v12957 = vunpack.c.l.b16 %v12824
    %v12958 = vunpack.c.l.b16 %v12827
    %v12959 = vunpack.c.l.b16 %v12831
    %v12960 = vunpack.c.l.b16 %v12834
    %v12961 = vunpack.c.l.b16 %v12838
    %v12962 = vunpack.c.l.b16 %v12841
    %v12963 = vunpack.c.l.b16 %v12845
    %v12964 = vunpack.c.l.b16 %v12848
    %v12965 = vunpack.c.l.b16 %v12852
    %v12966 = vunpack.c.l.b16 %v12855
    %v12967 = vunpack.c.l.b16 %v12859
    %v12968 = vunpack.c.l.b16 %v12862
    %v12969 = vunpack.c.l.b16 %v12866
    %v12970 = vunpack.c.l.b16 %v12869
    %v12971 = vunpack.c.l.b16 %v12873
    %v12972 = vunpack.c.l.b16 %v12876
    %v12973 = vunpack.c.l.b16 %v12880
    %v12974 = vunpack.c.l.b16 %v12883
    %v12975 = vunpack.c.l.b16 %v12887
    %v12976 = vunpack.c.l.b16 %v12890
    %v12977 = vunpack.c.l.b16 %v12894
    %v12978 = vunpack.c.l.b16 %v12897
    %v12979 = vunpack.c.l.b16 %v12901
    %v12980 = vunpack.c.l.b16 %v12904
    %v12981 = vunpack.c.l.b16 %v12908
    %v12982 = vunpack.c.l.b16 %v12911
    %v12983 = vunpack.c.l.b16 %v12915
    %v12984 = vunpack.c.l.b16 %v12918
    %v12985 = vpack.c.b16 %v12922, %v12921
    %v12986 = vpack.c.b16 %v12924, %v12923
    %v12987 = vpack.c.b16 %v12926, %v12925
    %v12988 = vpack.c.b16 %v12928, %v12927
    %v12989 = vpack.c.b16 %v12930, %v12929
    %v12990 = vpack.c.b16 %v12932, %v12931
    %v12991 = vpack.c.b16 %v12934, %v12933
    %v12992 = vpack.c.b16 %v12936, %v12935
    %v12993 = vpack.c.b16 %v12938, %v12937
    %v12994 = vpack.c.b16 %v12940, %v12939
    %v12995 = vpack.c.b16 %v12942, %v12941
    %v12996 = vpack.c.b16 %v12944, %v12943
    %v12997 = vpack.c.b16 %v12946, %v12945
    %v12998 = vpack.c.b16 %v12948, %v12947
    %v12999 = vpack.c.b16 %v12950, %v12949
    %v13000 = vpack.c.b16 %v12952, %v12951
    %v13001 = vpack.c.b16 %v12954, %v12953
    %v13002 = vpack.c.b16 %v12956, %v12955
    %v13003 = vpack.c.b16 %v12958, %v12957
    %v13004 = vpack.c.b16 %v12960, %v12959
    %v13005 = vpack.c.b16 %v12962, %v12961
    %v13006 = vpack.c.b16 %v12964, %v12963
    %v13007 = vpack.c.b16 %v12966, %v12965
    %v13008 = vpack.c.b16 %v12968, %v12967
    %v13009 = vpack.c.b16 %v12970, %v12969
    %v13010 = vpack.c.b16 %v12972, %v12971
    %v13011 = vpack.c.b16 %v12974, %v12973
    %v13012 = vpack.c.b16 %v12976, %v12975
    %v13013 = vpack.c.b16 %v12978, %v12977
    %v13014 = vpack.c.b16 %v12980, %v12979
    %v13015 = vpack.c.b16 %v12982, %v12981
    %v13016 = vpack.c.b16 %v12984, %v12983
    %v13018 = vsel %vm9883, %v12920, 0
    %v13021 = vsel %vm9883, %v12985, 0
    %v13024 = vsel %vm9883, %v12986, 0
    %v13027 = vsel %vm9883, %v12987, 0
    %v13030 = vsel %vm9883, %v12988, 0
    %v13033 = vsel %vm9883, %v12989, 0
    %v13036 = vsel %vm9883, %v12990, 0
    %v13039 = vsel %vm9883, %v12991, 0
    %v13042 = vsel %vm9883, %v12992, 0
    %v13045 = vsel %vm9883, %v12993, 0
    %v13048 = vsel %vm9883, %v12994, 0
    %v13051 = vsel %vm9883, %v12995, 0
    %v13054 = vsel %vm9883, %v12996, 0
    %v13057 = vsel %vm9883, %v12997, 0
    %v13060 = vsel %vm9883, %v12998, 0
    %v13063 = vsel %vm9883, %v12999, 0
    %v13066 = vsel %vm9883, %v13000, 0
    %v13069 = vsel %vm9883, %v13001, 0
    %v13072 = vsel %vm9883, %v13002, 0
    %v13075 = vsel %vm9883, %v13003, 0
    %v13078 = vsel %vm9883, %v13004, 0
    %v13081 = vsel %vm9883, %v13005, 0
    %v13084 = vsel %vm9883, %v13006, 0
    %v13087 = vsel %vm9883, %v13007, 0
    %v13090 = vsel %vm9883, %v13008, 0
    %v13093 = vsel %vm9883, %v13009, 0
    %v13096 = vsel %vm9883, %v13010, 0
    %v13099 = vsel %vm9883, %v13011, 0
    %v13102 = vsel %vm9883, %v13012, 0
    %v13105 = vsel %vm9883, %v13013, 0
    %v13108 = vsel %vm9883, %v13014, 0
    %v13111 = vsel %vm9883, %v13015, 0
    %v13114 = vsel %vm9883, %v13016, 0
    %13116 = vmatprep.subr.bf16.mxu0 0
    %13117 = vmatpush1.bf16.xpose.msra.mxu0 %v13021
    %13118 = vmatprep.subr.bf16.mxu0 0
    %13119 = vmatpush1.bf16.xpose.msra.mxu0 %v13024
    %13120 = vmatprep.subr.bf16.mxu0 0
    %13121 = vmatpush1.bf16.xpose.msra.mxu0 %v13027
    %13122 = vmatprep.subr.bf16.mxu0 0
    %13123 = vmatpush1.bf16.xpose.msra.mxu0 %v13030
    %13124 = vmatprep.subr.bf16.mxu0 0
    %13125 = vmatpush1.bf16.xpose.msra.mxu0 %v13033
    %13126 = vmatprep.subr.bf16.mxu0 0
    %13127 = vmatpush1.bf16.xpose.msra.mxu0 %v13036
    %13128 = vmatprep.subr.bf16.mxu0 0
    %13129 = vmatpush1.bf16.xpose.msra.mxu0 %v13039
    %13130 = vmatprep.subr.bf16.mxu0 0
    %13131 = vmatpush1.bf16.xpose.msra.mxu0 %v13042
    %13132 = vmatprep.subr.bf16.mxu0 0
    %13133 = vmatpush1.bf16.xpose.msra.mxu0 %v13045
    %13134 = vmatprep.subr.bf16.mxu0 0
    %13135 = vmatpush1.bf16.xpose.msra.mxu0 %v13048
    %13136 = vmatprep.subr.bf16.mxu0 0
    %13137 = vmatpush1.bf16.xpose.msra.mxu0 %v13051
    %13138 = vmatprep.subr.bf16.mxu0 0
    %13139 = vmatpush1.bf16.xpose.msra.mxu0 %v13054
    %13140 = vmatprep.subr.bf16.mxu0 0
    %13141 = vmatpush1.bf16.xpose.msra.mxu0 %v13057
    %13142 = vmatprep.subr.bf16.mxu0 0
    %13143 = vmatpush1.bf16.xpose.msra.mxu0 %v13060
    %13144 = vmatprep.subr.bf16.mxu0 0
    %13145 = vmatpush1.bf16.xpose.msra.mxu0 %v13063
    %13146 = vmatprep.subr.bf16.mxu0 0
    %13147 = vmatpush1.bf16.xpose.msra.mxu0 %v13066
    %13148 = vmatprep.mubr.bf16.mxu0 0
    %13149 = vmatmul.mubr.bf16.gmra.mrb[0].mxu0 %v13018
    %v13150 = vpop.f32.mrb[0].mxu0
    %v13151 = vadd.f32 0.0, %v13150
    %v13152 = vpop.f32.mrb[0].mxu0
    %v13153 = vadd.f32 0.0, %v13152
    %v13154 = vpop.f32.mrb[0].mxu0
    %v13155 = vpop.f32.mrb[0].mxu0
    %13156 = vdwg.mxu0
    %13157 = vmatprep.subr.bf16.mxu0 0
    %13158 = vmatpush1.bf16.xpose.msra.mxu0 %v13069
    %13159 = vmatprep.subr.bf16.mxu0 0
    %13160 = vmatpush1.bf16.xpose.msra.mxu0 %v13072
    %13161 = vmatprep.subr.bf16.mxu0 0
    %13162 = vmatpush1.bf16.xpose.msra.mxu0 %v13075
    %13163 = vmatprep.subr.bf16.mxu0 0
    %13164 = vmatpush1.bf16.xpose.msra.mxu0 %v13078
    %13165 = vmatprep.subr.bf16.mxu0 0
    %13166 = vmatpush1.bf16.xpose.msra.mxu0 %v13081
    %13167 = vmatprep.subr.bf16.mxu0 0
    %13168 = vmatpush1.bf16.xpose.msra.mxu0 %v13084
    %13169 = vmatprep.subr.bf16.mxu0 0
    %13170 = vmatpush1.bf16.xpose.msra.mxu0 %v13087
    %13171 = vmatprep.subr.bf16.mxu0 0
    %13172 = vmatpush1.bf16.xpose.msra.mxu0 %v13090
    %13173 = vmatprep.subr.bf16.mxu0 0
    %13174 = vmatpush1.bf16.xpose.msra.mxu0 %v13093
    %13175 = vmatprep.subr.bf16.mxu0 0
    %13176 = vmatpush1.bf16.xpose.msra.mxu0 %v13096
    %13177 = vmatprep.subr.bf16.mxu0 0
    %13178 = vmatpush1.bf16.xpose.msra.mxu0 %v13099
    %13179 = vmatprep.subr.bf16.mxu0 0
    %13180 = vmatpush1.bf16.xpose.msra.mxu0 %v13102
    %13181 = vmatprep.subr.bf16.mxu0 0
    %13182 = vmatpush1.bf16.xpose.msra.mxu0 %v13105
    %13183 = vmatprep.subr.bf16.mxu0 0
    %13184 = vmatpush1.bf16.xpose.msra.mxu0 %v13108
    %13185 = vmatprep.subr.bf16.mxu0 0
    %13186 = vmatpush1.bf16.xpose.msra.mxu0 %v13111
    %13187 = vmatprep.subr.bf16.mxu0 0
    %13188 = vmatpush1.bf16.xpose.msra.mxu0 %v13114
    %13189 = vmatprep.mubr.bf16.mxu0 0
    %13190 = vmatmul.mubr.bf16.gmra.mrb[0].mxu0 %v13018
    %v13191 = vpop.f32.mrb[0].mxu0
    %v13192 = vadd.f32 0.0, %v13191
    %v13193 = vpop.f32.mrb[0].mxu0
    %v13194 = vadd.f32 0.0, %v13193
    %v13195 = vpop.f32.mrb[0].mxu0
    %v13196 = vpop.f32.mrb[0].mxu0
    %13197 = vdwg.mxu0
    %v13198 = vadd.f32 %v12563, %v13151
    %v13199 = vadd.f32 %v12564, %v13153
    %v13200 = vadd.f32 %v12565, %v13192
    %v13201 = vadd.f32 %v12566, %v13194
    %v13202 = vld [vmem:[%s5491] sm:$0xf]
    %v13203 = vld [vmem:[%s5491 + $0x4] sm:$0xf]
    %v13204 = vld [vmem:[%s5491 + $0xc] sm:$0xf]
    %v13205 = vld [vmem:[%s5491 + $0x10] sm:$0xf]
    %v13206 = vld [vmem:[%s5491 + $0x18] sm:$0xf]
    %v13207 = vld [vmem:[%s5491 + $0x1c] sm:$0xf]
    %v13208 = vld [vmem:[%s5491 + $0x24] sm:$0xf]
    %v13209 = vld [vmem:[%s5491 + $0x28] sm:$0xf]
    %v13210 = vld [vmem:[%s5491 + $0x30] sm:$0xf]
    %v13211 = vld [vmem:[%s5491 + $0x34] sm:$0xf]
    %v13212 = vld [vmem:[%s5491 + $0x3c] sm:$0xf]
    %v13213 = vld [vmem:[%s5491 + $0x40] sm:$0xf]
    %v13214 = vld [vmem:[%s5491 + $0x48] sm:$0xf]
    %v13215 = vld [vmem:[%s5491 + $0x4c] sm:$0xf]
    %v13216 = vld [vmem:[%s5491 + $0x54] sm:$0xf]
    %v13217 = vld [vmem:[%s5491 + $0x58] sm:$0xf]
    %v13218 = vld [vmem:[%s5491 + $0x60] sm:$0xf]
    %v13219 = vld [vmem:[%s5491 + $0x64] sm:$0xf]
    %v13220 = vld [vmem:[%s5491 + $0x6c] sm:$0xf]
    %v13221 = vld [vmem:[%s5491 + $0x70] sm:$0xf]
    %v13222 = vld [vmem:[%s5491 + $0x78] sm:$0xf]
    %v13223 = vld [vmem:[%s5491 + $0x7c] sm:$0xf]
    %v13224 = vld [vmem:[%s5491 + $0x84] sm:$0xf]
    %v13225 = vld [vmem:[%s5491 + $0x88] sm:$0xf]
    %v13226 = vld [vmem:[%s5491 + $0x90] sm:$0xf]
    %v13227 = vld [vmem:[%s5491 + $0x94] sm:$0xf]
    %v13228 = vld [vmem:[%s5491 + $0x9c] sm:$0xf]
    %v13229 = vld [vmem:[%s5491 + $0xa0] sm:$0xf]
    %v13230 = vld [vmem:[%s5491 + $0xa8] sm:$0xf]
    %v13231 = vld [vmem:[%s5491 + $0xac] sm:$0xf]
    %v13232 = vld [vmem:[%s5491 + $0xb4] sm:$0xf]
    %v13233 = vld [vmem:[%s5491 + $0xb8] sm:$0xf]
    %v13234 = vld [vmem:[%s5491 + $0xd8] sm:$0xf]
    %v13235 = vld [vmem:[%s5491 + $0xdc] sm:$0xf]
    %v13236 = vld [vmem:[%s5491 + $0xe4] sm:$0xf]
    %v13237 = vld [vmem:[%s5491 + $0xe8] sm:$0xf]
    %v13238 = vld [vmem:[%s5491 + $0xf0] sm:$0xf]
    %v13239 = vld [vmem:[%s5491 + $0xf4] sm:$0xf]
    %v13240 = vld [vmem:[%s5491 + $0xfc] sm:$0xf]
    %v13241 = vld [vmem:[%s5491 + $0x100] sm:$0xf]
    %v13242 = vld [vmem:[%s5491 + $0x108] sm:$0xf]
    %v13243 = vld [vmem:[%s5491 + $0x10c] sm:$0xf]
    %v13244 = vld [vmem:[%s5491 + $0x114] sm:$0xf]
    %v13245 = vld [vmem:[%s5491 + $0x118] sm:$0xf]
    %v13246 = vld [vmem:[%s5491 + $0x120] sm:$0xf]
    %v13247 = vld [vmem:[%s5491 + $0x124] sm:$0xf]
    %v13248 = vld [vmem:[%s5491 + $0x12c] sm:$0xf]
    %v13249 = vld [vmem:[%s5491 + $0x130] sm:$0xf]
    %v13250 = vld [vmem:[%s5491 + $0x138] sm:$0xf]
    %v13251 = vld [vmem:[%s5491 + $0x13c] sm:$0xf]
    %v13252 = vld [vmem:[%s5491 + $0x144] sm:$0xf]
    %v13253 = vld [vmem:[%s5491 + $0x148] sm:$0xf]
    %v13254 = vld [vmem:[%s5491 + $0x150] sm:$0xf]
    %v13255 = vld [vmem:[%s5491 + $0x154] sm:$0xf]
    %v13256 = vld [vmem:[%s5491 + $0x15c] sm:$0xf]
    %v13257 = vld [vmem:[%s5491 + $0x160] sm:$0xf]
    %v13258 = vld [vmem:[%s5491 + $0x168] sm:$0xf]
    %v13259 = vld [vmem:[%s5491 + $0x16c] sm:$0xf]
    %v13260 = vld [vmem:[%s5491 + $0x174] sm:$0xf]
    %v13261 = vld [vmem:[%s5491 + $0x178] sm:$0xf]
    %v13262 = vld [vmem:[%s5491 + $0x180] sm:$0xf]
    %v13263 = vld [vmem:[%s5491 + $0x184] sm:$0xf]
    %v13264 = vld [vmem:[%s5491 + $0x18c] sm:$0xf]
    %v13265 = vld [vmem:[%s5491 + $0x190] sm:$0xf]
    %13266 = vrot.lane.b32.xlu0 %v9784, 80
    %v13267 = vpop.permute.xlu0 %13266
    %v13332 = vunpack.c.l.b16 %v13202
    %v13333 = vunpack.c.l.b16 %v13203
    %v13334 = vunpack.c.l.b16 %v13204
    %v13335 = vunpack.c.l.b16 %v13205
    %v13336 = vunpack.c.l.b16 %v13206
    %v13337 = vunpack.c.l.b16 %v13207
    %v13338 = vunpack.c.l.b16 %v13208
    %v13339 = vunpack.c.l.b16 %v13209
    %v13340 = vunpack.c.l.b16 %v13210
    %v13341 = vunpack.c.l.b16 %v13211
    %v13342 = vunpack.c.l.b16 %v13212
    %v13343 = vunpack.c.l.b16 %v13213
    %v13344 = vunpack.c.l.b16 %v13214
    %v13345 = vunpack.c.l.b16 %v13215
    %v13346 = vunpack.c.l.b16 %v13216
    %v13347 = vunpack.c.l.b16 %v13217
    %v13348 = vunpack.c.l.b16 %v13218
    %v13349 = vunpack.c.l.b16 %v13219
    %v13350 = vunpack.c.l.b16 %v13220
    %v13351 = vunpack.c.l.b16 %v13221
    %v13352 = vunpack.c.l.b16 %v13222
    %v13353 = vunpack.c.l.b16 %v13223
    %v13354 = vunpack.c.l.b16 %v13224
    %v13355 = vunpack.c.l.b16 %v13225
    %v13356 = vunpack.c.l.b16 %v13226
    %v13357 = vunpack.c.l.b16 %v13227
    %v13358 = vunpack.c.l.b16 %v13228
    %v13359 = vunpack.c.l.b16 %v13229
    %v13360 = vunpack.c.l.b16 %v13230
    %v13361 = vunpack.c.l.b16 %v13231
    %v13362 = vunpack.c.l.b16 %v13232
    %v13363 = vunpack.c.l.b16 %v13233
    %v13364 = vunpack.c.l.b16 %v13234
    %v13365 = vunpack.c.l.b16 %v13235
    %v13366 = vunpack.c.l.b16 %v13236
    %v13367 = vunpack.c.l.b16 %v13237
    %v13368 = vunpack.c.l.b16 %v13238
    %v13369 = vunpack.c.l.b16 %v13239
    %v13370 = vunpack.c.l.b16 %v13240
    %v13371 = vunpack.c.l.b16 %v13241
    %v13372 = vunpack.c.l.b16 %v13242
    %v13373 = vunpack.c.l.b16 %v13243
    %v13374 = vunpack.c.l.b16 %v13244
    %v13375 = vunpack.c.l.b16 %v13245
    %v13376 = vunpack.c.l.b16 %v13246
    %v13377 = vunpack.c.l.b16 %v13247
    %v13378 = vunpack.c.l.b16 %v13248
    %v13379 = vunpack.c.l.b16 %v13249
    %v13380 = vunpack.c.l.b16 %v13250
    %v13381 = vunpack.c.l.b16 %v13251
    %v13382 = vunpack.c.l.b16 %v13252
    %v13383 = vunpack.c.l.b16 %v13253
    %v13384 = vunpack.c.l.b16 %v13254
    %v13385 = vunpack.c.l.b16 %v13255
    %v13386 = vunpack.c.l.b16 %v13256
    %v13387 = vunpack.c.l.b16 %v13257
    %v13388 = vunpack.c.l.b16 %v13258
    %v13389 = vunpack.c.l.b16 %v13259
    %v13390 = vunpack.c.l.b16 %v13260
    %v13391 = vunpack.c.l.b16 %v13261
    %v13392 = vunpack.c.l.b16 %v13262
    %v13393 = vunpack.c.l.b16 %v13263
    %v13394 = vunpack.c.l.b16 %v13264
    %v13395 = vunpack.c.l.b16 %v13265
    %v13396 = vpack.c.b16 %v13333, %v13332
    %v13397 = vpack.c.b16 %v13335, %v13334
    %v13398 = vpack.c.b16 %v13337, %v13336
    %v13399 = vpack.c.b16 %v13339, %v13338
    %v13400 = vpack.c.b16 %v13341, %v13340
    %v13401 = vpack.c.b16 %v13343, %v13342
    %v13402 = vpack.c.b16 %v13345, %v13344
    %v13403 = vpack.c.b16 %v13347, %v13346
    %v13404 = vpack.c.b16 %v13349, %v13348
    %v13405 = vpack.c.b16 %v13351, %v13350
    %v13406 = vpack.c.b16 %v13353, %v13352
    %v13407 = vpack.c.b16 %v13355, %v13354
    %v13408 = vpack.c.b16 %v13357, %v13356
    %v13409 = vpack.c.b16 %v13359, %v13358
    %v13410 = vpack.c.b16 %v13361, %v13360
    %v13411 = vpack.c.b16 %v13363, %v13362
    %v13412 = vpack.c.b16 %v13365, %v13364
    %v13413 = vpack.c.b16 %v13367, %v13366
    %v13414 = vpack.c.b16 %v13369, %v13368
    %v13415 = vpack.c.b16 %v13371, %v13370
    %v13416 = vpack.c.b16 %v13373, %v13372
    %v13417 = vpack.c.b16 %v13375, %v13374
    %v13418 = vpack.c.b16 %v13377, %v13376
    %v13419 = vpack.c.b16 %v13379, %v13378
    %v13420 = vpack.c.b16 %v13381, %v13380
    %v13421 = vpack.c.b16 %v13383, %v13382
    %v13422 = vpack.c.b16 %v13385, %v13384
    %v13423 = vpack.c.b16 %v13387, %v13386
    %v13424 = vpack.c.b16 %v13389, %v13388
    %v13425 = vpack.c.b16 %v13391, %v13390
    %v13426 = vpack.c.b16 %v13393, %v13392
    %v13427 = vpack.c.b16 %v13395, %v13394
    %v13429 = vsel %vm9883, %v13267, 0
    %v13432 = vsel %vm9883, %v13396, 0
    %v13435 = vsel %vm9883, %v13397, 0
    %v13438 = vsel %vm9883, %v13398, 0
    %v13441 = vsel %vm9883, %v13399, 0
    %v13444 = vsel %vm9883, %v13400, 0
    %v13447 = vsel %vm9883, %v13401, 0
    %v13450 = vsel %vm9883, %v13402, 0
    %v13453 = vsel %vm9883, %v13403, 0
    %v13456 = vsel %vm9883, %v13404, 0
    %v13459 = vsel %vm9883, %v13405, 0
    %v13462 = vsel %vm9883, %v13406, 0
    %v13465 = vsel %vm9883, %v13407, 0
    %v13468 = vsel %vm9883, %v13408, 0
    %v13471 = vsel %vm9883, %v13409, 0
    %v13474 = vsel %vm9883, %v13410, 0
    %v13477 = vsel %vm9883, %v13411, 0
    %v13480 = vsel %vm9883, %v13412, 0
    %v13483 = vsel %vm9883, %v13413, 0
    %v13486 = vsel %vm9883, %v13414, 0
    %v13489 = vsel %vm9883, %v13415, 0
    %v13492 = vsel %vm9883, %v13416, 0
    %v13495 = vsel %vm9883, %v13417, 0
    %v13498 = vsel %vm9883, %v13418, 0
    %v13501 = vsel %vm9883, %v13419, 0
    %v13504 = vsel %vm9883, %v13420, 0
    %v13507 = vsel %vm9883, %v13421, 0
    %v13510 = vsel %vm9883, %v13422, 0
    %v13513 = vsel %vm9883, %v13423, 0
    %v13516 = vsel %vm9883, %v13424, 0
    %v13519 = vsel %vm9883, %v13425, 0
    %v13522 = vsel %vm9883, %v13426, 0
    %v13525 = vsel %vm9883, %v13427, 0
    %13527 = vmatprep.subr.bf16.mxu0 0
    %13528 = vmatpush1.bf16.xpose.msra.mxu0 %v13432
    %13529 = vmatprep.subr.bf16.mxu0 0
    %13530 = vmatpush1.bf16.xpose.msra.mxu0 %v13435
    %13531 = vmatprep.subr.bf16.mxu0 0
    %13532 = vmatpush1.bf16.xpose.msra.mxu0 %v13438
    %13533 = vmatprep.subr.bf16.mxu0 0
    %13534 = vmatpush1.bf16.xpose.msra.mxu0 %v13441
    %13535 = vmatprep.subr.bf16.mxu0 0
    %13536 = vmatpush1.bf16.xpose.msra.mxu0 %v13444
    %13537 = vmatprep.subr.bf16.mxu0 0
    %13538 = vmatpush1.bf16.xpose.msra.mxu0 %v13447
    %13539 = vmatprep.subr.bf16.mxu0 0
    %13540 = vmatpush1.bf16.xpose.msra.mxu0 %v13450
    %13541 = vmatprep.subr.bf16.mxu0 0
    %13542 = vmatpush1.bf16.xpose.msra.mxu0 %v13453
    %13543 = vmatprep.subr.bf16.mxu0 0
    %13544 = vmatpush1.bf16.xpose.msra.mxu0 %v13456
    %13545 = vmatprep.subr.bf16.mxu0 0
    %13546 = vmatpush1.bf16.xpose.msra.mxu0 %v13459
    %13547 = vmatprep.subr.bf16.mxu0 0
    %13548 = vmatpush1.bf16.xpose.msra.mxu0 %v13462
    %13549 = vmatprep.subr.bf16.mxu0 0
    %13550 = vmatpush1.bf16.xpose.msra.mxu0 %v13465
    %13551 = vmatprep.subr.bf16.mxu0 0
    %13552 = vmatpush1.bf16.xpose.msra.mxu0 %v13468
    %13553 = vmatprep.subr.bf16.mxu0 0
    %13554 = vmatpush1.bf16.xpose.msra.mxu0 %v13471
    %13555 = vmatprep.subr.bf16.mxu0 0
    %13556 = vmatpush1.bf16.xpose.msra.mxu0 %v13474
    %13557 = vmatprep.subr.bf16.mxu0 0
    %13558 = vmatpush1.bf16.xpose.msra.mxu0 %v13477
    %13559 = vmatprep.mubr.bf16.mxu0 0
    %13560 = vmatmul.mubr.bf16.gmra.mrb[0].mxu0 %v13429
    %v13561 = vpop.f32.mrb[0].mxu0
    %v13562 = vadd.f32 0.0, %v13561
    %v13563 = vpop.f32.mrb[0].mxu0
    %v13564 = vadd.f32 0.0, %v13563
    %v13565 = vpop.f32.mrb[0].mxu0
    %v13566 = vpop.f32.mrb[0].mxu0
    %13567 = vdwg.mxu0
    %13568 = vmatprep.subr.bf16.mxu0 0
    %13569 = vmatpush1.bf16.xpose.msra.mxu0 %v13480
    %13570 = vmatprep.subr.bf16.mxu0 0
    %13571 = vmatpush1.bf16.xpose.msra.mxu0 %v13483
    %13572 = vmatprep.subr.bf16.mxu0 0
    %13573 = vmatpush1.bf16.xpose.msra.mxu0 %v13486
    %13574 = vmatprep.subr.bf16.mxu0 0
    %13575 = vmatpush1.bf16.xpose.msra.mxu0 %v13489
    %13576 = vmatprep.subr.bf16.mxu0 0
    %13577 = vmatpush1.bf16.xpose.msra.mxu0 %v13492
    %13578 = vmatprep.subr.bf16.mxu0 0
    %13579 = vmatpush1.bf16.xpose.msra.mxu0 %v13495
    %13580 = vmatprep.subr.bf16.mxu0 0
    %13581 = vmatpush1.bf16.xpose.msra.mxu0 %v13498
    %13582 = vmatprep.subr.bf16.mxu0 0
    %13583 = vmatpush1.bf16.xpose.msra.mxu0 %v13501
    %13584 = vmatprep.subr.bf16.mxu0 0
    %13585 = vmatpush1.bf16.xpose.msra.mxu0 %v13504
    %13586 = vmatprep.subr.bf16.mxu0 0
    %13587 = vmatpush1.bf16.xpose.msra.mxu0 %v13507
    %13588 = vmatprep.subr.bf16.mxu0 0
    %13589 = vmatpush1.bf16.xpose.msra.mxu0 %v13510
    %13590 = vmatprep.subr.bf16.mxu0 0
    %13591 = vmatpush1.bf16.xpose.msra.mxu0 %v13513
    %13592 = vmatprep.subr.bf16.mxu0 0
    %13593 = vmatpush1.bf16.xpose.msra.mxu0 %v13516
    %13594 = vmatprep.subr.bf16.mxu0 0
    %13595 = vmatpush1.bf16.xpose.msra.mxu0 %v13519
    %13596 = vmatprep.subr.bf16.mxu0 0
    %13597 = vmatpush1.bf16.xpose.msra.mxu0 %v13522
    %13598 = vmatprep.subr.bf16.mxu0 0
    %13599 = vmatpush1.bf16.xpose.msra.mxu0 %v13525
    %13600 = vmatprep.mubr.bf16.mxu0 0
    %13601 = vmatmul.mubr.bf16.gmra.mrb[0].mxu0 %v13429
    %v13602 = vpop.f32.mrb[0].mxu0
    %v13603 = vadd.f32 0.0, %v13602
    %v13604 = vpop.f32.mrb[0].mxu0
    %v13605 = vadd.f32 0.0, %v13604
    %v13606 = vpop.f32.mrb[0].mxu0
    %v13607 = vpop.f32.mrb[0].mxu0
    %13608 = vdwg.mxu0
    %v13609 = vadd.f32 %v13198, %v13562
    %v13610 = vadd.f32 %v13199, %v13564
    %v13611 = vadd.f32 %v13200, %v13603
    %v13612 = vadd.f32 %v13201, %v13605
    %v13613 = vld [vmem:[%s5491] sm:$0xf]
    %v13614 = vld [vmem:[%s5491 + $0x4] sm:$0xf]
    %v13615 = vld [vmem:[%s5491 + $0x8] sm:$0x1]
    %v13616 = vld [vmem:[%s5491 + $0xc] sm:$0xf]
    %v13617 = vld [vmem:[%s5491 + $0x10] sm:$0xf]
    %v13618 = vld [vmem:[%s5491 + $0x14] sm:$0x1]
    %v13619 = vld [vmem:[%s5491 + $0x18] sm:$0xf]
    %v13620 = vld [vmem:[%s5491 + $0x1c] sm:$0xf]
    %v13621 = vld [vmem:[%s5491 + $0x20] sm:$0x1]
    %v13622 = vld [vmem:[%s5491 + $0x24] sm:$0xf]
    %v13623 = vld [vmem:[%s5491 + $0x28] sm:$0xf]
    %v13624 = vld [vmem:[%s5491 + $0x2c] sm:$0x1]
    %v13625 = vld [vmem:[%s5491 + $0x30] sm:$0xf]
    %v13626 = vld [vmem:[%s5491 + $0x34] sm:$0xf]
    %v13627 = vld [vmem:[%s5491 + $0x38] sm:$0x1]
    %v13628 = vld [vmem:[%s5491 + $0x3c] sm:$0xf]
    %v13629 = vld [vmem:[%s5491 + $0x40] sm:$0xf]
    %v13630 = vld [vmem:[%s5491 + $0x44] sm:$0x1]
    %v13631 = vld [vmem:[%s5491 + $0x48] sm:$0xf]
    %v13632 = vld [vmem:[%s5491 + $0x4c] sm:$0xf]
    %v13633 = vld [vmem:[%s5491 + $0x50] sm:$0x1]
    %v13634 = vld [vmem:[%s5491 + $0x54] sm:$0xf]
    %v13635 = vld [vmem:[%s5491 + $0x58] sm:$0xf]
    %v13636 = vld [vmem:[%s5491 + $0x5c] sm:$0x1]
    %v13637 = vld [vmem:[%s5491 + $0x60] sm:$0xf]
    %v13638 = vld [vmem:[%s5491 + $0x64] sm:$0xf]
    %v13639 = vld [vmem:[%s5491 + $0x68] sm:$0x1]
    %v13640 = vld [vmem:[%s5491 + $0x6c] sm:$0xf]
    %v13641 = vld [vmem:[%s5491 + $0x70] sm:$0xf]
    %v13642 = vld [vmem:[%s5491 + $0x74] sm:$0x1]
    %v13643 = vld [vmem:[%s5491 + $0x78] sm:$0xf]
    %v13644 = vld [vmem:[%s5491 + $0x7c] sm:$0xf]
    %v13645 = vld [vmem:[%s5491 + $0x80] sm:$0x1]
    %v13646 = vld [vmem:[%s5491 + $0x84] sm:$0xf]
    %v13647 = vld [vmem:[%s5491 + $0x88] sm:$0xf]
    %v13648 = vld [vmem:[%s5491 + $0x8c] sm:$0x1]
    %v13649 = vld [vmem:[%s5491 + $0x90] sm:$0xf]
    %v13650 = vld [vmem:[%s5491 + $0x94] sm:$0xf]
    %v13651 = vld [vmem:[%s5491 + $0x98] sm:$0x1]
    %v13652 = vld [vmem:[%s5491 + $0x9c] sm:$0xf]
    %v13653 = vld [vmem:[%s5491 + $0xa0] sm:$0xf]
    %v13654 = vld [vmem:[%s5491 + $0xa4] sm:$0x1]
    %v13655 = vld [vmem:[%s5491 + $0xa8] sm:$0xf]
    %v13656 = vld [vmem:[%s5491 + $0xac] sm:$0xf]
    %v13657 = vld [vmem:[%s5491 + $0xb0] sm:$0x1]
    %v13658 = vld [vmem:[%s5491 + $0xb4] sm:$0xf]
    %v13659 = vld [vmem:[%s5491 + $0xb8] sm:$0xf]
    %v13660 = vld [vmem:[%s5491 + $0xbc] sm:$0x1]
    %v13661 = vld [vmem:[%s5491 + $0xd8] sm:$0xf]
    %v13662 = vld [vmem:[%s5491 + $0xdc] sm:$0xf]
    %v13663 = vld [vmem:[%s5491 + $0xe0] sm:$0x1]
    %v13664 = vld [vmem:[%s5491 + $0xe4] sm:$0xf]
    %v13665 = vld [vmem:[%s5491 + $0xe8] sm:$0xf]
    %v13666 = vld [vmem:[%s5491 + $0xec] sm:$0x1]
    %v13667 = vld [vmem:[%s5491 + $0xf0] sm:$0xf]
    %v13668 = vld [vmem:[%s5491 + $0xf4] sm:$0xf]
    %v13669 = vld [vmem:[%s5491 + $0xf8] sm:$0x1]
    %v13670 = vld [vmem:[%s5491 + $0xfc] sm:$0xf]
    %v13671 = vld [vmem:[%s5491 + $0x100] sm:$0xf]
    %v13672 = vld [vmem:[%s5491 + $0x104] sm:$0x1]
    %v13673 = vld [vmem:[%s5491 + $0x108] sm:$0xf]
    %v13674 = vld [vmem:[%s5491 + $0x10c] sm:$0xf]
    %v13675 = vld [vmem:[%s5491 + $0x110] sm:$0x1]
    %v13676 = vld [vmem:[%s5491 + $0x114] sm:$0xf]
    %v13677 = vld [vmem:[%s5491 + $0x118] sm:$0xf]
    %v13678 = vld [vmem:[%s5491 + $0x11c] sm:$0x1]
    %v13679 = vld [vmem:[%s5491 + $0x120] sm:$0xf]
    %v13680 = vld [vmem:[%s5491 + $0x124] sm:$0xf]
    %v13681 = vld [vmem:[%s5491 + $0x128] sm:$0x1]
    %v13682 = vld [vmem:[%s5491 + $0x12c] sm:$0xf]
    %v13683 = vld [vmem:[%s5491 + $0x130] sm:$0xf]
    %v13684 = vld [vmem:[%s5491 + $0x134] sm:$0x1]
    %v13685 = vld [vmem:[%s5491 + $0x138] sm:$0xf]
    %v13686 = vld [vmem:[%s5491 + $0x13c] sm:$0xf]
    %v13687 = vld [vmem:[%s5491 + $0x140] sm:$0x1]
    %v13688 = vld [vmem:[%s5491 + $0x144] sm:$0xf]
    %v13689 = vld [vmem:[%s5491 + $0x148] sm:$0xf]
    %v13690 = vld [vmem:[%s5491 + $0x14c] sm:$0x1]
    %v13691 = vld [vmem:[%s5491 + $0x150] sm:$0xf]
    %v13692 = vld [vmem:[%s5491 + $0x154] sm:$0xf]
    %v13693 = vld [vmem:[%s5491 + $0x158] sm:$0x1]
    %v13694 = vld [vmem:[%s5491 + $0x15c] sm:$0xf]
    %v13695 = vld [vmem:[%s5491 + $0x160] sm:$0xf]
    %v13696 = vld [vmem:[%s5491 + $0x164] sm:$0x1]
    %v13697 = vld [vmem:[%s5491 + $0x168] sm:$0xf]
    %v13698 = vld [vmem:[%s5491 + $0x16c] sm:$0xf]
    %v13699 = vld [vmem:[%s5491 + $0x170] sm:$0x1]
    %v13700 = vld [vmem:[%s5491 + $0x174] sm:$0xf]
    %v13701 = vld [vmem:[%s5491 + $0x178] sm:$0xf]
    %v13702 = vld [vmem:[%s5491 + $0x17c] sm:$0x1]
    %v13703 = vld [vmem:[%s5491 + $0x180] sm:$0xf]
    %v13704 = vld [vmem:[%s5491 + $0x184] sm:$0xf]
    %v13705 = vld [vmem:[%s5491 + $0x188] sm:$0x1]
    %v13706 = vld [vmem:[%s5491 + $0x18c] sm:$0xf]
    %v13707 = vld [vmem:[%s5491 + $0x190] sm:$0xf]
    %v13708 = vld [vmem:[%s5491 + $0x194] sm:$0x1]
    %v13710 = vshrl.u32 %v13613, 16
    %v13712 = vrot.slane %v13710, 4
    %v13713 = vshll.u32 %v13613, 16
    %v13715 = vrot.slane %v13713, 5
    %v13716 = vor.u32 %v13712, %v13715
    %v13717 = vrot.slane %v13716, 4
    %v13719 = vshll.u32 %v13614, 16
    %v13721 = vrot.slane %v13719, 5
    %v13722 = vsel %vm1299, %v13717, %v13721
    %v13723 = vshrl.u32 %v13614, 16
    %v13725 = vrot.slane %v13723, 4
    %v13726 = vor.u32 %v13725, %v13721
    %v13727 = vrot.slane %v13726, 4
    %v13729 = vshll.u32 %v13615, 16
    %v13731 = vrot.slane %v13729, 5
    %v13732 = vsel %vm1299, %v13727, %v13731
    %v13734 = vshrl.u32 %v13616, 16
    %v13736 = vrot.slane %v13734, 4
    %v13737 = vshll.u32 %v13616, 16
    %v13739 = vrot.slane %v13737, 5
    %v13740 = vor.u32 %v13736, %v13739
    %v13741 = vrot.slane %v13740, 4
    %v13743 = vshll.u32 %v13617, 16
    %v13745 = vrot.slane %v13743, 5
    %v13746 = vsel %vm1299, %v13741, %v13745
    %v13747 = vshrl.u32 %v13617, 16
    %v13749 = vrot.slane %v13747, 4
    %v13750 = vor.u32 %v13749, %v13745
    %v13751 = vrot.slane %v13750, 4
    %v13753 = vshll.u32 %v13618, 16
    %v13755 = vrot.slane %v13753, 5
    %v13756 = vsel %vm1299, %v13751, %v13755
    %v13758 = vshrl.u32 %v13619, 16
    %v13760 = vrot.slane %v13758, 4
    %v13761 = vshll.u32 %v13619, 16
    %v13763 = vrot.slane %v13761, 5
    %v13764 = vor.u32 %v13760, %v13763
    %v13765 = vrot.slane %v13764, 4
    %v13767 = vshll.u32 %v13620, 16
    %v13769 = vrot.slane %v13767, 5
    %v13770 = vsel %vm1299, %v13765, %v13769
    %v13771 = vshrl.u32 %v13620, 16
    %v13773 = vrot.slane %v13771, 4
    %v13774 = vor.u32 %v13773, %v13769
    %v13775 = vrot.slane %v13774, 4
    %v13777 = vshll.u32 %v13621, 16
    %v13779 = vrot.slane %v13777, 5
    %v13780 = vsel %vm1299, %v13775, %v13779
    %v13782 = vshrl.u32 %v13622, 16
    %v13784 = vrot.slane %v13782, 4
    %v13785 = vshll.u32 %v13622, 16
    %v13787 = vrot.slane %v13785, 5
    %v13788 = vor.u32 %v13784, %v13787
    %v13789 = vrot.slane %v13788, 4
    %v13791 = vshll.u32 %v13623, 16
    %v13793 = vrot.slane %v13791, 5
    %v13794 = vsel %vm1299, %v13789, %v13793
    %v13795 = vshrl.u32 %v13623, 16
    %v13797 = vrot.slane %v13795, 4
    %v13798 = vor.u32 %v13797, %v13793
    %v13799 = vrot.slane %v13798, 4
    %v13801 = vshll.u32 %v13624, 16
    %v13803 = vrot.slane %v13801, 5
    %v13804 = vsel %vm1299, %v13799, %v13803
    %v13806 = vshrl.u32 %v13625, 16
    %v13808 = vrot.slane %v13806, 4
    %v13809 = vshll.u32 %v13625, 16
    %v13811 = vrot.slane %v13809, 5
    %v13812 = vor.u32 %v13808, %v13811
    %v13813 = vrot.slane %v13812, 4
    %v13815 = vshll.u32 %v13626, 16
    %v13817 = vrot.slane %v13815, 5
    %v13818 = vsel %vm1299, %v13813, %v13817
    %v13819 = vshrl.u32 %v13626, 16
    %v13821 = vrot.slane %v13819, 4
    %v13822 = vor.u32 %v13821, %v13817
    %v13823 = vrot.slane %v13822, 4
    %v13825 = vshll.u32 %v13627, 16
    %v13827 = vrot.slane %v13825, 5
    %v13828 = vsel %vm1299, %v13823, %v13827
    %v13830 = vshrl.u32 %v13628, 16
    %v13832 = vrot.slane %v13830, 4
    %v13833 = vshll.u32 %v13628, 16
    %v13835 = vrot.slane %v13833, 5
    %v13836 = vor.u32 %v13832, %v13835
    %v13837 = vrot.slane %v13836, 4
    %v13839 = vshll.u32 %v13629, 16
    %v13841 = vrot.slane %v13839, 5
    %v13842 = vsel %vm1299, %v13837, %v13841
    %v13843 = vshrl.u32 %v13629, 16
    %v13845 = vrot.slane %v13843, 4
    %v13846 = vor.u32 %v13845, %v13841
    %v13847 = vrot.slane %v13846, 4
    %v13849 = vshll.u32 %v13630, 16
    %v13851 = vrot.slane %v13849, 5
    %v13852 = vsel %vm1299, %v13847, %v13851
    %v13854 = vshrl.u32 %v13631, 16
    %v13856 = vrot.slane %v13854, 4
    %v13857 = vshll.u32 %v13631, 16
    %v13859 = vrot.slane %v13857, 5
    %v13860 = vor.u32 %v13856, %v13859
    %v13861 = vrot.slane %v13860, 4
    %v13863 = vshll.u32 %v13632, 16
    %v13865 = vrot.slane %v13863, 5
    %v13866 = vsel %vm1299, %v13861, %v13865
    %v13867 = vshrl.u32 %v13632, 16
    %v13869 = vrot.slane %v13867, 4
    %v13870 = vor.u32 %v13869, %v13865
    %v13871 = vrot.slane %v13870, 4
    %v13873 = vshll.u32 %v13633, 16
    %v13875 = vrot.slane %v13873, 5
    %v13876 = vsel %vm1299, %v13871, %v13875
    %v13878 = vshrl.u32 %v13634, 16
    %v13880 = vrot.slane %v13878, 4
    %v13881 = vshll.u32 %v13634, 16
    %v13883 = vrot.slane %v13881, 5
    %v13884 = vor.u32 %v13880, %v13883
    %v13885 = vrot.slane %v13884, 4
    %v13887 = vshll.u32 %v13635, 16
    %v13889 = vrot.slane %v13887, 5
    %v13890 = vsel %vm1299, %v13885, %v13889
    %v13891 = vshrl.u32 %v13635, 16
    %v13893 = vrot.slane %v13891, 4
    %v13894 = vor.u32 %v13893, %v13889
    %v13895 = vrot.slane %v13894, 4
    %v13897 = vshll.u32 %v13636, 16
    %v13899 = vrot.slane %v13897, 5
    %v13900 = vsel %vm1299, %v13895, %v13899
    %v13902 = vshrl.u32 %v13637, 16
    %v13904 = vrot.slane %v13902, 4
    %v13905 = vshll.u32 %v13637, 16
    %v13907 = vrot.slane %v13905, 5
    %v13908 = vor.u32 %v13904, %v13907
    %v13909 = vrot.slane %v13908, 4
    %v13911 = vshll.u32 %v13638, 16
    %v13913 = vrot.slane %v13911, 5
    %v13914 = vsel %vm1299, %v13909, %v13913
    %v13915 = vshrl.u32 %v13638, 16
    %v13917 = vrot.slane %v13915, 4
    %v13918 = vor.u32 %v13917, %v13913
    %v13919 = vrot.slane %v13918, 4
    %v13921 = vshll.u32 %v13639, 16
    %v13923 = vrot.slane %v13921, 5
    %v13924 = vsel %vm1299, %v13919, %v13923
    %v13926 = vshrl.u32 %v13640, 16
    %v13928 = vrot.slane %v13926, 4
    %v13929 = vshll.u32 %v13640, 16
    %v13931 = vrot.slane %v13929, 5
    %v13932 = vor.u32 %v13928, %v13931
    %v13933 = vrot.slane %v13932, 4
    %v13935 = vshll.u32 %v13641, 16
    %v13937 = vrot.slane %v13935, 5
    %v13938 = vsel %vm1299, %v13933, %v13937
    %v13939 = vshrl.u32 %v13641, 16
    %v13941 = vrot.slane %v13939, 4
    %v13942 = vor.u32 %v13941, %v13937
    %v13943 = vrot.slane %v13942, 4
    %v13945 = vshll.u32 %v13642, 16
    %v13947 = vrot.slane %v13945, 5
    %v13948 = vsel %vm1299, %v13943, %v13947
    %v13950 = vshrl.u32 %v13643, 16
    %v13952 = vrot.slane %v13950, 4
    %v13953 = vshll.u32 %v13643, 16
    %v13955 = vrot.slane %v13953, 5
    %v13956 = vor.u32 %v13952, %v13955
    %v13957 = vrot.slane %v13956, 4
    %v13959 = vshll.u32 %v13644, 16
    %v13961 = vrot.slane %v13959, 5
    %v13962 = vsel %vm1299, %v13957, %v13961
    %v13963 = vshrl.u32 %v13644, 16
    %v13965 = vrot.slane %v13963, 4
    %v13966 = vor.u32 %v13965, %v13961
    %v13967 = vrot.slane %v13966, 4
    %v13969 = vshll.u32 %v13645, 16
    %v13971 = vrot.slane %v13969, 5
    %v13972 = vsel %vm1299, %v13967, %v13971
    %v13974 = vshrl.u32 %v13646, 16
    %v13976 = vrot.slane %v13974, 4
    %v13977 = vshll.u32 %v13646, 16
    %v13979 = vrot.slane %v13977, 5
    %v13980 = vor.u32 %v13976, %v13979
    %v13981 = vrot.slane %v13980, 4
    %v13983 = vshll.u32 %v13647, 16
    %v13985 = vrot.slane %v13983, 5
    %v13986 = vsel %vm1299, %v13981, %v13985
    %v13987 = vshrl.u32 %v13647, 16
    %v13989 = vrot.slane %v13987, 4
    %v13990 = vor.u32 %v13989, %v13985
    %v13991 = vrot.slane %v13990, 4
    %v13993 = vshll.u32 %v13648, 16
    %v13995 = vrot.slane %v13993, 5
    %v13996 = vsel %vm1299, %v13991, %v13995
    %v13998 = vshrl.u32 %v13649, 16
    %v14000 = vrot.slane %v13998, 4
    %v14001 = vshll.u32 %v13649, 16
    %v14003 = vrot.slane %v14001, 5
    %v14004 = vor.u32 %v14000, %v14003
    %v14005 = vrot.slane %v14004, 4
    %v14007 = vshll.u32 %v13650, 16
    %v14009 = vrot.slane %v14007, 5
    %v14010 = vsel %vm1299, %v14005, %v14009
    %v14011 = vshrl.u32 %v13650, 16
    %v14013 = vrot.slane %v14011, 4
    %v14014 = vor.u32 %v14013, %v14009
    %v14015 = vrot.slane %v14014, 4
    %v14017 = vshll.u32 %v13651, 16
    %v14019 = vrot.slane %v14017, 5
    %v14020 = vsel %vm1299, %v14015, %v14019
    %v14022 = vshrl.u32 %v13652, 16
    %v14024 = vrot.slane %v14022, 4
    %v14025 = vshll.u32 %v13652, 16
    %v14027 = vrot.slane %v14025, 5
    %v14028 = vor.u32 %v14024, %v14027
    %v14029 = vrot.slane %v14028, 4
    %v14031 = vshll.u32 %v13653, 16
    %v14033 = vrot.slane %v14031, 5
    %v14034 = vsel %vm1299, %v14029, %v14033
    %v14035 = vshrl.u32 %v13653, 16
    %v14037 = vrot.slane %v14035, 4
    %v14038 = vor.u32 %v14037, %v14033
    %v14039 = vrot.slane %v14038, 4
    %v14041 = vshll.u32 %v13654, 16
    %v14043 = vrot.slane %v14041, 5
    %v14044 = vsel %vm1299, %v14039, %v14043
    %v14046 = vshrl.u32 %v13655, 16
    %v14048 = vrot.slane %v14046, 4
    %v14049 = vshll.u32 %v13655, 16
    %v14051 = vrot.slane %v14049, 5
    %v14052 = vor.u32 %v14048, %v14051
    %v14053 = vrot.slane %v14052, 4
    %v14055 = vshll.u32 %v13656, 16
    %v14057 = vrot.slane %v14055, 5
    %v14058 = vsel %vm1299, %v14053, %v14057
    %v14059 = vshrl.u32 %v13656, 16
    %v14061 = vrot.slane %v14059, 4
    %v14062 = vor.u32 %v14061, %v14057
    %v14063 = vrot.slane %v14062, 4
    %v14065 = vshll.u32 %v13657, 16
    %v14067 = vrot.slane %v14065, 5
    %v14068 = vsel %vm1299, %v14063, %v14067
    %v14070 = vshrl.u32 %v13658, 16
    %v14072 = vrot.slane %v14070, 4
    %v14073 = vshll.u32 %v13658, 16
    %v14075 = vrot.slane %v14073, 5
    %v14076 = vor.u32 %v14072, %v14075
    %v14077 = vrot.slane %v14076, 4
    %v14079 = vshll.u32 %v13659, 16
    %v14081 = vrot.slane %v14079, 5
    %v14082 = vsel %vm1299, %v14077, %v14081
    %v14083 = vshrl.u32 %v13659, 16
    %v14085 = vrot.slane %v14083, 4
    %v14086 = vor.u32 %v14085, %v14081
    %v14087 = vrot.slane %v14086, 4
    %v14089 = vshll.u32 %v13660, 16
    %v14091 = vrot.slane %v14089, 5
    %v14092 = vsel %vm1299, %v14087, %v14091
    %v14094 = vshrl.u32 %v13661, 16
    %v14096 = vrot.slane %v14094, 4
    %v14097 = vshll.u32 %v13661, 16
    %v14099 = vrot.slane %v14097, 5
    %v14100 = vor.u32 %v14096, %v14099
    %v14101 = vrot.slane %v14100, 4
    %v14103 = vshll.u32 %v13662, 16
    %v14105 = vrot.slane %v14103, 5
    %v14106 = vsel %vm1299, %v14101, %v14105
    %v14107 = vshrl.u32 %v13662, 16
    %v14109 = vrot.slane %v14107, 4
    %v14110 = vor.u32 %v14109, %v14105
    %v14111 = vrot.slane %v14110, 4
    %v14113 = vshll.u32 %v13663, 16
    %v14115 = vrot.slane %v14113, 5
    %v14116 = vsel %vm1299, %v14111, %v14115
    %v14118 = vshrl.u32 %v13664, 16
    %v14120 = vrot.slane %v14118, 4
    %v14121 = vshll.u32 %v13664, 16
    %v14123 = vrot.slane %v14121, 5
    %v14124 = vor.u32 %v14120, %v14123
    %v14125 = vrot.slane %v14124, 4
    %v14127 = vshll.u32 %v13665, 16
    %v14129 = vrot.slane %v14127, 5
    %v14130 = vsel %vm1299, %v14125, %v14129
    %v14131 = vshrl.u32 %v13665, 16
    %v14133 = vrot.slane %v14131, 4
    %v14134 = vor.u32 %v14133, %v14129
    %v14135 = vrot.slane %v14134, 4
    %v14137 = vshll.u32 %v13666, 16
    %v14139 = vrot.slane %v14137, 5
    %v14140 = vsel %vm1299, %v14135, %v14139
    %v14142 = vshrl.u32 %v13667, 16
    %v14144 = vrot.slane %v14142, 4
    %v14145 = vshll.u32 %v13667, 16
    %v14147 = vrot.slane %v14145, 5
    %v14148 = vor.u32 %v14144, %v14147
    %v14149 = vrot.slane %v14148, 4
    %v14151 = vshll.u32 %v13668, 16
    %v14153 = vrot.slane %v14151, 5
    %v14154 = vsel %vm1299, %v14149, %v14153
    %v14155 = vshrl.u32 %v13668, 16
    %v14157 = vrot.slane %v14155, 4
    %v14158 = vor.u32 %v14157, %v14153
    %v14159 = vrot.slane %v14158, 4
    %v14161 = vshll.u32 %v13669, 16
    %v14163 = vrot.slane %v14161, 5
    %v14164 = vsel %vm1299, %v14159, %v14163
    %v14166 = vshrl.u32 %v13670, 16
    %v14168 = vrot.slane %v14166, 4
    %v14169 = vshll.u32 %v13670, 16
    %v14171 = vrot.slane %v14169, 5
    %v14172 = vor.u32 %v14168, %v14171
    %v14173 = vrot.slane %v14172, 4
    %v14175 = vshll.u32 %v13671, 16
    %v14177 = vrot.slane %v14175, 5
    %v14178 = vsel %vm1299, %v14173, %v14177
    %v14179 = vshrl.u32 %v13671, 16
    %v14181 = vrot.slane %v14179, 4
    %v14182 = vor.u32 %v14181, %v14177
    %v14183 = vrot.slane %v14182, 4
    %v14185 = vshll.u32 %v13672, 16
    %v14187 = vrot.slane %v14185, 5
    %v14188 = vsel %vm1299, %v14183, %v14187
    %v14190 = vshrl.u32 %v13673, 16
    %v14192 = vrot.slane %v14190, 4
    %v14193 = vshll.u32 %v13673, 16
    %v14195 = vrot.slane %v14193, 5
    %v14196 = vor.u32 %v14192, %v14195
    %v14197 = vrot.slane %v14196, 4
    %v14199 = vshll.u32 %v13674, 16
    %v14201 = vrot.slane %v14199, 5
    %v14202 = vsel %vm1299, %v14197, %v14201
    %v14203 = vshrl.u32 %v13674, 16
    %v14205 = vrot.slane %v14203, 4
    %v14206 = vor.u32 %v14205, %v14201
    %v14207 = vrot.slane %v14206, 4
    %v14209 = vshll.u32 %v13675, 16
    %v14211 = vrot.slane %v14209, 5
    %v14212 = vsel %vm1299, %v14207, %v14211
    %v14214 = vshrl.u32 %v13676, 16
    %v14216 = vrot.slane %v14214, 4
    %v14217 = vshll.u32 %v13676, 16
    %v14219 = vrot.slane %v14217, 5
    %v14220 = vor.u32 %v14216, %v14219
    %v14221 = vrot.slane %v14220, 4
    %v14223 = vshll.u32 %v13677, 16
    %v14225 = vrot.slane %v14223, 5
    %v14226 = vsel %vm1299, %v14221, %v14225
    %v14227 = vshrl.u32 %v13677, 16
    %v14229 = vrot.slane %v14227, 4
    %v14230 = vor.u32 %v14229, %v14225
    %v14231 = vrot.slane %v14230, 4
    %v14233 = vshll.u32 %v13678, 16
    %v14235 = vrot.slane %v14233, 5
    %v14236 = vsel %vm1299, %v14231, %v14235
    %v14238 = vshrl.u32 %v13679, 16
    %v14240 = vrot.slane %v14238, 4
    %v14241 = vshll.u32 %v13679, 16
    %v14243 = vrot.slane %v14241, 5
    %v14244 = vor.u32 %v14240, %v14243
    %v14245 = vrot.slane %v14244, 4
    %v14247 = vshll.u32 %v13680, 16
    %v14249 = vrot.slane %v14247, 5
    %v14250 = vsel %vm1299, %v14245, %v14249
    %v14251 = vshrl.u32 %v13680, 16
    %v14253 = vrot.slane %v14251, 4
    %v14254 = vor.u32 %v14253, %v14249
    %v14255 = vrot.slane %v14254, 4
    %v14257 = vshll.u32 %v13681, 16
    %v14259 = vrot.slane %v14257, 5
    %v14260 = vsel %vm1299, %v14255, %v14259
    %v14262 = vshrl.u32 %v13682, 16
    %v14264 = vrot.slane %v14262, 4
    %v14265 = vshll.u32 %v13682, 16
    %v14267 = vrot.slane %v14265, 5
    %v14268 = vor.u32 %v14264, %v14267
    %v14269 = vrot.slane %v14268, 4
    %v14271 = vshll.u32 %v13683, 16
    %v14273 = vrot.slane %v14271, 5
    %v14274 = vsel %vm1299, %v14269, %v14273
    %v14275 = vshrl.u32 %v13683, 16
    %v14277 = vrot.slane %v14275, 4
    %v14278 = vor.u32 %v14277, %v14273
    %v14279 = vrot.slane %v14278, 4
    %v14281 = vshll.u32 %v13684, 16
    %v14283 = vrot.slane %v14281, 5
    %v14284 = vsel %vm1299, %v14279, %v14283
    %v14286 = vshrl.u32 %v13685, 16
    %v14288 = vrot.slane %v14286, 4
    %v14289 = vshll.u32 %v13685, 16
    %v14291 = vrot.slane %v14289, 5
    %v14292 = vor.u32 %v14288, %v14291
    %v14293 = vrot.slane %v14292, 4
    %v14295 = vshll.u32 %v13686, 16
    %v14297 = vrot.slane %v14295, 5
    %v14298 = vsel %vm1299, %v14293, %v14297
    %v14299 = vshrl.u32 %v13686, 16
    %v14301 = vrot.slane %v14299, 4
    %v14302 = vor.u32 %v14301, %v14297
    %v14303 = vrot.slane %v14302, 4
    %v14305 = vshll.u32 %v13687, 16
    %v14307 = vrot.slane %v14305, 5
    %v14308 = vsel %vm1299, %v14303, %v14307
    %v14310 = vshrl.u32 %v13688, 16
    %v14312 = vrot.slane %v14310, 4
    %v14313 = vshll.u32 %v13688, 16
    %v14315 = vrot.slane %v14313, 5
    %v14316 = vor.u32 %v14312, %v14315
    %v14317 = vrot.slane %v14316, 4
    %v14319 = vshll.u32 %v13689, 16
    %v14321 = vrot.slane %v14319, 5
    %v14322 = vsel %vm1299, %v14317, %v14321
    %v14323 = vshrl.u32 %v13689, 16
    %v14325 = vrot.slane %v14323, 4
    %v14326 = vor.u32 %v14325, %v14321
    %v14327 = vrot.slane %v14326, 4
    %v14329 = vshll.u32 %v13690, 16
    %v14331 = vrot.slane %v14329, 5
    %v14332 = vsel %vm1299, %v14327, %v14331
    %v14334 = vshrl.u32 %v13691, 16
    %v14336 = vrot.slane %v14334, 4
    %v14337 = vshll.u32 %v13691, 16
    %v14339 = vrot.slane %v14337, 5
    %v14340 = vor.u32 %v14336, %v14339
    %v14341 = vrot.slane %v14340, 4
    %v14343 = vshll.u32 %v13692, 16
    %v14345 = vrot.slane %v14343, 5
    %v14346 = vsel %vm1299, %v14341, %v14345
    %v14347 = vshrl.u32 %v13692, 16
    %v14349 = vrot.slane %v14347, 4
    %v14350 = vor.u32 %v14349, %v14345
    %v14351 = vrot.slane %v14350, 4
    %v14353 = vshll.u32 %v13693, 16
    %v14355 = vrot.slane %v14353, 5
    %v14356 = vsel %vm1299, %v14351, %v14355
    %v14358 = vshrl.u32 %v13694, 16
    %v14360 = vrot.slane %v14358, 4
    %v14361 = vshll.u32 %v13694, 16
    %v14363 = vrot.slane %v14361, 5
    %v14364 = vor.u32 %v14360, %v14363
    %v14365 = vrot.slane %v14364, 4
    %v14367 = vshll.u32 %v13695, 16
    %v14369 = vrot.slane %v14367, 5
    %v14370 = vsel %vm1299, %v14365, %v14369
    %v14371 = vshrl.u32 %v13695, 16
    %v14373 = vrot.slane %v14371, 4
    %v14374 = vor.u32 %v14373, %v14369
    %v14375 = vrot.slane %v14374, 4
    %v14377 = vshll.u32 %v13696, 16
    %v14379 = vrot.slane %v14377, 5
    %v14380 = vsel %vm1299, %v14375, %v14379
    %v14382 = vshrl.u32 %v13697, 16
    %v14384 = vrot.slane %v14382, 4
    %v14385 = vshll.u32 %v13697, 16
    %v14387 = vrot.slane %v14385, 5
    %v14388 = vor.u32 %v14384, %v14387
    %v14389 = vrot.slane %v14388, 4
    %v14391 = vshll.u32 %v13698, 16
    %v14393 = vrot.slane %v14391, 5
    %v14394 = vsel %vm1299, %v14389, %v14393
    %v14395 = vshrl.u32 %v13698, 16
    %v14397 = vrot.slane %v14395, 4
    %v14398 = vor.u32 %v14397, %v14393
    %v14399 = vrot.slane %v14398, 4
    %v14401 = vshll.u32 %v13699, 16
    %v14403 = vrot.slane %v14401, 5
    %v14404 = vsel %vm1299, %v14399, %v14403
    %v14406 = vshrl.u32 %v13700, 16
    %v14408 = vrot.slane %v14406, 4
    %v14409 = vshll.u32 %v13700, 16
    %v14411 = vrot.slane %v14409, 5
    %v14412 = vor.u32 %v14408, %v14411
    %v14413 = vrot.slane %v14412, 4
    %v14415 = vshll.u32 %v13701, 16
    %v14417 = vrot.slane %v14415, 5
    %v14418 = vsel %vm1299, %v14413, %v14417
    %v14419 = vshrl.u32 %v13701, 16
    %v14421 = vrot.slane %v14419, 4
    %v14422 = vor.u32 %v14421, %v14417
    %v14423 = vrot.slane %v14422, 4
    %v14425 = vshll.u32 %v13702, 16
    %v14427 = vrot.slane %v14425, 5
    %v14428 = vsel %vm1299, %v14423, %v14427
    %v14430 = vshrl.u32 %v13703, 16
    %v14432 = vrot.slane %v14430, 4
    %v14433 = vshll.u32 %v13703, 16
    %v14435 = vrot.slane %v14433, 5
    %v14436 = vor.u32 %v14432, %v14435
    %v14437 = vrot.slane %v14436, 4
    %v14439 = vshll.u32 %v13704, 16
    %v14441 = vrot.slane %v14439, 5
    %v14442 = vsel %vm1299, %v14437, %v14441
    %v14443 = vshrl.u32 %v13704, 16
    %v14445 = vrot.slane %v14443, 4
    %v14446 = vor.u32 %v14445, %v14441
    %v14447 = vrot.slane %v14446, 4
    %v14449 = vshll.u32 %v13705, 16
    %v14451 = vrot.slane %v14449, 5
    %v14452 = vsel %vm1299, %v14447, %v14451
    %v14454 = vshrl.u32 %v13706, 16
    %v14456 = vrot.slane %v14454, 4
    %v14457 = vshll.u32 %v13706, 16
    %v14459 = vrot.slane %v14457, 5
    %v14460 = vor.u32 %v14456, %v14459
    %v14461 = vrot.slane %v14460, 4
    %v14463 = vshll.u32 %v13707, 16
    %v14465 = vrot.slane %v14463, 5
    %v14466 = vsel %vm1299, %v14461, %v14465
    %v14467 = vshrl.u32 %v13707, 16
    %v14469 = vrot.slane %v14467, 4
    %v14470 = vor.u32 %v14469, %v14465
    %v14471 = vrot.slane %v14470, 4
    %v14473 = vshll.u32 %v13708, 16
    %v14475 = vrot.slane %v14473, 5
    %v14476 = vsel %vm1299, %v14471, %v14475
    %14477 = vrot.lane.b32.xlu0 %v9784, 72
    %v14478 = vpop.permute.xlu0 %14477
    %v14479 = vunpack.c.l.b16 %v13722
    %v14480 = vunpack.c.l.b16 %v13732
    %v14481 = vunpack.c.l.b16 %v13746
    %v14482 = vunpack.c.l.b16 %v13756
    %v14483 = vunpack.c.l.b16 %v13770
    %v14484 = vunpack.c.l.b16 %v13780
    %v14485 = vunpack.c.l.b16 %v13794
    %v14486 = vunpack.c.l.b16 %v13804
    %v14487 = vunpack.c.l.b16 %v13818
    %v14488 = vunpack.c.l.b16 %v13828
    %v14489 = vunpack.c.l.b16 %v13842
    %v14490 = vunpack.c.l.b16 %v13852
    %v14491 = vunpack.c.l.b16 %v13866
    %v14492 = vunpack.c.l.b16 %v13876
    %v14493 = vunpack.c.l.b16 %v13890
    %v14494 = vunpack.c.l.b16 %v13900
    %v14495 = vunpack.c.l.b16 %v13914
    %v14496 = vunpack.c.l.b16 %v13924
    %v14497 = vunpack.c.l.b16 %v13938
    %v14498 = vunpack.c.l.b16 %v13948
    %v14499 = vunpack.c.l.b16 %v13962
    %v14500 = vunpack.c.l.b16 %v13972
    %v14501 = vunpack.c.l.b16 %v13986
    %v14502 = vunpack.c.l.b16 %v13996
    %v14503 = vunpack.c.l.b16 %v14010
    %v14504 = vunpack.c.l.b16 %v14020
    %v14505 = vunpack.c.l.b16 %v14034
    %v14506 = vunpack.c.l.b16 %v14044
    %v14507 = vunpack.c.l.b16 %v14058
    %v14508 = vunpack.c.l.b16 %v14068
    %v14509 = vunpack.c.l.b16 %v14082
    %v14510 = vunpack.c.l.b16 %v14092
    %v14511 = vunpack.c.l.b16 %v14106
    %v14512 = vunpack.c.l.b16 %v14116
    %v14513 = vunpack.c.l.b16 %v14130
    %v14514 = vunpack.c.l.b16 %v14140
    %v14515 = vunpack.c.l.b16 %v14154
    %v14516 = vunpack.c.l.b16 %v14164
    %v14517 = vunpack.c.l.b16 %v14178
    %v14518 = vunpack.c.l.b16 %v14188
    %v14519 = vunpack.c.l.b16 %v14202
    %v14520 = vunpack.c.l.b16 %v14212
    %v14521 = vunpack.c.l.b16 %v14226
    %v14522 = vunpack.c.l.b16 %v14236
    %v14523 = vunpack.c.l.b16 %v14250
    %v14524 = vunpack.c.l.b16 %v14260
    %v14525 = vunpack.c.l.b16 %v14274
    %v14526 = vunpack.c.l.b16 %v14284
    %v14527 = vunpack.c.l.b16 %v14298
    %v14528 = vunpack.c.l.b16 %v14308
    %v14529 = vunpack.c.l.b16 %v14322
    %v14530 = vunpack.c.l.b16 %v14332
    %v14531 = vunpack.c.l.b16 %v14346
    %v14532 = vunpack.c.l.b16 %v14356
    %v14533 = vunpack.c.l.b16 %v14370
    %v14534 = vunpack.c.l.b16 %v14380
    %v14535 = vunpack.c.l.b16 %v14394
    %v14536 = vunpack.c.l.b16 %v14404
    %v14537 = vunpack.c.l.b16 %v14418
    %v14538 = vunpack.c.l.b16 %v14428
    %v14539 = vunpack.c.l.b16 %v14442
    %v14540 = vunpack.c.l.b16 %v14452
    %v14541 = vunpack.c.l.b16 %v14466
    %v14542 = vunpack.c.l.b16 %v14476
    %v14543 = vpack.c.b16 %v14480, %v14479
    %v14544 = vpack.c.b16 %v14482, %v14481
    %v14545 = vpack.c.b16 %v14484, %v14483
    %v14546 = vpack.c.b16 %v14486, %v14485
    %v14547 = vpack.c.b16 %v14488, %v14487
    %v14548 = vpack.c.b16 %v14490, %v14489
    %v14549 = vpack.c.b16 %v14492, %v14491
    %v14550 = vpack.c.b16 %v14494, %v14493
    %v14551 = vpack.c.b16 %v14496, %v14495
    %v14552 = vpack.c.b16 %v14498, %v14497
    %v14553 = vpack.c.b16 %v14500, %v14499
    %v14554 = vpack.c.b16 %v14502, %v14501
    %v14555 = vpack.c.b16 %v14504, %v14503
    %v14556 = vpack.c.b16 %v14506, %v14505
    %v14557 = vpack.c.b16 %v14508, %v14507
    %v14558 = vpack.c.b16 %v14510, %v14509
    %v14559 = vpack.c.b16 %v14512, %v14511
    %v14560 = vpack.c.b16 %v14514, %v14513
    %v14561 = vpack.c.b16 %v14516, %v14515
    %v14562 = vpack.c.b16 %v14518, %v14517
    %v14563 = vpack.c.b16 %v14520, %v14519
    %v14564 = vpack.c.b16 %v14522, %v14521
    %v14565 = vpack.c.b16 %v14524, %v14523
    %v14566 = vpack.c.b16 %v14526, %v14525
    %v14567 = vpack.c.b16 %v14528, %v14527
    %v14568 = vpack.c.b16 %v14530, %v14529
    %v14569 = vpack.c.b16 %v14532, %v14531
    %v14570 = vpack.c.b16 %v14534, %v14533
    %v14571 = vpack.c.b16 %v14536, %v14535
    %v14572 = vpack.c.b16 %v14538, %v14537
    %v14573 = vpack.c.b16 %v14540, %v14539
    %v14574 = vpack.c.b16 %v14542, %v14541
    %v14576 = vsel %vm9883, %v14478, 0
    %v14579 = vsel %vm9883, %v14543, 0
    %v14582 = vsel %vm9883, %v14544, 0
    %v14585 = vsel %vm9883, %v14545, 0
    %v14588 = vsel %vm9883, %v14546, 0
    %v14591 = vsel %vm9883, %v14547, 0
    %v14594 = vsel %vm9883, %v14548, 0
    %v14597 = vsel %vm9883, %v14549, 0
    %v14600 = vsel %vm9883, %v14550, 0
    %v14603 = vsel %vm9883, %v14551, 0
    %v14606 = vsel %vm9883, %v14552, 0
    %v14609 = vsel %vm9883, %v14553, 0
    %v14612 = vsel %vm9883, %v14554, 0
    %v14615 = vsel %vm9883, %v14555, 0
    %v14618 = vsel %vm9883, %v14556, 0
    %v14621 = vsel %vm9883, %v14557, 0
    %v14624 = vsel %vm9883, %v14558, 0
    %v14627 = vsel %vm9883, %v14559, 0
    %v14630 = vsel %vm9883, %v14560, 0
    %v14633 = vsel %vm9883, %v14561, 0
    %v14636 = vsel %vm9883, %v14562, 0
    %v14639 = vsel %vm9883, %v14563, 0
    %v14642 = vsel %vm9883, %v14564, 0
    %v14645 = vsel %vm9883, %v14565, 0
    %v14648 = vsel %vm9883, %v14566, 0
    %v14651 = vsel %vm9883, %v14567, 0
    %v14654 = vsel %vm9883, %v14568, 0
    %v14657 = vsel %vm9883, %v14569, 0
    %v14660 = vsel %vm9883, %v14570, 0
    %v14663 = vsel %vm9883, %v14571, 0
    %v14666 = vsel %vm9883, %v14572, 0
    %v14669 = vsel %vm9883, %v14573, 0
    %v14672 = vsel %vm9883, %v14574, 0
    %14674 = vmatprep.subr.bf16.mxu0 0
    %14675 = vmatpush1.bf16.xpose.msra.mxu0 %v14579
    %14676 = vmatprep.subr.bf16.mxu0 0
    %14677 = vmatpush1.bf16.xpose.msra.mxu0 %v14582
    %14678 = vmatprep.subr.bf16.mxu0 0
    %14679 = vmatpush1.bf16.xpose.msra.mxu0 %v14585
    %14680 = vmatprep.subr.bf16.mxu0 0
    %14681 = vmatpush1.bf16.xpose.msra.mxu0 %v14588
    %14682 = vmatprep.subr.bf16.mxu0 0
    %14683 = vmatpush1.bf16.xpose.msra.mxu0 %v14591
    %14684 = vmatprep.subr.bf16.mxu0 0
    %14685 = vmatpush1.bf16.xpose.msra.mxu0 %v14594
    %14686 = vmatprep.subr.bf16.mxu0 0
    %14687 = vmatpush1.bf16.xpose.msra.mxu0 %v14597
    %14688 = vmatprep.subr.bf16.mxu0 0
    %14689 = vmatpush1.bf16.xpose.msra.mxu0 %v14600
    %14690 = vmatprep.subr.bf16.mxu0 0
    %14691 = vmatpush1.bf16.xpose.msra.mxu0 %v14603
    %14692 = vmatprep.subr.bf16.mxu0 0
    %14693 = vmatpush1.bf16.xpose.msra.mxu0 %v14606
    %14694 = vmatprep.subr.bf16.mxu0 0
    %14695 = vmatpush1.bf16.xpose.msra.mxu0 %v14609
    %14696 = vmatprep.subr.bf16.mxu0 0
    %14697 = vmatpush1.bf16.xpose.msra.mxu0 %v14612
    %14698 = vmatprep.subr.bf16.mxu0 0
    %14699 = vmatpush1.bf16.xpose.msra.mxu0 %v14615
    %14700 = vmatprep.subr.bf16.mxu0 0
    %14701 = vmatpush1.bf16.xpose.msra.mxu0 %v14618
    %14702 = vmatprep.subr.bf16.mxu0 0
    %14703 = vmatpush1.bf16.xpose.msra.mxu0 %v14621
    %14704 = vmatprep.subr.bf16.mxu0 0
    %14705 = vmatpush1.bf16.xpose.msra.mxu0 %v14624
    %14706 = vmatprep.mubr.bf16.mxu0 0
    %14707 = vmatmul.mubr.bf16.gmra.mrb[0].mxu0 %v14576
    %v14708 = vpop.f32.mrb[0].mxu0
    %v14709 = vadd.f32 0.0, %v14708
    %v14710 = vpop.f32.mrb[0].mxu0
    %v14711 = vadd.f32 0.0, %v14710
    %v14712 = vpop.f32.mrb[0].mxu0
    %v14713 = vpop.f32.mrb[0].mxu0
    %14714 = vdwg.mxu0
    %14715 = vmatprep.subr.bf16.mxu0 0
    %14716 = vmatpush1.bf16.xpose.msra.mxu0 %v14627
    %14717 = vmatprep.subr.bf16.mxu0 0
    %14718 = vmatpush1.bf16.xpose.msra.mxu0 %v14630
    %14719 = vmatprep.subr.bf16.mxu0 0
    %14720 = vmatpush1.bf16.xpose.msra.mxu0 %v14633
    %14721 = vmatprep.subr.bf16.mxu0 0
    %14722 = vmatpush1.bf16.xpose.msra.mxu0 %v14636
    %14723 = vmatprep.subr.bf16.mxu0 0
    %14724 = vmatpush1.bf16.xpose.msra.mxu0 %v14639
    %14725 = vmatprep.subr.bf16.mxu0 0
    %14726 = vmatpush1.bf16.xpose.msra.mxu0 %v14642
    %14727 = vmatprep.subr.bf16.mxu0 0
    %14728 = vmatpush1.bf16.xpose.msra.mxu0 %v14645
    %14729 = vmatprep.subr.bf16.mxu0 0
    %14730 = vmatpush1.bf16.xpose.msra.mxu0 %v14648
    %14731 = vmatprep.subr.bf16.mxu0 0
    %14732 = vmatpush1.bf16.xpose.msra.mxu0 %v14651
    %14733 = vmatprep.subr.bf16.mxu0 0
    %14734 = vmatpush1.bf16.xpose.msra.mxu0 %v14654
    %14735 = vmatprep.subr.bf16.mxu0 0
    %14736 = vmatpush1.bf16.xpose.msra.mxu0 %v14657
    %14737 = vmatprep.subr.bf16.mxu0 0
    %14738 = vmatpush1.bf16.xpose.msra.mxu0 %v14660
    %14739 = vmatprep.subr.bf16.mxu0 0
    %14740 = vmatpush1.bf16.xpose.msra.mxu0 %v14663
    %14741 = vmatprep.subr.bf16.mxu0 0
    %14742 = vmatpush1.bf16.xpose.msra.mxu0 %v14666
    %14743 = vmatprep.subr.bf16.mxu0 0
    %14744 = vmatpush1.bf16.xpose.msra.mxu0 %v14669
    %14745 = vmatprep.subr.bf16.mxu0 0
    %14746 = vmatpush1.bf16.xpose.msra.mxu0 %v14672
    %14747 = vmatprep.mubr.bf16.mxu0 0
    %14748 = vmatmul.mubr.bf16.gmra.mrb[0].mxu0 %v14576
    %v14749 = vpop.f32.mrb[0].mxu0
    %v14750 = vadd.f32 0.0, %v14749
    %v14751 = vpop.f32.mrb[0].mxu0
    %v14752 = vadd.f32 0.0, %v14751
    %v14753 = vpop.f32.mrb[0].mxu0
    %v14754 = vpop.f32.mrb[0].mxu0
    %14755 = vdwg.mxu0
    %v14756 = vadd.f32 %v13609, %v14709
    %v14757 = vadd.f32 %v13610, %v14711
    %v14758 = vadd.f32 %v13611, %v14750
    %v14759 = vadd.f32 %v13612, %v14752
    %v14760 = vld [vmem:[%s5491] sm:$0xe]
    %v14761 = vld [vmem:[%s5491 + $0xc] sm:$0xe]
    %v14762 = vld [vmem:[%s5491 + $0x18] sm:$0xe]
    %v14763 = vld [vmem:[%s5491 + $0x24] sm:$0xe]
    %v14764 = vld [vmem:[%s5491 + $0x30] sm:$0xe]
    %v14765 = vld [vmem:[%s5491 + $0x3c] sm:$0xe]
    %v14766 = vld [vmem:[%s5491 + $0x48] sm:$0xe]
    %v14767 = vld [vmem:[%s5491 + $0x54] sm:$0xe]
    %v14768 = vld [vmem:[%s5491 + $0x60] sm:$0xe]
    %v14769 = vld [vmem:[%s5491 + $0x6c] sm:$0xe]
    %v14770 = vld [vmem:[%s5491 + $0x78] sm:$0xe]
    %v14771 = vld [vmem:[%s5491 + $0x84] sm:$0xe]
    %v14772 = vld [vmem:[%s5491 + $0x90] sm:$0xe]
    %v14773 = vld [vmem:[%s5491 + $0x9c] sm:$0xe]
    %v14774 = vld [vmem:[%s5491 + $0xa8] sm:$0xe]
    %v14775 = vld [vmem:[%s5491 + $0xb4] sm:$0xe]
    %v14776 = vld [vmem:[%s5491 + $0xd8] sm:$0xe]
    %v14777 = vld [vmem:[%s5491 + $0xe4] sm:$0xe]
    %v14778 = vld [vmem:[%s5491 + $0xf0] sm:$0xe]
    %v14779 = vld [vmem:[%s5491 + $0xfc] sm:$0xe]
    %v14780 = vld [vmem:[%s5491 + $0x108] sm:$0xe]
    %v14781 = vld [vmem:[%s5491 + $0x114] sm:$0xe]
    %v14782 = vld [vmem:[%s5491 + $0x120] sm:$0xe]
    %v14783 = vld [vmem:[%s5491 + $0x12c] sm:$0xe]
    %v14784 = vld [vmem:[%s5491 + $0x138] sm:$0xe]
    %v14785 = vld [vmem:[%s5491 + $0x144] sm:$0xe]
    %v14786 = vld [vmem:[%s5491 + $0x150] sm:$0xe]
    %v14787 = vld [vmem:[%s5491 + $0x15c] sm:$0xe]
    %v14788 = vld [vmem:[%s5491 + $0x168] sm:$0xe]
    %v14789 = vld [vmem:[%s5491 + $0x174] sm:$0xe]
    %v14790 = vld [vmem:[%s5491 + $0x180] sm:$0xe]
    %v14791 = vld [vmem:[%s5491 + $0x18c] sm:$0xe]
    %v14888 = vrot.slane %v14760, 5
    %v14889 = vrot.slane %v14888, 4
    %v14890 = vrot.slane %v13614, 5
    %v14891 = vsel %vm2790, %v14889, %v14890
    %v14892 = vrot.slane %v14890, 4
    %v14893 = vrot.slane %v13615, 5
    %v14894 = vsel %vm2790, %v14892, %v14893
    %v14895 = vrot.slane %v14761, 5
    %v14896 = vrot.slane %v14895, 4
    %v14897 = vrot.slane %v13617, 5
    %v14898 = vsel %vm2790, %v14896, %v14897
    %v14899 = vrot.slane %v14897, 4
    %v14900 = vrot.slane %v13618, 5
    %v14901 = vsel %vm2790, %v14899, %v14900
    %v14902 = vrot.slane %v14762, 5
    %v14903 = vrot.slane %v14902, 4
    %v14904 = vrot.slane %v13620, 5
    %v14905 = vsel %vm2790, %v14903, %v14904
    %v14906 = vrot.slane %v14904, 4
    %v14907 = vrot.slane %v13621, 5
    %v14908 = vsel %vm2790, %v14906, %v14907
    %v14909 = vrot.slane %v14763, 5
    %v14910 = vrot.slane %v14909, 4
    %v14911 = vrot.slane %v13623, 5
    %v14912 = vsel %vm2790, %v14910, %v14911
    %v14913 = vrot.slane %v14911, 4
    %v14914 = vrot.slane %v13624, 5
    %v14915 = vsel %vm2790, %v14913, %v14914
    %v14916 = vrot.slane %v14764, 5
    %v14917 = vrot.slane %v14916, 4
    %v14918 = vrot.slane %v13626, 5
    %v14919 = vsel %vm2790, %v14917, %v14918
    %v14920 = vrot.slane %v14918, 4
    %v14921 = vrot.slane %v13627, 5
    %v14922 = vsel %vm2790, %v14920, %v14921
    %v14923 = vrot.slane %v14765, 5
    %v14924 = vrot.slane %v14923, 4
    %v14925 = vrot.slane %v13629, 5
    %v14926 = vsel %vm2790, %v14924, %v14925
    %v14927 = vrot.slane %v14925, 4
    %v14928 = vrot.slane %v13630, 5
    %v14929 = vsel %vm2790, %v14927, %v14928
    %v14930 = vrot.slane %v14766, 5
    %v14931 = vrot.slane %v14930, 4
    %v14932 = vrot.slane %v13632, 5
    %v14933 = vsel %vm2790, %v14931, %v14932
    %v14934 = vrot.slane %v14932, 4
    %v14935 = vrot.slane %v13633, 5
    %v14936 = vsel %vm2790, %v14934, %v14935
    %v14937 = vrot.slane %v14767, 5
    %v14938 = vrot.slane %v14937, 4
    %v14939 = vrot.slane %v13635, 5
    %v14940 = vsel %vm2790, %v14938, %v14939
    %v14941 = vrot.slane %v14939, 4
    %v14942 = vrot.slane %v13636, 5
    %v14943 = vsel %vm2790, %v14941, %v14942
    %v14944 = vrot.slane %v14768, 5
    %v14945 = vrot.slane %v14944, 4
    %v14946 = vrot.slane %v13638, 5
    %v14947 = vsel %vm2790, %v14945, %v14946
    %v14948 = vrot.slane %v14946, 4
    %v14949 = vrot.slane %v13639, 5
    %v14950 = vsel %vm2790, %v14948, %v14949
    %v14951 = vrot.slane %v14769, 5
    %v14952 = vrot.slane %v14951, 4
    %v14953 = vrot.slane %v13641, 5
    %v14954 = vsel %vm2790, %v14952, %v14953
    %v14955 = vrot.slane %v14953, 4
    %v14956 = vrot.slane %v13642, 5
    %v14957 = vsel %vm2790, %v14955, %v14956
    %v14958 = vrot.slane %v14770, 5
    %v14959 = vrot.slane %v14958, 4
    %v14960 = vrot.slane %v13644, 5
    %v14961 = vsel %vm2790, %v14959, %v14960
    %v14962 = vrot.slane %v14960, 4
    %v14963 = vrot.slane %v13645, 5
    %v14964 = vsel %vm2790, %v14962, %v14963
    %v14965 = vrot.slane %v14771, 5
    %v14966 = vrot.slane %v14965, 4
    %v14967 = vrot.slane %v13647, 5
    %v14968 = vsel %vm2790, %v14966, %v14967
    %v14969 = vrot.slane %v14967, 4
    %v14970 = vrot.slane %v13648, 5
    %v14971 = vsel %vm2790, %v14969, %v14970
    %v14972 = vrot.slane %v14772, 5
    %v14973 = vrot.slane %v14972, 4
    %v14974 = vrot.slane %v13650, 5
    %v14975 = vsel %vm2790, %v14973, %v14974
    %v14976 = vrot.slane %v14974, 4
    %v14977 = vrot.slane %v13651, 5
    %v14978 = vsel %vm2790, %v14976, %v14977
    %v14979 = vrot.slane %v14773, 5
    %v14980 = vrot.slane %v14979, 4
    %v14981 = vrot.slane %v13653, 5
    %v14982 = vsel %vm2790, %v14980, %v14981
    %v14983 = vrot.slane %v14981, 4
    %v14984 = vrot.slane %v13654, 5
    %v14985 = vsel %vm2790, %v14983, %v14984
    %v14986 = vrot.slane %v14774, 5
    %v14987 = vrot.slane %v14986, 4
    %v14988 = vrot.slane %v13656, 5
    %v14989 = vsel %vm2790, %v14987, %v14988
    %v14990 = vrot.slane %v14988, 4
    %v14991 = vrot.slane %v13657, 5
    %v14992 = vsel %vm2790, %v14990, %v14991
    %v14993 = vrot.slane %v14775, 5
    %v14994 = vrot.slane %v14993, 4
    %v14995 = vrot.slane %v13659, 5
    %v14996 = vsel %vm2790, %v14994, %v14995
    %v14997 = vrot.slane %v14995, 4
    %v14998 = vrot.slane %v13660, 5
    %v14999 = vsel %vm2790, %v14997, %v14998
    %v15000 = vrot.slane %v14776, 5
    %v15001 = vrot.slane %v15000, 4
    %v15002 = vrot.slane %v13662, 5
    %v15003 = vsel %vm2790, %v15001, %v15002
    %v15004 = vrot.slane %v15002, 4
    %v15005 = vrot.slane %v13663, 5
    %v15006 = vsel %vm2790, %v15004, %v15005
    %v15007 = vrot.slane %v14777, 5
    %v15008 = vrot.slane %v15007, 4
    %v15009 = vrot.slane %v13665, 5
    %v15010 = vsel %vm2790, %v15008, %v15009
    %v15011 = vrot.slane %v15009, 4
    %v15012 = vrot.slane %v13666, 5
    %v15013 = vsel %vm2790, %v15011, %v15012
    %v15014 = vrot.slane %v14778, 5
    %v15015 = vrot.slane %v15014, 4
    %v15016 = vrot.slane %v13668, 5
    %v15017 = vsel %vm2790, %v15015, %v15016
    %v15018 = vrot.slane %v15016, 4
    %v15019 = vrot.slane %v13669, 5
    %v15020 = vsel %vm2790, %v15018, %v15019
    %v15021 = vrot.slane %v14779, 5
    %v15022 = vrot.slane %v15021, 4
    %v15023 = vrot.slane %v13671, 5
    %v15024 = vsel %vm2790, %v15022, %v15023
    %v15025 = vrot.slane %v15023, 4
    %v15026 = vrot.slane %v13672, 5
    %v15027 = vsel %vm2790, %v15025, %v15026
    %v15028 = vrot.slane %v14780, 5
    %v15029 = vrot.slane %v15028, 4
    %v15030 = vrot.slane %v13674, 5
    %v15031 = vsel %vm2790, %v15029, %v15030
    %v15032 = vrot.slane %v15030, 4
    %v15033 = vrot.slane %v13675, 5
    %v15034 = vsel %vm2790, %v15032, %v15033
    %v15035 = vrot.slane %v14781, 5
    %v15036 = vrot.slane %v15035, 4
    %v15037 = vrot.slane %v13677, 5
    %v15038 = vsel %vm2790, %v15036, %v15037
    %v15039 = vrot.slane %v15037, 4
    %v15040 = vrot.slane %v13678, 5
    %v15041 = vsel %vm2790, %v15039, %v15040
    %v15042 = vrot.slane %v14782, 5
    %v15043 = vrot.slane %v15042, 4
    %v15044 = vrot.slane %v13680, 5
    %v15045 = vsel %vm2790, %v15043, %v15044
    %v15046 = vrot.slane %v15044, 4
    %v15047 = vrot.slane %v13681, 5
    %v15048 = vsel %vm2790, %v15046, %v15047
    %v15049 = vrot.slane %v14783, 5
    %v15050 = vrot.slane %v15049, 4
    %v15051 = vrot.slane %v13683, 5
    %v15052 = vsel %vm2790, %v15050, %v15051
    %v15053 = vrot.slane %v15051, 4
    %v15054 = vrot.slane %v13684, 5
    %v15055 = vsel %vm2790, %v15053, %v15054
    %v15056 = vrot.slane %v14784, 5
    %v15057 = vrot.slane %v15056, 4
    %v15058 = vrot.slane %v13686, 5
    %v15059 = vsel %vm2790, %v15057, %v15058
    %v15060 = vrot.slane %v15058, 4
    %v15061 = vrot.slane %v13687, 5
    %v15062 = vsel %vm2790, %v15060, %v15061
    %v15063 = vrot.slane %v14785, 5
    %v15064 = vrot.slane %v15063, 4
    %v15065 = vrot.slane %v13689, 5
    %v15066 = vsel %vm2790, %v15064, %v15065
    %v15067 = vrot.slane %v15065, 4
    %v15068 = vrot.slane %v13690, 5
    %v15069 = vsel %vm2790, %v15067, %v15068
    %v15070 = vrot.slane %v14786, 5
    %v15071 = vrot.slane %v15070, 4
    %v15072 = vrot.slane %v13692, 5
    %v15073 = vsel %vm2790, %v15071, %v15072
    %v15074 = vrot.slane %v15072, 4
    %v15075 = vrot.slane %v13693, 5
    %v15076 = vsel %vm2790, %v15074, %v15075
    %v15077 = vrot.slane %v14787, 5
    %v15078 = vrot.slane %v15077, 4
    %v15079 = vrot.slane %v13695, 5
    %v15080 = vsel %vm2790, %v15078, %v15079
    %v15081 = vrot.slane %v15079, 4
    %v15082 = vrot.slane %v13696, 5
    %v15083 = vsel %vm2790, %v15081, %v15082
    %v15084 = vrot.slane %v14788, 5
    %v15085 = vrot.slane %v15084, 4
    %v15086 = vrot.slane %v13698, 5
    %v15087 = vsel %vm2790, %v15085, %v15086
    %v15088 = vrot.slane %v15086, 4
    %v15089 = vrot.slane %v13699, 5
    %v15090 = vsel %vm2790, %v15088, %v15089
    %v15091 = vrot.slane %v14789, 5
    %v15092 = vrot.slane %v15091, 4
    %v15093 = vrot.slane %v13701, 5
    %v15094 = vsel %vm2790, %v15092, %v15093
    %v15095 = vrot.slane %v15093, 4
    %v15096 = vrot.slane %v13702, 5
    %v15097 = vsel %vm2790, %v15095, %v15096
    %v15098 = vrot.slane %v14790, 5
    %v15099 = vrot.slane %v15098, 4
    %v15100 = vrot.slane %v13704, 5
    %v15101 = vsel %vm2790, %v15099, %v15100
    %v15102 = vrot.slane %v15100, 4
    %v15103 = vrot.slane %v13705, 5
    %v15104 = vsel %vm2790, %v15102, %v15103
    %v15105 = vrot.slane %v14791, 5
    %v15106 = vrot.slane %v15105, 4
    %v15107 = vrot.slane %v13707, 5
    %v15108 = vsel %vm2790, %v15106, %v15107
    %v15109 = vrot.slane %v15107, 4
    %v15110 = vrot.slane %v13708, 5
    %v15111 = vsel %vm2790, %v15109, %v15110
    %15112 = vrot.lane.b32.xlu0 %v9784, 64
    %v15113 = vpop.permute.xlu0 %15112
    %v15114 = vunpack.c.l.b16 %v14891
    %v15115 = vunpack.c.l.b16 %v14894
    %v15116 = vunpack.c.l.b16 %v14898
    %v15117 = vunpack.c.l.b16 %v14901
    %v15118 = vunpack.c.l.b16 %v14905
    %v15119 = vunpack.c.l.b16 %v14908
    %v15120 = vunpack.c.l.b16 %v14912
    %v15121 = vunpack.c.l.b16 %v14915
    %v15122 = vunpack.c.l.b16 %v14919
    %v15123 = vunpack.c.l.b16 %v14922
    %v15124 = vunpack.c.l.b16 %v14926
    %v15125 = vunpack.c.l.b16 %v14929
    %v15126 = vunpack.c.l.b16 %v14933
    %v15127 = vunpack.c.l.b16 %v14936
    %v15128 = vunpack.c.l.b16 %v14940
    %v15129 = vunpack.c.l.b16 %v14943
    %v15130 = vunpack.c.l.b16 %v14947
    %v15131 = vunpack.c.l.b16 %v14950
    %v15132 = vunpack.c.l.b16 %v14954
    %v15133 = vunpack.c.l.b16 %v14957
    %v15134 = vunpack.c.l.b16 %v14961
    %v15135 = vunpack.c.l.b16 %v14964
    %v15136 = vunpack.c.l.b16 %v14968
    %v15137 = vunpack.c.l.b16 %v14971
    %v15138 = vunpack.c.l.b16 %v14975
    %v15139 = vunpack.c.l.b16 %v14978
    %v15140 = vunpack.c.l.b16 %v14982
    %v15141 = vunpack.c.l.b16 %v14985
    %v15142 = vunpack.c.l.b16 %v14989
    %v15143 = vunpack.c.l.b16 %v14992
    %v15144 = vunpack.c.l.b16 %v14996
    %v15145 = vunpack.c.l.b16 %v14999
    %v15146 = vunpack.c.l.b16 %v15003
    %v15147 = vunpack.c.l.b16 %v15006
    %v15148 = vunpack.c.l.b16 %v15010
    %v15149 = vunpack.c.l.b16 %v15013
    %v15150 = vunpack.c.l.b16 %v15017
    %v15151 = vunpack.c.l.b16 %v15020
    %v15152 = vunpack.c.l.b16 %v15024
    %v15153 = vunpack.c.l.b16 %v15027
    %v15154 = vunpack.c.l.b16 %v15031
    %v15155 = vunpack.c.l.b16 %v15034
    %v15156 = vunpack.c.l.b16 %v15038
    %v15157 = vunpack.c.l.b16 %v15041
    %v15158 = vunpack.c.l.b16 %v15045
    %v15159 = vunpack.c.l.b16 %v15048
    %v15160 = vunpack.c.l.b16 %v15052
    %v15161 = vunpack.c.l.b16 %v15055
    %v15162 = vunpack.c.l.b16 %v15059
    %v15163 = vunpack.c.l.b16 %v15062
    %v15164 = vunpack.c.l.b16 %v15066
    %v15165 = vunpack.c.l.b16 %v15069
    %v15166 = vunpack.c.l.b16 %v15073
    %v15167 = vunpack.c.l.b16 %v15076
    %v15168 = vunpack.c.l.b16 %v15080
    %v15169 = vunpack.c.l.b16 %v15083
    %v15170 = vunpack.c.l.b16 %v15087
    %v15171 = vunpack.c.l.b16 %v15090
    %v15172 = vunpack.c.l.b16 %v15094
    %v15173 = vunpack.c.l.b16 %v15097
    %v15174 = vunpack.c.l.b16 %v15101
    %v15175 = vunpack.c.l.b16 %v15104
    %v15176 = vunpack.c.l.b16 %v15108
    %v15177 = vunpack.c.l.b16 %v15111
    %v15178 = vpack.c.b16 %v15115, %v15114
    %v15179 = vpack.c.b16 %v15117, %v15116
    %v15180 = vpack.c.b16 %v15119, %v15118
    %v15181 = vpack.c.b16 %v15121, %v15120
    %v15182 = vpack.c.b16 %v15123, %v15122
    %v15183 = vpack.c.b16 %v15125, %v15124
    %v15184 = vpack.c.b16 %v15127, %v15126
    %v15185 = vpack.c.b16 %v15129, %v15128
    %v15186 = vpack.c.b16 %v15131, %v15130
    %v15187 = vpack.c.b16 %v15133, %v15132
    %v15188 = vpack.c.b16 %v15135, %v15134
    %v15189 = vpack.c.b16 %v15137, %v15136
    %v15190 = vpack.c.b16 %v15139, %v15138
    %v15191 = vpack.c.b16 %v15141, %v15140
    %v15192 = vpack.c.b16 %v15143, %v15142
    %v15193 = vpack.c.b16 %v15145, %v15144
    %v15194 = vpack.c.b16 %v15147, %v15146
    %v15195 = vpack.c.b16 %v15149, %v15148
    %v15196 = vpack.c.b16 %v15151, %v15150
    %v15197 = vpack.c.b16 %v15153, %v15152
    %v15198 = vpack.c.b16 %v15155, %v15154
    %v15199 = vpack.c.b16 %v15157, %v15156
    %v15200 = vpack.c.b16 %v15159, %v15158
    %v15201 = vpack.c.b16 %v15161, %v15160
    %v15202 = vpack.c.b16 %v15163, %v15162
    %v15203 = vpack.c.b16 %v15165, %v15164
    %v15204 = vpack.c.b16 %v15167, %v15166
    %v15205 = vpack.c.b16 %v15169, %v15168
    %v15206 = vpack.c.b16 %v15171, %v15170
    %v15207 = vpack.c.b16 %v15173, %v15172
    %v15208 = vpack.c.b16 %v15175, %v15174
    %v15209 = vpack.c.b16 %v15177, %v15176
    %v15211 = vsel %vm9883, %v15113, 0
    %v15214 = vsel %vm9883, %v15178, 0
    %v15217 = vsel %vm9883, %v15179, 0
    %v15220 = vsel %vm9883, %v15180, 0
    %v15223 = vsel %vm9883, %v15181, 0
    %v15226 = vsel %vm9883, %v15182, 0
    %v15229 = vsel %vm9883, %v15183, 0
    %v15232 = vsel %vm9883, %v15184, 0
    %v15235 = vsel %vm9883, %v15185, 0
    %v15238 = vsel %vm9883, %v15186, 0
    %v15241 = vsel %vm9883, %v15187, 0
    %v15244 = vsel %vm9883, %v15188, 0
    %v15247 = vsel %vm9883, %v15189, 0
    %v15250 = vsel %vm9883, %v15190, 0
    %v15253 = vsel %vm9883, %v15191, 0
    %v15256 = vsel %vm9883, %v15192, 0
    %v15259 = vsel %vm9883, %v15193, 0
    %v15262 = vsel %vm9883, %v15194, 0
    %v15265 = vsel %vm9883, %v15195, 0
    %v15268 = vsel %vm9883, %v15196, 0
    %v15271 = vsel %vm9883, %v15197, 0
    %v15274 = vsel %vm9883, %v15198, 0
    %v15277 = vsel %vm9883, %v15199, 0
    %v15280 = vsel %vm9883, %v15200, 0
    %v15283 = vsel %vm9883, %v15201, 0
    %v15286 = vsel %vm9883, %v15202, 0
    %v15289 = vsel %vm9883, %v15203, 0
    %v15292 = vsel %vm9883, %v15204, 0
    %v15295 = vsel %vm9883, %v15205, 0
    %v15298 = vsel %vm9883, %v15206, 0
    %v15301 = vsel %vm9883, %v15207, 0
    %v15304 = vsel %vm9883, %v15208, 0
    %v15307 = vsel %vm9883, %v15209, 0
    %15309 = vmatprep.subr.bf16.mxu0 0
    %15310 = vmatpush1.bf16.xpose.msra.mxu0 %v15214
    %15311 = vmatprep.subr.bf16.mxu0 0
    %15312 = vmatpush1.bf16.xpose.msra.mxu0 %v15217
    %15313 = vmatprep.subr.bf16.mxu0 0
    %15314 = vmatpush1.bf16.xpose.msra.mxu0 %v15220
    %15315 = vmatprep.subr.bf16.mxu0 0
    %15316 = vmatpush1.bf16.xpose.msra.mxu0 %v15223
    %15317 = vmatprep.subr.bf16.mxu0 0
    %15318 = vmatpush1.bf16.xpose.msra.mxu0 %v15226
    %15319 = vmatprep.subr.bf16.mxu0 0
    %15320 = vmatpush1.bf16.xpose.msra.mxu0 %v15229
    %15321 = vmatprep.subr.bf16.mxu0 0
    %15322 = vmatpush1.bf16.xpose.msra.mxu0 %v15232
    %15323 = vmatprep.subr.bf16.mxu0 0
    %15324 = vmatpush1.bf16.xpose.msra.mxu0 %v15235
    %15325 = vmatprep.subr.bf16.mxu0 0
    %15326 = vmatpush1.bf16.xpose.msra.mxu0 %v15238
    %15327 = vmatprep.subr.bf16.mxu0 0
    %15328 = vmatpush1.bf16.xpose.msra.mxu0 %v15241
    %15329 = vmatprep.subr.bf16.mxu0 0
    %15330 = vmatpush1.bf16.xpose.msra.mxu0 %v15244
    %15331 = vmatprep.subr.bf16.mxu0 0
    %15332 = vmatpush1.bf16.xpose.msra.mxu0 %v15247
    %15333 = vmatprep.subr.bf16.mxu0 0
    %15334 = vmatpush1.bf16.xpose.msra.mxu0 %v15250
    %15335 = vmatprep.subr.bf16.mxu0 0
    %15336 = vmatpush1.bf16.xpose.msra.mxu0 %v15253
    %15337 = vmatprep.subr.bf16.mxu0 0
    %15338 = vmatpush1.bf16.xpose.msra.mxu0 %v15256
    %15339 = vmatprep.subr.bf16.mxu0 0
    %15340 = vmatpush1.bf16.xpose.msra.mxu0 %v15259
    %15341 = vmatprep.mubr.bf16.mxu0 0
    %15342 = vmatmul.mubr.bf16.gmra.mrb[0].mxu0 %v15211
    %v15343 = vpop.f32.mrb[0].mxu0
    %v15344 = vadd.f32 0.0, %v15343
    %v15345 = vpop.f32.mrb[0].mxu0
    %v15346 = vadd.f32 0.0, %v15345
    %v15347 = vpop.f32.mrb[0].mxu0
    %v15348 = vpop.f32.mrb[0].mxu0
    %15349 = vdwg.mxu0
    %15350 = vmatprep.subr.bf16.mxu0 0
    %15351 = vmatpush1.bf16.xpose.msra.mxu0 %v15262
    %15352 = vmatprep.subr.bf16.mxu0 0
    %15353 = vmatpush1.bf16.xpose.msra.mxu0 %v15265
    %15354 = vmatprep.subr.bf16.mxu0 0
    %15355 = vmatpush1.bf16.xpose.msra.mxu0 %v15268
    %15356 = vmatprep.subr.bf16.mxu0 0
    %15357 = vmatpush1.bf16.xpose.msra.mxu0 %v15271
    %15358 = vmatprep.subr.bf16.mxu0 0
    %15359 = vmatpush1.bf16.xpose.msra.mxu0 %v15274
    %15360 = vmatprep.subr.bf16.mxu0 0
    %15361 = vmatpush1.bf16.xpose.msra.mxu0 %v15277
    %15362 = vmatprep.subr.bf16.mxu0 0
    %15363 = vmatpush1.bf16.xpose.msra.mxu0 %v15280
    %15364 = vmatprep.subr.bf16.mxu0 0
    %15365 = vmatpush1.bf16.xpose.msra.mxu0 %v15283
    %15366 = vmatprep.subr.bf16.mxu0 0
    %15367 = vmatpush1.bf16.xpose.msra.mxu0 %v15286
    %15368 = vmatprep.subr.bf16.mxu0 0
    %15369 = vmatpush1.bf16.xpose.msra.mxu0 %v15289
    %15370 = vmatprep.subr.bf16.mxu0 0
    %15371 = vmatpush1.bf16.xpose.msra.mxu0 %v15292
    %15372 = vmatprep.subr.bf16.mxu0 0
    %15373 = vmatpush1.bf16.xpose.msra.mxu0 %v15295
    %15374 = vmatprep.subr.bf16.mxu0 0
    %15375 = vmatpush1.bf16.xpose.msra.mxu0 %v15298
    %15376 = vmatprep.subr.bf16.mxu0 0
    %15377 = vmatpush1.bf16.xpose.msra.mxu0 %v15301
    %15378 = vmatprep.subr.bf16.mxu0 0
    %15379 = vmatpush1.bf16.xpose.msra.mxu0 %v15304
    %15380 = vmatprep.subr.bf16.mxu0 0
    %15381 = vmatpush1.bf16.xpose.msra.mxu0 %v15307
    %15382 = vmatprep.mubr.bf16.mxu0 0
    %15383 = vmatmul.mubr.bf16.gmra.mrb[0].mxu0 %v15211
    %v15384 = vpop.f32.mrb[0].mxu0
    %v15385 = vadd.f32 0.0, %v15384
    %v15386 = vpop.f32.mrb[0].mxu0
    %v15387 = vadd.f32 0.0, %v15386
    %v15388 = vpop.f32.mrb[0].mxu0
    %v15389 = vpop.f32.mrb[0].mxu0
    %15390 = vdwg.mxu0
    %v15391 = vadd.f32 %v14756, %v15344
    %v15392 = vadd.f32 %v14757, %v15346
    %v15393 = vadd.f32 %v14758, %v15385
    %v15394 = vadd.f32 %v14759, %v15387
    %v15395 = vadd.f32 %v15391, %v15392
    %v15396 = vadd.f32 %v15395, %v15393
    %v15397 = vadd.f32 %v15396, %v15394
    %15398 = vadd.xlane.f32.xlu0 %v15397
    %v15399 = vpop.xlane.xlu0 %15398
    %v15400 = vmul.f32 %v15399, 0.001953125
    %v15401 = vmul.f32 %v15391, %v15391
    %v15402 = vmul.f32 %v15392, %v15392
    %v15403 = vmul.f32 %v15393, %v15393
    %v15404 = vmul.f32 %v15394, %v15394
    %v15405 = vadd.f32 %v15401, %v15402
    %v15406 = vadd.f32 %v15405, %v15403
    %v15407 = vadd.f32 %v15406, %v15404
    %15408 = vadd.xlane.f32.xlu0 %v15407
    %v15409 = vpop.xlane.xlu0 %15408
    %v15410 = vmul.f32 %v15409, 0.001953125
    %v15411 = vmul.f32 %v15400, %v15400
    %v15412 = vsub.f32 %v15410, %v15411
    %v15413 = vadd.f32 %v15412, 1e-05
    %v15414 = vrsqrt.pop %v15413
    %v15415 = vld [vmem:[%s5] sm:$0xff]
    %v15416 = vmul.f32 %v15414, %v15415
    %v15417 = vld [vmem:[%s6] sm:$0xff]
    %v15418 = vmul.f32 %v15400, %v15416
    %v15419 = vsub.f32 %v15417, %v15418
    %15421 = vset.pattern.permute.xlu0 0
    %15422 = vperm.xlu0 %15421, %v15416
    %v15423 = vpop.permute.xlu0 %15422
    %v15425 = vmul.f32 %v15391, %v15423
    %v15426 = vmul.f32 %v15392, %v15423
    %v15427 = vmul.f32 %v15393, %v15423
    %v15428 = vmul.f32 %v15394, %v15423
    %15430 = vset.pattern.permute.xlu0 0
    %15431 = vperm.xlu0 %15430, %v15419
    %v15432 = vpop.permute.xlu0 %15431
    %v15434 = vadd.f32 %v15425, %v15432
    %v15435 = vadd.f32 %v15426, %v15432
    %v15436 = vadd.f32 %v15427, %v15432
    %v15437 = vadd.f32 %v15428, %v15432
    %v15438 = vmax.f32 %v15434, 0.0
    %v15439 = vmax.f32 %v15435, 0.0
    %v15440 = vmax.f32 %v15436, 0.0
    %v15441 = vmax.f32 %v15437, 0.0
    %15442 = vst [vmem:[#allocation3] sm:$0xff] %v15438
    %15443 = vst [vmem:[#allocation3 + $0x8] sm:$0xff] %v15439
    %s15444 = scalar_lea.vmem [#allocation3], 16
    %15445 = vst [vmem:[%s15444] sm:$0xff] %v15440
    %15446 = vst [vmem:[%s15444 + $0x8] sm:$0xff] %v15441
    // Predicated region
    $region30: #{tpu_custom_call.1} parent=1 // pred_check
      _
    $region31: #{tpu_custom_call.1} parent=1 // pred_check_branch
      %15448 = sbr.rel (0) target = $region33
    $region32: #{tpu_custom_call.1} parent=1 // pred_region
      %s15450 = ssub.s32 512, 512
      %15451 = vsyncadd [#allocation4], %s15450
      %s15452 = sshll.u32 [#allocation3], 4
      %s15453 = int_to_ptr.vmem [resolvable:$true] %s15452
      %15458 = dma.vmem_to_hbm [thread:$0]  %s15453, 512, %s7, [#allocation4], 256, 256, 16
    $region33: #{tpu_custom_call.1} parent=1 // pred_fallthru
      _
    // Predicated region
    $region34: #{tpu_custom_call.1} parent=1 // pred_check
      _
    $region35: #{tpu_custom_call.1} parent=1 // pred_check_branch
      %15460 = sbr.rel (0) target = $region37
    $region36: #{tpu_custom_call.1} parent=1 // pred_region
      %15461 = dma.done [#allocation4], 512
    $region37: #{tpu_custom_call.1} parent=1 // pred_fallthru
      _
    %15462 = vsyncpa [#allocation4], 1

</llo_original>
